<compile_context>
chip_gen: v5e
topology: v5e:2x2
jax: 0.10.0
libtpu: 0.0.40
codegen_flags: <defaults>
</compile_context>

<pallas_src>
import functools

import jax
import jax.numpy as jnp
from jax.experimental import pallas as pl
from jax.experimental.pallas import tpu as pltpu

DROPOUT_P = 0.2
N_EMBED = 384  # as in the PyTorch module


def _round_up(x, m):
    return (x + m - 1) // m * m


def _ffn_body(x_ref, w1_ref, b1_ref, w2_ref, b2_ref):
    # Native-dtype MXU matmuls with f32 accumulation; f32 epilogue.
    h = jnp.dot(x_ref[...], w1_ref[...], preferred_element_type=jnp.float32)
    h = jnp.maximum(h + b1_ref[...].astype(jnp.float32), 0.0)
    y = jnp.dot(h.astype(w2_ref.dtype), w2_ref[...],
                preferred_element_type=jnp.float32)
    return y + b2_ref[...].astype(jnp.float32)


def _ffn_eval_kernel(x_ref, w1_ref, b1_ref, w2_ref, b2_ref, o_ref):
    o_ref[...] = _ffn_body(x_ref, w1_ref, b1_ref, w2_ref, b2_ref).astype(o_ref.dtype)


def _ffn_train_kernel(x_ref, w1_ref, b1_ref, w2_ref, b2_ref, rand_ref, o_ref,
                      *, dropout_p: float):
    y = _ffn_body(x_ref, w1_ref, b1_ref, w2_ref, b2_ref)
    # Inverted dropout: keep iff uniform uint32 >= round(p * 2^32).
    threshold = jnp.uint32(min(int(round(dropout_p * 2.0 ** 32)), 2 ** 32 - 1))
    keep = rand_ref[...] >= threshold
    y = jnp.where(keep, y * (1.0 / (1.0 - dropout_p)), 0.0)
    o_ref[...] = y.astype(o_ref.dtype)


def feed_forward(x, w1, b1, w2, b2, *, training=False, seed=0,
                 dropout_p=DROPOUT_P, tile_m=256):
    """x: (..., E); w1: (E, 4E); b1: (4E,); w2: (4E, E); b2: (E,)."""
    orig_shape = x.shape
    e = orig_shape[-1]
    hdim = w1.shape[1]
    # Lane-dense fast path wants E and 4E to be multiples of 128 (true for
    # n_embed=384); smaller widths still work (full-dim blocks) but slower.
    x2d = x.reshape(-1, e)
    m = x2d.shape[0]

    # Row tile: large by default (saturates the 128/256-wide MXU), clamped for
    # tiny inputs; pad rows up to a tile multiple instead of asserting.
    tile = min(tile_m, _round_up(m, 8))
    m_pad = _round_up(m, tile)
    if m_pad != m:
        x2d = jnp.pad(x2d, ((0, m_pad - m), (0, 0)))
    grid = (m_pad // tile,)

    b1_2d = b1.reshape(1, hdim)
    b2_2d = b2.reshape(1, e)

    use_dropout = training and dropout_p > 0.0
    operands = [x2d, w1, b1_2d, w2, b2_2d]
    if use_dropout:
        # Portable RNG: uint32 bits generated outside the kernel (pltpu.prng_*
        # has no interpret/CPU lowering), thresholded inside the kernel.
        rand = jax.random.bits(jax.random.PRNGKey(seed), (m_pad, e), jnp.uint32)
        operands.append(rand)
        kernel = functools.partial(_ffn_train_kernel, dropout_p=dropout_p)
    else:
        kernel = _ffn_eval_kernel

    nbytes = lambda a: a.size * a.dtype.itemsize
    out_bytes = m_pad * e * x.dtype.itemsize
    cost = pl.CostEstimate(
        flops=4 * m_pad * e * hdim,           # two matmuls, 2*M*E*H each
        transcendentals=0,
        bytes_accessed=int(sum(nbytes(a) for a in operands) + out_bytes))

    # VMEM budget: weights/biases (conservatively 2x in case single-buffering
    # is unavailable) + double-buffered row tiles + (tile, 4E) f32 intermediate.
    weight_bytes = nbytes(w1) + nbytes(w2) + nbytes(b1_2d) + nbytes(b2_2d)
    tile_io_bytes = 2 * (2 * tile * e * x.dtype.itemsize)
    if use_dropout:
        tile_io_bytes += 2 * tile * e * 4
    vmem_est = 2 * weight_bytes + tile_io_bytes + tile * hdim * 4 + (4 << 20)
    vmem_limit = int(min(max(vmem_est, 32 << 20), 64 << 20))

    row_spec = pl.BlockSpec((tile, e), lambda i: (i, 0))

    def call(weight_pipeline_mode):
        wkw = {} if weight_pipeline_mode is None else dict(
            pipeline_mode=weight_pipeline_mode)
        in_specs = [
            row_spec,                                              # x rows
            pl.BlockSpec((e, hdim), lambda i: (0, 0), **wkw),      # W1 (full)
            pl.BlockSpec((1, hdim), lambda i: (0, 0), **wkw),      # b1
            pl.BlockSpec((hdim, e), lambda i: (0, 0), **wkw),      # W2 (full)
            pl.BlockSpec((1, e), lambda i: (0, 0), **wkw),         # b2
        ]
        if use_dropout:
            in_specs.append(pl.BlockSpec((tile, e), lambda i: (i, 0)))  # bits
        return pl.pallas_call(
            kernel,
            out_shape=jax.ShapeDtypeStruct((m_pad, e), x.dtype),
            grid=grid,
            in_specs=in_specs,
            out_specs=pl.BlockSpec((tile, e), lambda i: (i, 0)),
            compiler_params=pltpu.CompilerParams(
                dimension_semantics=("parallel",),
                vmem_limit_bytes=vmem_limit),
            cost_estimate=cost,
        )(*operands)

    try:
        # Weights/biases are grid-invariant: single-buffer them (Pallas
        # double-buffers every input by default, doubling their VMEM cost).
        out2d = call(pl.Buffered(1))
    except Exception:  # fallback for builds without pipeline_mode support
        out2d = call(None)

    return out2d[:m].reshape(orig_shape)


def _init_params(key, n_embed):
    # Deterministic init mimicking nn.Linear's uniform(-1/sqrt(fan_in), ...).
    h = 4 * n_embed
    k1, k2, k3, k4 = jax.random.split(key, 4)
    lim1 = 1.0 / (n_embed ** 0.5)
    lim2 = 1.0 / (h ** 0.5)
    w1 = jax.random.uniform(k1, (n_embed, h), jnp.float32, -lim1, lim1)
    b1 = jax.random.uniform(k2, (h,), jnp.float32, -lim1, lim1)
    w2 = jax.random.uniform(k3, (h, n_embed), jnp.float32, -lim2, lim2)
    b2 = jax.random.uniform(k4, (n_embed,), jnp.float32, -lim2, lim2)
    return w1, b1, w2, b2


if __name__ == "__main__":
    # Small shapes consistent with the module: (batch, seq, n_embed=384).
    batch, seq, n_embed = 2, 8, N_EMBED
    key = jax.random.PRNGKey(0)
    kx, kp = jax.random.split(key)
    x = jax.random.normal(kx, (batch, seq, n_embed), jnp.float32)
    w1, b1, w2, b2 = _init_params(kp, n_embed)

    # Eval mode: dropout is identity -> deterministic, checked vs pure JAX.
    out = jax.block_until_ready(feed_forward(x, w1, b1, w2, b2, training=False))
    ref = jnp.maximum(x @ w1 + b1, 0.0) @ w2 + b2
    assert out.shape == x.shape and out.dtype == x.dtype
    assert jnp.allclose(out, ref, atol=2e-2, rtol=2e-2), "eval mismatch vs reference"

    # Training mode: every element must be 0 (dropped) or ~ref / (1 - p).
    out_tr = jax.block_until_ready(
        feed_forward(x, w1, b1, w2, b2, training=True, seed=123))
    scaled = ref / (1.0 - DROPOUT_P)
    ok = jnp.isclose(out_tr, 0.0, atol=1e-6) | jnp.isclose(
        out_tr, scaled, atol=2e-2, rtol=2e-2)
    assert bool(jnp.all(ok)), "training-mode values not in {0, ref/(1-p)}"
    drop_frac = float(jnp.mean(out_tr == 0.0))
    assert 0.08 < drop_frac < 0.35, f"dropout rate off: {drop_frac}"

    print("KERNEL_OK")
</pallas_src>

<mosaic_0001>
module attributes {stable_mosaic.version = 11 : i64} {
  func.func @_ffn_eval_kernel(%arg0: i32, %arg1: memref<16x384xf32, #tpu.memory_space<vmem>>, %arg2: memref<384x1536xf32, #tpu.memory_space<vmem>>, %arg3: memref<1x1536xf32, #tpu.memory_space<vmem>>, %arg4: memref<1536x384xf32, #tpu.memory_space<vmem>>, %arg5: memref<1x384xf32, #tpu.memory_space<vmem>>, %arg6: memref<16x384xf32, #tpu.memory_space<vmem>>) attributes {dimension_semantics = [#tpu.dimension_semantics<parallel>], iteration_bounds = array<i64: 1>, scalar_prefetch = 0 : i64, scratch_operands = 0 : i64, tpu.core_type = #tpu.core_type<tc>, window_params = [{transform_indices = @transform_0, window_bounds = array<i64: 16, 384>}, {pipeline_mode = #tpu.pipeline_mode<synchronous>, transform_indices = @transform_1, window_bounds = array<i64: 384, 1536>}, {pipeline_mode = #tpu.pipeline_mode<synchronous>, transform_indices = @transform_2, window_bounds = array<i64: 1, 1536>}, {pipeline_mode = #tpu.pipeline_mode<synchronous>, transform_indices = @transform_3, window_bounds = array<i64: 1536, 384>}, {pipeline_mode = #tpu.pipeline_mode<synchronous>, transform_indices = @transform_4, window_bounds = array<i64: 1, 384>}, {transform_indices = @transform_5, window_bounds = array<i64: 16, 384>}]} {
    %c0 = arith.constant 0 : index
    %c0_0 = arith.constant 0 : index
    %0 = vector.load %arg1[%c0, %c0_0] : memref<16x384xf32, #tpu.memory_space<vmem>>, vector<16x384xf32>
    %c0_1 = arith.constant 0 : index
    %c0_2 = arith.constant 0 : index
    %1 = vector.load %arg2[%c0_1, %c0_2] : memref<384x1536xf32, #tpu.memory_space<vmem>>, vector<384x1536xf32>
    %cst = arith.constant dense<0.000000e+00> : vector<16x1536xf32>
    %2 = tpu.matmul %0, %1, %cst {dimension_numbers = #tpu.dot_dimension_numbers<[1], [0], [0], [1], [0, 0, 1, 1], [], []>} : vector<16x384xf32>, vector<384x1536xf32>, vector<16x1536xf32> -> vector<16x1536xf32>
    %c0_3 = arith.constant 0 : index
    %c0_4 = arith.constant 0 : index
    %3 = vector.load %arg3[%c0_3, %c0_4] : memref<1x1536xf32, #tpu.memory_space<vmem>>, vector<1x1536xf32>
    %4 = vector.broadcast %3 : vector<1x1536xf32> to vector<16x1536xf32>
    %5 = arith.addf %2, %4 : vector<16x1536xf32>
    %cst_5 = arith.constant 0.000000e+00 : f32
    %6 = vector.broadcast %cst_5 : f32 to vector<16x1536xf32>
    %7 = arith.maximumf %5, %6 : vector<16x1536xf32>
    %c0_6 = arith.constant 0 : index
    %c0_7 = arith.constant 0 : index
    %8 = vector.load %arg4[%c0_6, %c0_7] : memref<1536x384xf32, #tpu.memory_space<vmem>>, vector<1536x384xf32>
    %cst_8 = arith.constant dense<0.000000e+00> : vector<16x384xf32>
    %9 = tpu.matmul %7, %8, %cst_8 {dimension_numbers = #tpu.dot_dimension_numbers<[1], [0], [0], [1], [0, 0, 1, 1], [], []>} : vector<16x1536xf32>, vector<1536x384xf32>, vector<16x384xf32> -> vector<16x384xf32>
    %c0_9 = arith.constant 0 : index
    %c0_10 = arith.constant 0 : index
    %10 = vector.load %arg5[%c0_9, %c0_10] : memref<1x384xf32, #tpu.memory_space<vmem>>, vector<1x384xf32>
    %11 = vector.broadcast %10 : vector<1x384xf32> to vector<16x384xf32>
    %12 = arith.addf %9, %11 : vector<16x384xf32>
    %c0_11 = arith.constant 0 : index
    %c0_12 = arith.constant 0 : index
    %13 = vector.load %arg6[%c0_11, %c0_12] : memref<16x384xf32, #tpu.memory_space<vmem>>, vector<16x384xf32>
    tpu.vector_store %arg6[%c0_11, %c0_12], %12 {strides = array<i32>} : memref<16x384xf32, #tpu.memory_space<vmem>>, vector<16x384xf32>,
    return
  }
  func.func @transform_0(%arg0: i32) -> (i32, i32) {
    %c0_i32 = arith.constant 0 : i32
    %c0_i32_0 = arith.constant 0 : i32
    return %arg0, %c0_i32 : i32, i32
  }
  func.func @transform_1(%arg0: i32) -> (i32, i32) {
    %c0_i32 = arith.constant 0 : i32
    %c0_i32_0 = arith.constant 0 : i32
    %c0_i32_1 = arith.constant 0 : i32
    return %c0_i32, %c0_i32_0 : i32, i32
  }
  func.func @transform_2(%arg0: i32) -> (i32, i32) {
    %c0_i32 = arith.constant 0 : i32
    %c0_i32_0 = arith.constant 0 : i32
    %c0_i32_1 = arith.constant 0 : i32
    return %c0_i32, %c0_i32_0 : i32, i32
  }
  func.func @transform_3(%arg0: i32) -> (i32, i32) {
    %c0_i32 = arith.constant 0 : i32
    %c0_i32_0 = arith.constant 0 : i32
    %c0_i32_1 = arith.constant 0 : i32
    return %c0_i32, %c0_i32_0 : i32, i32
  }
  func.func @transform_4(%arg0: i32) -> (i32, i32) {
    %c0_i32 = arith.constant 0 : i32
    %c0_i32_0 = arith.constant 0 : i32
    %c0_i32_1 = arith.constant 0 : i32
    return %c0_i32, %c0_i32_0 : i32, i32
  }
  func.func @transform_5(%arg0: i32) -> (i32, i32) {
    %c0_i32 = arith.constant 0 : i32
    %c0_i32_0 = arith.constant 0 : i32
    return %arg0, %c0_i32 : i32, i32
  }
}

module attributes {stable_mosaic.version = 11 : i64} {
  func.func @_ffn_eval_kernel(%arg0: i32, %arg1: memref<16x384xf32, #tpu.memory_space<vmem>>, %arg2: memref<384x1536xf32, #tpu.memory_space<vmem>>, %arg3: memref<1x1536xf32, #tpu.memory_space<vmem>>, %arg4: memref<1536x384xf32, #tpu.memory_space<vmem>>, %arg5: memref<1x384xf32, #tpu.memory_space<vmem>>, %arg6: memref<16x384xf32, #tpu.memory_space<vmem>>) attributes {dimension_semantics = [#tpu.dimension_semantics<parallel>], iteration_bounds = array<i64: 1>, scalar_prefetch = 0 : i64, scratch_operands = 0 : i64, tpu.core_type = #tpu.core_type<tc>, window_params = [{transform_indices = @transform_0, window_bounds = array<i64: 16, 384>}, {pipeline_mode = #tpu.pipeline_mode<synchronous>, transform_indices = @transform_1, window_bounds = array<i64: 384, 1536>}, {pipeline_mode = #tpu.pipeline_mode<synchronous>, transform_indices = @transform_2, window_bounds = array<i64: 1, 1536>}, {pipeline_mode = #tpu.pipeline_mode<synchronous>, transform_indices = @transform_3, window_bounds = array<i64: 1536, 384>}, {pipeline_mode = #tpu.pipeline_mode<synchronous>, transform_indices = @transform_4, window_bounds = array<i64: 1, 384>}, {transform_indices = @transform_5, window_bounds = array<i64: 16, 384>}]} {
    %c0 = arith.constant 0 : index
    %c0_0 = arith.constant 0 : index
    %0 = vector.load %arg1[%c0, %c0_0] : memref<16x384xf32, #tpu.memory_space<vmem>>, vector<16x384xf32>
    %c0_1 = arith.constant 0 : index
    %c0_2 = arith.constant 0 : index
    %1 = vector.load %arg2[%c0_1, %c0_2] : memref<384x1536xf32, #tpu.memory_space<vmem>>, vector<384x1536xf32>
    %cst = arith.constant dense<0.000000e+00> : vector<16x1536xf32>
    %2 = tpu.matmul %0, %1, %cst {dimension_numbers = #tpu.dot_dimension_numbers<[1], [0], [0], [1], [0, 0, 1, 1], [], []>} : vector<16x384xf32>, vector<384x1536xf32>, vector<16x1536xf32> -> vector<16x1536xf32>
    %c0_3 = arith.constant 0 : index
    %c0_4 = arith.constant 0 : index
    %3 = vector.load %arg3[%c0_3, %c0_4] : memref<1x1536xf32, #tpu.memory_space<vmem>>, vector<1x1536xf32>
    %4 = vector.broadcast %3 : vector<1x1536xf32> to vector<16x1536xf32>
    %5 = arith.addf %2, %4 : vector<16x1536xf32>
    %cst_5 = arith.constant 0.000000e+00 : f32
    %6 = vector.broadcast %cst_5 : f32 to vector<16x1536xf32>
    %7 = arith.maximumf %5, %6 : vector<16x1536xf32>
    %c0_6 = arith.constant 0 : index
    %c0_7 = arith.constant 0 : index
    %8 = vector.load %arg4[%c0_6, %c0_7] : memref<1536x384xf32, #tpu.memory_space<vmem>>, vector<1536x384xf32>
    %cst_8 = arith.constant dense<0.000000e+00> : vector<16x384xf32>
    %9 = tpu.matmul %7, %8, %cst_8 {dimension_numbers = #tpu.dot_dimension_numbers<[1], [0], [0], [1], [0, 0, 1, 1], [], []>} : vector<16x1536xf32>, vector<1536x384xf32>, vector<16x384xf32> -> vector<16x384xf32>
    %c0_9 = arith.constant 0 : index
    %c0_10 = arith.constant 0 : index
    %10 = vector.load %arg5[%c0_9, %c0_10] : memref<1x384xf32, #tpu.memory_space<vmem>>, vector<1x384xf32>
    %11 = vector.broadcast %10 : vector<1x384xf32> to vector<16x384xf32>
    %12 = arith.addf %9, %11 : vector<16x384xf32>
    %c0_11 = arith.constant 0 : index
    %c0_12 = arith.constant 0 : index
    %13 = vector.load %arg6[%c0_11, %c0_12] : memref<16x384xf32, #tpu.memory_space<vmem>>, vector<16x384xf32>
    tpu.vector_store %arg6[%c0_11, %c0_12], %12 {strides = array<i32>} : memref<16x384xf32, #tpu.memory_space<vmem>>, vector<16x384xf32>,
    return
  }
  func.func @transform_0(%arg0: i32) -> (i32, i32) {
    %c0_i32 = arith.constant 0 : i32
    %c0_i32_0 = arith.constant 0 : i32
    return %arg0, %c0_i32 : i32, i32
  }
  func.func @transform_1(%arg0: i32) -> (i32, i32) {
    %c0_i32 = arith.constant 0 : i32
    %c0_i32_0 = arith.constant 0 : i32
    %c0_i32_1 = arith.constant 0 : i32
    return %c0_i32, %c0_i32_0 : i32, i32
  }
  func.func @transform_2(%arg0: i32) -> (i32, i32) {
    %c0_i32 = arith.constant 0 : i32
    %c0_i32_0 = arith.constant 0 : i32
    %c0_i32_1 = arith.constant 0 : i32
    return %c0_i32, %c0_i32_0 : i32, i32
  }
  func.func @transform_3(%arg0: i32) -> (i32, i32) {
    %c0_i32 = arith.constant 0 : i32
    %c0_i32_0 = arith.constant 0 : i32
    %c0_i32_1 = arith.constant 0 : i32
    return %c0_i32, %c0_i32_0 : i32, i32
  }
  func.func @transform_4(%arg0: i32) -> (i32, i32) {
    %c0_i32 = arith.constant 0 : i32
    %c0_i32_0 = arith.constant 0 : i32
    %c0_i32_1 = arith.constant 0 : i32
    return %c0_i32, %c0_i32_0 : i32, i32
  }
  func.func @transform_5(%arg0: i32) -> (i32, i32) {
    %c0_i32 = arith.constant 0 : i32
    %c0_i32_0 = arith.constant 0 : i32
    return %arg0, %c0_i32 : i32, i32
  }
}

</mosaic_0001>

<llo_original>
// kernel: tpu_custom_call.1
$region0: #{tpu_custom_call.1}
  #allocation0 [shape = 'u32[]', space=smem, size = 0x4, offset = 0x4, fixed_abs, tag = 'smem constant byte address 0x4 - core index']
  #allocation1 [shape = 'u32[72,128]{1,0:T(1,128)}', space=vmem, size = 0x9000, scoped, tag = 'internal scratch']
  %s0 = inlined_call_operand.hbm [shape: f32[16,384], index: 0, kind: input, shape index: {}]
  %s1 = inlined_call_operand.hbm [shape: f32[384,1536], index: 1, kind: input, shape index: {}]
  %s2 = inlined_call_operand.hbm [shape: f32[1,1536], index: 2, kind: input, shape index: {}]
  %s3 = inlined_call_operand.hbm [shape: f32[1536,384], index: 3, kind: input, shape index: {}]
  %s4 = inlined_call_operand.hbm [shape: f32[1,384], index: 4, kind: input, shape index: {}]
  %s5 = inlined_call_operand.hbm [shape: f32[16,384], index: 5, kind: output, shape index: {}]
  %s6 = sld [smem:[#allocation0]]
  $region50: #{tpu_custom_call.1} parent=0
    _
  %s8 = ssub.s32 1, %s6
  %s9 = scalar_select 0, %s8, %s6
  $region1: #{tpu_custom_call.1} parent=0
    #allocation2 [shape = 'u8[24576]{0}', space=vmem, size = 0x6000, scoped, tag = 'input window, operand 0, single buffered']
    #allocation3 [shape = 's32[1]{0}', space=sflag, size = 0x4, scoped, tag = 'scoped memory for tpu_custom_call.1']
    #allocation4 [shape = 's32[1]{0}', space=sflag, size = 0x4, scoped, tag = 'scoped memory for tpu_custom_call.1']
    #allocation5 [shape = 'u8[2359296]{0}', space=vmem, size = 0x240000, scoped, tag = 'input window, operand 1, single buffered']
    #allocation6 [shape = 's32[1]{0}', space=sflag, size = 0x4, scoped, tag = 'scoped memory for tpu_custom_call.1']
    #allocation7 [shape = 'u8[6144]{0}', space=vmem, size = 0x1800, scoped, tag = 'input window, operand 2, single buffered']
    #allocation8 [shape = 'u8[2359296]{0}', space=vmem, size = 0x240000, scoped, tag = 'input window, operand 3, single buffered']
    #allocation9 [shape = 's32[1]{0}', space=sflag, size = 0x4, scoped, tag = 'scoped memory for tpu_custom_call.1']
    #allocation10 [shape = 'u8[1536]{0}', space=vmem, size = 0x800, scoped, tag = 'input window, operand 4, single buffered']
    #allocation11 [shape = 'u8[24576]{0}', space=vmem, size = 0x6000, scoped, tag = 'output window, operand 0, single buffered']
    %10 = vsyncpa [#allocation3], 0
    %11 = vsyncpa [#allocation6], 0
    %12 = vsyncpa [#allocation9], 0
    %13 = vsyncpa [#allocation4], 0
    // Predicated region
    $region2: #{tpu_custom_call.1} parent=1 // pred_check
      _
    $region3: #{tpu_custom_call.1} parent=1 // pred_check_branch
      %15 = sbr.rel (0) target = $region5
    $region4: #{tpu_custom_call.1} parent=1 // pred_region
      %17 = vsyncadd [#allocation3], 0
      %s18 = sshll.u32 %s0, 4
      %s19 = int_to_ptr.hbm [resolvable:$true] %s18
      %s20 = sshll.u32 [#allocation2], 4
      %s21 = int_to_ptr.vmem [resolvable:$true] %s20
      %26 = dma.hbm_to_vmem [thread:$0]  %s19, 768, %s21, [#allocation3], 384, 384, 24
    $region5: #{tpu_custom_call.1} parent=1 // pred_fallthru
      _
    // Predicated region
    $region6: #{tpu_custom_call.1} parent=1 // pred_check
      _
    $region7: #{tpu_custom_call.1} parent=1 // pred_check_branch
      %28 = sbr.rel (0) target = $region9
    $region8: #{tpu_custom_call.1} parent=1 // pred_region
      %30 = vsyncadd [#allocation6], 0
      %s31 = sshll.u32 %s1, 4
      %s32 = int_to_ptr.hbm [resolvable:$true] %s31
      %s33 = sshll.u32 [#allocation5], 4
      %s34 = int_to_ptr.vmem [resolvable:$true] %s33
      %39 = dma.hbm_to_vmem [thread:$0]  %s32, 73728, %s34, [#allocation6], 1536, 1536, 96
    $region9: #{tpu_custom_call.1} parent=1 // pred_fallthru
      _
    // Predicated region
    $region10: #{tpu_custom_call.1} parent=1 // pred_check
      _
    $region11: #{tpu_custom_call.1} parent=1 // pred_check_branch
      %41 = sbr.rel (0) target = $region13
    $region12: #{tpu_custom_call.1} parent=1 // pred_region
      %43 = vsyncadd [#allocation6], 0
      %s45 = sshll.u32 %s2, 4
      %s46 = int_to_ptr.hbm [resolvable:$true] %s45
      %s47 = sshll.u32 [#allocation7], 4
      %s48 = int_to_ptr.vmem [resolvable:$true] %s47
      %50 = dma.hbm_to_vmem [thread:$0]  %s46, 192, %s48, [#allocation6]
    $region13: #{tpu_custom_call.1} parent=1 // pred_fallthru
      _
    // Predicated region
    $region14: #{tpu_custom_call.1} parent=1 // pred_check
      _
    $region15: #{tpu_custom_call.1} parent=1 // pred_check_branch
      %52 = sbr.rel (0) target = $region17
    $region16: #{tpu_custom_call.1} parent=1 // pred_region
      %54 = vsyncadd [#allocation9], 0
      %s55 = sshll.u32 %s3, 4
      %s56 = int_to_ptr.hbm [resolvable:$true] %s55
      %s57 = sshll.u32 [#allocation8], 4
      %s58 = int_to_ptr.vmem [resolvable:$true] %s57
      %63 = dma.hbm_to_vmem [thread:$0]  %s56, 73728, %s58, [#allocation9], 384, 384, 24
    $region17: #{tpu_custom_call.1} parent=1 // pred_fallthru
      _
    // Predicated region
    $region18: #{tpu_custom_call.1} parent=1 // pred_check
      _
    $region19: #{tpu_custom_call.1} parent=1 // pred_check_branch
      %65 = sbr.rel (0) target = $region21
    $region20: #{tpu_custom_call.1} parent=1 // pred_region
      %67 = vsyncadd [#allocation9], 0
      %s69 = sshll.u32 %s4, 4
      %s70 = int_to_ptr.hbm [resolvable:$true] %s69
      %s71 = sshll.u32 [#allocation10], 4
      %s72 = int_to_ptr.vmem [resolvable:$true] %s71
      %74 = dma.hbm_to_vmem [thread:$0]  %s70, 48, %s72, [#allocation9]
    $region21: #{tpu_custom_call.1} parent=1 // pred_fallthru
      _
    // Predicated region
    $region22: #{tpu_custom_call.1} parent=1 // pred_check
      _
    $region23: #{tpu_custom_call.1} parent=1 // pred_check_branch
      %76 = sbr.rel (0) target = $region25
    $region24: #{tpu_custom_call.1} parent=1 // pred_region
      %78 = dma.done [#allocation3], 768
    $region25: #{tpu_custom_call.1} parent=1 // pred_fallthru
      _
    // Predicated region
    $region26: #{tpu_custom_call.1} parent=1 // pred_check
      _
    $region27: #{tpu_custom_call.1} parent=1 // pred_check_branch
      %80 = sbr.rel (0) target = $region29
    $region28: #{tpu_custom_call.1} parent=1 // pred_region
      %82 = dma.done [#allocation6], 73728
    $region29: #{tpu_custom_call.1} parent=1 // pred_fallthru
      _
    // Predicated region
    $region30: #{tpu_custom_call.1} parent=1 // pred_check
      _
    $region31: #{tpu_custom_call.1} parent=1 // pred_check_branch
      %84 = sbr.rel (0) target = $region33
    $region32: #{tpu_custom_call.1} parent=1 // pred_region
      %86 = dma.done [#allocation6], 192
    $region33: #{tpu_custom_call.1} parent=1 // pred_fallthru
      _
    // Predicated region
    $region34: #{tpu_custom_call.1} parent=1 // pred_check
      _
    $region35: #{tpu_custom_call.1} parent=1 // pred_check_branch
      %88 = sbr.rel (0) target = $region37
    $region36: #{tpu_custom_call.1} parent=1 // pred_region
      %90 = dma.done [#allocation9], 73728
    $region37: #{tpu_custom_call.1} parent=1 // pred_fallthru
      _
    // Predicated region
    $region38: #{tpu_custom_call.1} parent=1 // pred_check
      _
    $region39: #{tpu_custom_call.1} parent=1 // pred_check_branch
      %92 = sbr.rel (0) target = $region41
    $region40: #{tpu_custom_call.1} parent=1 // pred_region
      %94 = dma.done [#allocation9], 48
    $region41: #{tpu_custom_call.1} parent=1 // pred_fallthru
      _
    %v95 = vld [vmem:[#allocation2] sm:$0xff]
    %v96 = vld [vmem:[#allocation2 + $0x8] sm:$0xff]
    %v97 = vld [vmem:[#allocation2 + $0x10] sm:$0xff]
    %v98 = vld [vmem:[#allocation2 + $0x18] sm:$0xff]
    %v99 = vld [vmem:[#allocation2 + $0x20] sm:$0xff]
    %v100 = vld [vmem:[#allocation2 + $0x28] sm:$0xff]
    %v101 = vld [vmem:[#allocation5] sm:$0xff]
    %v102 = vld [vmem:[#allocation5 + $0x8] sm:$0xff]
    %v103 = vld [vmem:[#allocation5 + $0x10] sm:$0xff]
    %v104 = vld [vmem:[#allocation5 + $0x18] sm:$0xff]
    %v105 = vld [vmem:[#allocation5 + $0x20] sm:$0xff]
    %v106 = vld [vmem:[#allocation5 + $0x28] sm:$0xff]
    %v107 = vld [vmem:[#allocation5 + $0x30] sm:$0xff]
    %v108 = vld [vmem:[#allocation5 + $0x38] sm:$0xff]
    %v109 = vld [vmem:[#allocation5 + $0x40] sm:$0xff]
    %v110 = vld [vmem:[#allocation5 + $0x48] sm:$0xff]
    %v111 = vld [vmem:[#allocation5 + $0x50] sm:$0xff]
    %v112 = vld [vmem:[#allocation5 + $0x58] sm:$0xff]
    %v113 = vld [vmem:[#allocation5 + $0x60] sm:$0xff]
    %v114 = vld [vmem:[#allocation5 + $0x68] sm:$0xff]
    %v115 = vld [vmem:[#allocation5 + $0x70] sm:$0xff]
    %v116 = vld [vmem:[#allocation5 + $0x78] sm:$0xff]
    %v117 = vld [vmem:[#allocation5 + $0x80] sm:$0xff]
    %v118 = vld [vmem:[#allocation5 + $0x88] sm:$0xff]
    %v119 = vld [vmem:[#allocation5 + $0x90] sm:$0xff]
    %v120 = vld [vmem:[#allocation5 + $0x98] sm:$0xff]
    %v121 = vld [vmem:[#allocation5 + $0xa0] sm:$0xff]
    %v122 = vld [vmem:[#allocation5 + $0xa8] sm:$0xff]
    %v123 = vld [vmem:[#allocation5 + $0xb0] sm:$0xff]
    %v124 = vld [vmem:[#allocation5 + $0xb8] sm:$0xff]
    %v125 = vld [vmem:[#allocation5 + $0xc0] sm:$0xff]
    %v126 = vld [vmem:[#allocation5 + $0xc8] sm:$0xff]
    %v127 = vld [vmem:[#allocation5 + $0xd0] sm:$0xff]
    %v128 = vld [vmem:[#allocation5 + $0xd8] sm:$0xff]
    %v129 = vld [vmem:[#allocation5 + $0xe0] sm:$0xff]
    %v130 = vld [vmem:[#allocation5 + $0xe8] sm:$0xff]
    %v131 = vld [vmem:[#allocation5 + $0xf0] sm:$0xff]
    %v132 = vld [vmem:[#allocation5 + $0xf8] sm:$0xff]
    %v133 = vld [vmem:[#allocation5 + $0x100] sm:$0xff]
    %v134 = vld [vmem:[#allocation5 + $0x108] sm:$0xff]
    %v135 = vld [vmem:[#allocation5 + $0x110] sm:$0xff]
    %v136 = vld [vmem:[#allocation5 + $0x118] sm:$0xff]
    %v137 = vld [vmem:[#allocation5 + $0x120] sm:$0xff]
    %v138 = vld [vmem:[#allocation5 + $0x128] sm:$0xff]
    %v139 = vld [vmem:[#allocation5 + $0x130] sm:$0xff]
    %v140 = vld [vmem:[#allocation5 + $0x138] sm:$0xff]
    %v141 = vld [vmem:[#allocation5 + $0x140] sm:$0xff]
    %v142 = vld [vmem:[#allocation5 + $0x148] sm:$0xff]
    %v143 = vld [vmem:[#allocation5 + $0x150] sm:$0xff]
    %v144 = vld [vmem:[#allocation5 + $0x158] sm:$0xff]
    %v145 = vld [vmem:[#allocation5 + $0x160] sm:$0xff]
    %v146 = vld [vmem:[#allocation5 + $0x168] sm:$0xff]
    %v147 = vld [vmem:[#allocation5 + $0x170] sm:$0xff]
    %v148 = vld [vmem:[#allocation5 + $0x178] sm:$0xff]
    %v149 = vld [vmem:[#allocation5 + $0x180] sm:$0xff]
    %v150 = vld [vmem:[#allocation5 + $0x188] sm:$0xff]
    %v151 = vld [vmem:[#allocation5 + $0x190] sm:$0xff]
    %v152 = vld [vmem:[#allocation5 + $0x198] sm:$0xff]
    %v153 = vld [vmem:[#allocation5 + $0x1a0] sm:$0xff]
    %v154 = vld [vmem:[#allocation5 + $0x1a8] sm:$0xff]
    %v155 = vld [vmem:[#allocation5 + $0x1b0] sm:$0xff]
    %v156 = vld [vmem:[#allocation5 + $0x1b8] sm:$0xff]
    %v157 = vld [vmem:[#allocation5 + $0x1c0] sm:$0xff]
    %v158 = vld [vmem:[#allocation5 + $0x1c8] sm:$0xff]
    %v159 = vld [vmem:[#allocation5 + $0x1d0] sm:$0xff]
    %v160 = vld [vmem:[#allocation5 + $0x1d8] sm:$0xff]
    %v161 = vld [vmem:[#allocation5 + $0x1e0] sm:$0xff]
    %v162 = vld [vmem:[#allocation5 + $0x1e8] sm:$0xff]
    %v163 = vld [vmem:[#allocation5 + $0x1f0] sm:$0xff]
    %v164 = vld [vmem:[#allocation5 + $0x1f8] sm:$0xff]
    %v165 = vld [vmem:[#allocation5 + $0x200] sm:$0xff]
    %v166 = vld [vmem:[#allocation5 + $0x208] sm:$0xff]
    %v167 = vld [vmem:[#allocation5 + $0x210] sm:$0xff]
    %v168 = vld [vmem:[#allocation5 + $0x218] sm:$0xff]
    %v169 = vld [vmem:[#allocation5 + $0x220] sm:$0xff]
    %v170 = vld [vmem:[#allocation5 + $0x228] sm:$0xff]
    %v171 = vld [vmem:[#allocation5 + $0x230] sm:$0xff]
    %v172 = vld [vmem:[#allocation5 + $0x238] sm:$0xff]
    %v173 = vld [vmem:[#allocation5 + $0x240] sm:$0xff]
    %v174 = vld [vmem:[#allocation5 + $0x248] sm:$0xff]
    %v175 = vld [vmem:[#allocation5 + $0x250] sm:$0xff]
    %v176 = vld [vmem:[#allocation5 + $0x258] sm:$0xff]
    %v177 = vld [vmem:[#allocation5 + $0x260] sm:$0xff]
    %v178 = vld [vmem:[#allocation5 + $0x268] sm:$0xff]
    %v179 = vld [vmem:[#allocation5 + $0x270] sm:$0xff]
    %v180 = vld [vmem:[#allocation5 + $0x278] sm:$0xff]
    %v181 = vld [vmem:[#allocation5 + $0x280] sm:$0xff]
    %v182 = vld [vmem:[#allocation5 + $0x288] sm:$0xff]
    %v183 = vld [vmem:[#allocation5 + $0x290] sm:$0xff]
    %v184 = vld [vmem:[#allocation5 + $0x298] sm:$0xff]
    %v185 = vld [vmem:[#allocation5 + $0x2a0] sm:$0xff]
    %v186 = vld [vmem:[#allocation5 + $0x2a8] sm:$0xff]
    %v187 = vld [vmem:[#allocation5 + $0x2b0] sm:$0xff]
    %v188 = vld [vmem:[#allocation5 + $0x2b8] sm:$0xff]
    %v189 = vld [vmem:[#allocation5 + $0x2c0] sm:$0xff]
    %v190 = vld [vmem:[#allocation5 + $0x2c8] sm:$0xff]
    %v191 = vld [vmem:[#allocation5 + $0x2d0] sm:$0xff]
    %v192 = vld [vmem:[#allocation5 + $0x2d8] sm:$0xff]
    %v193 = vld [vmem:[#allocation5 + $0x2e0] sm:$0xff]
    %v194 = vld [vmem:[#allocation5 + $0x2e8] sm:$0xff]
    %v195 = vld [vmem:[#allocation5 + $0x2f0] sm:$0xff]
    %v196 = vld [vmem:[#allocation5 + $0x2f8] sm:$0xff]
    %v197 = vld [vmem:[#allocation5 + $0x300] sm:$0xff]
    %v198 = vld [vmem:[#allocation5 + $0x308] sm:$0xff]
    %v199 = vld [vmem:[#allocation5 + $0x310] sm:$0xff]
    %v200 = vld [vmem:[#allocation5 + $0x318] sm:$0xff]
    %v201 = vld [vmem:[#allocation5 + $0x320] sm:$0xff]
    %v202 = vld [vmem:[#allocation5 + $0x328] sm:$0xff]
    %v203 = vld [vmem:[#allocation5 + $0x330] sm:$0xff]
    %v204 = vld [vmem:[#allocation5 + $0x338] sm:$0xff]
    %v205 = vld [vmem:[#allocation5 + $0x340] sm:$0xff]
    %v206 = vld [vmem:[#allocation5 + $0x348] sm:$0xff]
    %v207 = vld [vmem:[#allocation5 + $0x350] sm:$0xff]
    %v208 = vld [vmem:[#allocation5 + $0x358] sm:$0xff]
    %v209 = vld [vmem:[#allocation5 + $0x360] sm:$0xff]
    %v210 = vld [vmem:[#allocation5 + $0x368] sm:$0xff]
    %v211 = vld [vmem:[#allocation5 + $0x370] sm:$0xff]
    %v212 = vld [vmem:[#allocation5 + $0x378] sm:$0xff]
    %v213 = vld [vmem:[#allocation5 + $0x380] sm:$0xff]
    %v214 = vld [vmem:[#allocation5 + $0x388] sm:$0xff]
    %v215 = vld [vmem:[#allocation5 + $0x390] sm:$0xff]
    %v216 = vld [vmem:[#allocation5 + $0x398] sm:$0xff]
    %v217 = vld [vmem:[#allocation5 + $0x3a0] sm:$0xff]
    %v218 = vld [vmem:[#allocation5 + $0x3a8] sm:$0xff]
    %v219 = vld [vmem:[#allocation5 + $0x3b0] sm:$0xff]
    %v220 = vld [vmem:[#allocation5 + $0x3b8] sm:$0xff]
    %v221 = vld [vmem:[#allocation5 + $0x3c0] sm:$0xff]
    %v222 = vld [vmem:[#allocation5 + $0x3c8] sm:$0xff]
    %v223 = vld [vmem:[#allocation5 + $0x3d0] sm:$0xff]
    %v224 = vld [vmem:[#allocation5 + $0x3d8] sm:$0xff]
    %v225 = vld [vmem:[#allocation5 + $0x3e0] sm:$0xff]
    %v226 = vld [vmem:[#allocation5 + $0x3e8] sm:$0xff]
    %v227 = vld [vmem:[#allocation5 + $0x3f0] sm:$0xff]
    %v228 = vld [vmem:[#allocation5 + $0x3f8] sm:$0xff]
    %v229 = vld [vmem:[#allocation5 + $0x400] sm:$0xff]
    %v230 = vld [vmem:[#allocation5 + $0x408] sm:$0xff]
    %v231 = vld [vmem:[#allocation5 + $0x410] sm:$0xff]
    %v232 = vld [vmem:[#allocation5 + $0x418] sm:$0xff]
    %v233 = vld [vmem:[#allocation5 + $0x420] sm:$0xff]
    %v234 = vld [vmem:[#allocation5 + $0x428] sm:$0xff]
    %v235 = vld [vmem:[#allocation5 + $0x430] sm:$0xff]
    %v236 = vld [vmem:[#allocation5 + $0x438] sm:$0xff]
    %v237 = vld [vmem:[#allocation5 + $0x440] sm:$0xff]
    %v238 = vld [vmem:[#allocation5 + $0x448] sm:$0xff]
    %v239 = vld [vmem:[#allocation5 + $0x450] sm:$0xff]
    %v240 = vld [vmem:[#allocation5 + $0x458] sm:$0xff]
    %v241 = vld [vmem:[#allocation5 + $0x460] sm:$0xff]
    %v242 = vld [vmem:[#allocation5 + $0x468] sm:$0xff]
    %v243 = vld [vmem:[#allocation5 + $0x470] sm:$0xff]
    %v244 = vld [vmem:[#allocation5 + $0x478] sm:$0xff]
    %v245 = vld [vmem:[#allocation5 + $0x480] sm:$0xff]
    %v246 = vld [vmem:[#allocation5 + $0x488] sm:$0xff]
    %v247 = vld [vmem:[#allocation5 + $0x490] sm:$0xff]
    %v248 = vld [vmem:[#allocation5 + $0x498] sm:$0xff]
    %v249 = vld [vmem:[#allocation5 + $0x4a0] sm:$0xff]
    %v250 = vld [vmem:[#allocation5 + $0x4a8] sm:$0xff]
    %v251 = vld [vmem:[#allocation5 + $0x4b0] sm:$0xff]
    %v252 = vld [vmem:[#allocation5 + $0x4b8] sm:$0xff]
    %v253 = vld [vmem:[#allocation5 + $0x4c0] sm:$0xff]
    %v254 = vld [vmem:[#allocation5 + $0x4c8] sm:$0xff]
    %v255 = vld [vmem:[#allocation5 + $0x4d0] sm:$0xff]
    %v256 = vld [vmem:[#allocation5 + $0x4d8] sm:$0xff]
    %v257 = vld [vmem:[#allocation5 + $0x4e0] sm:$0xff]
    %v258 = vld [vmem:[#allocation5 + $0x4e8] sm:$0xff]
    %v259 = vld [vmem:[#allocation5 + $0x4f0] sm:$0xff]
    %v260 = vld [vmem:[#allocation5 + $0x4f8] sm:$0xff]
    %v261 = vld [vmem:[#allocation5 + $0x500] sm:$0xff]
    %v262 = vld [vmem:[#allocation5 + $0x508] sm:$0xff]
    %v263 = vld [vmem:[#allocation5 + $0x510] sm:$0xff]
    %v264 = vld [vmem:[#allocation5 + $0x518] sm:$0xff]
    %v265 = vld [vmem:[#allocation5 + $0x520] sm:$0xff]
    %v266 = vld [vmem:[#allocation5 + $0x528] sm:$0xff]
    %v267 = vld [vmem:[#allocation5 + $0x530] sm:$0xff]
    %v268 = vld [vmem:[#allocation5 + $0x538] sm:$0xff]
    %v269 = vld [vmem:[#allocation5 + $0x540] sm:$0xff]
    %v270 = vld [vmem:[#allocation5 + $0x548] sm:$0xff]
    %v271 = vld [vmem:[#allocation5 + $0x550] sm:$0xff]
    %v272 = vld [vmem:[#allocation5 + $0x558] sm:$0xff]
    %v273 = vld [vmem:[#allocation5 + $0x560] sm:$0xff]
    %v274 = vld [vmem:[#allocation5 + $0x568] sm:$0xff]
    %v275 = vld [vmem:[#allocation5 + $0x570] sm:$0xff]
    %v276 = vld [vmem:[#allocation5 + $0x578] sm:$0xff]
    %v277 = vld [vmem:[#allocation5 + $0x580] sm:$0xff]
    %v278 = vld [vmem:[#allocation5 + $0x588] sm:$0xff]
    %v279 = vld [vmem:[#allocation5 + $0x590] sm:$0xff]
    %v280 = vld [vmem:[#allocation5 + $0x598] sm:$0xff]
    %v281 = vld [vmem:[#allocation5 + $0x5a0] sm:$0xff]
    %v282 = vld [vmem:[#allocation5 + $0x5a8] sm:$0xff]
    %v283 = vld [vmem:[#allocation5 + $0x5b0] sm:$0xff]
    %v284 = vld [vmem:[#allocation5 + $0x5b8] sm:$0xff]
    %v285 = vld [vmem:[#allocation5 + $0x5c0] sm:$0xff]
    %v286 = vld [vmem:[#allocation5 + $0x5c8] sm:$0xff]
    %v287 = vld [vmem:[#allocation5 + $0x5d0] sm:$0xff]
    %v288 = vld [vmem:[#allocation5 + $0x5d8] sm:$0xff]
    %v289 = vld [vmem:[#allocation5 + $0x5e0] sm:$0xff]
    %v290 = vld [vmem:[#allocation5 + $0x5e8] sm:$0xff]
    %v291 = vld [vmem:[#allocation5 + $0x5f0] sm:$0xff]
    %v292 = vld [vmem:[#allocation5 + $0x5f8] sm:$0xff]
    %v293 = vld [vmem:[#allocation5 + $0x600] sm:$0xff]
    %v294 = vld [vmem:[#allocation5 + $0x608] sm:$0xff]
    %v295 = vld [vmem:[#allocation5 + $0x610] sm:$0xff]
    %v296 = vld [vmem:[#allocation5 + $0x618] sm:$0xff]
    %v297 = vld [vmem:[#allocation5 + $0x620] sm:$0xff]
    %v298 = vld [vmem:[#allocation5 + $0x628] sm:$0xff]
    %v299 = vld [vmem:[#allocation5 + $0x630] sm:$0xff]
    %v300 = vld [vmem:[#allocation5 + $0x638] sm:$0xff]
    %v301 = vld [vmem:[#allocation5 + $0x640] sm:$0xff]
    %v302 = vld [vmem:[#allocation5 + $0x648] sm:$0xff]
    %v303 = vld [vmem:[#allocation5 + $0x650] sm:$0xff]
    %v304 = vld [vmem:[#allocation5 + $0x658] sm:$0xff]
    %v305 = vld [vmem:[#allocation5 + $0x660] sm:$0xff]
    %v306 = vld [vmem:[#allocation5 + $0x668] sm:$0xff]
    %v307 = vld [vmem:[#allocation5 + $0x670] sm:$0xff]
    %v308 = vld [vmem:[#allocation5 + $0x678] sm:$0xff]
    %v309 = vld [vmem:[#allocation5 + $0x680] sm:$0xff]
    %v310 = vld [vmem:[#allocation5 + $0x688] sm:$0xff]
    %v311 = vld [vmem:[#allocation5 + $0x690] sm:$0xff]
    %v312 = vld [vmem:[#allocation5 + $0x698] sm:$0xff]
    %v313 = vld [vmem:[#allocation5 + $0x6a0] sm:$0xff]
    %v314 = vld [vmem:[#allocation5 + $0x6a8] sm:$0xff]
    %v315 = vld [vmem:[#allocation5 + $0x6b0] sm:$0xff]
    %v316 = vld [vmem:[#allocation5 + $0x6b8] sm:$0xff]
    %v317 = vld [vmem:[#allocation5 + $0x6c0] sm:$0xff]
    %v318 = vld [vmem:[#allocation5 + $0x6c8] sm:$0xff]
    %v319 = vld [vmem:[#allocation5 + $0x6d0] sm:$0xff]
    %v320 = vld [vmem:[#allocation5 + $0x6d8] sm:$0xff]
    %v321 = vld [vmem:[#allocation5 + $0x6e0] sm:$0xff]
    %v322 = vld [vmem:[#allocation5 + $0x6e8] sm:$0xff]
    %v323 = vld [vmem:[#allocation5 + $0x6f0] sm:$0xff]
    %v324 = vld [vmem:[#allocation5 + $0x6f8] sm:$0xff]
    %v325 = vld [vmem:[#allocation5 + $0x700] sm:$0xff]
    %v326 = vld [vmem:[#allocation5 + $0x708] sm:$0xff]
    %v327 = vld [vmem:[#allocation5 + $0x710] sm:$0xff]
    %v328 = vld [vmem:[#allocation5 + $0x718] sm:$0xff]
    %v329 = vld [vmem:[#allocation5 + $0x720] sm:$0xff]
    %v330 = vld [vmem:[#allocation5 + $0x728] sm:$0xff]
    %v331 = vld [vmem:[#allocation5 + $0x730] sm:$0xff]
    %v332 = vld [vmem:[#allocation5 + $0x738] sm:$0xff]
    %v333 = vld [vmem:[#allocation5 + $0x740] sm:$0xff]
    %v334 = vld [vmem:[#allocation5 + $0x748] sm:$0xff]
    %v335 = vld [vmem:[#allocation5 + $0x750] sm:$0xff]
    %v336 = vld [vmem:[#allocation5 + $0x758] sm:$0xff]
    %v337 = vld [vmem:[#allocation5 + $0x760] sm:$0xff]
    %v338 = vld [vmem:[#allocation5 + $0x768] sm:$0xff]
    %v339 = vld [vmem:[#allocation5 + $0x770] sm:$0xff]
    %v340 = vld [vmem:[#allocation5 + $0x778] sm:$0xff]
    %v341 = vld [vmem:[#allocation5 + $0x780] sm:$0xff]
    %v342 = vld [vmem:[#allocation5 + $0x788] sm:$0xff]
    %v343 = vld [vmem:[#allocation5 + $0x790] sm:$0xff]
    %v344 = vld [vmem:[#allocation5 + $0x798] sm:$0xff]
    %v345 = vld [vmem:[#allocation5 + $0x7a0] sm:$0xff]
    %v346 = vld [vmem:[#allocation5 + $0x7a8] sm:$0xff]
    %v347 = vld [vmem:[#allocation5 + $0x7b0] sm:$0xff]
    %v348 = vld [vmem:[#allocation5 + $0x7b8] sm:$0xff]
    %v349 = vld [vmem:[#allocation5 + $0x7c0] sm:$0xff]
    %v350 = vld [vmem:[#allocation5 + $0x7c8] sm:$0xff]
    %v351 = vld [vmem:[#allocation5 + $0x7d0] sm:$0xff]
    %v352 = vld [vmem:[#allocation5 + $0x7d8] sm:$0xff]
    %v353 = vld [vmem:[#allocation5 + $0x7e0] sm:$0xff]
    %v354 = vld [vmem:[#allocation5 + $0x7e8] sm:$0xff]
    %v355 = vld [vmem:[#allocation5 + $0x7f0] sm:$0xff]
    %v356 = vld [vmem:[#allocation5 + $0x7f8] sm:$0xff]
    %v357 = vld [vmem:[#allocation5 + $0x800] sm:$0xff]
    %v358 = vld [vmem:[#allocation5 + $0x808] sm:$0xff]
    %v359 = vld [vmem:[#allocation5 + $0x810] sm:$0xff]
    %v360 = vld [vmem:[#allocation5 + $0x818] sm:$0xff]
    %v361 = vld [vmem:[#allocation5 + $0x820] sm:$0xff]
    %v362 = vld [vmem:[#allocation5 + $0x828] sm:$0xff]
    %v363 = vld [vmem:[#allocation5 + $0x830] sm:$0xff]
    %v364 = vld [vmem:[#allocation5 + $0x838] sm:$0xff]
    %v365 = vld [vmem:[#allocation5 + $0x840] sm:$0xff]
    %v366 = vld [vmem:[#allocation5 + $0x848] sm:$0xff]
    %v367 = vld [vmem:[#allocation5 + $0x850] sm:$0xff]
    %v368 = vld [vmem:[#allocation5 + $0x858] sm:$0xff]
    %v369 = vld [vmem:[#allocation5 + $0x860] sm:$0xff]
    %v370 = vld [vmem:[#allocation5 + $0x868] sm:$0xff]
    %v371 = vld [vmem:[#allocation5 + $0x870] sm:$0xff]
    %v372 = vld [vmem:[#allocation5 + $0x878] sm:$0xff]
    %v373 = vld [vmem:[#allocation5 + $0x880] sm:$0xff]
    %v374 = vld [vmem:[#allocation5 + $0x888] sm:$0xff]
    %v375 = vld [vmem:[#allocation5 + $0x890] sm:$0xff]
    %v376 = vld [vmem:[#allocation5 + $0x898] sm:$0xff]
    %v377 = vld [vmem:[#allocation5 + $0x8a0] sm:$0xff]
    %v378 = vld [vmem:[#allocation5 + $0x8a8] sm:$0xff]
    %v379 = vld [vmem:[#allocation5 + $0x8b0] sm:$0xff]
    %v380 = vld [vmem:[#allocation5 + $0x8b8] sm:$0xff]
    %v381 = vld [vmem:[#allocation5 + $0x8c0] sm:$0xff]
    %v382 = vld [vmem:[#allocation5 + $0x8c8] sm:$0xff]
    %v383 = vld [vmem:[#allocation5 + $0x8d0] sm:$0xff]
    %v384 = vld [vmem:[#allocation5 + $0x8d8] sm:$0xff]
    %v385 = vld [vmem:[#allocation5 + $0x8e0] sm:$0xff]
    %v386 = vld [vmem:[#allocation5 + $0x8e8] sm:$0xff]
    %v387 = vld [vmem:[#allocation5 + $0x8f0] sm:$0xff]
    %v388 = vld [vmem:[#allocation5 + $0x8f8] sm:$0xff]
    %v389 = vld [vmem:[#allocation5 + $0x900] sm:$0xff]
    %v390 = vld [vmem:[#allocation5 + $0x908] sm:$0xff]
    %v391 = vld [vmem:[#allocation5 + $0x910] sm:$0xff]
    %v392 = vld [vmem:[#allocation5 + $0x918] sm:$0xff]
    %v393 = vld [vmem:[#allocation5 + $0x920] sm:$0xff]
    %v394 = vld [vmem:[#allocation5 + $0x928] sm:$0xff]
    %v395 = vld [vmem:[#allocation5 + $0x930] sm:$0xff]
    %v396 = vld [vmem:[#allocation5 + $0x938] sm:$0xff]
    %v397 = vld [vmem:[#allocation5 + $0x940] sm:$0xff]
    %v398 = vld [vmem:[#allocation5 + $0x948] sm:$0xff]
    %v399 = vld [vmem:[#allocation5 + $0x950] sm:$0xff]
    %v400 = vld [vmem:[#allocation5 + $0x958] sm:$0xff]
    %v401 = vld [vmem:[#allocation5 + $0x960] sm:$0xff]
    %v402 = vld [vmem:[#allocation5 + $0x968] sm:$0xff]
    %v403 = vld [vmem:[#allocation5 + $0x970] sm:$0xff]
    %v404 = vld [vmem:[#allocation5 + $0x978] sm:$0xff]
    %v405 = vld [vmem:[#allocation5 + $0x980] sm:$0xff]
    %v406 = vld [vmem:[#allocation5 + $0x988] sm:$0xff]
    %v407 = vld [vmem:[#allocation5 + $0x990] sm:$0xff]
    %v408 = vld [vmem:[#allocation5 + $0x998] sm:$0xff]
    %v409 = vld [vmem:[#allocation5 + $0x9a0] sm:$0xff]
    %v410 = vld [vmem:[#allocation5 + $0x9a8] sm:$0xff]
    %v411 = vld [vmem:[#allocation5 + $0x9b0] sm:$0xff]
    %v412 = vld [vmem:[#allocation5 + $0x9b8] sm:$0xff]
    %v413 = vld [vmem:[#allocation5 + $0x9c0] sm:$0xff]
    %v414 = vld [vmem:[#allocation5 + $0x9c8] sm:$0xff]
    %v415 = vld [vmem:[#allocation5 + $0x9d0] sm:$0xff]
    %v416 = vld [vmem:[#allocation5 + $0x9d8] sm:$0xff]
    %v417 = vld [vmem:[#allocation5 + $0x9e0] sm:$0xff]
    %v418 = vld [vmem:[#allocation5 + $0x9e8] sm:$0xff]
    %v419 = vld [vmem:[#allocation5 + $0x9f0] sm:$0xff]
    %v420 = vld [vmem:[#allocation5 + $0x9f8] sm:$0xff]
    %v421 = vld [vmem:[#allocation5 + $0xa00] sm:$0xff]
    %v422 = vld [vmem:[#allocation5 + $0xa08] sm:$0xff]
    %v423 = vld [vmem:[#allocation5 + $0xa10] sm:$0xff]
    %v424 = vld [vmem:[#allocation5 + $0xa18] sm:$0xff]
    %v425 = vld [vmem:[#allocation5 + $0xa20] sm:$0xff]
    %v426 = vld [vmem:[#allocation5 + $0xa28] sm:$0xff]
    %v427 = vld [vmem:[#allocation5 + $0xa30] sm:$0xff]
    %v428 = vld [vmem:[#allocation5 + $0xa38] sm:$0xff]
    %v429 = vld [vmem:[#allocation5 + $0xa40] sm:$0xff]
    %v430 = vld [vmem:[#allocation5 + $0xa48] sm:$0xff]
    %v431 = vld [vmem:[#allocation5 + $0xa50] sm:$0xff]
    %v432 = vld [vmem:[#allocation5 + $0xa58] sm:$0xff]
    %v433 = vld [vmem:[#allocation5 + $0xa60] sm:$0xff]
    %v434 = vld [vmem:[#allocation5 + $0xa68] sm:$0xff]
    %v435 = vld [vmem:[#allocation5 + $0xa70] sm:$0xff]
    %v436 = vld [vmem:[#allocation5 + $0xa78] sm:$0xff]
    %v437 = vld [vmem:[#allocation5 + $0xa80] sm:$0xff]
    %v438 = vld [vmem:[#allocation5 + $0xa88] sm:$0xff]
    %v439 = vld [vmem:[#allocation5 + $0xa90] sm:$0xff]
    %v440 = vld [vmem:[#allocation5 + $0xa98] sm:$0xff]
    %v441 = vld [vmem:[#allocation5 + $0xaa0] sm:$0xff]
    %v442 = vld [vmem:[#allocation5 + $0xaa8] sm:$0xff]
    %v443 = vld [vmem:[#allocation5 + $0xab0] sm:$0xff]
    %v444 = vld [vmem:[#allocation5 + $0xab8] sm:$0xff]
    %v445 = vld [vmem:[#allocation5 + $0xac0] sm:$0xff]
    %v446 = vld [vmem:[#allocation5 + $0xac8] sm:$0xff]
    %v447 = vld [vmem:[#allocation5 + $0xad0] sm:$0xff]
    %v448 = vld [vmem:[#allocation5 + $0xad8] sm:$0xff]
    %v449 = vld [vmem:[#allocation5 + $0xae0] sm:$0xff]
    %v450 = vld [vmem:[#allocation5 + $0xae8] sm:$0xff]
    %v451 = vld [vmem:[#allocation5 + $0xaf0] sm:$0xff]
    %v452 = vld [vmem:[#allocation5 + $0xaf8] sm:$0xff]
    %v453 = vld [vmem:[#allocation5 + $0xb00] sm:$0xff]
    %v454 = vld [vmem:[#allocation5 + $0xb08] sm:$0xff]
    %v455 = vld [vmem:[#allocation5 + $0xb10] sm:$0xff]
    %v456 = vld [vmem:[#allocation5 + $0xb18] sm:$0xff]
    %v457 = vld [vmem:[#allocation5 + $0xb20] sm:$0xff]
    %v458 = vld [vmem:[#allocation5 + $0xb28] sm:$0xff]
    %v459 = vld [vmem:[#allocation5 + $0xb30] sm:$0xff]
    %v460 = vld [vmem:[#allocation5 + $0xb38] sm:$0xff]
    %v461 = vld [vmem:[#allocation5 + $0xb40] sm:$0xff]
    %v462 = vld [vmem:[#allocation5 + $0xb48] sm:$0xff]
    %v463 = vld [vmem:[#allocation5 + $0xb50] sm:$0xff]
    %v464 = vld [vmem:[#allocation5 + $0xb58] sm:$0xff]
    %v465 = vld [vmem:[#allocation5 + $0xb60] sm:$0xff]
    %v466 = vld [vmem:[#allocation5 + $0xb68] sm:$0xff]
    %v467 = vld [vmem:[#allocation5 + $0xb70] sm:$0xff]
    %v468 = vld [vmem:[#allocation5 + $0xb78] sm:$0xff]
    %v469 = vld [vmem:[#allocation5 + $0xb80] sm:$0xff]
    %v470 = vld [vmem:[#allocation5 + $0xb88] sm:$0xff]
    %v471 = vld [vmem:[#allocation5 + $0xb90] sm:$0xff]
    %v472 = vld [vmem:[#allocation5 + $0xb98] sm:$0xff]
    %v473 = vld [vmem:[#allocation5 + $0xba0] sm:$0xff]
    %v474 = vld [vmem:[#allocation5 + $0xba8] sm:$0xff]
    %v475 = vld [vmem:[#allocation5 + $0xbb0] sm:$0xff]
    %v476 = vld [vmem:[#allocation5 + $0xbb8] sm:$0xff]
    %v477 = vld [vmem:[#allocation5 + $0xbc0] sm:$0xff]
    %v478 = vld [vmem:[#allocation5 + $0xbc8] sm:$0xff]
    %v479 = vld [vmem:[#allocation5 + $0xbd0] sm:$0xff]
    %v480 = vld [vmem:[#allocation5 + $0xbd8] sm:$0xff]
    %v481 = vld [vmem:[#allocation5 + $0xbe0] sm:$0xff]
    %v482 = vld [vmem:[#allocation5 + $0xbe8] sm:$0xff]
    %v483 = vld [vmem:[#allocation5 + $0xbf0] sm:$0xff]
    %v484 = vld [vmem:[#allocation5 + $0xbf8] sm:$0xff]
    %v485 = vld [vmem:[#allocation5 + $0xc00] sm:$0xff]
    %v486 = vld [vmem:[#allocation5 + $0xc08] sm:$0xff]
    %v487 = vld [vmem:[#allocation5 + $0xc10] sm:$0xff]
    %v488 = vld [vmem:[#allocation5 + $0xc18] sm:$0xff]
    %v489 = vld [vmem:[#allocation5 + $0xc20] sm:$0xff]
    %v490 = vld [vmem:[#allocation5 + $0xc28] sm:$0xff]
    %v491 = vld [vmem:[#allocation5 + $0xc30] sm:$0xff]
    %v492 = vld [vmem:[#allocation5 + $0xc38] sm:$0xff]
    %v493 = vld [vmem:[#allocation5 + $0xc40] sm:$0xff]
    %v494 = vld [vmem:[#allocation5 + $0xc48] sm:$0xff]
    %v495 = vld [vmem:[#allocation5 + $0xc50] sm:$0xff]
    %v496 = vld [vmem:[#allocation5 + $0xc58] sm:$0xff]
    %v497 = vld [vmem:[#allocation5 + $0xc60] sm:$0xff]
    %v498 = vld [vmem:[#allocation5 + $0xc68] sm:$0xff]
    %v499 = vld [vmem:[#allocation5 + $0xc70] sm:$0xff]
    %v500 = vld [vmem:[#allocation5 + $0xc78] sm:$0xff]
    %v501 = vld [vmem:[#allocation5 + $0xc80] sm:$0xff]
    %v502 = vld [vmem:[#allocation5 + $0xc88] sm:$0xff]
    %v503 = vld [vmem:[#allocation5 + $0xc90] sm:$0xff]
    %v504 = vld [vmem:[#allocation5 + $0xc98] sm:$0xff]
    %v505 = vld [vmem:[#allocation5 + $0xca0] sm:$0xff]
    %v506 = vld [vmem:[#allocation5 + $0xca8] sm:$0xff]
    %v507 = vld [vmem:[#allocation5 + $0xcb0] sm:$0xff]
    %v508 = vld [vmem:[#allocation5 + $0xcb8] sm:$0xff]
    %v509 = vld [vmem:[#allocation5 + $0xcc0] sm:$0xff]
    %v510 = vld [vmem:[#allocation5 + $0xcc8] sm:$0xff]
    %v511 = vld [vmem:[#allocation5 + $0xcd0] sm:$0xff]
    %v512 = vld [vmem:[#allocation5 + $0xcd8] sm:$0xff]
    %v513 = vld [vmem:[#allocation5 + $0xce0] sm:$0xff]
    %v514 = vld [vmem:[#allocation5 + $0xce8] sm:$0xff]
    %v515 = vld [vmem:[#allocation5 + $0xcf0] sm:$0xff]
    %v516 = vld [vmem:[#allocation5 + $0xcf8] sm:$0xff]
    %v517 = vld [vmem:[#allocation5 + $0xd00] sm:$0xff]
    %v518 = vld [vmem:[#allocation5 + $0xd08] sm:$0xff]
    %v519 = vld [vmem:[#allocation5 + $0xd10] sm:$0xff]
    %v520 = vld [vmem:[#allocation5 + $0xd18] sm:$0xff]
    %v521 = vld [vmem:[#allocation5 + $0xd20] sm:$0xff]
    %v522 = vld [vmem:[#allocation5 + $0xd28] sm:$0xff]
    %v523 = vld [vmem:[#allocation5 + $0xd30] sm:$0xff]
    %v524 = vld [vmem:[#allocation5 + $0xd38] sm:$0xff]
    %v525 = vld [vmem:[#allocation5 + $0xd40] sm:$0xff]
    %v526 = vld [vmem:[#allocation5 + $0xd48] sm:$0xff]
    %v527 = vld [vmem:[#allocation5 + $0xd50] sm:$0xff]
    %v528 = vld [vmem:[#allocation5 + $0xd58] sm:$0xff]
    %v529 = vld [vmem:[#allocation5 + $0xd60] sm:$0xff]
    %v530 = vld [vmem:[#allocation5 + $0xd68] sm:$0xff]
    %v531 = vld [vmem:[#allocation5 + $0xd70] sm:$0xff]
    %v532 = vld [vmem:[#allocation5 + $0xd78] sm:$0xff]
    %v533 = vld [vmem:[#allocation5 + $0xd80] sm:$0xff]
    %v534 = vld [vmem:[#allocation5 + $0xd88] sm:$0xff]
    %v535 = vld [vmem:[#allocation5 + $0xd90] sm:$0xff]
    %v536 = vld [vmem:[#allocation5 + $0xd98] sm:$0xff]
    %v537 = vld [vmem:[#allocation5 + $0xda0] sm:$0xff]
    %v538 = vld [vmem:[#allocation5 + $0xda8] sm:$0xff]
    %v539 = vld [vmem:[#allocation5 + $0xdb0] sm:$0xff]
    %v540 = vld [vmem:[#allocation5 + $0xdb8] sm:$0xff]
    %v541 = vld [vmem:[#allocation5 + $0xdc0] sm:$0xff]
    %v542 = vld [vmem:[#allocation5 + $0xdc8] sm:$0xff]
    %v543 = vld [vmem:[#allocation5 + $0xdd0] sm:$0xff]
    %v544 = vld [vmem:[#allocation5 + $0xdd8] sm:$0xff]
    %v545 = vld [vmem:[#allocation5 + $0xde0] sm:$0xff]
    %v546 = vld [vmem:[#allocation5 + $0xde8] sm:$0xff]
    %v547 = vld [vmem:[#allocation5 + $0xdf0] sm:$0xff]
    %v548 = vld [vmem:[#allocation5 + $0xdf8] sm:$0xff]
    %v549 = vld [vmem:[#allocation5 + $0xe00] sm:$0xff]
    %v550 = vld [vmem:[#allocation5 + $0xe08] sm:$0xff]
    %v551 = vld [vmem:[#allocation5 + $0xe10] sm:$0xff]
    %v552 = vld [vmem:[#allocation5 + $0xe18] sm:$0xff]
    %v553 = vld [vmem:[#allocation5 + $0xe20] sm:$0xff]
    %v554 = vld [vmem:[#allocation5 + $0xe28] sm:$0xff]
    %v555 = vld [vmem:[#allocation5 + $0xe30] sm:$0xff]
    %v556 = vld [vmem:[#allocation5 + $0xe38] sm:$0xff]
    %v557 = vld [vmem:[#allocation5 + $0xe40] sm:$0xff]
    %v558 = vld [vmem:[#allocation5 + $0xe48] sm:$0xff]
    %v559 = vld [vmem:[#allocation5 + $0xe50] sm:$0xff]
    %v560 = vld [vmem:[#allocation5 + $0xe58] sm:$0xff]
    %v561 = vld [vmem:[#allocation5 + $0xe60] sm:$0xff]
    %v562 = vld [vmem:[#allocation5 + $0xe68] sm:$0xff]
    %v563 = vld [vmem:[#allocation5 + $0xe70] sm:$0xff]
    %v564 = vld [vmem:[#allocation5 + $0xe78] sm:$0xff]
    %v565 = vld [vmem:[#allocation5 + $0xe80] sm:$0xff]
    %v566 = vld [vmem:[#allocation5 + $0xe88] sm:$0xff]
    %v567 = vld [vmem:[#allocation5 + $0xe90] sm:$0xff]
    %v568 = vld [vmem:[#allocation5 + $0xe98] sm:$0xff]
    %v569 = vld [vmem:[#allocation5 + $0xea0] sm:$0xff]
    %v570 = vld [vmem:[#allocation5 + $0xea8] sm:$0xff]
    %v571 = vld [vmem:[#allocation5 + $0xeb0] sm:$0xff]
    %v572 = vld [vmem:[#allocation5 + $0xeb8] sm:$0xff]
    %v573 = vld [vmem:[#allocation5 + $0xec0] sm:$0xff]
    %v574 = vld [vmem:[#allocation5 + $0xec8] sm:$0xff]
    %v575 = vld [vmem:[#allocation5 + $0xed0] sm:$0xff]
    %v576 = vld [vmem:[#allocation5 + $0xed8] sm:$0xff]
    %v577 = vld [vmem:[#allocation5 + $0xee0] sm:$0xff]
    %v578 = vld [vmem:[#allocation5 + $0xee8] sm:$0xff]
    %v579 = vld [vmem:[#allocation5 + $0xef0] sm:$0xff]
    %v580 = vld [vmem:[#allocation5 + $0xef8] sm:$0xff]
    %v581 = vld [vmem:[#allocation5 + $0xf00] sm:$0xff]
    %v582 = vld [vmem:[#allocation5 + $0xf08] sm:$0xff]
    %v583 = vld [vmem:[#allocation5 + $0xf10] sm:$0xff]
    %v584 = vld [vmem:[#allocation5 + $0xf18] sm:$0xff]
    %v585 = vld [vmem:[#allocation5 + $0xf20] sm:$0xff]
    %v586 = vld [vmem:[#allocation5 + $0xf28] sm:$0xff]
    %v587 = vld [vmem:[#allocation5 + $0xf30] sm:$0xff]
    %v588 = vld [vmem:[#allocation5 + $0xf38] sm:$0xff]
    %v589 = vld [vmem:[#allocation5 + $0xf40] sm:$0xff]
    %v590 = vld [vmem:[#allocation5 + $0xf48] sm:$0xff]
    %v591 = vld [vmem:[#allocation5 + $0xf50] sm:$0xff]
    %v592 = vld [vmem:[#allocation5 + $0xf58] sm:$0xff]
    %v593 = vld [vmem:[#allocation5 + $0xf60] sm:$0xff]
    %v594 = vld [vmem:[#allocation5 + $0xf68] sm:$0xff]
    %v595 = vld [vmem:[#allocation5 + $0xf70] sm:$0xff]
    %v596 = vld [vmem:[#allocation5 + $0xf78] sm:$0xff]
    %v597 = vld [vmem:[#allocation5 + $0xf80] sm:$0xff]
    %v598 = vld [vmem:[#allocation5 + $0xf88] sm:$0xff]
    %v599 = vld [vmem:[#allocation5 + $0xf90] sm:$0xff]
    %v600 = vld [vmem:[#allocation5 + $0xf98] sm:$0xff]
    %v601 = vld [vmem:[#allocation5 + $0xfa0] sm:$0xff]
    %v602 = vld [vmem:[#allocation5 + $0xfa8] sm:$0xff]
    %v603 = vld [vmem:[#allocation5 + $0xfb0] sm:$0xff]
    %v604 = vld [vmem:[#allocation5 + $0xfb8] sm:$0xff]
    %v605 = vld [vmem:[#allocation5 + $0xfc0] sm:$0xff]
    %v606 = vld [vmem:[#allocation5 + $0xfc8] sm:$0xff]
    %v607 = vld [vmem:[#allocation5 + $0xfd0] sm:$0xff]
    %v608 = vld [vmem:[#allocation5 + $0xfd8] sm:$0xff]
    %v609 = vld [vmem:[#allocation5 + $0xfe0] sm:$0xff]
    %v610 = vld [vmem:[#allocation5 + $0xfe8] sm:$0xff]
    %v611 = vld [vmem:[#allocation5 + $0xff0] sm:$0xff]
    %v612 = vld [vmem:[#allocation5 + $0xff8] sm:$0xff]
    %v613 = vld [vmem:[#allocation5 + $0x1000] sm:$0xff]
    %v614 = vld [vmem:[#allocation5 + $0x1008] sm:$0xff]
    %v615 = vld [vmem:[#allocation5 + $0x1010] sm:$0xff]
    %v616 = vld [vmem:[#allocation5 + $0x1018] sm:$0xff]
    %v617 = vld [vmem:[#allocation5 + $0x1020] sm:$0xff]
    %v618 = vld [vmem:[#allocation5 + $0x1028] sm:$0xff]
    %v619 = vld [vmem:[#allocation5 + $0x1030] sm:$0xff]
    %v620 = vld [vmem:[#allocation5 + $0x1038] sm:$0xff]
    %v621 = vld [vmem:[#allocation5 + $0x1040] sm:$0xff]
    %v622 = vld [vmem:[#allocation5 + $0x1048] sm:$0xff]
    %v623 = vld [vmem:[#allocation5 + $0x1050] sm:$0xff]
    %v624 = vld [vmem:[#allocation5 + $0x1058] sm:$0xff]
    %v625 = vld [vmem:[#allocation5 + $0x1060] sm:$0xff]
    %v626 = vld [vmem:[#allocation5 + $0x1068] sm:$0xff]
    %v627 = vld [vmem:[#allocation5 + $0x1070] sm:$0xff]
    %v628 = vld [vmem:[#allocation5 + $0x1078] sm:$0xff]
    %v629 = vld [vmem:[#allocation5 + $0x1080] sm:$0xff]
    %v630 = vld [vmem:[#allocation5 + $0x1088] sm:$0xff]
    %v631 = vld [vmem:[#allocation5 + $0x1090] sm:$0xff]
    %v632 = vld [vmem:[#allocation5 + $0x1098] sm:$0xff]
    %v633 = vld [vmem:[#allocation5 + $0x10a0] sm:$0xff]
    %v634 = vld [vmem:[#allocation5 + $0x10a8] sm:$0xff]
    %v635 = vld [vmem:[#allocation5 + $0x10b0] sm:$0xff]
    %v636 = vld [vmem:[#allocation5 + $0x10b8] sm:$0xff]
    %v637 = vld [vmem:[#allocation5 + $0x10c0] sm:$0xff]
    %v638 = vld [vmem:[#allocation5 + $0x10c8] sm:$0xff]
    %v639 = vld [vmem:[#allocation5 + $0x10d0] sm:$0xff]
    %v640 = vld [vmem:[#allocation5 + $0x10d8] sm:$0xff]
    %v641 = vld [vmem:[#allocation5 + $0x10e0] sm:$0xff]
    %v642 = vld [vmem:[#allocation5 + $0x10e8] sm:$0xff]
    %v643 = vld [vmem:[#allocation5 + $0x10f0] sm:$0xff]
    %v644 = vld [vmem:[#allocation5 + $0x10f8] sm:$0xff]
    %v645 = vld [vmem:[#allocation5 + $0x1100] sm:$0xff]
    %v646 = vld [vmem:[#allocation5 + $0x1108] sm:$0xff]
    %v647 = vld [vmem:[#allocation5 + $0x1110] sm:$0xff]
    %v648 = vld [vmem:[#allocation5 + $0x1118] sm:$0xff]
    %v649 = vld [vmem:[#allocation5 + $0x1120] sm:$0xff]
    %v650 = vld [vmem:[#allocation5 + $0x1128] sm:$0xff]
    %v651 = vld [vmem:[#allocation5 + $0x1130] sm:$0xff]
    %v652 = vld [vmem:[#allocation5 + $0x1138] sm:$0xff]
    %v653 = vld [vmem:[#allocation5 + $0x1140] sm:$0xff]
    %v654 = vld [vmem:[#allocation5 + $0x1148] sm:$0xff]
    %v655 = vld [vmem:[#allocation5 + $0x1150] sm:$0xff]
    %v656 = vld [vmem:[#allocation5 + $0x1158] sm:$0xff]
    %v657 = vld [vmem:[#allocation5 + $0x1160] sm:$0xff]
    %v658 = vld [vmem:[#allocation5 + $0x1168] sm:$0xff]
    %v659 = vld [vmem:[#allocation5 + $0x1170] sm:$0xff]
    %v660 = vld [vmem:[#allocation5 + $0x1178] sm:$0xff]
    %v661 = vld [vmem:[#allocation5 + $0x1180] sm:$0xff]
    %v662 = vld [vmem:[#allocation5 + $0x1188] sm:$0xff]
    %v663 = vld [vmem:[#allocation5 + $0x1190] sm:$0xff]
    %v664 = vld [vmem:[#allocation5 + $0x1198] sm:$0xff]
    %v665 = vld [vmem:[#allocation5 + $0x11a0] sm:$0xff]
    %v666 = vld [vmem:[#allocation5 + $0x11a8] sm:$0xff]
    %v667 = vld [vmem:[#allocation5 + $0x11b0] sm:$0xff]
    %v668 = vld [vmem:[#allocation5 + $0x11b8] sm:$0xff]
    %v669 = vld [vmem:[#allocation5 + $0x11c0] sm:$0xff]
    %v670 = vld [vmem:[#allocation5 + $0x11c8] sm:$0xff]
    %v671 = vld [vmem:[#allocation5 + $0x11d0] sm:$0xff]
    %v672 = vld [vmem:[#allocation5 + $0x11d8] sm:$0xff]
    %v673 = vld [vmem:[#allocation5 + $0x11e0] sm:$0xff]
    %v674 = vld [vmem:[#allocation5 + $0x11e8] sm:$0xff]
    %v675 = vld [vmem:[#allocation5 + $0x11f0] sm:$0xff]
    %v676 = vld [vmem:[#allocation5 + $0x11f8] sm:$0xff]
    %v677 = vld [vmem:[#allocation7] sm:$0xff]
    %v678 = vld [vmem:[#allocation7 + $0x8] sm:$0xf]
    %v681 = vperm.slane %v677, 0
    %v682 = vperm.slane %v677, 1
    %v683 = vperm.slane %v677, 2
    %v684 = vperm.slane %v677, 3
    %v685 = vperm.slane %v677, 4
    %v686 = vperm.slane %v677, 5
    %v687 = vperm.slane %v677, 6
    %v688 = vperm.slane %v677, 7
    %v689 = vperm.slane %v678, 0
    %v690 = vperm.slane %v678, 1
    %v691 = vperm.slane %v678, 2
    %v692 = vperm.slane %v678, 3
    %705 = vmatpush.msra.mxu0 %v281
    %706 = vmatpush.msra.mxu0 %v269
    %707 = vmatpush.msra.mxu0 %v257
    %708 = vmatpush.msra.mxu0 %v245
    %709 = vmatpush.msra.mxu0 %v233
    %710 = vmatpush.msra.mxu0 %v221
    %711 = vmatpush.msra.mxu0 %v209
    %712 = vmatpush.msra.mxu0 %v197
    %713 = vmatpush.msra.mxu0 %v185
    %714 = vmatpush.msra.mxu0 %v173
    %715 = vmatpush.msra.mxu0 %v161
    %716 = vmatpush.msra.mxu0 %v149
    %717 = vmatpush.msra.mxu0 %v137
    %718 = vmatpush.msra.mxu0 %v125
    %719 = vmatpush.msra.mxu0 %v113
    %720 = vmatpush.msra.mxu0 %v101
    %721 = vmatmul.f32.gmra.mxu0 %v95
    %v722 = vpop.f32.mrf.mxu0
    %v723 = vadd.f32 %v681, %v722
    %724 = vmatmul.f32.gmra.mxu0 %v98
    %v725 = vpop.f32.mrf.mxu0
    %v726 = vadd.f32 %v681, %v725
    %727 = vdwg.mxu0
    %728 = vmatpush.msra.mxu0 %v473
    %729 = vmatpush.msra.mxu0 %v461
    %730 = vmatpush.msra.mxu0 %v449
    %731 = vmatpush.msra.mxu0 %v437
    %732 = vmatpush.msra.mxu0 %v425
    %733 = vmatpush.msra.mxu0 %v413
    %734 = vmatpush.msra.mxu0 %v401
    %735 = vmatpush.msra.mxu0 %v389
    %736 = vmatpush.msra.mxu0 %v377
    %737 = vmatpush.msra.mxu0 %v365
    %738 = vmatpush.msra.mxu0 %v353
    %739 = vmatpush.msra.mxu0 %v341
    %740 = vmatpush.msra.mxu0 %v329
    %741 = vmatpush.msra.mxu0 %v317
    %742 = vmatpush.msra.mxu0 %v305
    %743 = vmatpush.msra.mxu0 %v293
    %744 = vmatmul.f32.gmra.mxu0 %v96
    %v745 = vpop.f32.mrf.mxu0
    %v746 = vadd.f32 %v723, %v745
    %747 = vmatmul.f32.gmra.mxu0 %v99
    %v748 = vpop.f32.mrf.mxu0
    %v749 = vadd.f32 %v726, %v748
    %750 = vdwg.mxu0
    %751 = vmatpush.msra.mxu0 %v665
    %752 = vmatpush.msra.mxu0 %v653
    %753 = vmatpush.msra.mxu0 %v641
    %754 = vmatpush.msra.mxu0 %v629
    %755 = vmatpush.msra.mxu0 %v617
    %756 = vmatpush.msra.mxu0 %v605
    %757 = vmatpush.msra.mxu0 %v593
    %758 = vmatpush.msra.mxu0 %v581
    %759 = vmatpush.msra.mxu0 %v569
    %760 = vmatpush.msra.mxu0 %v557
    %761 = vmatpush.msra.mxu0 %v545
    %762 = vmatpush.msra.mxu0 %v533
    %763 = vmatpush.msra.mxu0 %v521
    %764 = vmatpush.msra.mxu0 %v509
    %765 = vmatpush.msra.mxu0 %v497
    %766 = vmatpush.msra.mxu0 %v485
    %767 = vmatmul.f32.gmra.mxu0 %v97
    %v768 = vpop.f32.mrf.mxu0
    %v769 = vadd.f32 %v746, %v768
    %770 = vmatmul.f32.gmra.mxu0 %v100
    %v771 = vpop.f32.mrf.mxu0
    %v772 = vadd.f32 %v749, %v771
    %773 = vdwg.mxu0
    %774 = vmatpush.msra.mxu0 %v282
    %775 = vmatpush.msra.mxu0 %v270
    %776 = vmatpush.msra.mxu0 %v258
    %777 = vmatpush.msra.mxu0 %v246
    %778 = vmatpush.msra.mxu0 %v234
    %779 = vmatpush.msra.mxu0 %v222
    %780 = vmatpush.msra.mxu0 %v210
    %781 = vmatpush.msra.mxu0 %v198
    %782 = vmatpush.msra.mxu0 %v186
    %783 = vmatpush.msra.mxu0 %v174
    %784 = vmatpush.msra.mxu0 %v162
    %785 = vmatpush.msra.mxu0 %v150
    %786 = vmatpush.msra.mxu0 %v138
    %787 = vmatpush.msra.mxu0 %v126
    %788 = vmatpush.msra.mxu0 %v114
    %789 = vmatpush.msra.mxu0 %v102
    %790 = vmatmul.f32.gmra.mxu0 %v95
    %v791 = vpop.f32.mrf.mxu0
    %v792 = vadd.f32 %v682, %v791
    %793 = vmatmul.f32.gmra.mxu0 %v98
    %v794 = vpop.f32.mrf.mxu0
    %v795 = vadd.f32 %v682, %v794
    %796 = vdwg.mxu0
    %797 = vmatpush.msra.mxu0 %v474
    %798 = vmatpush.msra.mxu0 %v462
    %799 = vmatpush.msra.mxu0 %v450
    %800 = vmatpush.msra.mxu0 %v438
    %801 = vmatpush.msra.mxu0 %v426
    %802 = vmatpush.msra.mxu0 %v414
    %803 = vmatpush.msra.mxu0 %v402
    %804 = vmatpush.msra.mxu0 %v390
    %805 = vmatpush.msra.mxu0 %v378
    %806 = vmatpush.msra.mxu0 %v366
    %807 = vmatpush.msra.mxu0 %v354
    %808 = vmatpush.msra.mxu0 %v342
    %809 = vmatpush.msra.mxu0 %v330
    %810 = vmatpush.msra.mxu0 %v318
    %811 = vmatpush.msra.mxu0 %v306
    %812 = vmatpush.msra.mxu0 %v294
    %813 = vmatmul.f32.gmra.mxu0 %v96
    %v814 = vpop.f32.mrf.mxu0
    %v815 = vadd.f32 %v792, %v814
    %816 = vmatmul.f32.gmra.mxu0 %v99
    %v817 = vpop.f32.mrf.mxu0
    %v818 = vadd.f32 %v795, %v817
    %819 = vdwg.mxu0
    %820 = vmatpush.msra.mxu0 %v666
    %821 = vmatpush.msra.mxu0 %v654
    %822 = vmatpush.msra.mxu0 %v642
    %823 = vmatpush.msra.mxu0 %v630
    %824 = vmatpush.msra.mxu0 %v618
    %825 = vmatpush.msra.mxu0 %v606
    %826 = vmatpush.msra.mxu0 %v594
    %827 = vmatpush.msra.mxu0 %v582
    %828 = vmatpush.msra.mxu0 %v570
    %829 = vmatpush.msra.mxu0 %v558
    %830 = vmatpush.msra.mxu0 %v546
    %831 = vmatpush.msra.mxu0 %v534
    %832 = vmatpush.msra.mxu0 %v522
    %833 = vmatpush.msra.mxu0 %v510
    %834 = vmatpush.msra.mxu0 %v498
    %835 = vmatpush.msra.mxu0 %v486
    %836 = vmatmul.f32.gmra.mxu0 %v97
    %v837 = vpop.f32.mrf.mxu0
    %v838 = vadd.f32 %v815, %v837
    %839 = vmatmul.f32.gmra.mxu0 %v100
    %v840 = vpop.f32.mrf.mxu0
    %v841 = vadd.f32 %v818, %v840
    %842 = vdwg.mxu0
    %843 = vmatpush.msra.mxu0 %v283
    %844 = vmatpush.msra.mxu0 %v271
    %845 = vmatpush.msra.mxu0 %v259
    %846 = vmatpush.msra.mxu0 %v247
    %847 = vmatpush.msra.mxu0 %v235
    %848 = vmatpush.msra.mxu0 %v223
    %849 = vmatpush.msra.mxu0 %v211
    %850 = vmatpush.msra.mxu0 %v199
    %851 = vmatpush.msra.mxu0 %v187
    %852 = vmatpush.msra.mxu0 %v175
    %853 = vmatpush.msra.mxu0 %v163
    %854 = vmatpush.msra.mxu0 %v151
    %855 = vmatpush.msra.mxu0 %v139
    %856 = vmatpush.msra.mxu0 %v127
    %857 = vmatpush.msra.mxu0 %v115
    %858 = vmatpush.msra.mxu0 %v103
    %859 = vmatmul.f32.gmra.mxu0 %v95
    %v860 = vpop.f32.mrf.mxu0
    %v861 = vadd.f32 %v683, %v860
    %862 = vmatmul.f32.gmra.mxu0 %v98
    %v863 = vpop.f32.mrf.mxu0
    %v864 = vadd.f32 %v683, %v863
    %865 = vdwg.mxu0
    %866 = vmatpush.msra.mxu0 %v475
    %867 = vmatpush.msra.mxu0 %v463
    %868 = vmatpush.msra.mxu0 %v451
    %869 = vmatpush.msra.mxu0 %v439
    %870 = vmatpush.msra.mxu0 %v427
    %871 = vmatpush.msra.mxu0 %v415
    %872 = vmatpush.msra.mxu0 %v403
    %873 = vmatpush.msra.mxu0 %v391
    %874 = vmatpush.msra.mxu0 %v379
    %875 = vmatpush.msra.mxu0 %v367
    %876 = vmatpush.msra.mxu0 %v355
    %877 = vmatpush.msra.mxu0 %v343
    %878 = vmatpush.msra.mxu0 %v331
    %879 = vmatpush.msra.mxu0 %v319
    %880 = vmatpush.msra.mxu0 %v307
    %881 = vmatpush.msra.mxu0 %v295
    %882 = vmatmul.f32.gmra.mxu0 %v96
    %v883 = vpop.f32.mrf.mxu0
    %v884 = vadd.f32 %v861, %v883
    %885 = vmatmul.f32.gmra.mxu0 %v99
    %v886 = vpop.f32.mrf.mxu0
    %v887 = vadd.f32 %v864, %v886
    %888 = vdwg.mxu0
    %889 = vmatpush.msra.mxu0 %v667
    %890 = vmatpush.msra.mxu0 %v655
    %891 = vmatpush.msra.mxu0 %v643
    %892 = vmatpush.msra.mxu0 %v631
    %893 = vmatpush.msra.mxu0 %v619
    %894 = vmatpush.msra.mxu0 %v607
    %895 = vmatpush.msra.mxu0 %v595
    %896 = vmatpush.msra.mxu0 %v583
    %897 = vmatpush.msra.mxu0 %v571
    %898 = vmatpush.msra.mxu0 %v559
    %899 = vmatpush.msra.mxu0 %v547
    %900 = vmatpush.msra.mxu0 %v535
    %901 = vmatpush.msra.mxu0 %v523
    %902 = vmatpush.msra.mxu0 %v511
    %903 = vmatpush.msra.mxu0 %v499
    %904 = vmatpush.msra.mxu0 %v487
    %905 = vmatmul.f32.gmra.mxu0 %v97
    %v906 = vpop.f32.mrf.mxu0
    %v907 = vadd.f32 %v884, %v906
    %908 = vmatmul.f32.gmra.mxu0 %v100
    %v909 = vpop.f32.mrf.mxu0
    %v910 = vadd.f32 %v887, %v909
    %911 = vdwg.mxu0
    %912 = vmatpush.msra.mxu0 %v284
    %913 = vmatpush.msra.mxu0 %v272
    %914 = vmatpush.msra.mxu0 %v260
    %915 = vmatpush.msra.mxu0 %v248
    %916 = vmatpush.msra.mxu0 %v236
    %917 = vmatpush.msra.mxu0 %v224
    %918 = vmatpush.msra.mxu0 %v212
    %919 = vmatpush.msra.mxu0 %v200
    %920 = vmatpush.msra.mxu0 %v188
    %921 = vmatpush.msra.mxu0 %v176
    %922 = vmatpush.msra.mxu0 %v164
    %923 = vmatpush.msra.mxu0 %v152
    %924 = vmatpush.msra.mxu0 %v140
    %925 = vmatpush.msra.mxu0 %v128
    %926 = vmatpush.msra.mxu0 %v116
    %927 = vmatpush.msra.mxu0 %v104
    %928 = vmatmul.f32.gmra.mxu0 %v95
    %v929 = vpop.f32.mrf.mxu0
    %v930 = vadd.f32 %v684, %v929
    %931 = vmatmul.f32.gmra.mxu0 %v98
    %v932 = vpop.f32.mrf.mxu0
    %v933 = vadd.f32 %v684, %v932
    %934 = vdwg.mxu0
    %935 = vmatpush.msra.mxu0 %v476
    %936 = vmatpush.msra.mxu0 %v464
    %937 = vmatpush.msra.mxu0 %v452
    %938 = vmatpush.msra.mxu0 %v440
    %939 = vmatpush.msra.mxu0 %v428
    %940 = vmatpush.msra.mxu0 %v416
    %941 = vmatpush.msra.mxu0 %v404
    %942 = vmatpush.msra.mxu0 %v392
    %943 = vmatpush.msra.mxu0 %v380
    %944 = vmatpush.msra.mxu0 %v368
    %945 = vmatpush.msra.mxu0 %v356
    %946 = vmatpush.msra.mxu0 %v344
    %947 = vmatpush.msra.mxu0 %v332
    %948 = vmatpush.msra.mxu0 %v320
    %949 = vmatpush.msra.mxu0 %v308
    %950 = vmatpush.msra.mxu0 %v296
    %951 = vmatmul.f32.gmra.mxu0 %v96
    %v952 = vpop.f32.mrf.mxu0
    %v953 = vadd.f32 %v930, %v952
    %954 = vmatmul.f32.gmra.mxu0 %v99
    %v955 = vpop.f32.mrf.mxu0
    %v956 = vadd.f32 %v933, %v955
    %957 = vdwg.mxu0
    %958 = vmatpush.msra.mxu0 %v668
    %959 = vmatpush.msra.mxu0 %v656
    %960 = vmatpush.msra.mxu0 %v644
    %961 = vmatpush.msra.mxu0 %v632
    %962 = vmatpush.msra.mxu0 %v620
    %963 = vmatpush.msra.mxu0 %v608
    %964 = vmatpush.msra.mxu0 %v596
    %965 = vmatpush.msra.mxu0 %v584
    %966 = vmatpush.msra.mxu0 %v572
    %967 = vmatpush.msra.mxu0 %v560
    %968 = vmatpush.msra.mxu0 %v548
    %969 = vmatpush.msra.mxu0 %v536
    %970 = vmatpush.msra.mxu0 %v524
    %971 = vmatpush.msra.mxu0 %v512
    %972 = vmatpush.msra.mxu0 %v500
    %973 = vmatpush.msra.mxu0 %v488
    %974 = vmatmul.f32.gmra.mxu0 %v97
    %v975 = vpop.f32.mrf.mxu0
    %v976 = vadd.f32 %v953, %v975
    %977 = vmatmul.f32.gmra.mxu0 %v100
    %v978 = vpop.f32.mrf.mxu0
    %v979 = vadd.f32 %v956, %v978
    %980 = vdwg.mxu0
    %981 = vmatpush.msra.mxu0 %v285
    %982 = vmatpush.msra.mxu0 %v273
    %983 = vmatpush.msra.mxu0 %v261
    %984 = vmatpush.msra.mxu0 %v249
    %985 = vmatpush.msra.mxu0 %v237
    %986 = vmatpush.msra.mxu0 %v225
    %987 = vmatpush.msra.mxu0 %v213
    %988 = vmatpush.msra.mxu0 %v201
    %989 = vmatpush.msra.mxu0 %v189
    %990 = vmatpush.msra.mxu0 %v177
    %991 = vmatpush.msra.mxu0 %v165
    %992 = vmatpush.msra.mxu0 %v153
    %993 = vmatpush.msra.mxu0 %v141
    %994 = vmatpush.msra.mxu0 %v129
    %995 = vmatpush.msra.mxu0 %v117
    %996 = vmatpush.msra.mxu0 %v105
    %997 = vmatmul.f32.gmra.mxu0 %v95
    %v998 = vpop.f32.mrf.mxu0
    %v999 = vadd.f32 %v685, %v998
    %1000 = vmatmul.f32.gmra.mxu0 %v98
    %v1001 = vpop.f32.mrf.mxu0
    %v1002 = vadd.f32 %v685, %v1001
    %1003 = vdwg.mxu0
    %1004 = vmatpush.msra.mxu0 %v477
    %1005 = vmatpush.msra.mxu0 %v465
    %1006 = vmatpush.msra.mxu0 %v453
    %1007 = vmatpush.msra.mxu0 %v441
    %1008 = vmatpush.msra.mxu0 %v429
    %1009 = vmatpush.msra.mxu0 %v417
    %1010 = vmatpush.msra.mxu0 %v405
    %1011 = vmatpush.msra.mxu0 %v393
    %1012 = vmatpush.msra.mxu0 %v381
    %1013 = vmatpush.msra.mxu0 %v369
    %1014 = vmatpush.msra.mxu0 %v357
    %1015 = vmatpush.msra.mxu0 %v345
    %1016 = vmatpush.msra.mxu0 %v333
    %1017 = vmatpush.msra.mxu0 %v321
    %1018 = vmatpush.msra.mxu0 %v309
    %1019 = vmatpush.msra.mxu0 %v297
    %1020 = vmatmul.f32.gmra.mxu0 %v96
    %v1021 = vpop.f32.mrf.mxu0
    %v1022 = vadd.f32 %v999, %v1021
    %1023 = vmatmul.f32.gmra.mxu0 %v99
    %v1024 = vpop.f32.mrf.mxu0
    %v1025 = vadd.f32 %v1002, %v1024
    %1026 = vdwg.mxu0
    %1027 = vmatpush.msra.mxu0 %v669
    %1028 = vmatpush.msra.mxu0 %v657
    %1029 = vmatpush.msra.mxu0 %v645
    %1030 = vmatpush.msra.mxu0 %v633
    %1031 = vmatpush.msra.mxu0 %v621
    %1032 = vmatpush.msra.mxu0 %v609
    %1033 = vmatpush.msra.mxu0 %v597
    %1034 = vmatpush.msra.mxu0 %v585
    %1035 = vmatpush.msra.mxu0 %v573
    %1036 = vmatpush.msra.mxu0 %v561
    %1037 = vmatpush.msra.mxu0 %v549
    %1038 = vmatpush.msra.mxu0 %v537
    %1039 = vmatpush.msra.mxu0 %v525
    %1040 = vmatpush.msra.mxu0 %v513
    %1041 = vmatpush.msra.mxu0 %v501
    %1042 = vmatpush.msra.mxu0 %v489
    %1043 = vmatmul.f32.gmra.mxu0 %v97
    %v1044 = vpop.f32.mrf.mxu0
    %v1045 = vadd.f32 %v1022, %v1044
    %1046 = vmatmul.f32.gmra.mxu0 %v100
    %v1047 = vpop.f32.mrf.mxu0
    %v1048 = vadd.f32 %v1025, %v1047
    %1049 = vdwg.mxu0
    %1050 = vmatpush.msra.mxu0 %v286
    %1051 = vmatpush.msra.mxu0 %v274
    %1052 = vmatpush.msra.mxu0 %v262
    %1053 = vmatpush.msra.mxu0 %v250
    %1054 = vmatpush.msra.mxu0 %v238
    %1055 = vmatpush.msra.mxu0 %v226
    %1056 = vmatpush.msra.mxu0 %v214
    %1057 = vmatpush.msra.mxu0 %v202
    %1058 = vmatpush.msra.mxu0 %v190
    %1059 = vmatpush.msra.mxu0 %v178
    %1060 = vmatpush.msra.mxu0 %v166
    %1061 = vmatpush.msra.mxu0 %v154
    %1062 = vmatpush.msra.mxu0 %v142
    %1063 = vmatpush.msra.mxu0 %v130
    %1064 = vmatpush.msra.mxu0 %v118
    %1065 = vmatpush.msra.mxu0 %v106
    %1066 = vmatmul.f32.gmra.mxu0 %v95
    %v1067 = vpop.f32.mrf.mxu0
    %v1068 = vadd.f32 %v686, %v1067
    %1069 = vmatmul.f32.gmra.mxu0 %v98
    %v1070 = vpop.f32.mrf.mxu0
    %v1071 = vadd.f32 %v686, %v1070
    %1072 = vdwg.mxu0
    %1073 = vmatpush.msra.mxu0 %v478
    %1074 = vmatpush.msra.mxu0 %v466
    %1075 = vmatpush.msra.mxu0 %v454
    %1076 = vmatpush.msra.mxu0 %v442
    %1077 = vmatpush.msra.mxu0 %v430
    %1078 = vmatpush.msra.mxu0 %v418
    %1079 = vmatpush.msra.mxu0 %v406
    %1080 = vmatpush.msra.mxu0 %v394
    %1081 = vmatpush.msra.mxu0 %v382
    %1082 = vmatpush.msra.mxu0 %v370
    %1083 = vmatpush.msra.mxu0 %v358
    %1084 = vmatpush.msra.mxu0 %v346
    %1085 = vmatpush.msra.mxu0 %v334
    %1086 = vmatpush.msra.mxu0 %v322
    %1087 = vmatpush.msra.mxu0 %v310
    %1088 = vmatpush.msra.mxu0 %v298
    %1089 = vmatmul.f32.gmra.mxu0 %v96
    %v1090 = vpop.f32.mrf.mxu0
    %v1091 = vadd.f32 %v1068, %v1090
    %1092 = vmatmul.f32.gmra.mxu0 %v99
    %v1093 = vpop.f32.mrf.mxu0
    %v1094 = vadd.f32 %v1071, %v1093
    %1095 = vdwg.mxu0
    %1096 = vmatpush.msra.mxu0 %v670
    %1097 = vmatpush.msra.mxu0 %v658
    %1098 = vmatpush.msra.mxu0 %v646
    %1099 = vmatpush.msra.mxu0 %v634
    %1100 = vmatpush.msra.mxu0 %v622
    %1101 = vmatpush.msra.mxu0 %v610
    %1102 = vmatpush.msra.mxu0 %v598
    %1103 = vmatpush.msra.mxu0 %v586
    %1104 = vmatpush.msra.mxu0 %v574
    %1105 = vmatpush.msra.mxu0 %v562
    %1106 = vmatpush.msra.mxu0 %v550
    %1107 = vmatpush.msra.mxu0 %v538
    %1108 = vmatpush.msra.mxu0 %v526
    %1109 = vmatpush.msra.mxu0 %v514
    %1110 = vmatpush.msra.mxu0 %v502
    %1111 = vmatpush.msra.mxu0 %v490
    %1112 = vmatmul.f32.gmra.mxu0 %v97
    %v1113 = vpop.f32.mrf.mxu0
    %v1114 = vadd.f32 %v1091, %v1113
    %1115 = vmatmul.f32.gmra.mxu0 %v100
    %v1116 = vpop.f32.mrf.mxu0
    %v1117 = vadd.f32 %v1094, %v1116
    %1118 = vdwg.mxu0
    %1119 = vmatpush.msra.mxu0 %v287
    %1120 = vmatpush.msra.mxu0 %v275
    %1121 = vmatpush.msra.mxu0 %v263
    %1122 = vmatpush.msra.mxu0 %v251
    %1123 = vmatpush.msra.mxu0 %v239
    %1124 = vmatpush.msra.mxu0 %v227
    %1125 = vmatpush.msra.mxu0 %v215
    %1126 = vmatpush.msra.mxu0 %v203
    %1127 = vmatpush.msra.mxu0 %v191
    %1128 = vmatpush.msra.mxu0 %v179
    %1129 = vmatpush.msra.mxu0 %v167
    %1130 = vmatpush.msra.mxu0 %v155
    %1131 = vmatpush.msra.mxu0 %v143
    %1132 = vmatpush.msra.mxu0 %v131
    %1133 = vmatpush.msra.mxu0 %v119
    %1134 = vmatpush.msra.mxu0 %v107
    %1135 = vmatmul.f32.gmra.mxu0 %v95
    %v1136 = vpop.f32.mrf.mxu0
    %v1137 = vadd.f32 %v687, %v1136
    %1138 = vmatmul.f32.gmra.mxu0 %v98
    %v1139 = vpop.f32.mrf.mxu0
    %v1140 = vadd.f32 %v687, %v1139
    %1141 = vdwg.mxu0
    %1142 = vmatpush.msra.mxu0 %v479
    %1143 = vmatpush.msra.mxu0 %v467
    %1144 = vmatpush.msra.mxu0 %v455
    %1145 = vmatpush.msra.mxu0 %v443
    %1146 = vmatpush.msra.mxu0 %v431
    %1147 = vmatpush.msra.mxu0 %v419
    %1148 = vmatpush.msra.mxu0 %v407
    %1149 = vmatpush.msra.mxu0 %v395
    %1150 = vmatpush.msra.mxu0 %v383
    %1151 = vmatpush.msra.mxu0 %v371
    %1152 = vmatpush.msra.mxu0 %v359
    %1153 = vmatpush.msra.mxu0 %v347
    %1154 = vmatpush.msra.mxu0 %v335
    %1155 = vmatpush.msra.mxu0 %v323
    %1156 = vmatpush.msra.mxu0 %v311
    %1157 = vmatpush.msra.mxu0 %v299
    %1158 = vmatmul.f32.gmra.mxu0 %v96
    %v1159 = vpop.f32.mrf.mxu0
    %v1160 = vadd.f32 %v1137, %v1159
    %1161 = vmatmul.f32.gmra.mxu0 %v99
    %v1162 = vpop.f32.mrf.mxu0
    %v1163 = vadd.f32 %v1140, %v1162
    %1164 = vdwg.mxu0
    %1165 = vmatpush.msra.mxu0 %v671
    %1166 = vmatpush.msra.mxu0 %v659
    %1167 = vmatpush.msra.mxu0 %v647
    %1168 = vmatpush.msra.mxu0 %v635
    %1169 = vmatpush.msra.mxu0 %v623
    %1170 = vmatpush.msra.mxu0 %v611
    %1171 = vmatpush.msra.mxu0 %v599
    %1172 = vmatpush.msra.mxu0 %v587
    %1173 = vmatpush.msra.mxu0 %v575
    %1174 = vmatpush.msra.mxu0 %v563
    %1175 = vmatpush.msra.mxu0 %v551
    %1176 = vmatpush.msra.mxu0 %v539
    %1177 = vmatpush.msra.mxu0 %v527
    %1178 = vmatpush.msra.mxu0 %v515
    %1179 = vmatpush.msra.mxu0 %v503
    %1180 = vmatpush.msra.mxu0 %v491
    %1181 = vmatmul.f32.gmra.mxu0 %v97
    %v1182 = vpop.f32.mrf.mxu0
    %v1183 = vadd.f32 %v1160, %v1182
    %1184 = vmatmul.f32.gmra.mxu0 %v100
    %v1185 = vpop.f32.mrf.mxu0
    %v1186 = vadd.f32 %v1163, %v1185
    %1187 = vdwg.mxu0
    %1188 = vmatpush.msra.mxu0 %v288
    %1189 = vmatpush.msra.mxu0 %v276
    %1190 = vmatpush.msra.mxu0 %v264
    %1191 = vmatpush.msra.mxu0 %v252
    %1192 = vmatpush.msra.mxu0 %v240
    %1193 = vmatpush.msra.mxu0 %v228
    %1194 = vmatpush.msra.mxu0 %v216
    %1195 = vmatpush.msra.mxu0 %v204
    %1196 = vmatpush.msra.mxu0 %v192
    %1197 = vmatpush.msra.mxu0 %v180
    %1198 = vmatpush.msra.mxu0 %v168
    %1199 = vmatpush.msra.mxu0 %v156
    %1200 = vmatpush.msra.mxu0 %v144
    %1201 = vmatpush.msra.mxu0 %v132
    %1202 = vmatpush.msra.mxu0 %v120
    %1203 = vmatpush.msra.mxu0 %v108
    %1204 = vmatmul.f32.gmra.mxu0 %v95
    %v1205 = vpop.f32.mrf.mxu0
    %v1206 = vadd.f32 %v688, %v1205
    %1207 = vmatmul.f32.gmra.mxu0 %v98
    %v1208 = vpop.f32.mrf.mxu0
    %v1209 = vadd.f32 %v688, %v1208
    %1210 = vdwg.mxu0
    %1211 = vmatpush.msra.mxu0 %v480
    %1212 = vmatpush.msra.mxu0 %v468
    %1213 = vmatpush.msra.mxu0 %v456
    %1214 = vmatpush.msra.mxu0 %v444
    %1215 = vmatpush.msra.mxu0 %v432
    %1216 = vmatpush.msra.mxu0 %v420
    %1217 = vmatpush.msra.mxu0 %v408
    %1218 = vmatpush.msra.mxu0 %v396
    %1219 = vmatpush.msra.mxu0 %v384
    %1220 = vmatpush.msra.mxu0 %v372
    %1221 = vmatpush.msra.mxu0 %v360
    %1222 = vmatpush.msra.mxu0 %v348
    %1223 = vmatpush.msra.mxu0 %v336
    %1224 = vmatpush.msra.mxu0 %v324
    %1225 = vmatpush.msra.mxu0 %v312
    %1226 = vmatpush.msra.mxu0 %v300
    %1227 = vmatmul.f32.gmra.mxu0 %v96
    %v1228 = vpop.f32.mrf.mxu0
    %v1229 = vadd.f32 %v1206, %v1228
    %1230 = vmatmul.f32.gmra.mxu0 %v99
    %v1231 = vpop.f32.mrf.mxu0
    %v1232 = vadd.f32 %v1209, %v1231
    %1233 = vdwg.mxu0
    %1234 = vmatpush.msra.mxu0 %v672
    %1235 = vmatpush.msra.mxu0 %v660
    %1236 = vmatpush.msra.mxu0 %v648
    %1237 = vmatpush.msra.mxu0 %v636
    %1238 = vmatpush.msra.mxu0 %v624
    %1239 = vmatpush.msra.mxu0 %v612
    %1240 = vmatpush.msra.mxu0 %v600
    %1241 = vmatpush.msra.mxu0 %v588
    %1242 = vmatpush.msra.mxu0 %v576
    %1243 = vmatpush.msra.mxu0 %v564
    %1244 = vmatpush.msra.mxu0 %v552
    %1245 = vmatpush.msra.mxu0 %v540
    %1246 = vmatpush.msra.mxu0 %v528
    %1247 = vmatpush.msra.mxu0 %v516
    %1248 = vmatpush.msra.mxu0 %v504
    %1249 = vmatpush.msra.mxu0 %v492
    %1250 = vmatmul.f32.gmra.mxu0 %v97
    %v1251 = vpop.f32.mrf.mxu0
    %v1252 = vadd.f32 %v1229, %v1251
    %1253 = vmatmul.f32.gmra.mxu0 %v100
    %v1254 = vpop.f32.mrf.mxu0
    %v1255 = vadd.f32 %v1232, %v1254
    %1256 = vdwg.mxu0
    %1257 = vmatpush.msra.mxu0 %v289
    %1258 = vmatpush.msra.mxu0 %v277
    %1259 = vmatpush.msra.mxu0 %v265
    %1260 = vmatpush.msra.mxu0 %v253
    %1261 = vmatpush.msra.mxu0 %v241
    %1262 = vmatpush.msra.mxu0 %v229
    %1263 = vmatpush.msra.mxu0 %v217
    %1264 = vmatpush.msra.mxu0 %v205
    %1265 = vmatpush.msra.mxu0 %v193
    %1266 = vmatpush.msra.mxu0 %v181
    %1267 = vmatpush.msra.mxu0 %v169
    %1268 = vmatpush.msra.mxu0 %v157
    %1269 = vmatpush.msra.mxu0 %v145
    %1270 = vmatpush.msra.mxu0 %v133
    %1271 = vmatpush.msra.mxu0 %v121
    %1272 = vmatpush.msra.mxu0 %v109
    %1273 = vmatmul.f32.gmra.mxu0 %v95
    %v1274 = vpop.f32.mrf.mxu0
    %v1275 = vadd.f32 %v689, %v1274
    %1276 = vmatmul.f32.gmra.mxu0 %v98
    %v1277 = vpop.f32.mrf.mxu0
    %v1278 = vadd.f32 %v689, %v1277
    %1279 = vdwg.mxu0
    %1280 = vmatpush.msra.mxu0 %v481
    %1281 = vmatpush.msra.mxu0 %v469
    %1282 = vmatpush.msra.mxu0 %v457
    %1283 = vmatpush.msra.mxu0 %v445
    %1284 = vmatpush.msra.mxu0 %v433
    %1285 = vmatpush.msra.mxu0 %v421
    %1286 = vmatpush.msra.mxu0 %v409
    %1287 = vmatpush.msra.mxu0 %v397
    %1288 = vmatpush.msra.mxu0 %v385
    %1289 = vmatpush.msra.mxu0 %v373
    %1290 = vmatpush.msra.mxu0 %v361
    %1291 = vmatpush.msra.mxu0 %v349
    %1292 = vmatpush.msra.mxu0 %v337
    %1293 = vmatpush.msra.mxu0 %v325
    %1294 = vmatpush.msra.mxu0 %v313
    %1295 = vmatpush.msra.mxu0 %v301
    %1296 = vmatmul.f32.gmra.mxu0 %v96
    %v1297 = vpop.f32.mrf.mxu0
    %v1298 = vadd.f32 %v1275, %v1297
    %1299 = vmatmul.f32.gmra.mxu0 %v99
    %v1300 = vpop.f32.mrf.mxu0
    %v1301 = vadd.f32 %v1278, %v1300
    %1302 = vdwg.mxu0
    %1303 = vmatpush.msra.mxu0 %v673
    %1304 = vmatpush.msra.mxu0 %v661
    %1305 = vmatpush.msra.mxu0 %v649
    %1306 = vmatpush.msra.mxu0 %v637
    %1307 = vmatpush.msra.mxu0 %v625
    %1308 = vmatpush.msra.mxu0 %v613
    %1309 = vmatpush.msra.mxu0 %v601
    %1310 = vmatpush.msra.mxu0 %v589
    %1311 = vmatpush.msra.mxu0 %v577
    %1312 = vmatpush.msra.mxu0 %v565
    %1313 = vmatpush.msra.mxu0 %v553
    %1314 = vmatpush.msra.mxu0 %v541
    %1315 = vmatpush.msra.mxu0 %v529
    %1316 = vmatpush.msra.mxu0 %v517
    %1317 = vmatpush.msra.mxu0 %v505
    %1318 = vmatpush.msra.mxu0 %v493
    %1319 = vmatmul.f32.gmra.mxu0 %v97
    %v1320 = vpop.f32.mrf.mxu0
    %v1321 = vadd.f32 %v1298, %v1320
    %1322 = vmatmul.f32.gmra.mxu0 %v100
    %v1323 = vpop.f32.mrf.mxu0
    %v1324 = vadd.f32 %v1301, %v1323
    %1325 = vdwg.mxu0
    %1326 = vmatpush.msra.mxu0 %v290
    %1327 = vmatpush.msra.mxu0 %v278
    %1328 = vmatpush.msra.mxu0 %v266
    %1329 = vmatpush.msra.mxu0 %v254
    %1330 = vmatpush.msra.mxu0 %v242
    %1331 = vmatpush.msra.mxu0 %v230
    %1332 = vmatpush.msra.mxu0 %v218
    %1333 = vmatpush.msra.mxu0 %v206
    %1334 = vmatpush.msra.mxu0 %v194
    %1335 = vmatpush.msra.mxu0 %v182
    %1336 = vmatpush.msra.mxu0 %v170
    %1337 = vmatpush.msra.mxu0 %v158
    %1338 = vmatpush.msra.mxu0 %v146
    %1339 = vmatpush.msra.mxu0 %v134
    %1340 = vmatpush.msra.mxu0 %v122
    %1341 = vmatpush.msra.mxu0 %v110
    %1342 = vmatmul.f32.gmra.mxu0 %v95
    %v1343 = vpop.f32.mrf.mxu0
    %v1344 = vadd.f32 %v690, %v1343
    %1345 = vmatmul.f32.gmra.mxu0 %v98
    %v1346 = vpop.f32.mrf.mxu0
    %v1347 = vadd.f32 %v690, %v1346
    %1348 = vdwg.mxu0
    %1349 = vmatpush.msra.mxu0 %v482
    %1350 = vmatpush.msra.mxu0 %v470
    %1351 = vmatpush.msra.mxu0 %v458
    %1352 = vmatpush.msra.mxu0 %v446
    %1353 = vmatpush.msra.mxu0 %v434
    %1354 = vmatpush.msra.mxu0 %v422
    %1355 = vmatpush.msra.mxu0 %v410
    %1356 = vmatpush.msra.mxu0 %v398
    %1357 = vmatpush.msra.mxu0 %v386
    %1358 = vmatpush.msra.mxu0 %v374
    %1359 = vmatpush.msra.mxu0 %v362
    %1360 = vmatpush.msra.mxu0 %v350
    %1361 = vmatpush.msra.mxu0 %v338
    %1362 = vmatpush.msra.mxu0 %v326
    %1363 = vmatpush.msra.mxu0 %v314
    %1364 = vmatpush.msra.mxu0 %v302
    %1365 = vmatmul.f32.gmra.mxu0 %v96
    %v1366 = vpop.f32.mrf.mxu0
    %v1367 = vadd.f32 %v1344, %v1366
    %1368 = vmatmul.f32.gmra.mxu0 %v99
    %v1369 = vpop.f32.mrf.mxu0
    %v1370 = vadd.f32 %v1347, %v1369
    %1371 = vdwg.mxu0
    %1372 = vmatpush.msra.mxu0 %v674
    %1373 = vmatpush.msra.mxu0 %v662
    %1374 = vmatpush.msra.mxu0 %v650
    %1375 = vmatpush.msra.mxu0 %v638
    %1376 = vmatpush.msra.mxu0 %v626
    %1377 = vmatpush.msra.mxu0 %v614
    %1378 = vmatpush.msra.mxu0 %v602
    %1379 = vmatpush.msra.mxu0 %v590
    %1380 = vmatpush.msra.mxu0 %v578
    %1381 = vmatpush.msra.mxu0 %v566
    %1382 = vmatpush.msra.mxu0 %v554
    %1383 = vmatpush.msra.mxu0 %v542
    %1384 = vmatpush.msra.mxu0 %v530
    %1385 = vmatpush.msra.mxu0 %v518
    %1386 = vmatpush.msra.mxu0 %v506
    %1387 = vmatpush.msra.mxu0 %v494
    %1388 = vmatmul.f32.gmra.mxu0 %v97
    %v1389 = vpop.f32.mrf.mxu0
    %v1390 = vadd.f32 %v1367, %v1389
    %1391 = vmatmul.f32.gmra.mxu0 %v100
    %v1392 = vpop.f32.mrf.mxu0
    %v1393 = vadd.f32 %v1370, %v1392
    %1394 = vdwg.mxu0
    %1395 = vmatpush.msra.mxu0 %v291
    %1396 = vmatpush.msra.mxu0 %v279
    %1397 = vmatpush.msra.mxu0 %v267
    %1398 = vmatpush.msra.mxu0 %v255
    %1399 = vmatpush.msra.mxu0 %v243
    %1400 = vmatpush.msra.mxu0 %v231
    %1401 = vmatpush.msra.mxu0 %v219
    %1402 = vmatpush.msra.mxu0 %v207
    %1403 = vmatpush.msra.mxu0 %v195
    %1404 = vmatpush.msra.mxu0 %v183
    %1405 = vmatpush.msra.mxu0 %v171
    %1406 = vmatpush.msra.mxu0 %v159
    %1407 = vmatpush.msra.mxu0 %v147
    %1408 = vmatpush.msra.mxu0 %v135
    %1409 = vmatpush.msra.mxu0 %v123
    %1410 = vmatpush.msra.mxu0 %v111
    %1411 = vmatmul.f32.gmra.mxu0 %v95
    %v1412 = vpop.f32.mrf.mxu0
    %v1413 = vadd.f32 %v691, %v1412
    %1414 = vmatmul.f32.gmra.mxu0 %v98
    %v1415 = vpop.f32.mrf.mxu0
    %v1416 = vadd.f32 %v691, %v1415
    %1417 = vdwg.mxu0
    %1418 = vmatpush.msra.mxu0 %v483
    %1419 = vmatpush.msra.mxu0 %v471
    %1420 = vmatpush.msra.mxu0 %v459
    %1421 = vmatpush.msra.mxu0 %v447
    %1422 = vmatpush.msra.mxu0 %v435
    %1423 = vmatpush.msra.mxu0 %v423
    %1424 = vmatpush.msra.mxu0 %v411
    %1425 = vmatpush.msra.mxu0 %v399
    %1426 = vmatpush.msra.mxu0 %v387
    %1427 = vmatpush.msra.mxu0 %v375
    %1428 = vmatpush.msra.mxu0 %v363
    %1429 = vmatpush.msra.mxu0 %v351
    %1430 = vmatpush.msra.mxu0 %v339
    %1431 = vmatpush.msra.mxu0 %v327
    %1432 = vmatpush.msra.mxu0 %v315
    %1433 = vmatpush.msra.mxu0 %v303
    %1434 = vmatmul.f32.gmra.mxu0 %v96
    %v1435 = vpop.f32.mrf.mxu0
    %v1436 = vadd.f32 %v1413, %v1435
    %1437 = vmatmul.f32.gmra.mxu0 %v99
    %v1438 = vpop.f32.mrf.mxu0
    %v1439 = vadd.f32 %v1416, %v1438
    %1440 = vdwg.mxu0
    %1441 = vmatpush.msra.mxu0 %v675
    %1442 = vmatpush.msra.mxu0 %v663
    %1443 = vmatpush.msra.mxu0 %v651
    %1444 = vmatpush.msra.mxu0 %v639
    %1445 = vmatpush.msra.mxu0 %v627
    %1446 = vmatpush.msra.mxu0 %v615
    %1447 = vmatpush.msra.mxu0 %v603
    %1448 = vmatpush.msra.mxu0 %v591
    %1449 = vmatpush.msra.mxu0 %v579
    %1450 = vmatpush.msra.mxu0 %v567
    %1451 = vmatpush.msra.mxu0 %v555
    %1452 = vmatpush.msra.mxu0 %v543
    %1453 = vmatpush.msra.mxu0 %v531
    %1454 = vmatpush.msra.mxu0 %v519
    %1455 = vmatpush.msra.mxu0 %v507
    %1456 = vmatpush.msra.mxu0 %v495
    %1457 = vmatmul.f32.gmra.mxu0 %v97
    %v1458 = vpop.f32.mrf.mxu0
    %v1459 = vadd.f32 %v1436, %v1458
    %1460 = vmatmul.f32.gmra.mxu0 %v100
    %v1461 = vpop.f32.mrf.mxu0
    %v1462 = vadd.f32 %v1439, %v1461
    %1463 = vdwg.mxu0
    %1464 = vmatpush.msra.mxu0 %v292
    %1465 = vmatpush.msra.mxu0 %v280
    %1466 = vmatpush.msra.mxu0 %v268
    %1467 = vmatpush.msra.mxu0 %v256
    %1468 = vmatpush.msra.mxu0 %v244
    %1469 = vmatpush.msra.mxu0 %v232
    %1470 = vmatpush.msra.mxu0 %v220
    %1471 = vmatpush.msra.mxu0 %v208
    %1472 = vmatpush.msra.mxu0 %v196
    %1473 = vmatpush.msra.mxu0 %v184
    %1474 = vmatpush.msra.mxu0 %v172
    %1475 = vmatpush.msra.mxu0 %v160
    %1476 = vmatpush.msra.mxu0 %v148
    %1477 = vmatpush.msra.mxu0 %v136
    %1478 = vmatpush.msra.mxu0 %v124
    %1479 = vmatpush.msra.mxu0 %v112
    %1480 = vmatmul.f32.gmra.mxu0 %v95
    %v1481 = vpop.f32.mrf.mxu0
    %v1482 = vadd.f32 %v692, %v1481
    %1483 = vmatmul.f32.gmra.mxu0 %v98
    %v1484 = vpop.f32.mrf.mxu0
    %v1485 = vadd.f32 %v692, %v1484
    %1486 = vdwg.mxu0
    %1487 = vmatpush.msra.mxu0 %v484
    %1488 = vmatpush.msra.mxu0 %v472
    %1489 = vmatpush.msra.mxu0 %v460
    %1490 = vmatpush.msra.mxu0 %v448
    %1491 = vmatpush.msra.mxu0 %v436
    %1492 = vmatpush.msra.mxu0 %v424
    %1493 = vmatpush.msra.mxu0 %v412
    %1494 = vmatpush.msra.mxu0 %v400
    %1495 = vmatpush.msra.mxu0 %v388
    %1496 = vmatpush.msra.mxu0 %v376
    %1497 = vmatpush.msra.mxu0 %v364
    %1498 = vmatpush.msra.mxu0 %v352
    %1499 = vmatpush.msra.mxu0 %v340
    %1500 = vmatpush.msra.mxu0 %v328
    %1501 = vmatpush.msra.mxu0 %v316
    %1502 = vmatpush.msra.mxu0 %v304
    %1503 = vmatmul.f32.gmra.mxu0 %v96
    %v1504 = vpop.f32.mrf.mxu0
    %v1505 = vadd.f32 %v1482, %v1504
    %1506 = vmatmul.f32.gmra.mxu0 %v99
    %v1507 = vpop.f32.mrf.mxu0
    %v1508 = vadd.f32 %v1485, %v1507
    %1509 = vdwg.mxu0
    %1510 = vmatpush.msra.mxu0 %v676
    %1511 = vmatpush.msra.mxu0 %v664
    %1512 = vmatpush.msra.mxu0 %v652
    %1513 = vmatpush.msra.mxu0 %v640
    %1514 = vmatpush.msra.mxu0 %v628
    %1515 = vmatpush.msra.mxu0 %v616
    %1516 = vmatpush.msra.mxu0 %v604
    %1517 = vmatpush.msra.mxu0 %v592
    %1518 = vmatpush.msra.mxu0 %v580
    %1519 = vmatpush.msra.mxu0 %v568
    %1520 = vmatpush.msra.mxu0 %v556
    %1521 = vmatpush.msra.mxu0 %v544
    %1522 = vmatpush.msra.mxu0 %v532
    %1523 = vmatpush.msra.mxu0 %v520
    %1524 = vmatpush.msra.mxu0 %v508
    %1525 = vmatpush.msra.mxu0 %v496
    %1526 = vmatmul.f32.gmra.mxu0 %v97
    %v1527 = vpop.f32.mrf.mxu0
    %v1528 = vadd.f32 %v1505, %v1527
    %1529 = vmatmul.f32.gmra.mxu0 %v100
    %v1530 = vpop.f32.mrf.mxu0
    %v1531 = vadd.f32 %v1508, %v1530
    %1532 = vdwg.mxu0
    %v1533 = vmax.f32 %v769, 0.0
    %v1534 = vmax.f32 %v838, 0.0
    %v1535 = vmax.f32 %v907, 0.0
    %v1536 = vmax.f32 %v976, 0.0
    %v1537 = vmax.f32 %v1045, 0.0
    %v1538 = vmax.f32 %v1114, 0.0
    %v1539 = vmax.f32 %v1183, 0.0
    %v1540 = vmax.f32 %v1252, 0.0
    %v1541 = vmax.f32 %v1321, 0.0
    %v1542 = vmax.f32 %v1390, 0.0
    %v1543 = vmax.f32 %v1459, 0.0
    %v1544 = vmax.f32 %v1528, 0.0
    %v1545 = vmax.f32 %v772, 0.0
    %v1546 = vmax.f32 %v841, 0.0
    %v1547 = vmax.f32 %v910, 0.0
    %v1548 = vmax.f32 %v979, 0.0
    %v1549 = vmax.f32 %v1048, 0.0
    %v1550 = vmax.f32 %v1117, 0.0
    %v1551 = vmax.f32 %v1186, 0.0
    %v1552 = vmax.f32 %v1255, 0.0
    %v1553 = vmax.f32 %v1324, 0.0
    %v1554 = vmax.f32 %v1393, 0.0
    %v1555 = vmax.f32 %v1462, 0.0
    %v1556 = vmax.f32 %v1531, 0.0
    %v1557 = vld [vmem:[#allocation8] sm:$0xff]
    %v1558 = vld [vmem:[#allocation8 + $0x8] sm:$0xff]
    %v1559 = vld [vmem:[#allocation8 + $0x10] sm:$0xff]
    %v1560 = vld [vmem:[#allocation8 + $0x18] sm:$0xff]
    %v1561 = vld [vmem:[#allocation8 + $0x20] sm:$0xff]
    %v1562 = vld [vmem:[#allocation8 + $0x28] sm:$0xff]
    %v1563 = vld [vmem:[#allocation8 + $0x30] sm:$0xff]
    %v1564 = vld [vmem:[#allocation8 + $0x38] sm:$0xff]
    %v1565 = vld [vmem:[#allocation8 + $0x40] sm:$0xff]
    %v1566 = vld [vmem:[#allocation8 + $0x48] sm:$0xff]
    %v1567 = vld [vmem:[#allocation8 + $0x50] sm:$0xff]
    %v1568 = vld [vmem:[#allocation8 + $0x58] sm:$0xff]
    %v1569 = vld [vmem:[#allocation8 + $0x60] sm:$0xff]
    %v1570 = vld [vmem:[#allocation8 + $0x68] sm:$0xff]
    %v1571 = vld [vmem:[#allocation8 + $0x70] sm:$0xff]
    %v1572 = vld [vmem:[#allocation8 + $0x78] sm:$0xff]
    %v1573 = vld [vmem:[#allocation8 + $0x80] sm:$0xff]
    %v1574 = vld [vmem:[#allocation8 + $0x88] sm:$0xff]
    %v1575 = vld [vmem:[#allocation8 + $0x90] sm:$0xff]
    %v1576 = vld [vmem:[#allocation8 + $0x98] sm:$0xff]
    %v1577 = vld [vmem:[#allocation8 + $0xa0] sm:$0xff]
    %v1578 = vld [vmem:[#allocation8 + $0xa8] sm:$0xff]
    %v1579 = vld [vmem:[#allocation8 + $0xb0] sm:$0xff]
    %v1580 = vld [vmem:[#allocation8 + $0xb8] sm:$0xff]
    %v1581 = vld [vmem:[#allocation8 + $0xc0] sm:$0xff]
    %v1582 = vld [vmem:[#allocation8 + $0xc8] sm:$0xff]
    %v1583 = vld [vmem:[#allocation8 + $0xd0] sm:$0xff]
    %v1584 = vld [vmem:[#allocation8 + $0xd8] sm:$0xff]
    %v1585 = vld [vmem:[#allocation8 + $0xe0] sm:$0xff]
    %v1586 = vld [vmem:[#allocation8 + $0xe8] sm:$0xff]
    %v1587 = vld [vmem:[#allocation8 + $0xf0] sm:$0xff]
    %v1588 = vld [vmem:[#allocation8 + $0xf8] sm:$0xff]
    %v1589 = vld [vmem:[#allocation8 + $0x100] sm:$0xff]
    %v1590 = vld [vmem:[#allocation8 + $0x108] sm:$0xff]
    %v1591 = vld [vmem:[#allocation8 + $0x110] sm:$0xff]
    %v1592 = vld [vmem:[#allocation8 + $0x118] sm:$0xff]
    %v1593 = vld [vmem:[#allocation8 + $0x120] sm:$0xff]
    %v1594 = vld [vmem:[#allocation8 + $0x128] sm:$0xff]
    %v1595 = vld [vmem:[#allocation8 + $0x130] sm:$0xff]
    %v1596 = vld [vmem:[#allocation8 + $0x138] sm:$0xff]
    %v1597 = vld [vmem:[#allocation8 + $0x140] sm:$0xff]
    %v1598 = vld [vmem:[#allocation8 + $0x148] sm:$0xff]
    %v1599 = vld [vmem:[#allocation8 + $0x150] sm:$0xff]
    %v1600 = vld [vmem:[#allocation8 + $0x158] sm:$0xff]
    %v1601 = vld [vmem:[#allocation8 + $0x160] sm:$0xff]
    %v1602 = vld [vmem:[#allocation8 + $0x168] sm:$0xff]
    %v1603 = vld [vmem:[#allocation8 + $0x170] sm:$0xff]
    %v1604 = vld [vmem:[#allocation8 + $0x178] sm:$0xff]
    %v1605 = vld [vmem:[#allocation8 + $0x180] sm:$0xff]
    %v1606 = vld [vmem:[#allocation8 + $0x188] sm:$0xff]
    %v1607 = vld [vmem:[#allocation8 + $0x190] sm:$0xff]
    %v1608 = vld [vmem:[#allocation8 + $0x198] sm:$0xff]
    %v1609 = vld [vmem:[#allocation8 + $0x1a0] sm:$0xff]
    %v1610 = vld [vmem:[#allocation8 + $0x1a8] sm:$0xff]
    %v1611 = vld [vmem:[#allocation8 + $0x1b0] sm:$0xff]
    %v1612 = vld [vmem:[#allocation8 + $0x1b8] sm:$0xff]
    %v1613 = vld [vmem:[#allocation8 + $0x1c0] sm:$0xff]
    %v1614 = vld [vmem:[#allocation8 + $0x1c8] sm:$0xff]
    %v1615 = vld [vmem:[#allocation8 + $0x1d0] sm:$0xff]
    %v1616 = vld [vmem:[#allocation8 + $0x1d8] sm:$0xff]
    %v1617 = vld [vmem:[#allocation8 + $0x1e0] sm:$0xff]
    %v1618 = vld [vmem:[#allocation8 + $0x1e8] sm:$0xff]
    %v1619 = vld [vmem:[#allocation8 + $0x1f0] sm:$0xff]
    %v1620 = vld [vmem:[#allocation8 + $0x1f8] sm:$0xff]
    %v1621 = vld [vmem:[#allocation8 + $0x200] sm:$0xff]
    %v1622 = vld [vmem:[#allocation8 + $0x208] sm:$0xff]
    %v1623 = vld [vmem:[#allocation8 + $0x210] sm:$0xff]
    %v1624 = vld [vmem:[#allocation8 + $0x218] sm:$0xff]
    %v1625 = vld [vmem:[#allocation8 + $0x220] sm:$0xff]
    %v1626 = vld [vmem:[#allocation8 + $0x228] sm:$0xff]
    %v1627 = vld [vmem:[#allocation8 + $0x230] sm:$0xff]
    %v1628 = vld [vmem:[#allocation8 + $0x238] sm:$0xff]
    %v1629 = vld [vmem:[#allocation8 + $0x240] sm:$0xff]
    %v1630 = vld [vmem:[#allocation8 + $0x248] sm:$0xff]
    %v1631 = vld [vmem:[#allocation8 + $0x250] sm:$0xff]
    %v1632 = vld [vmem:[#allocation8 + $0x258] sm:$0xff]
    %v1633 = vld [vmem:[#allocation8 + $0x260] sm:$0xff]
    %v1634 = vld [vmem:[#allocation8 + $0x268] sm:$0xff]
    %v1635 = vld [vmem:[#allocation8 + $0x270] sm:$0xff]
    %v1636 = vld [vmem:[#allocation8 + $0x278] sm:$0xff]
    %v1637 = vld [vmem:[#allocation8 + $0x280] sm:$0xff]
    %v1638 = vld [vmem:[#allocation8 + $0x288] sm:$0xff]
    %v1639 = vld [vmem:[#allocation8 + $0x290] sm:$0xff]
    %v1640 = vld [vmem:[#allocation8 + $0x298] sm:$0xff]
    %v1641 = vld [vmem:[#allocation8 + $0x2a0] sm:$0xff]
    %v1642 = vld [vmem:[#allocation8 + $0x2a8] sm:$0xff]
    %v1643 = vld [vmem:[#allocation8 + $0x2b0] sm:$0xff]
    %v1644 = vld [vmem:[#allocation8 + $0x2b8] sm:$0xff]
    %v1645 = vld [vmem:[#allocation8 + $0x2c0] sm:$0xff]
    %v1646 = vld [vmem:[#allocation8 + $0x2c8] sm:$0xff]
    %v1647 = vld [vmem:[#allocation8 + $0x2d0] sm:$0xff]
    %v1648 = vld [vmem:[#allocation8 + $0x2d8] sm:$0xff]
    %v1649 = vld [vmem:[#allocation8 + $0x2e0] sm:$0xff]
    %v1650 = vld [vmem:[#allocation8 + $0x2e8] sm:$0xff]
    %v1651 = vld [vmem:[#allocation8 + $0x2f0] sm:$0xff]
    %v1652 = vld [vmem:[#allocation8 + $0x2f8] sm:$0xff]
    %v1653 = vld [vmem:[#allocation8 + $0x300] sm:$0xff]
    %v1654 = vld [vmem:[#allocation8 + $0x308] sm:$0xff]
    %v1655 = vld [vmem:[#allocation8 + $0x310] sm:$0xff]
    %v1656 = vld [vmem:[#allocation8 + $0x318] sm:$0xff]
    %v1657 = vld [vmem:[#allocation8 + $0x320] sm:$0xff]
    %v1658 = vld [vmem:[#allocation8 + $0x328] sm:$0xff]
    %v1659 = vld [vmem:[#allocation8 + $0x330] sm:$0xff]
    %v1660 = vld [vmem:[#allocation8 + $0x338] sm:$0xff]
    %v1661 = vld [vmem:[#allocation8 + $0x340] sm:$0xff]
    %v1662 = vld [vmem:[#allocation8 + $0x348] sm:$0xff]
    %v1663 = vld [vmem:[#allocation8 + $0x350] sm:$0xff]
    %v1664 = vld [vmem:[#allocation8 + $0x358] sm:$0xff]
    %v1665 = vld [vmem:[#allocation8 + $0x360] sm:$0xff]
    %v1666 = vld [vmem:[#allocation8 + $0x368] sm:$0xff]
    %v1667 = vld [vmem:[#allocation8 + $0x370] sm:$0xff]
    %v1668 = vld [vmem:[#allocation8 + $0x378] sm:$0xff]
    %v1669 = vld [vmem:[#allocation8 + $0x380] sm:$0xff]
    %v1670 = vld [vmem:[#allocation8 + $0x388] sm:$0xff]
    %v1671 = vld [vmem:[#allocation8 + $0x390] sm:$0xff]
    %v1672 = vld [vmem:[#allocation8 + $0x398] sm:$0xff]
    %v1673 = vld [vmem:[#allocation8 + $0x3a0] sm:$0xff]
    %v1674 = vld [vmem:[#allocation8 + $0x3a8] sm:$0xff]
    %v1675 = vld [vmem:[#allocation8 + $0x3b0] sm:$0xff]
    %v1676 = vld [vmem:[#allocation8 + $0x3b8] sm:$0xff]
    %v1677 = vld [vmem:[#allocation8 + $0x3c0] sm:$0xff]
    %v1678 = vld [vmem:[#allocation8 + $0x3c8] sm:$0xff]
    %v1679 = vld [vmem:[#allocation8 + $0x3d0] sm:$0xff]
    %v1680 = vld [vmem:[#allocation8 + $0x3d8] sm:$0xff]
    %v1681 = vld [vmem:[#allocation8 + $0x3e0] sm:$0xff]
    %v1682 = vld [vmem:[#allocation8 + $0x3e8] sm:$0xff]
    %v1683 = vld [vmem:[#allocation8 + $0x3f0] sm:$0xff]
    %v1684 = vld [vmem:[#allocation8 + $0x3f8] sm:$0xff]
    %v1685 = vld [vmem:[#allocation8 + $0x400] sm:$0xff]
    %v1686 = vld [vmem:[#allocation8 + $0x408] sm:$0xff]
    %v1687 = vld [vmem:[#allocation8 + $0x410] sm:$0xff]
    %v1688 = vld [vmem:[#allocation8 + $0x418] sm:$0xff]
    %v1689 = vld [vmem:[#allocation8 + $0x420] sm:$0xff]
    %v1690 = vld [vmem:[#allocation8 + $0x428] sm:$0xff]
    %v1691 = vld [vmem:[#allocation8 + $0x430] sm:$0xff]
    %v1692 = vld [vmem:[#allocation8 + $0x438] sm:$0xff]
    %v1693 = vld [vmem:[#allocation8 + $0x440] sm:$0xff]
    %v1694 = vld [vmem:[#allocation8 + $0x448] sm:$0xff]
    %v1695 = vld [vmem:[#allocation8 + $0x450] sm:$0xff]
    %v1696 = vld [vmem:[#allocation8 + $0x458] sm:$0xff]
    %v1697 = vld [vmem:[#allocation8 + $0x460] sm:$0xff]
    %v1698 = vld [vmem:[#allocation8 + $0x468] sm:$0xff]
    %v1699 = vld [vmem:[#allocation8 + $0x470] sm:$0xff]
    %v1700 = vld [vmem:[#allocation8 + $0x478] sm:$0xff]
    %v1701 = vld [vmem:[#allocation8 + $0x480] sm:$0xff]
    %v1702 = vld [vmem:[#allocation8 + $0x488] sm:$0xff]
    %v1703 = vld [vmem:[#allocation8 + $0x490] sm:$0xff]
    %v1704 = vld [vmem:[#allocation8 + $0x498] sm:$0xff]
    %v1705 = vld [vmem:[#allocation8 + $0x4a0] sm:$0xff]
    %v1706 = vld [vmem:[#allocation8 + $0x4a8] sm:$0xff]
    %v1707 = vld [vmem:[#allocation8 + $0x4b0] sm:$0xff]
    %v1708 = vld [vmem:[#allocation8 + $0x4b8] sm:$0xff]
    %v1709 = vld [vmem:[#allocation8 + $0x4c0] sm:$0xff]
    %v1710 = vld [vmem:[#allocation8 + $0x4c8] sm:$0xff]
    %v1711 = vld [vmem:[#allocation8 + $0x4d0] sm:$0xff]
    %v1712 = vld [vmem:[#allocation8 + $0x4d8] sm:$0xff]
    %v1713 = vld [vmem:[#allocation8 + $0x4e0] sm:$0xff]
    %v1714 = vld [vmem:[#allocation8 + $0x4e8] sm:$0xff]
    %v1715 = vld [vmem:[#allocation8 + $0x4f0] sm:$0xff]
    %v1716 = vld [vmem:[#allocation8 + $0x4f8] sm:$0xff]
    %v1717 = vld [vmem:[#allocation8 + $0x500] sm:$0xff]
    %v1718 = vld [vmem:[#allocation8 + $0x508] sm:$0xff]
    %v1719 = vld [vmem:[#allocation8 + $0x510] sm:$0xff]
    %v1720 = vld [vmem:[#allocation8 + $0x518] sm:$0xff]
    %v1721 = vld [vmem:[#allocation8 + $0x520] sm:$0xff]
    %v1722 = vld [vmem:[#allocation8 + $0x528] sm:$0xff]
    %v1723 = vld [vmem:[#allocation8 + $0x530] sm:$0xff]
    %v1724 = vld [vmem:[#allocation8 + $0x538] sm:$0xff]
    %v1725 = vld [vmem:[#allocation8 + $0x540] sm:$0xff]
    %v1726 = vld [vmem:[#allocation8 + $0x548] sm:$0xff]
    %v1727 = vld [vmem:[#allocation8 + $0x550] sm:$0xff]
    %v1728 = vld [vmem:[#allocation8 + $0x558] sm:$0xff]
    %v1729 = vld [vmem:[#allocation8 + $0x560] sm:$0xff]
    %v1730 = vld [vmem:[#allocation8 + $0x568] sm:$0xff]
    %v1731 = vld [vmem:[#allocation8 + $0x570] sm:$0xff]
    %v1732 = vld [vmem:[#allocation8 + $0x578] sm:$0xff]
    %v1733 = vld [vmem:[#allocation8 + $0x580] sm:$0xff]
    %v1734 = vld [vmem:[#allocation8 + $0x588] sm:$0xff]
    %v1735 = vld [vmem:[#allocation8 + $0x590] sm:$0xff]
    %v1736 = vld [vmem:[#allocation8 + $0x598] sm:$0xff]
    %v1737 = vld [vmem:[#allocation8 + $0x5a0] sm:$0xff]
    %v1738 = vld [vmem:[#allocation8 + $0x5a8] sm:$0xff]
    %v1739 = vld [vmem:[#allocation8 + $0x5b0] sm:$0xff]
    %v1740 = vld [vmem:[#allocation8 + $0x5b8] sm:$0xff]
    %v1741 = vld [vmem:[#allocation8 + $0x5c0] sm:$0xff]
    %v1742 = vld [vmem:[#allocation8 + $0x5c8] sm:$0xff]
    %v1743 = vld [vmem:[#allocation8 + $0x5d0] sm:$0xff]
    %v1744 = vld [vmem:[#allocation8 + $0x5d8] sm:$0xff]
    %v1745 = vld [vmem:[#allocation8 + $0x5e0] sm:$0xff]
    %v1746 = vld [vmem:[#allocation8 + $0x5e8] sm:$0xff]
    %v1747 = vld [vmem:[#allocation8 + $0x5f0] sm:$0xff]
    %v1748 = vld [vmem:[#allocation8 + $0x5f8] sm:$0xff]
    %v1749 = vld [vmem:[#allocation8 + $0x600] sm:$0xff]
    %v1750 = vld [vmem:[#allocation8 + $0x608] sm:$0xff]
    %v1751 = vld [vmem:[#allocation8 + $0x610] sm:$0xff]
    %v1752 = vld [vmem:[#allocation8 + $0x618] sm:$0xff]
    %v1753 = vld [vmem:[#allocation8 + $0x620] sm:$0xff]
    %v1754 = vld [vmem:[#allocation8 + $0x628] sm:$0xff]
    %v1755 = vld [vmem:[#allocation8 + $0x630] sm:$0xff]
    %v1756 = vld [vmem:[#allocation8 + $0x638] sm:$0xff]
    %v1757 = vld [vmem:[#allocation8 + $0x640] sm:$0xff]
    %v1758 = vld [vmem:[#allocation8 + $0x648] sm:$0xff]
    %v1759 = vld [vmem:[#allocation8 + $0x650] sm:$0xff]
    %v1760 = vld [vmem:[#allocation8 + $0x658] sm:$0xff]
    %v1761 = vld [vmem:[#allocation8 + $0x660] sm:$0xff]
    %v1762 = vld [vmem:[#allocation8 + $0x668] sm:$0xff]
    %v1763 = vld [vmem:[#allocation8 + $0x670] sm:$0xff]
    %v1764 = vld [vmem:[#allocation8 + $0x678] sm:$0xff]
    %v1765 = vld [vmem:[#allocation8 + $0x680] sm:$0xff]
    %v1766 = vld [vmem:[#allocation8 + $0x688] sm:$0xff]
    %v1767 = vld [vmem:[#allocation8 + $0x690] sm:$0xff]
    %v1768 = vld [vmem:[#allocation8 + $0x698] sm:$0xff]
    %v1769 = vld [vmem:[#allocation8 + $0x6a0] sm:$0xff]
    %v1770 = vld [vmem:[#allocation8 + $0x6a8] sm:$0xff]
    %v1771 = vld [vmem:[#allocation8 + $0x6b0] sm:$0xff]
    %v1772 = vld [vmem:[#allocation8 + $0x6b8] sm:$0xff]
    %v1773 = vld [vmem:[#allocation8 + $0x6c0] sm:$0xff]
    %v1774 = vld [vmem:[#allocation8 + $0x6c8] sm:$0xff]
    %v1775 = vld [vmem:[#allocation8 + $0x6d0] sm:$0xff]
    %v1776 = vld [vmem:[#allocation8 + $0x6d8] sm:$0xff]
    %v1777 = vld [vmem:[#allocation8 + $0x6e0] sm:$0xff]
    %v1778 = vld [vmem:[#allocation8 + $0x6e8] sm:$0xff]
    %v1779 = vld [vmem:[#allocation8 + $0x6f0] sm:$0xff]
    %v1780 = vld [vmem:[#allocation8 + $0x6f8] sm:$0xff]
    %v1781 = vld [vmem:[#allocation8 + $0x700] sm:$0xff]
    %v1782 = vld [vmem:[#allocation8 + $0x708] sm:$0xff]
    %v1783 = vld [vmem:[#allocation8 + $0x710] sm:$0xff]
    %v1784 = vld [vmem:[#allocation8 + $0x718] sm:$0xff]
    %v1785 = vld [vmem:[#allocation8 + $0x720] sm:$0xff]
    %v1786 = vld [vmem:[#allocation8 + $0x728] sm:$0xff]
    %v1787 = vld [vmem:[#allocation8 + $0x730] sm:$0xff]
    %v1788 = vld [vmem:[#allocation8 + $0x738] sm:$0xff]
    %v1789 = vld [vmem:[#allocation8 + $0x740] sm:$0xff]
    %v1790 = vld [vmem:[#allocation8 + $0x748] sm:$0xff]
    %v1791 = vld [vmem:[#allocation8 + $0x750] sm:$0xff]
    %v1792 = vld [vmem:[#allocation8 + $0x758] sm:$0xff]
    %v1793 = vld [vmem:[#allocation8 + $0x760] sm:$0xff]
    %v1794 = vld [vmem:[#allocation8 + $0x768] sm:$0xff]
    %v1795 = vld [vmem:[#allocation8 + $0x770] sm:$0xff]
    %v1796 = vld [vmem:[#allocation8 + $0x778] sm:$0xff]
    %v1797 = vld [vmem:[#allocation8 + $0x780] sm:$0xff]
    %v1798 = vld [vmem:[#allocation8 + $0x788] sm:$0xff]
    %v1799 = vld [vmem:[#allocation8 + $0x790] sm:$0xff]
    %v1800 = vld [vmem:[#allocation8 + $0x798] sm:$0xff]
    %v1801 = vld [vmem:[#allocation8 + $0x7a0] sm:$0xff]
    %v1802 = vld [vmem:[#allocation8 + $0x7a8] sm:$0xff]
    %v1803 = vld [vmem:[#allocation8 + $0x7b0] sm:$0xff]
    %v1804 = vld [vmem:[#allocation8 + $0x7b8] sm:$0xff]
    %v1805 = vld [vmem:[#allocation8 + $0x7c0] sm:$0xff]
    %v1806 = vld [vmem:[#allocation8 + $0x7c8] sm:$0xff]
    %v1807 = vld [vmem:[#allocation8 + $0x7d0] sm:$0xff]
    %v1808 = vld [vmem:[#allocation8 + $0x7d8] sm:$0xff]
    %v1809 = vld [vmem:[#allocation8 + $0x7e0] sm:$0xff]
    %v1810 = vld [vmem:[#allocation8 + $0x7e8] sm:$0xff]
    %v1811 = vld [vmem:[#allocation8 + $0x7f0] sm:$0xff]
    %v1812 = vld [vmem:[#allocation8 + $0x7f8] sm:$0xff]
    %v1813 = vld [vmem:[#allocation8 + $0x800] sm:$0xff]
    %v1814 = vld [vmem:[#allocation8 + $0x808] sm:$0xff]
    %v1815 = vld [vmem:[#allocation8 + $0x810] sm:$0xff]
    %v1816 = vld [vmem:[#allocation8 + $0x818] sm:$0xff]
    %v1817 = vld [vmem:[#allocation8 + $0x820] sm:$0xff]
    %v1818 = vld [vmem:[#allocation8 + $0x828] sm:$0xff]
    %v1819 = vld [vmem:[#allocation8 + $0x830] sm:$0xff]
    %v1820 = vld [vmem:[#allocation8 + $0x838] sm:$0xff]
    %v1821 = vld [vmem:[#allocation8 + $0x840] sm:$0xff]
    %v1822 = vld [vmem:[#allocation8 + $0x848] sm:$0xff]
    %v1823 = vld [vmem:[#allocation8 + $0x850] sm:$0xff]
    %v1824 = vld [vmem:[#allocation8 + $0x858] sm:$0xff]
    %v1825 = vld [vmem:[#allocation8 + $0x860] sm:$0xff]
    %v1826 = vld [vmem:[#allocation8 + $0x868] sm:$0xff]
    %v1827 = vld [vmem:[#allocation8 + $0x870] sm:$0xff]
    %v1828 = vld [vmem:[#allocation8 + $0x878] sm:$0xff]
    %v1829 = vld [vmem:[#allocation8 + $0x880] sm:$0xff]
    %v1830 = vld [vmem:[#allocation8 + $0x888] sm:$0xff]
    %v1831 = vld [vmem:[#allocation8 + $0x890] sm:$0xff]
    %v1832 = vld [vmem:[#allocation8 + $0x898] sm:$0xff]
    %v1833 = vld [vmem:[#allocation8 + $0x8a0] sm:$0xff]
    %v1834 = vld [vmem:[#allocation8 + $0x8a8] sm:$0xff]
    %v1835 = vld [vmem:[#allocation8 + $0x8b0] sm:$0xff]
    %v1836 = vld [vmem:[#allocation8 + $0x8b8] sm:$0xff]
    %v1837 = vld [vmem:[#allocation8 + $0x8c0] sm:$0xff]
    %v1838 = vld [vmem:[#allocation8 + $0x8c8] sm:$0xff]
    %v1839 = vld [vmem:[#allocation8 + $0x8d0] sm:$0xff]
    %v1840 = vld [vmem:[#allocation8 + $0x8d8] sm:$0xff]
    %v1841 = vld [vmem:[#allocation8 + $0x8e0] sm:$0xff]
    %v1842 = vld [vmem:[#allocation8 + $0x8e8] sm:$0xff]
    %v1843 = vld [vmem:[#allocation8 + $0x8f0] sm:$0xff]
    %v1844 = vld [vmem:[#allocation8 + $0x8f8] sm:$0xff]
    %v1845 = vld [vmem:[#allocation8 + $0x900] sm:$0xff]
    %v1846 = vld [vmem:[#allocation8 + $0x908] sm:$0xff]
    %v1847 = vld [vmem:[#allocation8 + $0x910] sm:$0xff]
    %v1848 = vld [vmem:[#allocation8 + $0x918] sm:$0xff]
    %v1849 = vld [vmem:[#allocation8 + $0x920] sm:$0xff]
    %v1850 = vld [vmem:[#allocation8 + $0x928] sm:$0xff]
    %v1851 = vld [vmem:[#allocation8 + $0x930] sm:$0xff]
    %v1852 = vld [vmem:[#allocation8 + $0x938] sm:$0xff]
    %v1853 = vld [vmem:[#allocation8 + $0x940] sm:$0xff]
    %v1854 = vld [vmem:[#allocation8 + $0x948] sm:$0xff]
    %v1855 = vld [vmem:[#allocation8 + $0x950] sm:$0xff]
    %v1856 = vld [vmem:[#allocation8 + $0x958] sm:$0xff]
    %v1857 = vld [vmem:[#allocation8 + $0x960] sm:$0xff]
    %v1858 = vld [vmem:[#allocation8 + $0x968] sm:$0xff]
    %v1859 = vld [vmem:[#allocation8 + $0x970] sm:$0xff]
    %v1860 = vld [vmem:[#allocation8 + $0x978] sm:$0xff]
    %v1861 = vld [vmem:[#allocation8 + $0x980] sm:$0xff]
    %v1862 = vld [vmem:[#allocation8 + $0x988] sm:$0xff]
    %v1863 = vld [vmem:[#allocation8 + $0x990] sm:$0xff]
    %v1864 = vld [vmem:[#allocation8 + $0x998] sm:$0xff]
    %v1865 = vld [vmem:[#allocation8 + $0x9a0] sm:$0xff]
    %v1866 = vld [vmem:[#allocation8 + $0x9a8] sm:$0xff]
    %v1867 = vld [vmem:[#allocation8 + $0x9b0] sm:$0xff]
    %v1868 = vld [vmem:[#allocation8 + $0x9b8] sm:$0xff]
    %v1869 = vld [vmem:[#allocation8 + $0x9c0] sm:$0xff]
    %v1870 = vld [vmem:[#allocation8 + $0x9c8] sm:$0xff]
    %v1871 = vld [vmem:[#allocation8 + $0x9d0] sm:$0xff]
    %v1872 = vld [vmem:[#allocation8 + $0x9d8] sm:$0xff]
    %v1873 = vld [vmem:[#allocation8 + $0x9e0] sm:$0xff]
    %v1874 = vld [vmem:[#allocation8 + $0x9e8] sm:$0xff]
    %v1875 = vld [vmem:[#allocation8 + $0x9f0] sm:$0xff]
    %v1876 = vld [vmem:[#allocation8 + $0x9f8] sm:$0xff]
    %v1877 = vld [vmem:[#allocation8 + $0xa00] sm:$0xff]
    %v1878 = vld [vmem:[#allocation8 + $0xa08] sm:$0xff]
    %v1879 = vld [vmem:[#allocation8 + $0xa10] sm:$0xff]
    %v1880 = vld [vmem:[#allocation8 + $0xa18] sm:$0xff]
    %v1881 = vld [vmem:[#allocation8 + $0xa20] sm:$0xff]
    %v1882 = vld [vmem:[#allocation8 + $0xa28] sm:$0xff]
    %v1883 = vld [vmem:[#allocation8 + $0xa30] sm:$0xff]
    %v1884 = vld [vmem:[#allocation8 + $0xa38] sm:$0xff]
    %v1885 = vld [vmem:[#allocation8 + $0xa40] sm:$0xff]
    %v1886 = vld [vmem:[#allocation8 + $0xa48] sm:$0xff]
    %v1887 = vld [vmem:[#allocation8 + $0xa50] sm:$0xff]
    %v1888 = vld [vmem:[#allocation8 + $0xa58] sm:$0xff]
    %v1889 = vld [vmem:[#allocation8 + $0xa60] sm:$0xff]
    %v1890 = vld [vmem:[#allocation8 + $0xa68] sm:$0xff]
    %v1891 = vld [vmem:[#allocation8 + $0xa70] sm:$0xff]
    %v1892 = vld [vmem:[#allocation8 + $0xa78] sm:$0xff]
    %v1893 = vld [vmem:[#allocation8 + $0xa80] sm:$0xff]
    %v1894 = vld [vmem:[#allocation8 + $0xa88] sm:$0xff]
    %v1895 = vld [vmem:[#allocation8 + $0xa90] sm:$0xff]
    %v1896 = vld [vmem:[#allocation8 + $0xa98] sm:$0xff]
    %v1897 = vld [vmem:[#allocation8 + $0xaa0] sm:$0xff]
    %v1898 = vld [vmem:[#allocation8 + $0xaa8] sm:$0xff]
    %v1899 = vld [vmem:[#allocation8 + $0xab0] sm:$0xff]
    %v1900 = vld [vmem:[#allocation8 + $0xab8] sm:$0xff]
    %v1901 = vld [vmem:[#allocation8 + $0xac0] sm:$0xff]
    %v1902 = vld [vmem:[#allocation8 + $0xac8] sm:$0xff]
    %v1903 = vld [vmem:[#allocation8 + $0xad0] sm:$0xff]
    %v1904 = vld [vmem:[#allocation8 + $0xad8] sm:$0xff]
    %v1905 = vld [vmem:[#allocation8 + $0xae0] sm:$0xff]
    %v1906 = vld [vmem:[#allocation8 + $0xae8] sm:$0xff]
    %v1907 = vld [vmem:[#allocation8 + $0xaf0] sm:$0xff]
    %v1908 = vld [vmem:[#allocation8 + $0xaf8] sm:$0xff]
    %v1909 = vld [vmem:[#allocation8 + $0xb00] sm:$0xff]
    %v1910 = vld [vmem:[#allocation8 + $0xb08] sm:$0xff]
    %v1911 = vld [vmem:[#allocation8 + $0xb10] sm:$0xff]
    %v1912 = vld [vmem:[#allocation8 + $0xb18] sm:$0xff]
    %v1913 = vld [vmem:[#allocation8 + $0xb20] sm:$0xff]
    %v1914 = vld [vmem:[#allocation8 + $0xb28] sm:$0xff]
    %v1915 = vld [vmem:[#allocation8 + $0xb30] sm:$0xff]
    %v1916 = vld [vmem:[#allocation8 + $0xb38] sm:$0xff]
    %v1917 = vld [vmem:[#allocation8 + $0xb40] sm:$0xff]
    %v1918 = vld [vmem:[#allocation8 + $0xb48] sm:$0xff]
    %v1919 = vld [vmem:[#allocation8 + $0xb50] sm:$0xff]
    %v1920 = vld [vmem:[#allocation8 + $0xb58] sm:$0xff]
    %v1921 = vld [vmem:[#allocation8 + $0xb60] sm:$0xff]
    %v1922 = vld [vmem:[#allocation8 + $0xb68] sm:$0xff]
    %v1923 = vld [vmem:[#allocation8 + $0xb70] sm:$0xff]
    %v1924 = vld [vmem:[#allocation8 + $0xb78] sm:$0xff]
    %v1925 = vld [vmem:[#allocation8 + $0xb80] sm:$0xff]
    %v1926 = vld [vmem:[#allocation8 + $0xb88] sm:$0xff]
    %v1927 = vld [vmem:[#allocation8 + $0xb90] sm:$0xff]
    %v1928 = vld [vmem:[#allocation8 + $0xb98] sm:$0xff]
    %v1929 = vld [vmem:[#allocation8 + $0xba0] sm:$0xff]
    %v1930 = vld [vmem:[#allocation8 + $0xba8] sm:$0xff]
    %v1931 = vld [vmem:[#allocation8 + $0xbb0] sm:$0xff]
    %v1932 = vld [vmem:[#allocation8 + $0xbb8] sm:$0xff]
    %v1933 = vld [vmem:[#allocation8 + $0xbc0] sm:$0xff]
    %v1934 = vld [vmem:[#allocation8 + $0xbc8] sm:$0xff]
    %v1935 = vld [vmem:[#allocation8 + $0xbd0] sm:$0xff]
    %v1936 = vld [vmem:[#allocation8 + $0xbd8] sm:$0xff]
    %v1937 = vld [vmem:[#allocation8 + $0xbe0] sm:$0xff]
    %v1938 = vld [vmem:[#allocation8 + $0xbe8] sm:$0xff]
    %v1939 = vld [vmem:[#allocation8 + $0xbf0] sm:$0xff]
    %v1940 = vld [vmem:[#allocation8 + $0xbf8] sm:$0xff]
    %v1941 = vld [vmem:[#allocation8 + $0xc00] sm:$0xff]
    %v1942 = vld [vmem:[#allocation8 + $0xc08] sm:$0xff]
    %v1943 = vld [vmem:[#allocation8 + $0xc10] sm:$0xff]
    %v1944 = vld [vmem:[#allocation8 + $0xc18] sm:$0xff]
    %v1945 = vld [vmem:[#allocation8 + $0xc20] sm:$0xff]
    %v1946 = vld [vmem:[#allocation8 + $0xc28] sm:$0xff]
    %v1947 = vld [vmem:[#allocation8 + $0xc30] sm:$0xff]
    %v1948 = vld [vmem:[#allocation8 + $0xc38] sm:$0xff]
    %v1949 = vld [vmem:[#allocation8 + $0xc40] sm:$0xff]
    %v1950 = vld [vmem:[#allocation8 + $0xc48] sm:$0xff]
    %v1951 = vld [vmem:[#allocation8 + $0xc50] sm:$0xff]
    %v1952 = vld [vmem:[#allocation8 + $0xc58] sm:$0xff]
    %v1953 = vld [vmem:[#allocation8 + $0xc60] sm:$0xff]
    %v1954 = vld [vmem:[#allocation8 + $0xc68] sm:$0xff]
    %v1955 = vld [vmem:[#allocation8 + $0xc70] sm:$0xff]
    %v1956 = vld [vmem:[#allocation8 + $0xc78] sm:$0xff]
    %v1957 = vld [vmem:[#allocation8 + $0xc80] sm:$0xff]
    %v1958 = vld [vmem:[#allocation8 + $0xc88] sm:$0xff]
    %v1959 = vld [vmem:[#allocation8 + $0xc90] sm:$0xff]
    %v1960 = vld [vmem:[#allocation8 + $0xc98] sm:$0xff]
    %v1961 = vld [vmem:[#allocation8 + $0xca0] sm:$0xff]
    %v1962 = vld [vmem:[#allocation8 + $0xca8] sm:$0xff]
    %v1963 = vld [vmem:[#allocation8 + $0xcb0] sm:$0xff]
    %v1964 = vld [vmem:[#allocation8 + $0xcb8] sm:$0xff]
    %v1965 = vld [vmem:[#allocation8 + $0xcc0] sm:$0xff]
    %v1966 = vld [vmem:[#allocation8 + $0xcc8] sm:$0xff]
    %v1967 = vld [vmem:[#allocation8 + $0xcd0] sm:$0xff]
    %v1968 = vld [vmem:[#allocation8 + $0xcd8] sm:$0xff]
    %v1969 = vld [vmem:[#allocation8 + $0xce0] sm:$0xff]
    %v1970 = vld [vmem:[#allocation8 + $0xce8] sm:$0xff]
    %v1971 = vld [vmem:[#allocation8 + $0xcf0] sm:$0xff]
    %v1972 = vld [vmem:[#allocation8 + $0xcf8] sm:$0xff]
    %v1973 = vld [vmem:[#allocation8 + $0xd00] sm:$0xff]
    %v1974 = vld [vmem:[#allocation8 + $0xd08] sm:$0xff]
    %v1975 = vld [vmem:[#allocation8 + $0xd10] sm:$0xff]
    %v1976 = vld [vmem:[#allocation8 + $0xd18] sm:$0xff]
    %v1977 = vld [vmem:[#allocation8 + $0xd20] sm:$0xff]
    %v1978 = vld [vmem:[#allocation8 + $0xd28] sm:$0xff]
    %v1979 = vld [vmem:[#allocation8 + $0xd30] sm:$0xff]
    %v1980 = vld [vmem:[#allocation8 + $0xd38] sm:$0xff]
    %v1981 = vld [vmem:[#allocation8 + $0xd40] sm:$0xff]
    %v1982 = vld [vmem:[#allocation8 + $0xd48] sm:$0xff]
    %v1983 = vld [vmem:[#allocation8 + $0xd50] sm:$0xff]
    %v1984 = vld [vmem:[#allocation8 + $0xd58] sm:$0xff]
    %v1985 = vld [vmem:[#allocation8 + $0xd60] sm:$0xff]
    %v1986 = vld [vmem:[#allocation8 + $0xd68] sm:$0xff]
    %v1987 = vld [vmem:[#allocation8 + $0xd70] sm:$0xff]
    %v1988 = vld [vmem:[#allocation8 + $0xd78] sm:$0xff]
    %v1989 = vld [vmem:[#allocation8 + $0xd80] sm:$0xff]
    %v1990 = vld [vmem:[#allocation8 + $0xd88] sm:$0xff]
    %v1991 = vld [vmem:[#allocation8 + $0xd90] sm:$0xff]
    %v1992 = vld [vmem:[#allocation8 + $0xd98] sm:$0xff]
    %v1993 = vld [vmem:[#allocation8 + $0xda0] sm:$0xff]
    %v1994 = vld [vmem:[#allocation8 + $0xda8] sm:$0xff]
    %v1995 = vld [vmem:[#allocation8 + $0xdb0] sm:$0xff]
    %v1996 = vld [vmem:[#allocation8 + $0xdb8] sm:$0xff]
    %v1997 = vld [vmem:[#allocation8 + $0xdc0] sm:$0xff]
    %v1998 = vld [vmem:[#allocation8 + $0xdc8] sm:$0xff]
    %v1999 = vld [vmem:[#allocation8 + $0xdd0] sm:$0xff]
    %v2000 = vld [vmem:[#allocation8 + $0xdd8] sm:$0xff]
    %v2001 = vld [vmem:[#allocation8 + $0xde0] sm:$0xff]
    %v2002 = vld [vmem:[#allocation8 + $0xde8] sm:$0xff]
    %v2003 = vld [vmem:[#allocation8 + $0xdf0] sm:$0xff]
    %v2004 = vld [vmem:[#allocation8 + $0xdf8] sm:$0xff]
    %v2005 = vld [vmem:[#allocation8 + $0xe00] sm:$0xff]
    %v2006 = vld [vmem:[#allocation8 + $0xe08] sm:$0xff]
    %v2007 = vld [vmem:[#allocation8 + $0xe10] sm:$0xff]
    %v2008 = vld [vmem:[#allocation8 + $0xe18] sm:$0xff]
    %v2009 = vld [vmem:[#allocation8 + $0xe20] sm:$0xff]
    %v2010 = vld [vmem:[#allocation8 + $0xe28] sm:$0xff]
    %v2011 = vld [vmem:[#allocation8 + $0xe30] sm:$0xff]
    %v2012 = vld [vmem:[#allocation8 + $0xe38] sm:$0xff]
    %v2013 = vld [vmem:[#allocation8 + $0xe40] sm:$0xff]
    %v2014 = vld [vmem:[#allocation8 + $0xe48] sm:$0xff]
    %v2015 = vld [vmem:[#allocation8 + $0xe50] sm:$0xff]
    %v2016 = vld [vmem:[#allocation8 + $0xe58] sm:$0xff]
    %v2017 = vld [vmem:[#allocation8 + $0xe60] sm:$0xff]
    %v2018 = vld [vmem:[#allocation8 + $0xe68] sm:$0xff]
    %v2019 = vld [vmem:[#allocation8 + $0xe70] sm:$0xff]
    %v2020 = vld [vmem:[#allocation8 + $0xe78] sm:$0xff]
    %v2021 = vld [vmem:[#allocation8 + $0xe80] sm:$0xff]
    %v2022 = vld [vmem:[#allocation8 + $0xe88] sm:$0xff]
    %v2023 = vld [vmem:[#allocation8 + $0xe90] sm:$0xff]
    %v2024 = vld [vmem:[#allocation8 + $0xe98] sm:$0xff]
    %v2025 = vld [vmem:[#allocation8 + $0xea0] sm:$0xff]
    %v2026 = vld [vmem:[#allocation8 + $0xea8] sm:$0xff]
    %v2027 = vld [vmem:[#allocation8 + $0xeb0] sm:$0xff]
    %v2028 = vld [vmem:[#allocation8 + $0xeb8] sm:$0xff]
    %v2029 = vld [vmem:[#allocation8 + $0xec0] sm:$0xff]
    %v2030 = vld [vmem:[#allocation8 + $0xec8] sm:$0xff]
    %v2031 = vld [vmem:[#allocation8 + $0xed0] sm:$0xff]
    %v2032 = vld [vmem:[#allocation8 + $0xed8] sm:$0xff]
    %v2033 = vld [vmem:[#allocation8 + $0xee0] sm:$0xff]
    %v2034 = vld [vmem:[#allocation8 + $0xee8] sm:$0xff]
    %v2035 = vld [vmem:[#allocation8 + $0xef0] sm:$0xff]
    %v2036 = vld [vmem:[#allocation8 + $0xef8] sm:$0xff]
    %v2037 = vld [vmem:[#allocation8 + $0xf00] sm:$0xff]
    %v2038 = vld [vmem:[#allocation8 + $0xf08] sm:$0xff]
    %v2039 = vld [vmem:[#allocation8 + $0xf10] sm:$0xff]
    %v2040 = vld [vmem:[#allocation8 + $0xf18] sm:$0xff]
    %v2041 = vld [vmem:[#allocation8 + $0xf20] sm:$0xff]
    %v2042 = vld [vmem:[#allocation8 + $0xf28] sm:$0xff]
    %v2043 = vld [vmem:[#allocation8 + $0xf30] sm:$0xff]
    %v2044 = vld [vmem:[#allocation8 + $0xf38] sm:$0xff]
    %v2045 = vld [vmem:[#allocation8 + $0xf40] sm:$0xff]
    %v2046 = vld [vmem:[#allocation8 + $0xf48] sm:$0xff]
    %v2047 = vld [vmem:[#allocation8 + $0xf50] sm:$0xff]
    %v2048 = vld [vmem:[#allocation8 + $0xf58] sm:$0xff]
    %v2049 = vld [vmem:[#allocation8 + $0xf60] sm:$0xff]
    %v2050 = vld [vmem:[#allocation8 + $0xf68] sm:$0xff]
    %v2051 = vld [vmem:[#allocation8 + $0xf70] sm:$0xff]
    %v2052 = vld [vmem:[#allocation8 + $0xf78] sm:$0xff]
    %v2053 = vld [vmem:[#allocation8 + $0xf80] sm:$0xff]
    %v2054 = vld [vmem:[#allocation8 + $0xf88] sm:$0xff]
    %v2055 = vld [vmem:[#allocation8 + $0xf90] sm:$0xff]
    %v2056 = vld [vmem:[#allocation8 + $0xf98] sm:$0xff]
    %v2057 = vld [vmem:[#allocation8 + $0xfa0] sm:$0xff]
    %v2058 = vld [vmem:[#allocation8 + $0xfa8] sm:$0xff]
    %v2059 = vld [vmem:[#allocation8 + $0xfb0] sm:$0xff]
    %v2060 = vld [vmem:[#allocation8 + $0xfb8] sm:$0xff]
    %v2061 = vld [vmem:[#allocation8 + $0xfc0] sm:$0xff]
    %v2062 = vld [vmem:[#allocation8 + $0xfc8] sm:$0xff]
    %v2063 = vld [vmem:[#allocation8 + $0xfd0] sm:$0xff]
    %v2064 = vld [vmem:[#allocation8 + $0xfd8] sm:$0xff]
    %v2065 = vld [vmem:[#allocation8 + $0xfe0] sm:$0xff]
    %v2066 = vld [vmem:[#allocation8 + $0xfe8] sm:$0xff]
    %v2067 = vld [vmem:[#allocation8 + $0xff0] sm:$0xff]
    %v2068 = vld [vmem:[#allocation8 + $0xff8] sm:$0xff]
    %v2069 = vld [vmem:[#allocation8 + $0x1000] sm:$0xff]
    %v2070 = vld [vmem:[#allocation8 + $0x1008] sm:$0xff]
    %v2071 = vld [vmem:[#allocation8 + $0x1010] sm:$0xff]
    %v2072 = vld [vmem:[#allocation8 + $0x1018] sm:$0xff]
    %v2073 = vld [vmem:[#allocation8 + $0x1020] sm:$0xff]
    %v2074 = vld [vmem:[#allocation8 + $0x1028] sm:$0xff]
    %v2075 = vld [vmem:[#allocation8 + $0x1030] sm:$0xff]
    %v2076 = vld [vmem:[#allocation8 + $0x1038] sm:$0xff]
    %v2077 = vld [vmem:[#allocation8 + $0x1040] sm:$0xff]
    %v2078 = vld [vmem:[#allocation8 + $0x1048] sm:$0xff]
    %v2079 = vld [vmem:[#allocation8 + $0x1050] sm:$0xff]
    %v2080 = vld [vmem:[#allocation8 + $0x1058] sm:$0xff]
    %v2081 = vld [vmem:[#allocation8 + $0x1060] sm:$0xff]
    %v2082 = vld [vmem:[#allocation8 + $0x1068] sm:$0xff]
    %v2083 = vld [vmem:[#allocation8 + $0x1070] sm:$0xff]
    %v2084 = vld [vmem:[#allocation8 + $0x1078] sm:$0xff]
    %v2085 = vld [vmem:[#allocation8 + $0x1080] sm:$0xff]
    %v2086 = vld [vmem:[#allocation8 + $0x1088] sm:$0xff]
    %v2087 = vld [vmem:[#allocation8 + $0x1090] sm:$0xff]
    %v2088 = vld [vmem:[#allocation8 + $0x1098] sm:$0xff]
    %v2089 = vld [vmem:[#allocation8 + $0x10a0] sm:$0xff]
    %v2090 = vld [vmem:[#allocation8 + $0x10a8] sm:$0xff]
    %v2091 = vld [vmem:[#allocation8 + $0x10b0] sm:$0xff]
    %v2092 = vld [vmem:[#allocation8 + $0x10b8] sm:$0xff]
    %v2093 = vld [vmem:[#allocation8 + $0x10c0] sm:$0xff]
    %v2094 = vld [vmem:[#allocation8 + $0x10c8] sm:$0xff]
    %v2095 = vld [vmem:[#allocation8 + $0x10d0] sm:$0xff]
    %v2096 = vld [vmem:[#allocation8 + $0x10d8] sm:$0xff]
    %v2097 = vld [vmem:[#allocation8 + $0x10e0] sm:$0xff]
    %v2098 = vld [vmem:[#allocation8 + $0x10e8] sm:$0xff]
    %v2099 = vld [vmem:[#allocation8 + $0x10f0] sm:$0xff]
    %v2100 = vld [vmem:[#allocation8 + $0x10f8] sm:$0xff]
    %v2101 = vld [vmem:[#allocation8 + $0x1100] sm:$0xff]
    %v2102 = vld [vmem:[#allocation8 + $0x1108] sm:$0xff]
    %v2103 = vld [vmem:[#allocation8 + $0x1110] sm:$0xff]
    %v2104 = vld [vmem:[#allocation8 + $0x1118] sm:$0xff]
    %v2105 = vld [vmem:[#allocation8 + $0x1120] sm:$0xff]
    %v2106 = vld [vmem:[#allocation8 + $0x1128] sm:$0xff]
    %v2107 = vld [vmem:[#allocation8 + $0x1130] sm:$0xff]
    %v2108 = vld [vmem:[#allocation8 + $0x1138] sm:$0xff]
    %v2109 = vld [vmem:[#allocation8 + $0x1140] sm:$0xff]
    %v2110 = vld [vmem:[#allocation8 + $0x1148] sm:$0xff]
    %v2111 = vld [vmem:[#allocation8 + $0x1150] sm:$0xff]
    %v2112 = vld [vmem:[#allocation8 + $0x1158] sm:$0xff]
    %v2113 = vld [vmem:[#allocation8 + $0x1160] sm:$0xff]
    %v2114 = vld [vmem:[#allocation8 + $0x1168] sm:$0xff]
    %v2115 = vld [vmem:[#allocation8 + $0x1170] sm:$0xff]
    %v2116 = vld [vmem:[#allocation8 + $0x1178] sm:$0xff]
    %v2117 = vld [vmem:[#allocation8 + $0x1180] sm:$0xff]
    %v2118 = vld [vmem:[#allocation8 + $0x1188] sm:$0xff]
    %v2119 = vld [vmem:[#allocation8 + $0x1190] sm:$0xff]
    %v2120 = vld [vmem:[#allocation8 + $0x1198] sm:$0xff]
    %v2121 = vld [vmem:[#allocation8 + $0x11a0] sm:$0xff]
    %v2122 = vld [vmem:[#allocation8 + $0x11a8] sm:$0xff]
    %v2123 = vld [vmem:[#allocation8 + $0x11b0] sm:$0xff]
    %v2124 = vld [vmem:[#allocation8 + $0x11b8] sm:$0xff]
    %v2125 = vld [vmem:[#allocation8 + $0x11c0] sm:$0xff]
    %v2126 = vld [vmem:[#allocation8 + $0x11c8] sm:$0xff]
    %v2127 = vld [vmem:[#allocation8 + $0x11d0] sm:$0xff]
    %v2128 = vld [vmem:[#allocation8 + $0x11d8] sm:$0xff]
    %v2129 = vld [vmem:[#allocation8 + $0x11e0] sm:$0xff]
    %v2130 = vld [vmem:[#allocation8 + $0x11e8] sm:$0xff]
    %v2131 = vld [vmem:[#allocation8 + $0x11f0] sm:$0xff]
    %v2132 = vld [vmem:[#allocation8 + $0x11f8] sm:$0xff]
    %v2133 = vld [vmem:[#allocation10] sm:$0x7]
    %v2135 = vperm.slane %v2133, 0
    %v2136 = vperm.slane %v2133, 1
    %v2137 = vperm.slane %v2133, 2
    %2141 = vmatpush.msra.mxu0 %v1602
    %2142 = vmatpush.msra.mxu0 %v1599
    %2143 = vmatpush.msra.mxu0 %v1596
    %2144 = vmatpush.msra.mxu0 %v1593
    %2145 = vmatpush.msra.mxu0 %v1590
    %2146 = vmatpush.msra.mxu0 %v1587
    %2147 = vmatpush.msra.mxu0 %v1584
    %2148 = vmatpush.msra.mxu0 %v1581
    %2149 = vmatpush.msra.mxu0 %v1578
    %2150 = vmatpush.msra.mxu0 %v1575
    %2151 = vmatpush.msra.mxu0 %v1572
    %2152 = vmatpush.msra.mxu0 %v1569
    %2153 = vmatpush.msra.mxu0 %v1566
    %2154 = vmatpush.msra.mxu0 %v1563
    %2155 = vmatpush.msra.mxu0 %v1560
    %2156 = vmatpush.msra.mxu0 %v1557
    %2157 = vmatmul.f32.gmra.mxu0 %v1533
    %v2158 = vpop.f32.mrf.mxu0
    %v2159 = vadd.f32 %v2135, %v2158
    %2160 = vmatmul.f32.gmra.mxu0 %v1545
    %v2161 = vpop.f32.mrf.mxu0
    %v2162 = vadd.f32 %v2135, %v2161
    %2163 = vdwg.mxu0
    %2164 = vmatpush.msra.mxu0 %v1650
    %2165 = vmatpush.msra.mxu0 %v1647
    %2166 = vmatpush.msra.mxu0 %v1644
    %2167 = vmatpush.msra.mxu0 %v1641
    %2168 = vmatpush.msra.mxu0 %v1638
    %2169 = vmatpush.msra.mxu0 %v1635
    %2170 = vmatpush.msra.mxu0 %v1632
    %2171 = vmatpush.msra.mxu0 %v1629
    %2172 = vmatpush.msra.mxu0 %v1626
    %2173 = vmatpush.msra.mxu0 %v1623
    %2174 = vmatpush.msra.mxu0 %v1620
    %2175 = vmatpush.msra.mxu0 %v1617
    %2176 = vmatpush.msra.mxu0 %v1614
    %2177 = vmatpush.msra.mxu0 %v1611
    %2178 = vmatpush.msra.mxu0 %v1608
    %2179 = vmatpush.msra.mxu0 %v1605
    %2180 = vmatmul.f32.gmra.mxu0 %v1534
    %v2181 = vpop.f32.mrf.mxu0
    %v2182 = vadd.f32 %v2159, %v2181
    %2183 = vmatmul.f32.gmra.mxu0 %v1546
    %v2184 = vpop.f32.mrf.mxu0
    %v2185 = vadd.f32 %v2162, %v2184
    %2186 = vdwg.mxu0
    %2187 = vmatpush.msra.mxu0 %v1698
    %2188 = vmatpush.msra.mxu0 %v1695
    %2189 = vmatpush.msra.mxu0 %v1692
    %2190 = vmatpush.msra.mxu0 %v1689
    %2191 = vmatpush.msra.mxu0 %v1686
    %2192 = vmatpush.msra.mxu0 %v1683
    %2193 = vmatpush.msra.mxu0 %v1680
    %2194 = vmatpush.msra.mxu0 %v1677
    %2195 = vmatpush.msra.mxu0 %v1674
    %2196 = vmatpush.msra.mxu0 %v1671
    %2197 = vmatpush.msra.mxu0 %v1668
    %2198 = vmatpush.msra.mxu0 %v1665
    %2199 = vmatpush.msra.mxu0 %v1662
    %2200 = vmatpush.msra.mxu0 %v1659
    %2201 = vmatpush.msra.mxu0 %v1656
    %2202 = vmatpush.msra.mxu0 %v1653
    %2203 = vmatmul.f32.gmra.mxu0 %v1535
    %v2204 = vpop.f32.mrf.mxu0
    %v2205 = vadd.f32 %v2182, %v2204
    %2206 = vmatmul.f32.gmra.mxu0 %v1547
    %v2207 = vpop.f32.mrf.mxu0
    %v2208 = vadd.f32 %v2185, %v2207
    %2209 = vdwg.mxu0
    %2210 = vmatpush.msra.mxu0 %v1746
    %2211 = vmatpush.msra.mxu0 %v1743
    %2212 = vmatpush.msra.mxu0 %v1740
    %2213 = vmatpush.msra.mxu0 %v1737
    %2214 = vmatpush.msra.mxu0 %v1734
    %2215 = vmatpush.msra.mxu0 %v1731
    %2216 = vmatpush.msra.mxu0 %v1728
    %2217 = vmatpush.msra.mxu0 %v1725
    %2218 = vmatpush.msra.mxu0 %v1722
    %2219 = vmatpush.msra.mxu0 %v1719
    %2220 = vmatpush.msra.mxu0 %v1716
    %2221 = vmatpush.msra.mxu0 %v1713
    %2222 = vmatpush.msra.mxu0 %v1710
    %2223 = vmatpush.msra.mxu0 %v1707
    %2224 = vmatpush.msra.mxu0 %v1704
    %2225 = vmatpush.msra.mxu0 %v1701
    %2226 = vmatmul.f32.gmra.mxu0 %v1536
    %v2227 = vpop.f32.mrf.mxu0
    %v2228 = vadd.f32 %v2205, %v2227
    %2229 = vmatmul.f32.gmra.mxu0 %v1548
    %v2230 = vpop.f32.mrf.mxu0
    %v2231 = vadd.f32 %v2208, %v2230
    %2232 = vdwg.mxu0
    %2233 = vmatpush.msra.mxu0 %v1794
    %2234 = vmatpush.msra.mxu0 %v1791
    %2235 = vmatpush.msra.mxu0 %v1788
    %2236 = vmatpush.msra.mxu0 %v1785
    %2237 = vmatpush.msra.mxu0 %v1782
    %2238 = vmatpush.msra.mxu0 %v1779
    %2239 = vmatpush.msra.mxu0 %v1776
    %2240 = vmatpush.msra.mxu0 %v1773
    %2241 = vmatpush.msra.mxu0 %v1770
    %2242 = vmatpush.msra.mxu0 %v1767
    %2243 = vmatpush.msra.mxu0 %v1764
    %2244 = vmatpush.msra.mxu0 %v1761
    %2245 = vmatpush.msra.mxu0 %v1758
    %2246 = vmatpush.msra.mxu0 %v1755
    %2247 = vmatpush.msra.mxu0 %v1752
    %2248 = vmatpush.msra.mxu0 %v1749
    %2249 = vmatmul.f32.gmra.mxu0 %v1537
    %v2250 = vpop.f32.mrf.mxu0
    %v2251 = vadd.f32 %v2228, %v2250
    %2252 = vmatmul.f32.gmra.mxu0 %v1549
    %v2253 = vpop.f32.mrf.mxu0
    %v2254 = vadd.f32 %v2231, %v2253
    %2255 = vdwg.mxu0
    %2256 = vmatpush.msra.mxu0 %v1842
    %2257 = vmatpush.msra.mxu0 %v1839
    %2258 = vmatpush.msra.mxu0 %v1836
    %2259 = vmatpush.msra.mxu0 %v1833
    %2260 = vmatpush.msra.mxu0 %v1830
    %2261 = vmatpush.msra.mxu0 %v1827
    %2262 = vmatpush.msra.mxu0 %v1824
    %2263 = vmatpush.msra.mxu0 %v1821
    %2264 = vmatpush.msra.mxu0 %v1818
    %2265 = vmatpush.msra.mxu0 %v1815
    %2266 = vmatpush.msra.mxu0 %v1812
    %2267 = vmatpush.msra.mxu0 %v1809
    %2268 = vmatpush.msra.mxu0 %v1806
    %2269 = vmatpush.msra.mxu0 %v1803
    %2270 = vmatpush.msra.mxu0 %v1800
    %2271 = vmatpush.msra.mxu0 %v1797
    %2272 = vmatmul.f32.gmra.mxu0 %v1538
    %v2273 = vpop.f32.mrf.mxu0
    %v2274 = vadd.f32 %v2251, %v2273
    %2275 = vmatmul.f32.gmra.mxu0 %v1550
    %v2276 = vpop.f32.mrf.mxu0
    %v2277 = vadd.f32 %v2254, %v2276
    %2278 = vdwg.mxu0
    %2279 = vmatpush.msra.mxu0 %v1890
    %2280 = vmatpush.msra.mxu0 %v1887
    %2281 = vmatpush.msra.mxu0 %v1884
    %2282 = vmatpush.msra.mxu0 %v1881
    %2283 = vmatpush.msra.mxu0 %v1878
    %2284 = vmatpush.msra.mxu0 %v1875
    %2285 = vmatpush.msra.mxu0 %v1872
    %2286 = vmatpush.msra.mxu0 %v1869
    %2287 = vmatpush.msra.mxu0 %v1866
    %2288 = vmatpush.msra.mxu0 %v1863
    %2289 = vmatpush.msra.mxu0 %v1860
    %2290 = vmatpush.msra.mxu0 %v1857
    %2291 = vmatpush.msra.mxu0 %v1854
    %2292 = vmatpush.msra.mxu0 %v1851
    %2293 = vmatpush.msra.mxu0 %v1848
    %2294 = vmatpush.msra.mxu0 %v1845
    %2295 = vmatmul.f32.gmra.mxu0 %v1539
    %v2296 = vpop.f32.mrf.mxu0
    %v2297 = vadd.f32 %v2274, %v2296
    %2298 = vmatmul.f32.gmra.mxu0 %v1551
    %v2299 = vpop.f32.mrf.mxu0
    %v2300 = vadd.f32 %v2277, %v2299
    %2301 = vdwg.mxu0
    %2302 = vmatpush.msra.mxu0 %v1938
    %2303 = vmatpush.msra.mxu0 %v1935
    %2304 = vmatpush.msra.mxu0 %v1932
    %2305 = vmatpush.msra.mxu0 %v1929
    %2306 = vmatpush.msra.mxu0 %v1926
    %2307 = vmatpush.msra.mxu0 %v1923
    %2308 = vmatpush.msra.mxu0 %v1920
    %2309 = vmatpush.msra.mxu0 %v1917
    %2310 = vmatpush.msra.mxu0 %v1914
    %2311 = vmatpush.msra.mxu0 %v1911
    %2312 = vmatpush.msra.mxu0 %v1908
    %2313 = vmatpush.msra.mxu0 %v1905
    %2314 = vmatpush.msra.mxu0 %v1902
    %2315 = vmatpush.msra.mxu0 %v1899
    %2316 = vmatpush.msra.mxu0 %v1896
    %2317 = vmatpush.msra.mxu0 %v1893
    %2318 = vmatmul.f32.gmra.mxu0 %v1540
    %v2319 = vpop.f32.mrf.mxu0
    %v2320 = vadd.f32 %v2297, %v2319
    %2321 = vmatmul.f32.gmra.mxu0 %v1552
    %v2322 = vpop.f32.mrf.mxu0
    %v2323 = vadd.f32 %v2300, %v2322
    %2324 = vdwg.mxu0
    %2325 = vmatpush.msra.mxu0 %v1986
    %2326 = vmatpush.msra.mxu0 %v1983
    %2327 = vmatpush.msra.mxu0 %v1980
    %2328 = vmatpush.msra.mxu0 %v1977
    %2329 = vmatpush.msra.mxu0 %v1974
    %2330 = vmatpush.msra.mxu0 %v1971
    %2331 = vmatpush.msra.mxu0 %v1968
    %2332 = vmatpush.msra.mxu0 %v1965
    %2333 = vmatpush.msra.mxu0 %v1962
    %2334 = vmatpush.msra.mxu0 %v1959
    %2335 = vmatpush.msra.mxu0 %v1956
    %2336 = vmatpush.msra.mxu0 %v1953
    %2337 = vmatpush.msra.mxu0 %v1950
    %2338 = vmatpush.msra.mxu0 %v1947
    %2339 = vmatpush.msra.mxu0 %v1944
    %2340 = vmatpush.msra.mxu0 %v1941
    %2341 = vmatmul.f32.gmra.mxu0 %v1541
    %v2342 = vpop.f32.mrf.mxu0
    %v2343 = vadd.f32 %v2320, %v2342
    %2344 = vmatmul.f32.gmra.mxu0 %v1553
    %v2345 = vpop.f32.mrf.mxu0
    %v2346 = vadd.f32 %v2323, %v2345
    %2347 = vdwg.mxu0
    %2348 = vmatpush.msra.mxu0 %v2034
    %2349 = vmatpush.msra.mxu0 %v2031
    %2350 = vmatpush.msra.mxu0 %v2028
    %2351 = vmatpush.msra.mxu0 %v2025
    %2352 = vmatpush.msra.mxu0 %v2022
    %2353 = vmatpush.msra.mxu0 %v2019
    %2354 = vmatpush.msra.mxu0 %v2016
    %2355 = vmatpush.msra.mxu0 %v2013
    %2356 = vmatpush.msra.mxu0 %v2010
    %2357 = vmatpush.msra.mxu0 %v2007
    %2358 = vmatpush.msra.mxu0 %v2004
    %2359 = vmatpush.msra.mxu0 %v2001
    %2360 = vmatpush.msra.mxu0 %v1998
    %2361 = vmatpush.msra.mxu0 %v1995
    %2362 = vmatpush.msra.mxu0 %v1992
    %2363 = vmatpush.msra.mxu0 %v1989
    %2364 = vmatmul.f32.gmra.mxu0 %v1542
    %v2365 = vpop.f32.mrf.mxu0
    %v2366 = vadd.f32 %v2343, %v2365
    %2367 = vmatmul.f32.gmra.mxu0 %v1554
    %v2368 = vpop.f32.mrf.mxu0
    %v2369 = vadd.f32 %v2346, %v2368
    %2370 = vdwg.mxu0
    %2371 = vmatpush.msra.mxu0 %v2082
    %2372 = vmatpush.msra.mxu0 %v2079
    %2373 = vmatpush.msra.mxu0 %v2076
    %2374 = vmatpush.msra.mxu0 %v2073
    %2375 = vmatpush.msra.mxu0 %v2070
    %2376 = vmatpush.msra.mxu0 %v2067
    %2377 = vmatpush.msra.mxu0 %v2064
    %2378 = vmatpush.msra.mxu0 %v2061
    %2379 = vmatpush.msra.mxu0 %v2058
    %2380 = vmatpush.msra.mxu0 %v2055
    %2381 = vmatpush.msra.mxu0 %v2052
    %2382 = vmatpush.msra.mxu0 %v2049
    %2383 = vmatpush.msra.mxu0 %v2046
    %2384 = vmatpush.msra.mxu0 %v2043
    %2385 = vmatpush.msra.mxu0 %v2040
    %2386 = vmatpush.msra.mxu0 %v2037
    %2387 = vmatmul.f32.gmra.mxu0 %v1543
    %v2388 = vpop.f32.mrf.mxu0
    %v2389 = vadd.f32 %v2366, %v2388
    %2390 = vmatmul.f32.gmra.mxu0 %v1555
    %v2391 = vpop.f32.mrf.mxu0
    %v2392 = vadd.f32 %v2369, %v2391
    %2393 = vdwg.mxu0
    %2394 = vmatpush.msra.mxu0 %v2130
    %2395 = vmatpush.msra.mxu0 %v2127
    %2396 = vmatpush.msra.mxu0 %v2124
    %2397 = vmatpush.msra.mxu0 %v2121
    %2398 = vmatpush.msra.mxu0 %v2118
    %2399 = vmatpush.msra.mxu0 %v2115
    %2400 = vmatpush.msra.mxu0 %v2112
    %2401 = vmatpush.msra.mxu0 %v2109
    %2402 = vmatpush.msra.mxu0 %v2106
    %2403 = vmatpush.msra.mxu0 %v2103
    %2404 = vmatpush.msra.mxu0 %v2100
    %2405 = vmatpush.msra.mxu0 %v2097
    %2406 = vmatpush.msra.mxu0 %v2094
    %2407 = vmatpush.msra.mxu0 %v2091
    %2408 = vmatpush.msra.mxu0 %v2088
    %2409 = vmatpush.msra.mxu0 %v2085
    %2410 = vmatmul.f32.gmra.mxu0 %v1544
    %v2411 = vpop.f32.mrf.mxu0
    %v2412 = vadd.f32 %v2389, %v2411
    %2413 = vmatmul.f32.gmra.mxu0 %v1556
    %v2414 = vpop.f32.mrf.mxu0
    %v2415 = vadd.f32 %v2392, %v2414
    %2416 = vdwg.mxu0
    %2417 = vmatpush.msra.mxu0 %v1603
    %2418 = vmatpush.msra.mxu0 %v1600
    %2419 = vmatpush.msra.mxu0 %v1597
    %2420 = vmatpush.msra.mxu0 %v1594
    %2421 = vmatpush.msra.mxu0 %v1591
    %2422 = vmatpush.msra.mxu0 %v1588
    %2423 = vmatpush.msra.mxu0 %v1585
    %2424 = vmatpush.msra.mxu0 %v1582
    %2425 = vmatpush.msra.mxu0 %v1579
    %2426 = vmatpush.msra.mxu0 %v1576
    %2427 = vmatpush.msra.mxu0 %v1573
    %2428 = vmatpush.msra.mxu0 %v1570
    %2429 = vmatpush.msra.mxu0 %v1567
    %2430 = vmatpush.msra.mxu0 %v1564
    %2431 = vmatpush.msra.mxu0 %v1561
    %2432 = vmatpush.msra.mxu0 %v1558
    %2433 = vmatmul.f32.gmra.mxu0 %v1533
    %v2434 = vpop.f32.mrf.mxu0
    %v2435 = vadd.f32 %v2136, %v2434
    %2436 = vmatmul.f32.gmra.mxu0 %v1545
    %v2437 = vpop.f32.mrf.mxu0
    %v2438 = vadd.f32 %v2136, %v2437
    %2439 = vdwg.mxu0
    %2440 = vmatpush.msra.mxu0 %v1651
    %2441 = vmatpush.msra.mxu0 %v1648
    %2442 = vmatpush.msra.mxu0 %v1645
    %2443 = vmatpush.msra.mxu0 %v1642
    %2444 = vmatpush.msra.mxu0 %v1639
    %2445 = vmatpush.msra.mxu0 %v1636
    %2446 = vmatpush.msra.mxu0 %v1633
    %2447 = vmatpush.msra.mxu0 %v1630
    %2448 = vmatpush.msra.mxu0 %v1627
    %2449 = vmatpush.msra.mxu0 %v1624
    %2450 = vmatpush.msra.mxu0 %v1621
    %2451 = vmatpush.msra.mxu0 %v1618
    %2452 = vmatpush.msra.mxu0 %v1615
    %2453 = vmatpush.msra.mxu0 %v1612
    %2454 = vmatpush.msra.mxu0 %v1609
    %2455 = vmatpush.msra.mxu0 %v1606
    %2456 = vmatmul.f32.gmra.mxu0 %v1534
    %v2457 = vpop.f32.mrf.mxu0
    %v2458 = vadd.f32 %v2435, %v2457
    %2459 = vmatmul.f32.gmra.mxu0 %v1546
    %v2460 = vpop.f32.mrf.mxu0
    %v2461 = vadd.f32 %v2438, %v2460
    %2462 = vdwg.mxu0
    %2463 = vmatpush.msra.mxu0 %v1699
    %2464 = vmatpush.msra.mxu0 %v1696
    %2465 = vmatpush.msra.mxu0 %v1693
    %2466 = vmatpush.msra.mxu0 %v1690
    %2467 = vmatpush.msra.mxu0 %v1687
    %2468 = vmatpush.msra.mxu0 %v1684
    %2469 = vmatpush.msra.mxu0 %v1681
    %2470 = vmatpush.msra.mxu0 %v1678
    %2471 = vmatpush.msra.mxu0 %v1675
    %2472 = vmatpush.msra.mxu0 %v1672
    %2473 = vmatpush.msra.mxu0 %v1669
    %2474 = vmatpush.msra.mxu0 %v1666
    %2475 = vmatpush.msra.mxu0 %v1663
    %2476 = vmatpush.msra.mxu0 %v1660
    %2477 = vmatpush.msra.mxu0 %v1657
    %2478 = vmatpush.msra.mxu0 %v1654
    %2479 = vmatmul.f32.gmra.mxu0 %v1535
    %v2480 = vpop.f32.mrf.mxu0
    %v2481 = vadd.f32 %v2458, %v2480
    %2482 = vmatmul.f32.gmra.mxu0 %v1547
    %v2483 = vpop.f32.mrf.mxu0
    %v2484 = vadd.f32 %v2461, %v2483
    %2485 = vdwg.mxu0
    %2486 = vmatpush.msra.mxu0 %v1747
    %2487 = vmatpush.msra.mxu0 %v1744
    %2488 = vmatpush.msra.mxu0 %v1741
    %2489 = vmatpush.msra.mxu0 %v1738
    %2490 = vmatpush.msra.mxu0 %v1735
    %2491 = vmatpush.msra.mxu0 %v1732
    %2492 = vmatpush.msra.mxu0 %v1729
    %2493 = vmatpush.msra.mxu0 %v1726
    %2494 = vmatpush.msra.mxu0 %v1723
    %2495 = vmatpush.msra.mxu0 %v1720
    %2496 = vmatpush.msra.mxu0 %v1717
    %2497 = vmatpush.msra.mxu0 %v1714
    %2498 = vmatpush.msra.mxu0 %v1711
    %2499 = vmatpush.msra.mxu0 %v1708
    %2500 = vmatpush.msra.mxu0 %v1705
    %2501 = vmatpush.msra.mxu0 %v1702
    %2502 = vmatmul.f32.gmra.mxu0 %v1536
    %v2503 = vpop.f32.mrf.mxu0
    %v2504 = vadd.f32 %v2481, %v2503
    %2505 = vmatmul.f32.gmra.mxu0 %v1548
    %v2506 = vpop.f32.mrf.mxu0
    %v2507 = vadd.f32 %v2484, %v2506
    %2508 = vdwg.mxu0
    %2509 = vmatpush.msra.mxu0 %v1795
    %2510 = vmatpush.msra.mxu0 %v1792
    %2511 = vmatpush.msra.mxu0 %v1789
    %2512 = vmatpush.msra.mxu0 %v1786
    %2513 = vmatpush.msra.mxu0 %v1783
    %2514 = vmatpush.msra.mxu0 %v1780
    %2515 = vmatpush.msra.mxu0 %v1777
    %2516 = vmatpush.msra.mxu0 %v1774
    %2517 = vmatpush.msra.mxu0 %v1771
    %2518 = vmatpush.msra.mxu0 %v1768
    %2519 = vmatpush.msra.mxu0 %v1765
    %2520 = vmatpush.msra.mxu0 %v1762
    %2521 = vmatpush.msra.mxu0 %v1759
    %2522 = vmatpush.msra.mxu0 %v1756
    %2523 = vmatpush.msra.mxu0 %v1753
    %2524 = vmatpush.msra.mxu0 %v1750
    %2525 = vmatmul.f32.gmra.mxu0 %v1537
    %v2526 = vpop.f32.mrf.mxu0
    %v2527 = vadd.f32 %v2504, %v2526
    %2528 = vmatmul.f32.gmra.mxu0 %v1549
    %v2529 = vpop.f32.mrf.mxu0
    %v2530 = vadd.f32 %v2507, %v2529
    %2531 = vdwg.mxu0
    %2532 = vmatpush.msra.mxu0 %v1843
    %2533 = vmatpush.msra.mxu0 %v1840
    %2534 = vmatpush.msra.mxu0 %v1837
    %2535 = vmatpush.msra.mxu0 %v1834
    %2536 = vmatpush.msra.mxu0 %v1831
    %2537 = vmatpush.msra.mxu0 %v1828
    %2538 = vmatpush.msra.mxu0 %v1825
    %2539 = vmatpush.msra.mxu0 %v1822
    %2540 = vmatpush.msra.mxu0 %v1819
    %2541 = vmatpush.msra.mxu0 %v1816
    %2542 = vmatpush.msra.mxu0 %v1813
    %2543 = vmatpush.msra.mxu0 %v1810
    %2544 = vmatpush.msra.mxu0 %v1807
    %2545 = vmatpush.msra.mxu0 %v1804
    %2546 = vmatpush.msra.mxu0 %v1801
    %2547 = vmatpush.msra.mxu0 %v1798
    %2548 = vmatmul.f32.gmra.mxu0 %v1538
    %v2549 = vpop.f32.mrf.mxu0
    %v2550 = vadd.f32 %v2527, %v2549
    %2551 = vmatmul.f32.gmra.mxu0 %v1550
    %v2552 = vpop.f32.mrf.mxu0
    %v2553 = vadd.f32 %v2530, %v2552
    %2554 = vdwg.mxu0
    %2555 = vmatpush.msra.mxu0 %v1891
    %2556 = vmatpush.msra.mxu0 %v1888
    %2557 = vmatpush.msra.mxu0 %v1885
    %2558 = vmatpush.msra.mxu0 %v1882
    %2559 = vmatpush.msra.mxu0 %v1879
    %2560 = vmatpush.msra.mxu0 %v1876
    %2561 = vmatpush.msra.mxu0 %v1873
    %2562 = vmatpush.msra.mxu0 %v1870
    %2563 = vmatpush.msra.mxu0 %v1867
    %2564 = vmatpush.msra.mxu0 %v1864
    %2565 = vmatpush.msra.mxu0 %v1861
    %2566 = vmatpush.msra.mxu0 %v1858
    %2567 = vmatpush.msra.mxu0 %v1855
    %2568 = vmatpush.msra.mxu0 %v1852
    %2569 = vmatpush.msra.mxu0 %v1849
    %2570 = vmatpush.msra.mxu0 %v1846
    %2571 = vmatmul.f32.gmra.mxu0 %v1539
    %v2572 = vpop.f32.mrf.mxu0
    %v2573 = vadd.f32 %v2550, %v2572
    %2574 = vmatmul.f32.gmra.mxu0 %v1551
    %v2575 = vpop.f32.mrf.mxu0
    %v2576 = vadd.f32 %v2553, %v2575
    %2577 = vdwg.mxu0
    %2578 = vmatpush.msra.mxu0 %v1939
    %2579 = vmatpush.msra.mxu0 %v1936
    %2580 = vmatpush.msra.mxu0 %v1933
    %2581 = vmatpush.msra.mxu0 %v1930
    %2582 = vmatpush.msra.mxu0 %v1927
    %2583 = vmatpush.msra.mxu0 %v1924
    %2584 = vmatpush.msra.mxu0 %v1921
    %2585 = vmatpush.msra.mxu0 %v1918
    %2586 = vmatpush.msra.mxu0 %v1915
    %2587 = vmatpush.msra.mxu0 %v1912
    %2588 = vmatpush.msra.mxu0 %v1909
    %2589 = vmatpush.msra.mxu0 %v1906
    %2590 = vmatpush.msra.mxu0 %v1903
    %2591 = vmatpush.msra.mxu0 %v1900
    %2592 = vmatpush.msra.mxu0 %v1897
    %2593 = vmatpush.msra.mxu0 %v1894
    %2594 = vmatmul.f32.gmra.mxu0 %v1540
    %v2595 = vpop.f32.mrf.mxu0
    %v2596 = vadd.f32 %v2573, %v2595
    %2597 = vmatmul.f32.gmra.mxu0 %v1552
    %v2598 = vpop.f32.mrf.mxu0
    %v2599 = vadd.f32 %v2576, %v2598
    %2600 = vdwg.mxu0
    %2601 = vmatpush.msra.mxu0 %v1987
    %2602 = vmatpush.msra.mxu0 %v1984
    %2603 = vmatpush.msra.mxu0 %v1981
    %2604 = vmatpush.msra.mxu0 %v1978
    %2605 = vmatpush.msra.mxu0 %v1975
    %2606 = vmatpush.msra.mxu0 %v1972
    %2607 = vmatpush.msra.mxu0 %v1969
    %2608 = vmatpush.msra.mxu0 %v1966
    %2609 = vmatpush.msra.mxu0 %v1963
    %2610 = vmatpush.msra.mxu0 %v1960
    %2611 = vmatpush.msra.mxu0 %v1957
    %2612 = vmatpush.msra.mxu0 %v1954
    %2613 = vmatpush.msra.mxu0 %v1951
    %2614 = vmatpush.msra.mxu0 %v1948
    %2615 = vmatpush.msra.mxu0 %v1945
    %2616 = vmatpush.msra.mxu0 %v1942
    %2617 = vmatmul.f32.gmra.mxu0 %v1541
    %v2618 = vpop.f32.mrf.mxu0
    %v2619 = vadd.f32 %v2596, %v2618
    %2620 = vmatmul.f32.gmra.mxu0 %v1553
    %v2621 = vpop.f32.mrf.mxu0
    %v2622 = vadd.f32 %v2599, %v2621
    %2623 = vdwg.mxu0
    %2624 = vmatpush.msra.mxu0 %v2035
    %2625 = vmatpush.msra.mxu0 %v2032
    %2626 = vmatpush.msra.mxu0 %v2029
    %2627 = vmatpush.msra.mxu0 %v2026
    %2628 = vmatpush.msra.mxu0 %v2023
    %2629 = vmatpush.msra.mxu0 %v2020
    %2630 = vmatpush.msra.mxu0 %v2017
    %2631 = vmatpush.msra.mxu0 %v2014
    %2632 = vmatpush.msra.mxu0 %v2011
    %2633 = vmatpush.msra.mxu0 %v2008
    %2634 = vmatpush.msra.mxu0 %v2005
    %2635 = vmatpush.msra.mxu0 %v2002
    %2636 = vmatpush.msra.mxu0 %v1999
    %2637 = vmatpush.msra.mxu0 %v1996
    %2638 = vmatpush.msra.mxu0 %v1993
    %2639 = vmatpush.msra.mxu0 %v1990
    %2640 = vmatmul.f32.gmra.mxu0 %v1542
    %v2641 = vpop.f32.mrf.mxu0
    %v2642 = vadd.f32 %v2619, %v2641
    %2643 = vmatmul.f32.gmra.mxu0 %v1554
    %v2644 = vpop.f32.mrf.mxu0
    %v2645 = vadd.f32 %v2622, %v2644
    %2646 = vdwg.mxu0
    %2647 = vmatpush.msra.mxu0 %v2083
    %2648 = vmatpush.msra.mxu0 %v2080
    %2649 = vmatpush.msra.mxu0 %v2077
    %2650 = vmatpush.msra.mxu0 %v2074
    %2651 = vmatpush.msra.mxu0 %v2071
    %2652 = vmatpush.msra.mxu0 %v2068
    %2653 = vmatpush.msra.mxu0 %v2065
    %2654 = vmatpush.msra.mxu0 %v2062
    %2655 = vmatpush.msra.mxu0 %v2059
    %2656 = vmatpush.msra.mxu0 %v2056
    %2657 = vmatpush.msra.mxu0 %v2053
    %2658 = vmatpush.msra.mxu0 %v2050
    %2659 = vmatpush.msra.mxu0 %v2047
    %2660 = vmatpush.msra.mxu0 %v2044
    %2661 = vmatpush.msra.mxu0 %v2041
    %2662 = vmatpush.msra.mxu0 %v2038
    %2663 = vmatmul.f32.gmra.mxu0 %v1543
    %v2664 = vpop.f32.mrf.mxu0
    %v2665 = vadd.f32 %v2642, %v2664
    %2666 = vmatmul.f32.gmra.mxu0 %v1555
    %v2667 = vpop.f32.mrf.mxu0
    %v2668 = vadd.f32 %v2645, %v2667
    %2669 = vdwg.mxu0
    %2670 = vmatpush.msra.mxu0 %v2131
    %2671 = vmatpush.msra.mxu0 %v2128
    %2672 = vmatpush.msra.mxu0 %v2125
    %2673 = vmatpush.msra.mxu0 %v2122
    %2674 = vmatpush.msra.mxu0 %v2119
    %2675 = vmatpush.msra.mxu0 %v2116
    %2676 = vmatpush.msra.mxu0 %v2113
    %2677 = vmatpush.msra.mxu0 %v2110
    %2678 = vmatpush.msra.mxu0 %v2107
    %2679 = vmatpush.msra.mxu0 %v2104
    %2680 = vmatpush.msra.mxu0 %v2101
    %2681 = vmatpush.msra.mxu0 %v2098
    %2682 = vmatpush.msra.mxu0 %v2095
    %2683 = vmatpush.msra.mxu0 %v2092
    %2684 = vmatpush.msra.mxu0 %v2089
    %2685 = vmatpush.msra.mxu0 %v2086
    %2686 = vmatmul.f32.gmra.mxu0 %v1544
    %v2687 = vpop.f32.mrf.mxu0
    %v2688 = vadd.f32 %v2665, %v2687
    %2689 = vmatmul.f32.gmra.mxu0 %v1556
    %v2690 = vpop.f32.mrf.mxu0
    %v2691 = vadd.f32 %v2668, %v2690
    %2692 = vdwg.mxu0
    %2693 = vmatpush.msra.mxu0 %v1604
    %2694 = vmatpush.msra.mxu0 %v1601
    %2695 = vmatpush.msra.mxu0 %v1598
    %2696 = vmatpush.msra.mxu0 %v1595
    %2697 = vmatpush.msra.mxu0 %v1592
    %2698 = vmatpush.msra.mxu0 %v1589
    %2699 = vmatpush.msra.mxu0 %v1586
    %2700 = vmatpush.msra.mxu0 %v1583
    %2701 = vmatpush.msra.mxu0 %v1580
    %2702 = vmatpush.msra.mxu0 %v1577
    %2703 = vmatpush.msra.mxu0 %v1574
    %2704 = vmatpush.msra.mxu0 %v1571
    %2705 = vmatpush.msra.mxu0 %v1568
    %2706 = vmatpush.msra.mxu0 %v1565
    %2707 = vmatpush.msra.mxu0 %v1562
    %2708 = vmatpush.msra.mxu0 %v1559
    %2709 = vmatmul.f32.gmra.mxu0 %v1533
    %v2710 = vpop.f32.mrf.mxu0
    %v2711 = vadd.f32 %v2137, %v2710
    %2712 = vmatmul.f32.gmra.mxu0 %v1545
    %v2713 = vpop.f32.mrf.mxu0
    %v2714 = vadd.f32 %v2137, %v2713
    %2715 = vdwg.mxu0
    %2716 = vmatpush.msra.mxu0 %v1652
    %2717 = vmatpush.msra.mxu0 %v1649
    %2718 = vmatpush.msra.mxu0 %v1646
    %2719 = vmatpush.msra.mxu0 %v1643
    %2720 = vmatpush.msra.mxu0 %v1640
    %2721 = vmatpush.msra.mxu0 %v1637
    %2722 = vmatpush.msra.mxu0 %v1634
    %2723 = vmatpush.msra.mxu0 %v1631
    %2724 = vmatpush.msra.mxu0 %v1628
    %2725 = vmatpush.msra.mxu0 %v1625
    %2726 = vmatpush.msra.mxu0 %v1622
    %2727 = vmatpush.msra.mxu0 %v1619
    %2728 = vmatpush.msra.mxu0 %v1616
    %2729 = vmatpush.msra.mxu0 %v1613
    %2730 = vmatpush.msra.mxu0 %v1610
    %2731 = vmatpush.msra.mxu0 %v1607
    %2732 = vmatmul.f32.gmra.mxu0 %v1534
    %v2733 = vpop.f32.mrf.mxu0
    %v2734 = vadd.f32 %v2711, %v2733
    %2735 = vmatmul.f32.gmra.mxu0 %v1546
    %v2736 = vpop.f32.mrf.mxu0
    %v2737 = vadd.f32 %v2714, %v2736
    %2738 = vdwg.mxu0
    %2739 = vmatpush.msra.mxu0 %v1700
    %2740 = vmatpush.msra.mxu0 %v1697
    %2741 = vmatpush.msra.mxu0 %v1694
    %2742 = vmatpush.msra.mxu0 %v1691
    %2743 = vmatpush.msra.mxu0 %v1688
    %2744 = vmatpush.msra.mxu0 %v1685
    %2745 = vmatpush.msra.mxu0 %v1682
    %2746 = vmatpush.msra.mxu0 %v1679
    %2747 = vmatpush.msra.mxu0 %v1676
    %2748 = vmatpush.msra.mxu0 %v1673
    %2749 = vmatpush.msra.mxu0 %v1670
    %2750 = vmatpush.msra.mxu0 %v1667
    %2751 = vmatpush.msra.mxu0 %v1664
    %2752 = vmatpush.msra.mxu0 %v1661
    %2753 = vmatpush.msra.mxu0 %v1658
    %2754 = vmatpush.msra.mxu0 %v1655
    %2755 = vmatmul.f32.gmra.mxu0 %v1535
    %v2756 = vpop.f32.mrf.mxu0
    %v2757 = vadd.f32 %v2734, %v2756
    %2758 = vmatmul.f32.gmra.mxu0 %v1547
    %v2759 = vpop.f32.mrf.mxu0
    %v2760 = vadd.f32 %v2737, %v2759
    %2761 = vdwg.mxu0
    %2762 = vmatpush.msra.mxu0 %v1748
    %2763 = vmatpush.msra.mxu0 %v1745
    %2764 = vmatpush.msra.mxu0 %v1742
    %2765 = vmatpush.msra.mxu0 %v1739
    %2766 = vmatpush.msra.mxu0 %v1736
    %2767 = vmatpush.msra.mxu0 %v1733
    %2768 = vmatpush.msra.mxu0 %v1730
    %2769 = vmatpush.msra.mxu0 %v1727
    %2770 = vmatpush.msra.mxu0 %v1724
    %2771 = vmatpush.msra.mxu0 %v1721
    %2772 = vmatpush.msra.mxu0 %v1718
    %2773 = vmatpush.msra.mxu0 %v1715
    %2774 = vmatpush.msra.mxu0 %v1712
    %2775 = vmatpush.msra.mxu0 %v1709
    %2776 = vmatpush.msra.mxu0 %v1706
    %2777 = vmatpush.msra.mxu0 %v1703
    %2778 = vmatmul.f32.gmra.mxu0 %v1536
    %v2779 = vpop.f32.mrf.mxu0
    %v2780 = vadd.f32 %v2757, %v2779
    %2781 = vmatmul.f32.gmra.mxu0 %v1548
    %v2782 = vpop.f32.mrf.mxu0
    %v2783 = vadd.f32 %v2760, %v2782
    %2784 = vdwg.mxu0
    %2785 = vmatpush.msra.mxu0 %v1796
    %2786 = vmatpush.msra.mxu0 %v1793
    %2787 = vmatpush.msra.mxu0 %v1790
    %2788 = vmatpush.msra.mxu0 %v1787
    %2789 = vmatpush.msra.mxu0 %v1784
    %2790 = vmatpush.msra.mxu0 %v1781
    %2791 = vmatpush.msra.mxu0 %v1778
    %2792 = vmatpush.msra.mxu0 %v1775
    %2793 = vmatpush.msra.mxu0 %v1772
    %2794 = vmatpush.msra.mxu0 %v1769
    %2795 = vmatpush.msra.mxu0 %v1766
    %2796 = vmatpush.msra.mxu0 %v1763
    %2797 = vmatpush.msra.mxu0 %v1760
    %2798 = vmatpush.msra.mxu0 %v1757
    %2799 = vmatpush.msra.mxu0 %v1754
    %2800 = vmatpush.msra.mxu0 %v1751
    %2801 = vmatmul.f32.gmra.mxu0 %v1537
    %v2802 = vpop.f32.mrf.mxu0
    %v2803 = vadd.f32 %v2780, %v2802
    %2804 = vmatmul.f32.gmra.mxu0 %v1549
    %v2805 = vpop.f32.mrf.mxu0
    %v2806 = vadd.f32 %v2783, %v2805
    %2807 = vdwg.mxu0
    %2808 = vmatpush.msra.mxu0 %v1844
    %2809 = vmatpush.msra.mxu0 %v1841
    %2810 = vmatpush.msra.mxu0 %v1838
    %2811 = vmatpush.msra.mxu0 %v1835
    %2812 = vmatpush.msra.mxu0 %v1832
    %2813 = vmatpush.msra.mxu0 %v1829
    %2814 = vmatpush.msra.mxu0 %v1826
    %2815 = vmatpush.msra.mxu0 %v1823
    %2816 = vmatpush.msra.mxu0 %v1820
    %2817 = vmatpush.msra.mxu0 %v1817
    %2818 = vmatpush.msra.mxu0 %v1814
    %2819 = vmatpush.msra.mxu0 %v1811
    %2820 = vmatpush.msra.mxu0 %v1808
    %2821 = vmatpush.msra.mxu0 %v1805
    %2822 = vmatpush.msra.mxu0 %v1802
    %2823 = vmatpush.msra.mxu0 %v1799
    %2824 = vmatmul.f32.gmra.mxu0 %v1538
    %v2825 = vpop.f32.mrf.mxu0
    %v2826 = vadd.f32 %v2803, %v2825
    %2827 = vmatmul.f32.gmra.mxu0 %v1550
    %v2828 = vpop.f32.mrf.mxu0
    %v2829 = vadd.f32 %v2806, %v2828
    %2830 = vdwg.mxu0
    %2831 = vmatpush.msra.mxu0 %v1892
    %2832 = vmatpush.msra.mxu0 %v1889
    %2833 = vmatpush.msra.mxu0 %v1886
    %2834 = vmatpush.msra.mxu0 %v1883
    %2835 = vmatpush.msra.mxu0 %v1880
    %2836 = vmatpush.msra.mxu0 %v1877
    %2837 = vmatpush.msra.mxu0 %v1874
    %2838 = vmatpush.msra.mxu0 %v1871
    %2839 = vmatpush.msra.mxu0 %v1868
    %2840 = vmatpush.msra.mxu0 %v1865
    %2841 = vmatpush.msra.mxu0 %v1862
    %2842 = vmatpush.msra.mxu0 %v1859
    %2843 = vmatpush.msra.mxu0 %v1856
    %2844 = vmatpush.msra.mxu0 %v1853
    %2845 = vmatpush.msra.mxu0 %v1850
    %2846 = vmatpush.msra.mxu0 %v1847
    %2847 = vmatmul.f32.gmra.mxu0 %v1539
    %v2848 = vpop.f32.mrf.mxu0
    %v2849 = vadd.f32 %v2826, %v2848
    %2850 = vmatmul.f32.gmra.mxu0 %v1551
    %v2851 = vpop.f32.mrf.mxu0
    %v2852 = vadd.f32 %v2829, %v2851
    %2853 = vdwg.mxu0
    %2854 = vmatpush.msra.mxu0 %v1940
    %2855 = vmatpush.msra.mxu0 %v1937
    %2856 = vmatpush.msra.mxu0 %v1934
    %2857 = vmatpush.msra.mxu0 %v1931
    %2858 = vmatpush.msra.mxu0 %v1928
    %2859 = vmatpush.msra.mxu0 %v1925
    %2860 = vmatpush.msra.mxu0 %v1922
    %2861 = vmatpush.msra.mxu0 %v1919
    %2862 = vmatpush.msra.mxu0 %v1916
    %2863 = vmatpush.msra.mxu0 %v1913
    %2864 = vmatpush.msra.mxu0 %v1910
    %2865 = vmatpush.msra.mxu0 %v1907
    %2866 = vmatpush.msra.mxu0 %v1904
    %2867 = vmatpush.msra.mxu0 %v1901
    %2868 = vmatpush.msra.mxu0 %v1898
    %2869 = vmatpush.msra.mxu0 %v1895
    %2870 = vmatmul.f32.gmra.mxu0 %v1540
    %v2871 = vpop.f32.mrf.mxu0
    %v2872 = vadd.f32 %v2849, %v2871
    %2873 = vmatmul.f32.gmra.mxu0 %v1552
    %v2874 = vpop.f32.mrf.mxu0
    %v2875 = vadd.f32 %v2852, %v2874
    %2876 = vdwg.mxu0
    %2877 = vmatpush.msra.mxu0 %v1988
    %2878 = vmatpush.msra.mxu0 %v1985
    %2879 = vmatpush.msra.mxu0 %v1982
    %2880 = vmatpush.msra.mxu0 %v1979
    %2881 = vmatpush.msra.mxu0 %v1976
    %2882 = vmatpush.msra.mxu0 %v1973
    %2883 = vmatpush.msra.mxu0 %v1970
    %2884 = vmatpush.msra.mxu0 %v1967
    %2885 = vmatpush.msra.mxu0 %v1964
    %2886 = vmatpush.msra.mxu0 %v1961
    %2887 = vmatpush.msra.mxu0 %v1958
    %2888 = vmatpush.msra.mxu0 %v1955
    %2889 = vmatpush.msra.mxu0 %v1952
    %2890 = vmatpush.msra.mxu0 %v1949
    %2891 = vmatpush.msra.mxu0 %v1946
    %2892 = vmatpush.msra.mxu0 %v1943
    %2893 = vmatmul.f32.gmra.mxu0 %v1541
    %v2894 = vpop.f32.mrf.mxu0
    %v2895 = vadd.f32 %v2872, %v2894
    %2896 = vmatmul.f32.gmra.mxu0 %v1553
    %v2897 = vpop.f32.mrf.mxu0
    %v2898 = vadd.f32 %v2875, %v2897
    %2899 = vdwg.mxu0
    %2900 = vmatpush.msra.mxu0 %v2036
    %2901 = vmatpush.msra.mxu0 %v2033
    %2902 = vmatpush.msra.mxu0 %v2030
    %2903 = vmatpush.msra.mxu0 %v2027
    %2904 = vmatpush.msra.mxu0 %v2024
    %2905 = vmatpush.msra.mxu0 %v2021
    %2906 = vmatpush.msra.mxu0 %v2018
    %2907 = vmatpush.msra.mxu0 %v2015
    %2908 = vmatpush.msra.mxu0 %v2012
    %2909 = vmatpush.msra.mxu0 %v2009
    %2910 = vmatpush.msra.mxu0 %v2006
    %2911 = vmatpush.msra.mxu0 %v2003
    %2912 = vmatpush.msra.mxu0 %v2000
    %2913 = vmatpush.msra.mxu0 %v1997
    %2914 = vmatpush.msra.mxu0 %v1994
    %2915 = vmatpush.msra.mxu0 %v1991
    %2916 = vmatmul.f32.gmra.mxu0 %v1542
    %v2917 = vpop.f32.mrf.mxu0
    %v2918 = vadd.f32 %v2895, %v2917
    %2919 = vmatmul.f32.gmra.mxu0 %v1554
    %v2920 = vpop.f32.mrf.mxu0
    %v2921 = vadd.f32 %v2898, %v2920
    %2922 = vdwg.mxu0
    %2923 = vmatpush.msra.mxu0 %v2084
    %2924 = vmatpush.msra.mxu0 %v2081
    %2925 = vmatpush.msra.mxu0 %v2078
    %2926 = vmatpush.msra.mxu0 %v2075
    %2927 = vmatpush.msra.mxu0 %v2072
    %2928 = vmatpush.msra.mxu0 %v2069
    %2929 = vmatpush.msra.mxu0 %v2066
    %2930 = vmatpush.msra.mxu0 %v2063
    %2931 = vmatpush.msra.mxu0 %v2060
    %2932 = vmatpush.msra.mxu0 %v2057
    %2933 = vmatpush.msra.mxu0 %v2054
    %2934 = vmatpush.msra.mxu0 %v2051
    %2935 = vmatpush.msra.mxu0 %v2048
    %2936 = vmatpush.msra.mxu0 %v2045
    %2937 = vmatpush.msra.mxu0 %v2042
    %2938 = vmatpush.msra.mxu0 %v2039
    %2939 = vmatmul.f32.gmra.mxu0 %v1543
    %v2940 = vpop.f32.mrf.mxu0
    %v2941 = vadd.f32 %v2918, %v2940
    %2942 = vmatmul.f32.gmra.mxu0 %v1555
    %v2943 = vpop.f32.mrf.mxu0
    %v2944 = vadd.f32 %v2921, %v2943
    %2945 = vdwg.mxu0
    %2946 = vmatpush.msra.mxu0 %v2132
    %2947 = vmatpush.msra.mxu0 %v2129
    %2948 = vmatpush.msra.mxu0 %v2126
    %2949 = vmatpush.msra.mxu0 %v2123
    %2950 = vmatpush.msra.mxu0 %v2120
    %2951 = vmatpush.msra.mxu0 %v2117
    %2952 = vmatpush.msra.mxu0 %v2114
    %2953 = vmatpush.msra.mxu0 %v2111
    %2954 = vmatpush.msra.mxu0 %v2108
    %2955 = vmatpush.msra.mxu0 %v2105
    %2956 = vmatpush.msra.mxu0 %v2102
    %2957 = vmatpush.msra.mxu0 %v2099
    %2958 = vmatpush.msra.mxu0 %v2096
    %2959 = vmatpush.msra.mxu0 %v2093
    %2960 = vmatpush.msra.mxu0 %v2090
    %2961 = vmatpush.msra.mxu0 %v2087
    %2962 = vmatmul.f32.gmra.mxu0 %v1544
    %v2963 = vpop.f32.mrf.mxu0
    %v2964 = vadd.f32 %v2941, %v2963
    %2965 = vmatmul.f32.gmra.mxu0 %v1556
    %v2966 = vpop.f32.mrf.mxu0
    %v2967 = vadd.f32 %v2944, %v2966
    %2968 = vdwg.mxu0
    %2969 = vst [vmem:[#allocation11] sm:$0xff] %v2412
    %2970 = vst [vmem:[#allocation11 + $0x8] sm:$0xff] %v2688
    %2971 = vst [vmem:[#allocation11 + $0x10] sm:$0xff] %v2964
    %2972 = vst [vmem:[#allocation11 + $0x18] sm:$0xff] %v2415
    %2973 = vst [vmem:[#allocation11 + $0x20] sm:$0xff] %v2691
    %2974 = vst [vmem:[#allocation11 + $0x28] sm:$0xff] %v2967
    // Predicated region
    $region42: #{tpu_custom_call.1} parent=1 // pred_check
      _
    $region43: #{tpu_custom_call.1} parent=1 // pred_check_branch
      %2976 = sbr.rel (0) target = $region45
    $region44: #{tpu_custom_call.1} parent=1 // pred_region
      %2978 = vsyncadd [#allocation4], 0
      %s2979 = sshll.u32 [#allocation11], 4
      %s2980 = int_to_ptr.vmem [resolvable:$true] %s2979
      %s2981 = sshll.u32 %s5, 4
      %s2982 = int_to_ptr.hbm [resolvable:$true] %s2981
      %2987 = dma.vmem_to_hbm [thread:$0]  %s2980, 768, %s2982, [#allocation4], 384, 384, 24
    $region45: #{tpu_custom_call.1} parent=1 // pred_fallthru
      _
    // Predicated region
    $region46: #{tpu_custom_call.1} parent=1 // pred_check
      _
    $region47: #{tpu_custom_call.1} parent=1 // pred_check_branch
      %2989 = sbr.rel (0) target = $region49
    $region48: #{tpu_custom_call.1} parent=1 // pred_region
      %2991 = dma.done [#allocation4], 768
    $region49: #{tpu_custom_call.1} parent=1 // pred_fallthru
      _
    %2992 = vsyncpa [#allocation3], 1
    %2993 = vsyncpa [#allocation6], 1
    %2994 = vsyncpa [#allocation9], 1
    %2995 = vsyncpa [#allocation4], 1

// kernel: tpu_custom_call.1
$region0: #{tpu_custom_call.1}
  #allocation0 [shape = 'u32[]', space=smem, size = 0x4, offset = 0x4, fixed_abs, tag = 'smem constant byte address 0x4 - core index']
  #allocation1 [shape = 'u32[72,128]{1,0:T(1,128)}', space=vmem, size = 0x9000, scoped, tag = 'internal scratch']
  %s0 = inlined_call_operand.hbm [shape: f32[16,384], index: 0, kind: input, shape index: {}]
  %s1 = inlined_call_operand.hbm [shape: f32[384,1536], index: 1, kind: input, shape index: {}]
  %s2 = inlined_call_operand.hbm [shape: f32[1,1536], index: 2, kind: input, shape index: {}]
  %s3 = inlined_call_operand.hbm [shape: f32[1536,384], index: 3, kind: input, shape index: {}]
  %s4 = inlined_call_operand.hbm [shape: f32[1,384], index: 4, kind: input, shape index: {}]
  %s5 = inlined_call_operand.hbm [shape: f32[16,384], index: 5, kind: output, shape index: {}]
  %s6 = sld [smem:[#allocation0]]
  $region50: #{tpu_custom_call.1} parent=0
    _
  %s8 = ssub.s32 1, %s6
  %s9 = scalar_select 0, %s8, %s6
  $region1: #{tpu_custom_call.1} parent=0
    #allocation2 [shape = 'u8[24576]{0}', space=vmem, size = 0x6000, scoped, tag = 'input window, operand 0, single buffered']
    #allocation3 [shape = 's32[1]{0}', space=sflag, size = 0x4, scoped, tag = 'scoped memory for tpu_custom_call.1']
    #allocation4 [shape = 's32[1]{0}', space=sflag, size = 0x4, scoped, tag = 'scoped memory for tpu_custom_call.1']
    #allocation5 [shape = 'u8[2359296]{0}', space=vmem, size = 0x240000, scoped, tag = 'input window, operand 1, single buffered']
    #allocation6 [shape = 's32[1]{0}', space=sflag, size = 0x4, scoped, tag = 'scoped memory for tpu_custom_call.1']
    #allocation7 [shape = 'u8[6144]{0}', space=vmem, size = 0x1800, scoped, tag = 'input window, operand 2, single buffered']
    #allocation8 [shape = 'u8[2359296]{0}', space=vmem, size = 0x240000, scoped, tag = 'input window, operand 3, single buffered']
    #allocation9 [shape = 's32[1]{0}', space=sflag, size = 0x4, scoped, tag = 'scoped memory for tpu_custom_call.1']
    #allocation10 [shape = 'u8[1536]{0}', space=vmem, size = 0x800, scoped, tag = 'input window, operand 4, single buffered']
    #allocation11 [shape = 'u8[24576]{0}', space=vmem, size = 0x6000, scoped, tag = 'output window, operand 0, single buffered']
    %10 = vsyncpa [#allocation3], 0
    %11 = vsyncpa [#allocation6], 0
    %12 = vsyncpa [#allocation9], 0
    %13 = vsyncpa [#allocation4], 0
    // Predicated region
    $region2: #{tpu_custom_call.1} parent=1 // pred_check
      _
    $region3: #{tpu_custom_call.1} parent=1 // pred_check_branch
      %15 = sbr.rel (0) target = $region5
    $region4: #{tpu_custom_call.1} parent=1 // pred_region
      %17 = vsyncadd [#allocation3], 0
      %s18 = sshll.u32 %s0, 4
      %s19 = int_to_ptr.hbm [resolvable:$true] %s18
      %s20 = sshll.u32 [#allocation2], 4
      %s21 = int_to_ptr.vmem [resolvable:$true] %s20
      %26 = dma.hbm_to_vmem [thread:$0]  %s19, 768, %s21, [#allocation3], 384, 384, 24
    $region5: #{tpu_custom_call.1} parent=1 // pred_fallthru
      _
    // Predicated region
    $region6: #{tpu_custom_call.1} parent=1 // pred_check
      _
    $region7: #{tpu_custom_call.1} parent=1 // pred_check_branch
      %28 = sbr.rel (0) target = $region9
    $region8: #{tpu_custom_call.1} parent=1 // pred_region
      %30 = vsyncadd [#allocation6], 0
      %s31 = sshll.u32 %s1, 4
      %s32 = int_to_ptr.hbm [resolvable:$true] %s31
      %s33 = sshll.u32 [#allocation5], 4
      %s34 = int_to_ptr.vmem [resolvable:$true] %s33
      %39 = dma.hbm_to_vmem [thread:$0]  %s32, 73728, %s34, [#allocation6], 1536, 1536, 96
    $region9: #{tpu_custom_call.1} parent=1 // pred_fallthru
      _
    // Predicated region
    $region10: #{tpu_custom_call.1} parent=1 // pred_check
      _
    $region11: #{tpu_custom_call.1} parent=1 // pred_check_branch
      %41 = sbr.rel (0) target = $region13
    $region12: #{tpu_custom_call.1} parent=1 // pred_region
      %43 = vsyncadd [#allocation6], 0
      %s45 = sshll.u32 %s2, 4
      %s46 = int_to_ptr.hbm [resolvable:$true] %s45
      %s47 = sshll.u32 [#allocation7], 4
      %s48 = int_to_ptr.vmem [resolvable:$true] %s47
      %50 = dma.hbm_to_vmem [thread:$0]  %s46, 192, %s48, [#allocation6]
    $region13: #{tpu_custom_call.1} parent=1 // pred_fallthru
      _
    // Predicated region
    $region14: #{tpu_custom_call.1} parent=1 // pred_check
      _
    $region15: #{tpu_custom_call.1} parent=1 // pred_check_branch
      %52 = sbr.rel (0) target = $region17
    $region16: #{tpu_custom_call.1} parent=1 // pred_region
      %54 = vsyncadd [#allocation9], 0
      %s55 = sshll.u32 %s3, 4
      %s56 = int_to_ptr.hbm [resolvable:$true] %s55
      %s57 = sshll.u32 [#allocation8], 4
      %s58 = int_to_ptr.vmem [resolvable:$true] %s57
      %63 = dma.hbm_to_vmem [thread:$0]  %s56, 73728, %s58, [#allocation9], 384, 384, 24
    $region17: #{tpu_custom_call.1} parent=1 // pred_fallthru
      _
    // Predicated region
    $region18: #{tpu_custom_call.1} parent=1 // pred_check
      _
    $region19: #{tpu_custom_call.1} parent=1 // pred_check_branch
      %65 = sbr.rel (0) target = $region21
    $region20: #{tpu_custom_call.1} parent=1 // pred_region
      %67 = vsyncadd [#allocation9], 0
      %s69 = sshll.u32 %s4, 4
      %s70 = int_to_ptr.hbm [resolvable:$true] %s69
      %s71 = sshll.u32 [#allocation10], 4
      %s72 = int_to_ptr.vmem [resolvable:$true] %s71
      %74 = dma.hbm_to_vmem [thread:$0]  %s70, 48, %s72, [#allocation9]
    $region21: #{tpu_custom_call.1} parent=1 // pred_fallthru
      _
    // Predicated region
    $region22: #{tpu_custom_call.1} parent=1 // pred_check
      _
    $region23: #{tpu_custom_call.1} parent=1 // pred_check_branch
      %76 = sbr.rel (0) target = $region25
    $region24: #{tpu_custom_call.1} parent=1 // pred_region
      %78 = dma.done [#allocation3], 768
    $region25: #{tpu_custom_call.1} parent=1 // pred_fallthru
      _
    // Predicated region
    $region26: #{tpu_custom_call.1} parent=1 // pred_check
      _
    $region27: #{tpu_custom_call.1} parent=1 // pred_check_branch
      %80 = sbr.rel (0) target = $region29
    $region28: #{tpu_custom_call.1} parent=1 // pred_region
      %82 = dma.done [#allocation6], 73728
    $region29: #{tpu_custom_call.1} parent=1 // pred_fallthru
      _
    // Predicated region
    $region30: #{tpu_custom_call.1} parent=1 // pred_check
      _
    $region31: #{tpu_custom_call.1} parent=1 // pred_check_branch
      %84 = sbr.rel (0) target = $region33
    $region32: #{tpu_custom_call.1} parent=1 // pred_region
      %86 = dma.done [#allocation6], 192
    $region33: #{tpu_custom_call.1} parent=1 // pred_fallthru
      _
    // Predicated region
    $region34: #{tpu_custom_call.1} parent=1 // pred_check
      _
    $region35: #{tpu_custom_call.1} parent=1 // pred_check_branch
      %88 = sbr.rel (0) target = $region37
    $region36: #{tpu_custom_call.1} parent=1 // pred_region
      %90 = dma.done [#allocation9], 73728
    $region37: #{tpu_custom_call.1} parent=1 // pred_fallthru
      _
    // Predicated region
    $region38: #{tpu_custom_call.1} parent=1 // pred_check
      _
    $region39: #{tpu_custom_call.1} parent=1 // pred_check_branch
      %92 = sbr.rel (0) target = $region41
    $region40: #{tpu_custom_call.1} parent=1 // pred_region
      %94 = dma.done [#allocation9], 48
    $region41: #{tpu_custom_call.1} parent=1 // pred_fallthru
      _
    %v95 = vld [vmem:[#allocation2] sm:$0xff]
    %v96 = vld [vmem:[#allocation2 + $0x8] sm:$0xff]
    %v97 = vld [vmem:[#allocation2 + $0x10] sm:$0xff]
    %v98 = vld [vmem:[#allocation2 + $0x18] sm:$0xff]
    %v99 = vld [vmem:[#allocation2 + $0x20] sm:$0xff]
    %v100 = vld [vmem:[#allocation2 + $0x28] sm:$0xff]
    %v101 = vld [vmem:[#allocation5] sm:$0xff]
    %v102 = vld [vmem:[#allocation5 + $0x8] sm:$0xff]
    %v103 = vld [vmem:[#allocation5 + $0x10] sm:$0xff]
    %v104 = vld [vmem:[#allocation5 + $0x18] sm:$0xff]
    %v105 = vld [vmem:[#allocation5 + $0x20] sm:$0xff]
    %v106 = vld [vmem:[#allocation5 + $0x28] sm:$0xff]
    %v107 = vld [vmem:[#allocation5 + $0x30] sm:$0xff]
    %v108 = vld [vmem:[#allocation5 + $0x38] sm:$0xff]
    %v109 = vld [vmem:[#allocation5 + $0x40] sm:$0xff]
    %v110 = vld [vmem:[#allocation5 + $0x48] sm:$0xff]
    %v111 = vld [vmem:[#allocation5 + $0x50] sm:$0xff]
    %v112 = vld [vmem:[#allocation5 + $0x58] sm:$0xff]
    %v113 = vld [vmem:[#allocation5 + $0x60] sm:$0xff]
    %v114 = vld [vmem:[#allocation5 + $0x68] sm:$0xff]
    %v115 = vld [vmem:[#allocation5 + $0x70] sm:$0xff]
    %v116 = vld [vmem:[#allocation5 + $0x78] sm:$0xff]
    %v117 = vld [vmem:[#allocation5 + $0x80] sm:$0xff]
    %v118 = vld [vmem:[#allocation5 + $0x88] sm:$0xff]
    %v119 = vld [vmem:[#allocation5 + $0x90] sm:$0xff]
    %v120 = vld [vmem:[#allocation5 + $0x98] sm:$0xff]
    %v121 = vld [vmem:[#allocation5 + $0xa0] sm:$0xff]
    %v122 = vld [vmem:[#allocation5 + $0xa8] sm:$0xff]
    %v123 = vld [vmem:[#allocation5 + $0xb0] sm:$0xff]
    %v124 = vld [vmem:[#allocation5 + $0xb8] sm:$0xff]
    %v125 = vld [vmem:[#allocation5 + $0xc0] sm:$0xff]
    %v126 = vld [vmem:[#allocation5 + $0xc8] sm:$0xff]
    %v127 = vld [vmem:[#allocation5 + $0xd0] sm:$0xff]
    %v128 = vld [vmem:[#allocation5 + $0xd8] sm:$0xff]
    %v129 = vld [vmem:[#allocation5 + $0xe0] sm:$0xff]
    %v130 = vld [vmem:[#allocation5 + $0xe8] sm:$0xff]
    %v131 = vld [vmem:[#allocation5 + $0xf0] sm:$0xff]
    %v132 = vld [vmem:[#allocation5 + $0xf8] sm:$0xff]
    %v133 = vld [vmem:[#allocation5 + $0x100] sm:$0xff]
    %v134 = vld [vmem:[#allocation5 + $0x108] sm:$0xff]
    %v135 = vld [vmem:[#allocation5 + $0x110] sm:$0xff]
    %v136 = vld [vmem:[#allocation5 + $0x118] sm:$0xff]
    %v137 = vld [vmem:[#allocation5 + $0x120] sm:$0xff]
    %v138 = vld [vmem:[#allocation5 + $0x128] sm:$0xff]
    %v139 = vld [vmem:[#allocation5 + $0x130] sm:$0xff]
    %v140 = vld [vmem:[#allocation5 + $0x138] sm:$0xff]
    %v141 = vld [vmem:[#allocation5 + $0x140] sm:$0xff]
    %v142 = vld [vmem:[#allocation5 + $0x148] sm:$0xff]
    %v143 = vld [vmem:[#allocation5 + $0x150] sm:$0xff]
    %v144 = vld [vmem:[#allocation5 + $0x158] sm:$0xff]
    %v145 = vld [vmem:[#allocation5 + $0x160] sm:$0xff]
    %v146 = vld [vmem:[#allocation5 + $0x168] sm:$0xff]
    %v147 = vld [vmem:[#allocation5 + $0x170] sm:$0xff]
    %v148 = vld [vmem:[#allocation5 + $0x178] sm:$0xff]
    %v149 = vld [vmem:[#allocation5 + $0x180] sm:$0xff]
    %v150 = vld [vmem:[#allocation5 + $0x188] sm:$0xff]
    %v151 = vld [vmem:[#allocation5 + $0x190] sm:$0xff]
    %v152 = vld [vmem:[#allocation5 + $0x198] sm:$0xff]
    %v153 = vld [vmem:[#allocation5 + $0x1a0] sm:$0xff]
    %v154 = vld [vmem:[#allocation5 + $0x1a8] sm:$0xff]
    %v155 = vld [vmem:[#allocation5 + $0x1b0] sm:$0xff]
    %v156 = vld [vmem:[#allocation5 + $0x1b8] sm:$0xff]
    %v157 = vld [vmem:[#allocation5 + $0x1c0] sm:$0xff]
    %v158 = vld [vmem:[#allocation5 + $0x1c8] sm:$0xff]
    %v159 = vld [vmem:[#allocation5 + $0x1d0] sm:$0xff]
    %v160 = vld [vmem:[#allocation5 + $0x1d8] sm:$0xff]
    %v161 = vld [vmem:[#allocation5 + $0x1e0] sm:$0xff]
    %v162 = vld [vmem:[#allocation5 + $0x1e8] sm:$0xff]
    %v163 = vld [vmem:[#allocation5 + $0x1f0] sm:$0xff]
    %v164 = vld [vmem:[#allocation5 + $0x1f8] sm:$0xff]
    %v165 = vld [vmem:[#allocation5 + $0x200] sm:$0xff]
    %v166 = vld [vmem:[#allocation5 + $0x208] sm:$0xff]
    %v167 = vld [vmem:[#allocation5 + $0x210] sm:$0xff]
    %v168 = vld [vmem:[#allocation5 + $0x218] sm:$0xff]
    %v169 = vld [vmem:[#allocation5 + $0x220] sm:$0xff]
    %v170 = vld [vmem:[#allocation5 + $0x228] sm:$0xff]
    %v171 = vld [vmem:[#allocation5 + $0x230] sm:$0xff]
    %v172 = vld [vmem:[#allocation5 + $0x238] sm:$0xff]
    %v173 = vld [vmem:[#allocation5 + $0x240] sm:$0xff]
    %v174 = vld [vmem:[#allocation5 + $0x248] sm:$0xff]
    %v175 = vld [vmem:[#allocation5 + $0x250] sm:$0xff]
    %v176 = vld [vmem:[#allocation5 + $0x258] sm:$0xff]
    %v177 = vld [vmem:[#allocation5 + $0x260] sm:$0xff]
    %v178 = vld [vmem:[#allocation5 + $0x268] sm:$0xff]
    %v179 = vld [vmem:[#allocation5 + $0x270] sm:$0xff]
    %v180 = vld [vmem:[#allocation5 + $0x278] sm:$0xff]
    %v181 = vld [vmem:[#allocation5 + $0x280] sm:$0xff]
    %v182 = vld [vmem:[#allocation5 + $0x288] sm:$0xff]
    %v183 = vld [vmem:[#allocation5 + $0x290] sm:$0xff]
    %v184 = vld [vmem:[#allocation5 + $0x298] sm:$0xff]
    %v185 = vld [vmem:[#allocation5 + $0x2a0] sm:$0xff]
    %v186 = vld [vmem:[#allocation5 + $0x2a8] sm:$0xff]
    %v187 = vld [vmem:[#allocation5 + $0x2b0] sm:$0xff]
    %v188 = vld [vmem:[#allocation5 + $0x2b8] sm:$0xff]
    %v189 = vld [vmem:[#allocation5 + $0x2c0] sm:$0xff]
    %v190 = vld [vmem:[#allocation5 + $0x2c8] sm:$0xff]
    %v191 = vld [vmem:[#allocation5 + $0x2d0] sm:$0xff]
    %v192 = vld [vmem:[#allocation5 + $0x2d8] sm:$0xff]
    %v193 = vld [vmem:[#allocation5 + $0x2e0] sm:$0xff]
    %v194 = vld [vmem:[#allocation5 + $0x2e8] sm:$0xff]
    %v195 = vld [vmem:[#allocation5 + $0x2f0] sm:$0xff]
    %v196 = vld [vmem:[#allocation5 + $0x2f8] sm:$0xff]
    %v197 = vld [vmem:[#allocation5 + $0x300] sm:$0xff]
    %v198 = vld [vmem:[#allocation5 + $0x308] sm:$0xff]
    %v199 = vld [vmem:[#allocation5 + $0x310] sm:$0xff]
    %v200 = vld [vmem:[#allocation5 + $0x318] sm:$0xff]
    %v201 = vld [vmem:[#allocation5 + $0x320] sm:$0xff]
    %v202 = vld [vmem:[#allocation5 + $0x328] sm:$0xff]
    %v203 = vld [vmem:[#allocation5 + $0x330] sm:$0xff]
    %v204 = vld [vmem:[#allocation5 + $0x338] sm:$0xff]
    %v205 = vld [vmem:[#allocation5 + $0x340] sm:$0xff]
    %v206 = vld [vmem:[#allocation5 + $0x348] sm:$0xff]
    %v207 = vld [vmem:[#allocation5 + $0x350] sm:$0xff]
    %v208 = vld [vmem:[#allocation5 + $0x358] sm:$0xff]
    %v209 = vld [vmem:[#allocation5 + $0x360] sm:$0xff]
    %v210 = vld [vmem:[#allocation5 + $0x368] sm:$0xff]
    %v211 = vld [vmem:[#allocation5 + $0x370] sm:$0xff]
    %v212 = vld [vmem:[#allocation5 + $0x378] sm:$0xff]
    %v213 = vld [vmem:[#allocation5 + $0x380] sm:$0xff]
    %v214 = vld [vmem:[#allocation5 + $0x388] sm:$0xff]
    %v215 = vld [vmem:[#allocation5 + $0x390] sm:$0xff]
    %v216 = vld [vmem:[#allocation5 + $0x398] sm:$0xff]
    %v217 = vld [vmem:[#allocation5 + $0x3a0] sm:$0xff]
    %v218 = vld [vmem:[#allocation5 + $0x3a8] sm:$0xff]
    %v219 = vld [vmem:[#allocation5 + $0x3b0] sm:$0xff]
    %v220 = vld [vmem:[#allocation5 + $0x3b8] sm:$0xff]
    %v221 = vld [vmem:[#allocation5 + $0x3c0] sm:$0xff]
    %v222 = vld [vmem:[#allocation5 + $0x3c8] sm:$0xff]
    %v223 = vld [vmem:[#allocation5 + $0x3d0] sm:$0xff]
    %v224 = vld [vmem:[#allocation5 + $0x3d8] sm:$0xff]
    %v225 = vld [vmem:[#allocation5 + $0x3e0] sm:$0xff]
    %v226 = vld [vmem:[#allocation5 + $0x3e8] sm:$0xff]
    %v227 = vld [vmem:[#allocation5 + $0x3f0] sm:$0xff]
    %v228 = vld [vmem:[#allocation5 + $0x3f8] sm:$0xff]
    %v229 = vld [vmem:[#allocation5 + $0x400] sm:$0xff]
    %v230 = vld [vmem:[#allocation5 + $0x408] sm:$0xff]
    %v231 = vld [vmem:[#allocation5 + $0x410] sm:$0xff]
    %v232 = vld [vmem:[#allocation5 + $0x418] sm:$0xff]
    %v233 = vld [vmem:[#allocation5 + $0x420] sm:$0xff]
    %v234 = vld [vmem:[#allocation5 + $0x428] sm:$0xff]
    %v235 = vld [vmem:[#allocation5 + $0x430] sm:$0xff]
    %v236 = vld [vmem:[#allocation5 + $0x438] sm:$0xff]
    %v237 = vld [vmem:[#allocation5 + $0x440] sm:$0xff]
    %v238 = vld [vmem:[#allocation5 + $0x448] sm:$0xff]
    %v239 = vld [vmem:[#allocation5 + $0x450] sm:$0xff]
    %v240 = vld [vmem:[#allocation5 + $0x458] sm:$0xff]
    %v241 = vld [vmem:[#allocation5 + $0x460] sm:$0xff]
    %v242 = vld [vmem:[#allocation5 + $0x468] sm:$0xff]
    %v243 = vld [vmem:[#allocation5 + $0x470] sm:$0xff]
    %v244 = vld [vmem:[#allocation5 + $0x478] sm:$0xff]
    %v245 = vld [vmem:[#allocation5 + $0x480] sm:$0xff]
    %v246 = vld [vmem:[#allocation5 + $0x488] sm:$0xff]
    %v247 = vld [vmem:[#allocation5 + $0x490] sm:$0xff]
    %v248 = vld [vmem:[#allocation5 + $0x498] sm:$0xff]
    %v249 = vld [vmem:[#allocation5 + $0x4a0] sm:$0xff]
    %v250 = vld [vmem:[#allocation5 + $0x4a8] sm:$0xff]
    %v251 = vld [vmem:[#allocation5 + $0x4b0] sm:$0xff]
    %v252 = vld [vmem:[#allocation5 + $0x4b8] sm:$0xff]
    %v253 = vld [vmem:[#allocation5 + $0x4c0] sm:$0xff]
    %v254 = vld [vmem:[#allocation5 + $0x4c8] sm:$0xff]
    %v255 = vld [vmem:[#allocation5 + $0x4d0] sm:$0xff]
    %v256 = vld [vmem:[#allocation5 + $0x4d8] sm:$0xff]
    %v257 = vld [vmem:[#allocation5 + $0x4e0] sm:$0xff]
    %v258 = vld [vmem:[#allocation5 + $0x4e8] sm:$0xff]
    %v259 = vld [vmem:[#allocation5 + $0x4f0] sm:$0xff]
    %v260 = vld [vmem:[#allocation5 + $0x4f8] sm:$0xff]
    %v261 = vld [vmem:[#allocation5 + $0x500] sm:$0xff]
    %v262 = vld [vmem:[#allocation5 + $0x508] sm:$0xff]
    %v263 = vld [vmem:[#allocation5 + $0x510] sm:$0xff]
    %v264 = vld [vmem:[#allocation5 + $0x518] sm:$0xff]
    %v265 = vld [vmem:[#allocation5 + $0x520] sm:$0xff]
    %v266 = vld [vmem:[#allocation5 + $0x528] sm:$0xff]
    %v267 = vld [vmem:[#allocation5 + $0x530] sm:$0xff]
    %v268 = vld [vmem:[#allocation5 + $0x538] sm:$0xff]
    %v269 = vld [vmem:[#allocation5 + $0x540] sm:$0xff]
    %v270 = vld [vmem:[#allocation5 + $0x548] sm:$0xff]
    %v271 = vld [vmem:[#allocation5 + $0x550] sm:$0xff]
    %v272 = vld [vmem:[#allocation5 + $0x558] sm:$0xff]
    %v273 = vld [vmem:[#allocation5 + $0x560] sm:$0xff]
    %v274 = vld [vmem:[#allocation5 + $0x568] sm:$0xff]
    %v275 = vld [vmem:[#allocation5 + $0x570] sm:$0xff]
    %v276 = vld [vmem:[#allocation5 + $0x578] sm:$0xff]
    %v277 = vld [vmem:[#allocation5 + $0x580] sm:$0xff]
    %v278 = vld [vmem:[#allocation5 + $0x588] sm:$0xff]
    %v279 = vld [vmem:[#allocation5 + $0x590] sm:$0xff]
    %v280 = vld [vmem:[#allocation5 + $0x598] sm:$0xff]
    %v281 = vld [vmem:[#allocation5 + $0x5a0] sm:$0xff]
    %v282 = vld [vmem:[#allocation5 + $0x5a8] sm:$0xff]
    %v283 = vld [vmem:[#allocation5 + $0x5b0] sm:$0xff]
    %v284 = vld [vmem:[#allocation5 + $0x5b8] sm:$0xff]
    %v285 = vld [vmem:[#allocation5 + $0x5c0] sm:$0xff]
    %v286 = vld [vmem:[#allocation5 + $0x5c8] sm:$0xff]
    %v287 = vld [vmem:[#allocation5 + $0x5d0] sm:$0xff]
    %v288 = vld [vmem:[#allocation5 + $0x5d8] sm:$0xff]
    %v289 = vld [vmem:[#allocation5 + $0x5e0] sm:$0xff]
    %v290 = vld [vmem:[#allocation5 + $0x5e8] sm:$0xff]
    %v291 = vld [vmem:[#allocation5 + $0x5f0] sm:$0xff]
    %v292 = vld [vmem:[#allocation5 + $0x5f8] sm:$0xff]
    %v293 = vld [vmem:[#allocation5 + $0x600] sm:$0xff]
    %v294 = vld [vmem:[#allocation5 + $0x608] sm:$0xff]
    %v295 = vld [vmem:[#allocation5 + $0x610] sm:$0xff]
    %v296 = vld [vmem:[#allocation5 + $0x618] sm:$0xff]
    %v297 = vld [vmem:[#allocation5 + $0x620] sm:$0xff]
    %v298 = vld [vmem:[#allocation5 + $0x628] sm:$0xff]
    %v299 = vld [vmem:[#allocation5 + $0x630] sm:$0xff]
    %v300 = vld [vmem:[#allocation5 + $0x638] sm:$0xff]
    %v301 = vld [vmem:[#allocation5 + $0x640] sm:$0xff]
    %v302 = vld [vmem:[#allocation5 + $0x648] sm:$0xff]
    %v303 = vld [vmem:[#allocation5 + $0x650] sm:$0xff]
    %v304 = vld [vmem:[#allocation5 + $0x658] sm:$0xff]
    %v305 = vld [vmem:[#allocation5 + $0x660] sm:$0xff]
    %v306 = vld [vmem:[#allocation5 + $0x668] sm:$0xff]
    %v307 = vld [vmem:[#allocation5 + $0x670] sm:$0xff]
    %v308 = vld [vmem:[#allocation5 + $0x678] sm:$0xff]
    %v309 = vld [vmem:[#allocation5 + $0x680] sm:$0xff]
    %v310 = vld [vmem:[#allocation5 + $0x688] sm:$0xff]
    %v311 = vld [vmem:[#allocation5 + $0x690] sm:$0xff]
    %v312 = vld [vmem:[#allocation5 + $0x698] sm:$0xff]
    %v313 = vld [vmem:[#allocation5 + $0x6a0] sm:$0xff]
    %v314 = vld [vmem:[#allocation5 + $0x6a8] sm:$0xff]
    %v315 = vld [vmem:[#allocation5 + $0x6b0] sm:$0xff]
    %v316 = vld [vmem:[#allocation5 + $0x6b8] sm:$0xff]
    %v317 = vld [vmem:[#allocation5 + $0x6c0] sm:$0xff]
    %v318 = vld [vmem:[#allocation5 + $0x6c8] sm:$0xff]
    %v319 = vld [vmem:[#allocation5 + $0x6d0] sm:$0xff]
    %v320 = vld [vmem:[#allocation5 + $0x6d8] sm:$0xff]
    %v321 = vld [vmem:[#allocation5 + $0x6e0] sm:$0xff]
    %v322 = vld [vmem:[#allocation5 + $0x6e8] sm:$0xff]
    %v323 = vld [vmem:[#allocation5 + $0x6f0] sm:$0xff]
    %v324 = vld [vmem:[#allocation5 + $0x6f8] sm:$0xff]
    %v325 = vld [vmem:[#allocation5 + $0x700] sm:$0xff]
    %v326 = vld [vmem:[#allocation5 + $0x708] sm:$0xff]
    %v327 = vld [vmem:[#allocation5 + $0x710] sm:$0xff]
    %v328 = vld [vmem:[#allocation5 + $0x718] sm:$0xff]
    %v329 = vld [vmem:[#allocation5 + $0x720] sm:$0xff]
    %v330 = vld [vmem:[#allocation5 + $0x728] sm:$0xff]
    %v331 = vld [vmem:[#allocation5 + $0x730] sm:$0xff]
    %v332 = vld [vmem:[#allocation5 + $0x738] sm:$0xff]
    %v333 = vld [vmem:[#allocation5 + $0x740] sm:$0xff]
    %v334 = vld [vmem:[#allocation5 + $0x748] sm:$0xff]
    %v335 = vld [vmem:[#allocation5 + $0x750] sm:$0xff]
    %v336 = vld [vmem:[#allocation5 + $0x758] sm:$0xff]
    %v337 = vld [vmem:[#allocation5 + $0x760] sm:$0xff]
    %v338 = vld [vmem:[#allocation5 + $0x768] sm:$0xff]
    %v339 = vld [vmem:[#allocation5 + $0x770] sm:$0xff]
    %v340 = vld [vmem:[#allocation5 + $0x778] sm:$0xff]
    %v341 = vld [vmem:[#allocation5 + $0x780] sm:$0xff]
    %v342 = vld [vmem:[#allocation5 + $0x788] sm:$0xff]
    %v343 = vld [vmem:[#allocation5 + $0x790] sm:$0xff]
    %v344 = vld [vmem:[#allocation5 + $0x798] sm:$0xff]
    %v345 = vld [vmem:[#allocation5 + $0x7a0] sm:$0xff]
    %v346 = vld [vmem:[#allocation5 + $0x7a8] sm:$0xff]
    %v347 = vld [vmem:[#allocation5 + $0x7b0] sm:$0xff]
    %v348 = vld [vmem:[#allocation5 + $0x7b8] sm:$0xff]
    %v349 = vld [vmem:[#allocation5 + $0x7c0] sm:$0xff]
    %v350 = vld [vmem:[#allocation5 + $0x7c8] sm:$0xff]
    %v351 = vld [vmem:[#allocation5 + $0x7d0] sm:$0xff]
    %v352 = vld [vmem:[#allocation5 + $0x7d8] sm:$0xff]
    %v353 = vld [vmem:[#allocation5 + $0x7e0] sm:$0xff]
    %v354 = vld [vmem:[#allocation5 + $0x7e8] sm:$0xff]
    %v355 = vld [vmem:[#allocation5 + $0x7f0] sm:$0xff]
    %v356 = vld [vmem:[#allocation5 + $0x7f8] sm:$0xff]
    %v357 = vld [vmem:[#allocation5 + $0x800] sm:$0xff]
    %v358 = vld [vmem:[#allocation5 + $0x808] sm:$0xff]
    %v359 = vld [vmem:[#allocation5 + $0x810] sm:$0xff]
    %v360 = vld [vmem:[#allocation5 + $0x818] sm:$0xff]
    %v361 = vld [vmem:[#allocation5 + $0x820] sm:$0xff]
    %v362 = vld [vmem:[#allocation5 + $0x828] sm:$0xff]
    %v363 = vld [vmem:[#allocation5 + $0x830] sm:$0xff]
    %v364 = vld [vmem:[#allocation5 + $0x838] sm:$0xff]
    %v365 = vld [vmem:[#allocation5 + $0x840] sm:$0xff]
    %v366 = vld [vmem:[#allocation5 + $0x848] sm:$0xff]
    %v367 = vld [vmem:[#allocation5 + $0x850] sm:$0xff]
    %v368 = vld [vmem:[#allocation5 + $0x858] sm:$0xff]
    %v369 = vld [vmem:[#allocation5 + $0x860] sm:$0xff]
    %v370 = vld [vmem:[#allocation5 + $0x868] sm:$0xff]
    %v371 = vld [vmem:[#allocation5 + $0x870] sm:$0xff]
    %v372 = vld [vmem:[#allocation5 + $0x878] sm:$0xff]
    %v373 = vld [vmem:[#allocation5 + $0x880] sm:$0xff]
    %v374 = vld [vmem:[#allocation5 + $0x888] sm:$0xff]
    %v375 = vld [vmem:[#allocation5 + $0x890] sm:$0xff]
    %v376 = vld [vmem:[#allocation5 + $0x898] sm:$0xff]
    %v377 = vld [vmem:[#allocation5 + $0x8a0] sm:$0xff]
    %v378 = vld [vmem:[#allocation5 + $0x8a8] sm:$0xff]
    %v379 = vld [vmem:[#allocation5 + $0x8b0] sm:$0xff]
    %v380 = vld [vmem:[#allocation5 + $0x8b8] sm:$0xff]
    %v381 = vld [vmem:[#allocation5 + $0x8c0] sm:$0xff]
    %v382 = vld [vmem:[#allocation5 + $0x8c8] sm:$0xff]
    %v383 = vld [vmem:[#allocation5 + $0x8d0] sm:$0xff]
    %v384 = vld [vmem:[#allocation5 + $0x8d8] sm:$0xff]
    %v385 = vld [vmem:[#allocation5 + $0x8e0] sm:$0xff]
    %v386 = vld [vmem:[#allocation5 + $0x8e8] sm:$0xff]
    %v387 = vld [vmem:[#allocation5 + $0x8f0] sm:$0xff]
    %v388 = vld [vmem:[#allocation5 + $0x8f8] sm:$0xff]
    %v389 = vld [vmem:[#allocation5 + $0x900] sm:$0xff]
    %v390 = vld [vmem:[#allocation5 + $0x908] sm:$0xff]
    %v391 = vld [vmem:[#allocation5 + $0x910] sm:$0xff]
    %v392 = vld [vmem:[#allocation5 + $0x918] sm:$0xff]
    %v393 = vld [vmem:[#allocation5 + $0x920] sm:$0xff]
    %v394 = vld [vmem:[#allocation5 + $0x928] sm:$0xff]
    %v395 = vld [vmem:[#allocation5 + $0x930] sm:$0xff]
    %v396 = vld [vmem:[#allocation5 + $0x938] sm:$0xff]
    %v397 = vld [vmem:[#allocation5 + $0x940] sm:$0xff]
    %v398 = vld [vmem:[#allocation5 + $0x948] sm:$0xff]
    %v399 = vld [vmem:[#allocation5 + $0x950] sm:$0xff]
    %v400 = vld [vmem:[#allocation5 + $0x958] sm:$0xff]
    %v401 = vld [vmem:[#allocation5 + $0x960] sm:$0xff]
    %v402 = vld [vmem:[#allocation5 + $0x968] sm:$0xff]
    %v403 = vld [vmem:[#allocation5 + $0x970] sm:$0xff]
    %v404 = vld [vmem:[#allocation5 + $0x978] sm:$0xff]
    %v405 = vld [vmem:[#allocation5 + $0x980] sm:$0xff]
    %v406 = vld [vmem:[#allocation5 + $0x988] sm:$0xff]
    %v407 = vld [vmem:[#allocation5 + $0x990] sm:$0xff]
    %v408 = vld [vmem:[#allocation5 + $0x998] sm:$0xff]
    %v409 = vld [vmem:[#allocation5 + $0x9a0] sm:$0xff]
    %v410 = vld [vmem:[#allocation5 + $0x9a8] sm:$0xff]
    %v411 = vld [vmem:[#allocation5 + $0x9b0] sm:$0xff]
    %v412 = vld [vmem:[#allocation5 + $0x9b8] sm:$0xff]
    %v413 = vld [vmem:[#allocation5 + $0x9c0] sm:$0xff]
    %v414 = vld [vmem:[#allocation5 + $0x9c8] sm:$0xff]
    %v415 = vld [vmem:[#allocation5 + $0x9d0] sm:$0xff]
    %v416 = vld [vmem:[#allocation5 + $0x9d8] sm:$0xff]
    %v417 = vld [vmem:[#allocation5 + $0x9e0] sm:$0xff]
    %v418 = vld [vmem:[#allocation5 + $0x9e8] sm:$0xff]
    %v419 = vld [vmem:[#allocation5 + $0x9f0] sm:$0xff]
    %v420 = vld [vmem:[#allocation5 + $0x9f8] sm:$0xff]
    %v421 = vld [vmem:[#allocation5 + $0xa00] sm:$0xff]
    %v422 = vld [vmem:[#allocation5 + $0xa08] sm:$0xff]
    %v423 = vld [vmem:[#allocation5 + $0xa10] sm:$0xff]
    %v424 = vld [vmem:[#allocation5 + $0xa18] sm:$0xff]
    %v425 = vld [vmem:[#allocation5 + $0xa20] sm:$0xff]
    %v426 = vld [vmem:[#allocation5 + $0xa28] sm:$0xff]
    %v427 = vld [vmem:[#allocation5 + $0xa30] sm:$0xff]
    %v428 = vld [vmem:[#allocation5 + $0xa38] sm:$0xff]
    %v429 = vld [vmem:[#allocation5 + $0xa40] sm:$0xff]
    %v430 = vld [vmem:[#allocation5 + $0xa48] sm:$0xff]
    %v431 = vld [vmem:[#allocation5 + $0xa50] sm:$0xff]
    %v432 = vld [vmem:[#allocation5 + $0xa58] sm:$0xff]
    %v433 = vld [vmem:[#allocation5 + $0xa60] sm:$0xff]
    %v434 = vld [vmem:[#allocation5 + $0xa68] sm:$0xff]
    %v435 = vld [vmem:[#allocation5 + $0xa70] sm:$0xff]
    %v436 = vld [vmem:[#allocation5 + $0xa78] sm:$0xff]
    %v437 = vld [vmem:[#allocation5 + $0xa80] sm:$0xff]
    %v438 = vld [vmem:[#allocation5 + $0xa88] sm:$0xff]
    %v439 = vld [vmem:[#allocation5 + $0xa90] sm:$0xff]
    %v440 = vld [vmem:[#allocation5 + $0xa98] sm:$0xff]
    %v441 = vld [vmem:[#allocation5 + $0xaa0] sm:$0xff]
    %v442 = vld [vmem:[#allocation5 + $0xaa8] sm:$0xff]
    %v443 = vld [vmem:[#allocation5 + $0xab0] sm:$0xff]
    %v444 = vld [vmem:[#allocation5 + $0xab8] sm:$0xff]
    %v445 = vld [vmem:[#allocation5 + $0xac0] sm:$0xff]
    %v446 = vld [vmem:[#allocation5 + $0xac8] sm:$0xff]
    %v447 = vld [vmem:[#allocation5 + $0xad0] sm:$0xff]
    %v448 = vld [vmem:[#allocation5 + $0xad8] sm:$0xff]
    %v449 = vld [vmem:[#allocation5 + $0xae0] sm:$0xff]
    %v450 = vld [vmem:[#allocation5 + $0xae8] sm:$0xff]
    %v451 = vld [vmem:[#allocation5 + $0xaf0] sm:$0xff]
    %v452 = vld [vmem:[#allocation5 + $0xaf8] sm:$0xff]
    %v453 = vld [vmem:[#allocation5 + $0xb00] sm:$0xff]
    %v454 = vld [vmem:[#allocation5 + $0xb08] sm:$0xff]
    %v455 = vld [vmem:[#allocation5 + $0xb10] sm:$0xff]
    %v456 = vld [vmem:[#allocation5 + $0xb18] sm:$0xff]
    %v457 = vld [vmem:[#allocation5 + $0xb20] sm:$0xff]
    %v458 = vld [vmem:[#allocation5 + $0xb28] sm:$0xff]
    %v459 = vld [vmem:[#allocation5 + $0xb30] sm:$0xff]
    %v460 = vld [vmem:[#allocation5 + $0xb38] sm:$0xff]
    %v461 = vld [vmem:[#allocation5 + $0xb40] sm:$0xff]
    %v462 = vld [vmem:[#allocation5 + $0xb48] sm:$0xff]
    %v463 = vld [vmem:[#allocation5 + $0xb50] sm:$0xff]
    %v464 = vld [vmem:[#allocation5 + $0xb58] sm:$0xff]
    %v465 = vld [vmem:[#allocation5 + $0xb60] sm:$0xff]
    %v466 = vld [vmem:[#allocation5 + $0xb68] sm:$0xff]
    %v467 = vld [vmem:[#allocation5 + $0xb70] sm:$0xff]
    %v468 = vld [vmem:[#allocation5 + $0xb78] sm:$0xff]
    %v469 = vld [vmem:[#allocation5 + $0xb80] sm:$0xff]
    %v470 = vld [vmem:[#allocation5 + $0xb88] sm:$0xff]
    %v471 = vld [vmem:[#allocation5 + $0xb90] sm:$0xff]
    %v472 = vld [vmem:[#allocation5 + $0xb98] sm:$0xff]
    %v473 = vld [vmem:[#allocation5 + $0xba0] sm:$0xff]
    %v474 = vld [vmem:[#allocation5 + $0xba8] sm:$0xff]
    %v475 = vld [vmem:[#allocation5 + $0xbb0] sm:$0xff]
    %v476 = vld [vmem:[#allocation5 + $0xbb8] sm:$0xff]
    %v477 = vld [vmem:[#allocation5 + $0xbc0] sm:$0xff]
    %v478 = vld [vmem:[#allocation5 + $0xbc8] sm:$0xff]
    %v479 = vld [vmem:[#allocation5 + $0xbd0] sm:$0xff]
    %v480 = vld [vmem:[#allocation5 + $0xbd8] sm:$0xff]
    %v481 = vld [vmem:[#allocation5 + $0xbe0] sm:$0xff]
    %v482 = vld [vmem:[#allocation5 + $0xbe8] sm:$0xff]
    %v483 = vld [vmem:[#allocation5 + $0xbf0] sm:$0xff]
    %v484 = vld [vmem:[#allocation5 + $0xbf8] sm:$0xff]
    %v485 = vld [vmem:[#allocation5 + $0xc00] sm:$0xff]
    %v486 = vld [vmem:[#allocation5 + $0xc08] sm:$0xff]
    %v487 = vld [vmem:[#allocation5 + $0xc10] sm:$0xff]
    %v488 = vld [vmem:[#allocation5 + $0xc18] sm:$0xff]
    %v489 = vld [vmem:[#allocation5 + $0xc20] sm:$0xff]
    %v490 = vld [vmem:[#allocation5 + $0xc28] sm:$0xff]
    %v491 = vld [vmem:[#allocation5 + $0xc30] sm:$0xff]
    %v492 = vld [vmem:[#allocation5 + $0xc38] sm:$0xff]
    %v493 = vld [vmem:[#allocation5 + $0xc40] sm:$0xff]
    %v494 = vld [vmem:[#allocation5 + $0xc48] sm:$0xff]
    %v495 = vld [vmem:[#allocation5 + $0xc50] sm:$0xff]
    %v496 = vld [vmem:[#allocation5 + $0xc58] sm:$0xff]
    %v497 = vld [vmem:[#allocation5 + $0xc60] sm:$0xff]
    %v498 = vld [vmem:[#allocation5 + $0xc68] sm:$0xff]
    %v499 = vld [vmem:[#allocation5 + $0xc70] sm:$0xff]
    %v500 = vld [vmem:[#allocation5 + $0xc78] sm:$0xff]
    %v501 = vld [vmem:[#allocation5 + $0xc80] sm:$0xff]
    %v502 = vld [vmem:[#allocation5 + $0xc88] sm:$0xff]
    %v503 = vld [vmem:[#allocation5 + $0xc90] sm:$0xff]
    %v504 = vld [vmem:[#allocation5 + $0xc98] sm:$0xff]
    %v505 = vld [vmem:[#allocation5 + $0xca0] sm:$0xff]
    %v506 = vld [vmem:[#allocation5 + $0xca8] sm:$0xff]
    %v507 = vld [vmem:[#allocation5 + $0xcb0] sm:$0xff]
    %v508 = vld [vmem:[#allocation5 + $0xcb8] sm:$0xff]
    %v509 = vld [vmem:[#allocation5 + $0xcc0] sm:$0xff]
    %v510 = vld [vmem:[#allocation5 + $0xcc8] sm:$0xff]
    %v511 = vld [vmem:[#allocation5 + $0xcd0] sm:$0xff]
    %v512 = vld [vmem:[#allocation5 + $0xcd8] sm:$0xff]
    %v513 = vld [vmem:[#allocation5 + $0xce0] sm:$0xff]
    %v514 = vld [vmem:[#allocation5 + $0xce8] sm:$0xff]
    %v515 = vld [vmem:[#allocation5 + $0xcf0] sm:$0xff]
    %v516 = vld [vmem:[#allocation5 + $0xcf8] sm:$0xff]
    %v517 = vld [vmem:[#allocation5 + $0xd00] sm:$0xff]
    %v518 = vld [vmem:[#allocation5 + $0xd08] sm:$0xff]
    %v519 = vld [vmem:[#allocation5 + $0xd10] sm:$0xff]
    %v520 = vld [vmem:[#allocation5 + $0xd18] sm:$0xff]
    %v521 = vld [vmem:[#allocation5 + $0xd20] sm:$0xff]
    %v522 = vld [vmem:[#allocation5 + $0xd28] sm:$0xff]
    %v523 = vld [vmem:[#allocation5 + $0xd30] sm:$0xff]
    %v524 = vld [vmem:[#allocation5 + $0xd38] sm:$0xff]
    %v525 = vld [vmem:[#allocation5 + $0xd40] sm:$0xff]
    %v526 = vld [vmem:[#allocation5 + $0xd48] sm:$0xff]
    %v527 = vld [vmem:[#allocation5 + $0xd50] sm:$0xff]
    %v528 = vld [vmem:[#allocation5 + $0xd58] sm:$0xff]
    %v529 = vld [vmem:[#allocation5 + $0xd60] sm:$0xff]
    %v530 = vld [vmem:[#allocation5 + $0xd68] sm:$0xff]
    %v531 = vld [vmem:[#allocation5 + $0xd70] sm:$0xff]
    %v532 = vld [vmem:[#allocation5 + $0xd78] sm:$0xff]
    %v533 = vld [vmem:[#allocation5 + $0xd80] sm:$0xff]
    %v534 = vld [vmem:[#allocation5 + $0xd88] sm:$0xff]
    %v535 = vld [vmem:[#allocation5 + $0xd90] sm:$0xff]
    %v536 = vld [vmem:[#allocation5 + $0xd98] sm:$0xff]
    %v537 = vld [vmem:[#allocation5 + $0xda0] sm:$0xff]
    %v538 = vld [vmem:[#allocation5 + $0xda8] sm:$0xff]
    %v539 = vld [vmem:[#allocation5 + $0xdb0] sm:$0xff]
    %v540 = vld [vmem:[#allocation5 + $0xdb8] sm:$0xff]
    %v541 = vld [vmem:[#allocation5 + $0xdc0] sm:$0xff]
    %v542 = vld [vmem:[#allocation5 + $0xdc8] sm:$0xff]
    %v543 = vld [vmem:[#allocation5 + $0xdd0] sm:$0xff]
    %v544 = vld [vmem:[#allocation5 + $0xdd8] sm:$0xff]
    %v545 = vld [vmem:[#allocation5 + $0xde0] sm:$0xff]
    %v546 = vld [vmem:[#allocation5 + $0xde8] sm:$0xff]
    %v547 = vld [vmem:[#allocation5 + $0xdf0] sm:$0xff]
    %v548 = vld [vmem:[#allocation5 + $0xdf8] sm:$0xff]
    %v549 = vld [vmem:[#allocation5 + $0xe00] sm:$0xff]
    %v550 = vld [vmem:[#allocation5 + $0xe08] sm:$0xff]
    %v551 = vld [vmem:[#allocation5 + $0xe10] sm:$0xff]
    %v552 = vld [vmem:[#allocation5 + $0xe18] sm:$0xff]
    %v553 = vld [vmem:[#allocation5 + $0xe20] sm:$0xff]
    %v554 = vld [vmem:[#allocation5 + $0xe28] sm:$0xff]
    %v555 = vld [vmem:[#allocation5 + $0xe30] sm:$0xff]
    %v556 = vld [vmem:[#allocation5 + $0xe38] sm:$0xff]
    %v557 = vld [vmem:[#allocation5 + $0xe40] sm:$0xff]
    %v558 = vld [vmem:[#allocation5 + $0xe48] sm:$0xff]
    %v559 = vld [vmem:[#allocation5 + $0xe50] sm:$0xff]
    %v560 = vld [vmem:[#allocation5 + $0xe58] sm:$0xff]
    %v561 = vld [vmem:[#allocation5 + $0xe60] sm:$0xff]
    %v562 = vld [vmem:[#allocation5 + $0xe68] sm:$0xff]
    %v563 = vld [vmem:[#allocation5 + $0xe70] sm:$0xff]
    %v564 = vld [vmem:[#allocation5 + $0xe78] sm:$0xff]
    %v565 = vld [vmem:[#allocation5 + $0xe80] sm:$0xff]
    %v566 = vld [vmem:[#allocation5 + $0xe88] sm:$0xff]
    %v567 = vld [vmem:[#allocation5 + $0xe90] sm:$0xff]
    %v568 = vld [vmem:[#allocation5 + $0xe98] sm:$0xff]
    %v569 = vld [vmem:[#allocation5 + $0xea0] sm:$0xff]
    %v570 = vld [vmem:[#allocation5 + $0xea8] sm:$0xff]
    %v571 = vld [vmem:[#allocation5 + $0xeb0] sm:$0xff]
    %v572 = vld [vmem:[#allocation5 + $0xeb8] sm:$0xff]
    %v573 = vld [vmem:[#allocation5 + $0xec0] sm:$0xff]
    %v574 = vld [vmem:[#allocation5 + $0xec8] sm:$0xff]
    %v575 = vld [vmem:[#allocation5 + $0xed0] sm:$0xff]
    %v576 = vld [vmem:[#allocation5 + $0xed8] sm:$0xff]
    %v577 = vld [vmem:[#allocation5 + $0xee0] sm:$0xff]
    %v578 = vld [vmem:[#allocation5 + $0xee8] sm:$0xff]
    %v579 = vld [vmem:[#allocation5 + $0xef0] sm:$0xff]
    %v580 = vld [vmem:[#allocation5 + $0xef8] sm:$0xff]
    %v581 = vld [vmem:[#allocation5 + $0xf00] sm:$0xff]
    %v582 = vld [vmem:[#allocation5 + $0xf08] sm:$0xff]
    %v583 = vld [vmem:[#allocation5 + $0xf10] sm:$0xff]
    %v584 = vld [vmem:[#allocation5 + $0xf18] sm:$0xff]
    %v585 = vld [vmem:[#allocation5 + $0xf20] sm:$0xff]
    %v586 = vld [vmem:[#allocation5 + $0xf28] sm:$0xff]
    %v587 = vld [vmem:[#allocation5 + $0xf30] sm:$0xff]
    %v588 = vld [vmem:[#allocation5 + $0xf38] sm:$0xff]
    %v589 = vld [vmem:[#allocation5 + $0xf40] sm:$0xff]
    %v590 = vld [vmem:[#allocation5 + $0xf48] sm:$0xff]
    %v591 = vld [vmem:[#allocation5 + $0xf50] sm:$0xff]
    %v592 = vld [vmem:[#allocation5 + $0xf58] sm:$0xff]
    %v593 = vld [vmem:[#allocation5 + $0xf60] sm:$0xff]
    %v594 = vld [vmem:[#allocation5 + $0xf68] sm:$0xff]
    %v595 = vld [vmem:[#allocation5 + $0xf70] sm:$0xff]
    %v596 = vld [vmem:[#allocation5 + $0xf78] sm:$0xff]
    %v597 = vld [vmem:[#allocation5 + $0xf80] sm:$0xff]
    %v598 = vld [vmem:[#allocation5 + $0xf88] sm:$0xff]
    %v599 = vld [vmem:[#allocation5 + $0xf90] sm:$0xff]
    %v600 = vld [vmem:[#allocation5 + $0xf98] sm:$0xff]
    %v601 = vld [vmem:[#allocation5 + $0xfa0] sm:$0xff]
    %v602 = vld [vmem:[#allocation5 + $0xfa8] sm:$0xff]
    %v603 = vld [vmem:[#allocation5 + $0xfb0] sm:$0xff]
    %v604 = vld [vmem:[#allocation5 + $0xfb8] sm:$0xff]
    %v605 = vld [vmem:[#allocation5 + $0xfc0] sm:$0xff]
    %v606 = vld [vmem:[#allocation5 + $0xfc8] sm:$0xff]
    %v607 = vld [vmem:[#allocation5 + $0xfd0] sm:$0xff]
    %v608 = vld [vmem:[#allocation5 + $0xfd8] sm:$0xff]
    %v609 = vld [vmem:[#allocation5 + $0xfe0] sm:$0xff]
    %v610 = vld [vmem:[#allocation5 + $0xfe8] sm:$0xff]
    %v611 = vld [vmem:[#allocation5 + $0xff0] sm:$0xff]
    %v612 = vld [vmem:[#allocation5 + $0xff8] sm:$0xff]
    %v613 = vld [vmem:[#allocation5 + $0x1000] sm:$0xff]
    %v614 = vld [vmem:[#allocation5 + $0x1008] sm:$0xff]
    %v615 = vld [vmem:[#allocation5 + $0x1010] sm:$0xff]
    %v616 = vld [vmem:[#allocation5 + $0x1018] sm:$0xff]
    %v617 = vld [vmem:[#allocation5 + $0x1020] sm:$0xff]
    %v618 = vld [vmem:[#allocation5 + $0x1028] sm:$0xff]
    %v619 = vld [vmem:[#allocation5 + $0x1030] sm:$0xff]
    %v620 = vld [vmem:[#allocation5 + $0x1038] sm:$0xff]
    %v621 = vld [vmem:[#allocation5 + $0x1040] sm:$0xff]
    %v622 = vld [vmem:[#allocation5 + $0x1048] sm:$0xff]
    %v623 = vld [vmem:[#allocation5 + $0x1050] sm:$0xff]
    %v624 = vld [vmem:[#allocation5 + $0x1058] sm:$0xff]
    %v625 = vld [vmem:[#allocation5 + $0x1060] sm:$0xff]
    %v626 = vld [vmem:[#allocation5 + $0x1068] sm:$0xff]
    %v627 = vld [vmem:[#allocation5 + $0x1070] sm:$0xff]
    %v628 = vld [vmem:[#allocation5 + $0x1078] sm:$0xff]
    %v629 = vld [vmem:[#allocation5 + $0x1080] sm:$0xff]
    %v630 = vld [vmem:[#allocation5 + $0x1088] sm:$0xff]
    %v631 = vld [vmem:[#allocation5 + $0x1090] sm:$0xff]
    %v632 = vld [vmem:[#allocation5 + $0x1098] sm:$0xff]
    %v633 = vld [vmem:[#allocation5 + $0x10a0] sm:$0xff]
    %v634 = vld [vmem:[#allocation5 + $0x10a8] sm:$0xff]
    %v635 = vld [vmem:[#allocation5 + $0x10b0] sm:$0xff]
    %v636 = vld [vmem:[#allocation5 + $0x10b8] sm:$0xff]
    %v637 = vld [vmem:[#allocation5 + $0x10c0] sm:$0xff]
    %v638 = vld [vmem:[#allocation5 + $0x10c8] sm:$0xff]
    %v639 = vld [vmem:[#allocation5 + $0x10d0] sm:$0xff]
    %v640 = vld [vmem:[#allocation5 + $0x10d8] sm:$0xff]
    %v641 = vld [vmem:[#allocation5 + $0x10e0] sm:$0xff]
    %v642 = vld [vmem:[#allocation5 + $0x10e8] sm:$0xff]
    %v643 = vld [vmem:[#allocation5 + $0x10f0] sm:$0xff]
    %v644 = vld [vmem:[#allocation5 + $0x10f8] sm:$0xff]
    %v645 = vld [vmem:[#allocation5 + $0x1100] sm:$0xff]
    %v646 = vld [vmem:[#allocation5 + $0x1108] sm:$0xff]
    %v647 = vld [vmem:[#allocation5 + $0x1110] sm:$0xff]
    %v648 = vld [vmem:[#allocation5 + $0x1118] sm:$0xff]
    %v649 = vld [vmem:[#allocation5 + $0x1120] sm:$0xff]
    %v650 = vld [vmem:[#allocation5 + $0x1128] sm:$0xff]
    %v651 = vld [vmem:[#allocation5 + $0x1130] sm:$0xff]
    %v652 = vld [vmem:[#allocation5 + $0x1138] sm:$0xff]
    %v653 = vld [vmem:[#allocation5 + $0x1140] sm:$0xff]
    %v654 = vld [vmem:[#allocation5 + $0x1148] sm:$0xff]
    %v655 = vld [vmem:[#allocation5 + $0x1150] sm:$0xff]
    %v656 = vld [vmem:[#allocation5 + $0x1158] sm:$0xff]
    %v657 = vld [vmem:[#allocation5 + $0x1160] sm:$0xff]
    %v658 = vld [vmem:[#allocation5 + $0x1168] sm:$0xff]
    %v659 = vld [vmem:[#allocation5 + $0x1170] sm:$0xff]
    %v660 = vld [vmem:[#allocation5 + $0x1178] sm:$0xff]
    %v661 = vld [vmem:[#allocation5 + $0x1180] sm:$0xff]
    %v662 = vld [vmem:[#allocation5 + $0x1188] sm:$0xff]
    %v663 = vld [vmem:[#allocation5 + $0x1190] sm:$0xff]
    %v664 = vld [vmem:[#allocation5 + $0x1198] sm:$0xff]
    %v665 = vld [vmem:[#allocation5 + $0x11a0] sm:$0xff]
    %v666 = vld [vmem:[#allocation5 + $0x11a8] sm:$0xff]
    %v667 = vld [vmem:[#allocation5 + $0x11b0] sm:$0xff]
    %v668 = vld [vmem:[#allocation5 + $0x11b8] sm:$0xff]
    %v669 = vld [vmem:[#allocation5 + $0x11c0] sm:$0xff]
    %v670 = vld [vmem:[#allocation5 + $0x11c8] sm:$0xff]
    %v671 = vld [vmem:[#allocation5 + $0x11d0] sm:$0xff]
    %v672 = vld [vmem:[#allocation5 + $0x11d8] sm:$0xff]
    %v673 = vld [vmem:[#allocation5 + $0x11e0] sm:$0xff]
    %v674 = vld [vmem:[#allocation5 + $0x11e8] sm:$0xff]
    %v675 = vld [vmem:[#allocation5 + $0x11f0] sm:$0xff]
    %v676 = vld [vmem:[#allocation5 + $0x11f8] sm:$0xff]
    %v677 = vld [vmem:[#allocation7] sm:$0xff]
    %v678 = vld [vmem:[#allocation7 + $0x8] sm:$0xf]
    %v681 = vperm.slane %v677, 0
    %v682 = vperm.slane %v677, 1
    %v683 = vperm.slane %v677, 2
    %v684 = vperm.slane %v677, 3
    %v685 = vperm.slane %v677, 4
    %v686 = vperm.slane %v677, 5
    %v687 = vperm.slane %v677, 6
    %v688 = vperm.slane %v677, 7
    %v689 = vperm.slane %v678, 0
    %v690 = vperm.slane %v678, 1
    %v691 = vperm.slane %v678, 2
    %v692 = vperm.slane %v678, 3
    %705 = vmatpush.msra.mxu0 %v281
    %706 = vmatpush.msra.mxu0 %v269
    %707 = vmatpush.msra.mxu0 %v257
    %708 = vmatpush.msra.mxu0 %v245
    %709 = vmatpush.msra.mxu0 %v233
    %710 = vmatpush.msra.mxu0 %v221
    %711 = vmatpush.msra.mxu0 %v209
    %712 = vmatpush.msra.mxu0 %v197
    %713 = vmatpush.msra.mxu0 %v185
    %714 = vmatpush.msra.mxu0 %v173
    %715 = vmatpush.msra.mxu0 %v161
    %716 = vmatpush.msra.mxu0 %v149
    %717 = vmatpush.msra.mxu0 %v137
    %718 = vmatpush.msra.mxu0 %v125
    %719 = vmatpush.msra.mxu0 %v113
    %720 = vmatpush.msra.mxu0 %v101
    %721 = vmatmul.f32.gmra.mxu0 %v95
    %v722 = vpop.f32.mrf.mxu0
    %v723 = vadd.f32 %v681, %v722
    %724 = vmatmul.f32.gmra.mxu0 %v98
    %v725 = vpop.f32.mrf.mxu0
    %v726 = vadd.f32 %v681, %v725
    %727 = vdwg.mxu0
    %728 = vmatpush.msra.mxu0 %v473
    %729 = vmatpush.msra.mxu0 %v461
    %730 = vmatpush.msra.mxu0 %v449
    %731 = vmatpush.msra.mxu0 %v437
    %732 = vmatpush.msra.mxu0 %v425
    %733 = vmatpush.msra.mxu0 %v413
    %734 = vmatpush.msra.mxu0 %v401
    %735 = vmatpush.msra.mxu0 %v389
    %736 = vmatpush.msra.mxu0 %v377
    %737 = vmatpush.msra.mxu0 %v365
    %738 = vmatpush.msra.mxu0 %v353
    %739 = vmatpush.msra.mxu0 %v341
    %740 = vmatpush.msra.mxu0 %v329
    %741 = vmatpush.msra.mxu0 %v317
    %742 = vmatpush.msra.mxu0 %v305
    %743 = vmatpush.msra.mxu0 %v293
    %744 = vmatmul.f32.gmra.mxu0 %v96
    %v745 = vpop.f32.mrf.mxu0
    %v746 = vadd.f32 %v723, %v745
    %747 = vmatmul.f32.gmra.mxu0 %v99
    %v748 = vpop.f32.mrf.mxu0
    %v749 = vadd.f32 %v726, %v748
    %750 = vdwg.mxu0
    %751 = vmatpush.msra.mxu0 %v665
    %752 = vmatpush.msra.mxu0 %v653
    %753 = vmatpush.msra.mxu0 %v641
    %754 = vmatpush.msra.mxu0 %v629
    %755 = vmatpush.msra.mxu0 %v617
    %756 = vmatpush.msra.mxu0 %v605
    %757 = vmatpush.msra.mxu0 %v593
    %758 = vmatpush.msra.mxu0 %v581
    %759 = vmatpush.msra.mxu0 %v569
    %760 = vmatpush.msra.mxu0 %v557
    %761 = vmatpush.msra.mxu0 %v545
    %762 = vmatpush.msra.mxu0 %v533
    %763 = vmatpush.msra.mxu0 %v521
    %764 = vmatpush.msra.mxu0 %v509
    %765 = vmatpush.msra.mxu0 %v497
    %766 = vmatpush.msra.mxu0 %v485
    %767 = vmatmul.f32.gmra.mxu0 %v97
    %v768 = vpop.f32.mrf.mxu0
    %v769 = vadd.f32 %v746, %v768
    %770 = vmatmul.f32.gmra.mxu0 %v100
    %v771 = vpop.f32.mrf.mxu0
    %v772 = vadd.f32 %v749, %v771
    %773 = vdwg.mxu0
    %774 = vmatpush.msra.mxu0 %v282
    %775 = vmatpush.msra.mxu0 %v270
    %776 = vmatpush.msra.mxu0 %v258
    %777 = vmatpush.msra.mxu0 %v246
    %778 = vmatpush.msra.mxu0 %v234
    %779 = vmatpush.msra.mxu0 %v222
    %780 = vmatpush.msra.mxu0 %v210
    %781 = vmatpush.msra.mxu0 %v198
    %782 = vmatpush.msra.mxu0 %v186
    %783 = vmatpush.msra.mxu0 %v174
    %784 = vmatpush.msra.mxu0 %v162
    %785 = vmatpush.msra.mxu0 %v150
    %786 = vmatpush.msra.mxu0 %v138
    %787 = vmatpush.msra.mxu0 %v126
    %788 = vmatpush.msra.mxu0 %v114
    %789 = vmatpush.msra.mxu0 %v102
    %790 = vmatmul.f32.gmra.mxu0 %v95
    %v791 = vpop.f32.mrf.mxu0
    %v792 = vadd.f32 %v682, %v791
    %793 = vmatmul.f32.gmra.mxu0 %v98
    %v794 = vpop.f32.mrf.mxu0
    %v795 = vadd.f32 %v682, %v794
    %796 = vdwg.mxu0
    %797 = vmatpush.msra.mxu0 %v474
    %798 = vmatpush.msra.mxu0 %v462
    %799 = vmatpush.msra.mxu0 %v450
    %800 = vmatpush.msra.mxu0 %v438
    %801 = vmatpush.msra.mxu0 %v426
    %802 = vmatpush.msra.mxu0 %v414
    %803 = vmatpush.msra.mxu0 %v402
    %804 = vmatpush.msra.mxu0 %v390
    %805 = vmatpush.msra.mxu0 %v378
    %806 = vmatpush.msra.mxu0 %v366
    %807 = vmatpush.msra.mxu0 %v354
    %808 = vmatpush.msra.mxu0 %v342
    %809 = vmatpush.msra.mxu0 %v330
    %810 = vmatpush.msra.mxu0 %v318
    %811 = vmatpush.msra.mxu0 %v306
    %812 = vmatpush.msra.mxu0 %v294
    %813 = vmatmul.f32.gmra.mxu0 %v96
    %v814 = vpop.f32.mrf.mxu0
    %v815 = vadd.f32 %v792, %v814
    %816 = vmatmul.f32.gmra.mxu0 %v99
    %v817 = vpop.f32.mrf.mxu0
    %v818 = vadd.f32 %v795, %v817
    %819 = vdwg.mxu0
    %820 = vmatpush.msra.mxu0 %v666
    %821 = vmatpush.msra.mxu0 %v654
    %822 = vmatpush.msra.mxu0 %v642
    %823 = vmatpush.msra.mxu0 %v630
    %824 = vmatpush.msra.mxu0 %v618
    %825 = vmatpush.msra.mxu0 %v606
    %826 = vmatpush.msra.mxu0 %v594
    %827 = vmatpush.msra.mxu0 %v582
    %828 = vmatpush.msra.mxu0 %v570
    %829 = vmatpush.msra.mxu0 %v558
    %830 = vmatpush.msra.mxu0 %v546
    %831 = vmatpush.msra.mxu0 %v534
    %832 = vmatpush.msra.mxu0 %v522
    %833 = vmatpush.msra.mxu0 %v510
    %834 = vmatpush.msra.mxu0 %v498
    %835 = vmatpush.msra.mxu0 %v486
    %836 = vmatmul.f32.gmra.mxu0 %v97
    %v837 = vpop.f32.mrf.mxu0
    %v838 = vadd.f32 %v815, %v837
    %839 = vmatmul.f32.gmra.mxu0 %v100
    %v840 = vpop.f32.mrf.mxu0
    %v841 = vadd.f32 %v818, %v840
    %842 = vdwg.mxu0
    %843 = vmatpush.msra.mxu0 %v283
    %844 = vmatpush.msra.mxu0 %v271
    %845 = vmatpush.msra.mxu0 %v259
    %846 = vmatpush.msra.mxu0 %v247
    %847 = vmatpush.msra.mxu0 %v235
    %848 = vmatpush.msra.mxu0 %v223
    %849 = vmatpush.msra.mxu0 %v211
    %850 = vmatpush.msra.mxu0 %v199
    %851 = vmatpush.msra.mxu0 %v187
    %852 = vmatpush.msra.mxu0 %v175
    %853 = vmatpush.msra.mxu0 %v163
    %854 = vmatpush.msra.mxu0 %v151
    %855 = vmatpush.msra.mxu0 %v139
    %856 = vmatpush.msra.mxu0 %v127
    %857 = vmatpush.msra.mxu0 %v115
    %858 = vmatpush.msra.mxu0 %v103
    %859 = vmatmul.f32.gmra.mxu0 %v95
    %v860 = vpop.f32.mrf.mxu0
    %v861 = vadd.f32 %v683, %v860
    %862 = vmatmul.f32.gmra.mxu0 %v98
    %v863 = vpop.f32.mrf.mxu0
    %v864 = vadd.f32 %v683, %v863
    %865 = vdwg.mxu0
    %866 = vmatpush.msra.mxu0 %v475
    %867 = vmatpush.msra.mxu0 %v463
    %868 = vmatpush.msra.mxu0 %v451
    %869 = vmatpush.msra.mxu0 %v439
    %870 = vmatpush.msra.mxu0 %v427
    %871 = vmatpush.msra.mxu0 %v415
    %872 = vmatpush.msra.mxu0 %v403
    %873 = vmatpush.msra.mxu0 %v391
    %874 = vmatpush.msra.mxu0 %v379
    %875 = vmatpush.msra.mxu0 %v367
    %876 = vmatpush.msra.mxu0 %v355
    %877 = vmatpush.msra.mxu0 %v343
    %878 = vmatpush.msra.mxu0 %v331
    %879 = vmatpush.msra.mxu0 %v319
    %880 = vmatpush.msra.mxu0 %v307
    %881 = vmatpush.msra.mxu0 %v295
    %882 = vmatmul.f32.gmra.mxu0 %v96
    %v883 = vpop.f32.mrf.mxu0
    %v884 = vadd.f32 %v861, %v883
    %885 = vmatmul.f32.gmra.mxu0 %v99
    %v886 = vpop.f32.mrf.mxu0
    %v887 = vadd.f32 %v864, %v886
    %888 = vdwg.mxu0
    %889 = vmatpush.msra.mxu0 %v667
    %890 = vmatpush.msra.mxu0 %v655
    %891 = vmatpush.msra.mxu0 %v643
    %892 = vmatpush.msra.mxu0 %v631
    %893 = vmatpush.msra.mxu0 %v619
    %894 = vmatpush.msra.mxu0 %v607
    %895 = vmatpush.msra.mxu0 %v595
    %896 = vmatpush.msra.mxu0 %v583
    %897 = vmatpush.msra.mxu0 %v571
    %898 = vmatpush.msra.mxu0 %v559
    %899 = vmatpush.msra.mxu0 %v547
    %900 = vmatpush.msra.mxu0 %v535
    %901 = vmatpush.msra.mxu0 %v523
    %902 = vmatpush.msra.mxu0 %v511
    %903 = vmatpush.msra.mxu0 %v499
    %904 = vmatpush.msra.mxu0 %v487
    %905 = vmatmul.f32.gmra.mxu0 %v97
    %v906 = vpop.f32.mrf.mxu0
    %v907 = vadd.f32 %v884, %v906
    %908 = vmatmul.f32.gmra.mxu0 %v100
    %v909 = vpop.f32.mrf.mxu0
    %v910 = vadd.f32 %v887, %v909
    %911 = vdwg.mxu0
    %912 = vmatpush.msra.mxu0 %v284
    %913 = vmatpush.msra.mxu0 %v272
    %914 = vmatpush.msra.mxu0 %v260
    %915 = vmatpush.msra.mxu0 %v248
    %916 = vmatpush.msra.mxu0 %v236
    %917 = vmatpush.msra.mxu0 %v224
    %918 = vmatpush.msra.mxu0 %v212
    %919 = vmatpush.msra.mxu0 %v200
    %920 = vmatpush.msra.mxu0 %v188
    %921 = vmatpush.msra.mxu0 %v176
    %922 = vmatpush.msra.mxu0 %v164
    %923 = vmatpush.msra.mxu0 %v152
    %924 = vmatpush.msra.mxu0 %v140
    %925 = vmatpush.msra.mxu0 %v128
    %926 = vmatpush.msra.mxu0 %v116
    %927 = vmatpush.msra.mxu0 %v104
    %928 = vmatmul.f32.gmra.mxu0 %v95
    %v929 = vpop.f32.mrf.mxu0
    %v930 = vadd.f32 %v684, %v929
    %931 = vmatmul.f32.gmra.mxu0 %v98
    %v932 = vpop.f32.mrf.mxu0
    %v933 = vadd.f32 %v684, %v932
    %934 = vdwg.mxu0
    %935 = vmatpush.msra.mxu0 %v476
    %936 = vmatpush.msra.mxu0 %v464
    %937 = vmatpush.msra.mxu0 %v452
    %938 = vmatpush.msra.mxu0 %v440
    %939 = vmatpush.msra.mxu0 %v428
    %940 = vmatpush.msra.mxu0 %v416
    %941 = vmatpush.msra.mxu0 %v404
    %942 = vmatpush.msra.mxu0 %v392
    %943 = vmatpush.msra.mxu0 %v380
    %944 = vmatpush.msra.mxu0 %v368
    %945 = vmatpush.msra.mxu0 %v356
    %946 = vmatpush.msra.mxu0 %v344
    %947 = vmatpush.msra.mxu0 %v332
    %948 = vmatpush.msra.mxu0 %v320
    %949 = vmatpush.msra.mxu0 %v308
    %950 = vmatpush.msra.mxu0 %v296
    %951 = vmatmul.f32.gmra.mxu0 %v96
    %v952 = vpop.f32.mrf.mxu0
    %v953 = vadd.f32 %v930, %v952
    %954 = vmatmul.f32.gmra.mxu0 %v99
    %v955 = vpop.f32.mrf.mxu0
    %v956 = vadd.f32 %v933, %v955
    %957 = vdwg.mxu0
    %958 = vmatpush.msra.mxu0 %v668
    %959 = vmatpush.msra.mxu0 %v656
    %960 = vmatpush.msra.mxu0 %v644
    %961 = vmatpush.msra.mxu0 %v632
    %962 = vmatpush.msra.mxu0 %v620
    %963 = vmatpush.msra.mxu0 %v608
    %964 = vmatpush.msra.mxu0 %v596
    %965 = vmatpush.msra.mxu0 %v584
    %966 = vmatpush.msra.mxu0 %v572
    %967 = vmatpush.msra.mxu0 %v560
    %968 = vmatpush.msra.mxu0 %v548
    %969 = vmatpush.msra.mxu0 %v536
    %970 = vmatpush.msra.mxu0 %v524
    %971 = vmatpush.msra.mxu0 %v512
    %972 = vmatpush.msra.mxu0 %v500
    %973 = vmatpush.msra.mxu0 %v488
    %974 = vmatmul.f32.gmra.mxu0 %v97
    %v975 = vpop.f32.mrf.mxu0
    %v976 = vadd.f32 %v953, %v975
    %977 = vmatmul.f32.gmra.mxu0 %v100
    %v978 = vpop.f32.mrf.mxu0
    %v979 = vadd.f32 %v956, %v978
    %980 = vdwg.mxu0
    %981 = vmatpush.msra.mxu0 %v285
    %982 = vmatpush.msra.mxu0 %v273
    %983 = vmatpush.msra.mxu0 %v261
    %984 = vmatpush.msra.mxu0 %v249
    %985 = vmatpush.msra.mxu0 %v237
    %986 = vmatpush.msra.mxu0 %v225
    %987 = vmatpush.msra.mxu0 %v213
    %988 = vmatpush.msra.mxu0 %v201
    %989 = vmatpush.msra.mxu0 %v189
    %990 = vmatpush.msra.mxu0 %v177
    %991 = vmatpush.msra.mxu0 %v165
    %992 = vmatpush.msra.mxu0 %v153
    %993 = vmatpush.msra.mxu0 %v141
    %994 = vmatpush.msra.mxu0 %v129
    %995 = vmatpush.msra.mxu0 %v117
    %996 = vmatpush.msra.mxu0 %v105
    %997 = vmatmul.f32.gmra.mxu0 %v95
    %v998 = vpop.f32.mrf.mxu0
    %v999 = vadd.f32 %v685, %v998
    %1000 = vmatmul.f32.gmra.mxu0 %v98
    %v1001 = vpop.f32.mrf.mxu0
    %v1002 = vadd.f32 %v685, %v1001
    %1003 = vdwg.mxu0
    %1004 = vmatpush.msra.mxu0 %v477
    %1005 = vmatpush.msra.mxu0 %v465
    %1006 = vmatpush.msra.mxu0 %v453
    %1007 = vmatpush.msra.mxu0 %v441
    %1008 = vmatpush.msra.mxu0 %v429
    %1009 = vmatpush.msra.mxu0 %v417
    %1010 = vmatpush.msra.mxu0 %v405
    %1011 = vmatpush.msra.mxu0 %v393
    %1012 = vmatpush.msra.mxu0 %v381
    %1013 = vmatpush.msra.mxu0 %v369
    %1014 = vmatpush.msra.mxu0 %v357
    %1015 = vmatpush.msra.mxu0 %v345
    %1016 = vmatpush.msra.mxu0 %v333
    %1017 = vmatpush.msra.mxu0 %v321
    %1018 = vmatpush.msra.mxu0 %v309
    %1019 = vmatpush.msra.mxu0 %v297
    %1020 = vmatmul.f32.gmra.mxu0 %v96
    %v1021 = vpop.f32.mrf.mxu0
    %v1022 = vadd.f32 %v999, %v1021
    %1023 = vmatmul.f32.gmra.mxu0 %v99
    %v1024 = vpop.f32.mrf.mxu0
    %v1025 = vadd.f32 %v1002, %v1024
    %1026 = vdwg.mxu0
    %1027 = vmatpush.msra.mxu0 %v669
    %1028 = vmatpush.msra.mxu0 %v657
    %1029 = vmatpush.msra.mxu0 %v645
    %1030 = vmatpush.msra.mxu0 %v633
    %1031 = vmatpush.msra.mxu0 %v621
    %1032 = vmatpush.msra.mxu0 %v609
    %1033 = vmatpush.msra.mxu0 %v597
    %1034 = vmatpush.msra.mxu0 %v585
    %1035 = vmatpush.msra.mxu0 %v573
    %1036 = vmatpush.msra.mxu0 %v561
    %1037 = vmatpush.msra.mxu0 %v549
    %1038 = vmatpush.msra.mxu0 %v537
    %1039 = vmatpush.msra.mxu0 %v525
    %1040 = vmatpush.msra.mxu0 %v513
    %1041 = vmatpush.msra.mxu0 %v501
    %1042 = vmatpush.msra.mxu0 %v489
    %1043 = vmatmul.f32.gmra.mxu0 %v97
    %v1044 = vpop.f32.mrf.mxu0
    %v1045 = vadd.f32 %v1022, %v1044
    %1046 = vmatmul.f32.gmra.mxu0 %v100
    %v1047 = vpop.f32.mrf.mxu0
    %v1048 = vadd.f32 %v1025, %v1047
    %1049 = vdwg.mxu0
    %1050 = vmatpush.msra.mxu0 %v286
    %1051 = vmatpush.msra.mxu0 %v274
    %1052 = vmatpush.msra.mxu0 %v262
    %1053 = vmatpush.msra.mxu0 %v250
    %1054 = vmatpush.msra.mxu0 %v238
    %1055 = vmatpush.msra.mxu0 %v226
    %1056 = vmatpush.msra.mxu0 %v214
    %1057 = vmatpush.msra.mxu0 %v202
    %1058 = vmatpush.msra.mxu0 %v190
    %1059 = vmatpush.msra.mxu0 %v178
    %1060 = vmatpush.msra.mxu0 %v166
    %1061 = vmatpush.msra.mxu0 %v154
    %1062 = vmatpush.msra.mxu0 %v142
    %1063 = vmatpush.msra.mxu0 %v130
    %1064 = vmatpush.msra.mxu0 %v118
    %1065 = vmatpush.msra.mxu0 %v106
    %1066 = vmatmul.f32.gmra.mxu0 %v95
    %v1067 = vpop.f32.mrf.mxu0
    %v1068 = vadd.f32 %v686, %v1067
    %1069 = vmatmul.f32.gmra.mxu0 %v98
    %v1070 = vpop.f32.mrf.mxu0
    %v1071 = vadd.f32 %v686, %v1070
    %1072 = vdwg.mxu0
    %1073 = vmatpush.msra.mxu0 %v478
    %1074 = vmatpush.msra.mxu0 %v466
    %1075 = vmatpush.msra.mxu0 %v454
    %1076 = vmatpush.msra.mxu0 %v442
    %1077 = vmatpush.msra.mxu0 %v430
    %1078 = vmatpush.msra.mxu0 %v418
    %1079 = vmatpush.msra.mxu0 %v406
    %1080 = vmatpush.msra.mxu0 %v394
    %1081 = vmatpush.msra.mxu0 %v382
    %1082 = vmatpush.msra.mxu0 %v370
    %1083 = vmatpush.msra.mxu0 %v358
    %1084 = vmatpush.msra.mxu0 %v346
    %1085 = vmatpush.msra.mxu0 %v334
    %1086 = vmatpush.msra.mxu0 %v322
    %1087 = vmatpush.msra.mxu0 %v310
    %1088 = vmatpush.msra.mxu0 %v298
    %1089 = vmatmul.f32.gmra.mxu0 %v96
    %v1090 = vpop.f32.mrf.mxu0
    %v1091 = vadd.f32 %v1068, %v1090
    %1092 = vmatmul.f32.gmra.mxu0 %v99
    %v1093 = vpop.f32.mrf.mxu0
    %v1094 = vadd.f32 %v1071, %v1093
    %1095 = vdwg.mxu0
    %1096 = vmatpush.msra.mxu0 %v670
    %1097 = vmatpush.msra.mxu0 %v658
    %1098 = vmatpush.msra.mxu0 %v646
    %1099 = vmatpush.msra.mxu0 %v634
    %1100 = vmatpush.msra.mxu0 %v622
    %1101 = vmatpush.msra.mxu0 %v610
    %1102 = vmatpush.msra.mxu0 %v598
    %1103 = vmatpush.msra.mxu0 %v586
    %1104 = vmatpush.msra.mxu0 %v574
    %1105 = vmatpush.msra.mxu0 %v562
    %1106 = vmatpush.msra.mxu0 %v550
    %1107 = vmatpush.msra.mxu0 %v538
    %1108 = vmatpush.msra.mxu0 %v526
    %1109 = vmatpush.msra.mxu0 %v514
    %1110 = vmatpush.msra.mxu0 %v502
    %1111 = vmatpush.msra.mxu0 %v490
    %1112 = vmatmul.f32.gmra.mxu0 %v97
    %v1113 = vpop.f32.mrf.mxu0
    %v1114 = vadd.f32 %v1091, %v1113
    %1115 = vmatmul.f32.gmra.mxu0 %v100
    %v1116 = vpop.f32.mrf.mxu0
    %v1117 = vadd.f32 %v1094, %v1116
    %1118 = vdwg.mxu0
    %1119 = vmatpush.msra.mxu0 %v287
    %1120 = vmatpush.msra.mxu0 %v275
    %1121 = vmatpush.msra.mxu0 %v263
    %1122 = vmatpush.msra.mxu0 %v251
    %1123 = vmatpush.msra.mxu0 %v239
    %1124 = vmatpush.msra.mxu0 %v227
    %1125 = vmatpush.msra.mxu0 %v215
    %1126 = vmatpush.msra.mxu0 %v203
    %1127 = vmatpush.msra.mxu0 %v191
    %1128 = vmatpush.msra.mxu0 %v179
    %1129 = vmatpush.msra.mxu0 %v167
    %1130 = vmatpush.msra.mxu0 %v155
    %1131 = vmatpush.msra.mxu0 %v143
    %1132 = vmatpush.msra.mxu0 %v131
    %1133 = vmatpush.msra.mxu0 %v119
    %1134 = vmatpush.msra.mxu0 %v107
    %1135 = vmatmul.f32.gmra.mxu0 %v95
    %v1136 = vpop.f32.mrf.mxu0
    %v1137 = vadd.f32 %v687, %v1136
    %1138 = vmatmul.f32.gmra.mxu0 %v98
    %v1139 = vpop.f32.mrf.mxu0
    %v1140 = vadd.f32 %v687, %v1139
    %1141 = vdwg.mxu0
    %1142 = vmatpush.msra.mxu0 %v479
    %1143 = vmatpush.msra.mxu0 %v467
    %1144 = vmatpush.msra.mxu0 %v455
    %1145 = vmatpush.msra.mxu0 %v443
    %1146 = vmatpush.msra.mxu0 %v431
    %1147 = vmatpush.msra.mxu0 %v419
    %1148 = vmatpush.msra.mxu0 %v407
    %1149 = vmatpush.msra.mxu0 %v395
    %1150 = vmatpush.msra.mxu0 %v383
    %1151 = vmatpush.msra.mxu0 %v371
    %1152 = vmatpush.msra.mxu0 %v359
    %1153 = vmatpush.msra.mxu0 %v347
    %1154 = vmatpush.msra.mxu0 %v335
    %1155 = vmatpush.msra.mxu0 %v323
    %1156 = vmatpush.msra.mxu0 %v311
    %1157 = vmatpush.msra.mxu0 %v299
    %1158 = vmatmul.f32.gmra.mxu0 %v96
    %v1159 = vpop.f32.mrf.mxu0
    %v1160 = vadd.f32 %v1137, %v1159
    %1161 = vmatmul.f32.gmra.mxu0 %v99
    %v1162 = vpop.f32.mrf.mxu0
    %v1163 = vadd.f32 %v1140, %v1162
    %1164 = vdwg.mxu0
    %1165 = vmatpush.msra.mxu0 %v671
    %1166 = vmatpush.msra.mxu0 %v659
    %1167 = vmatpush.msra.mxu0 %v647
    %1168 = vmatpush.msra.mxu0 %v635
    %1169 = vmatpush.msra.mxu0 %v623
    %1170 = vmatpush.msra.mxu0 %v611
    %1171 = vmatpush.msra.mxu0 %v599
    %1172 = vmatpush.msra.mxu0 %v587
    %1173 = vmatpush.msra.mxu0 %v575
    %1174 = vmatpush.msra.mxu0 %v563
    %1175 = vmatpush.msra.mxu0 %v551
    %1176 = vmatpush.msra.mxu0 %v539
    %1177 = vmatpush.msra.mxu0 %v527
    %1178 = vmatpush.msra.mxu0 %v515
    %1179 = vmatpush.msra.mxu0 %v503
    %1180 = vmatpush.msra.mxu0 %v491
    %1181 = vmatmul.f32.gmra.mxu0 %v97
    %v1182 = vpop.f32.mrf.mxu0
    %v1183 = vadd.f32 %v1160, %v1182
    %1184 = vmatmul.f32.gmra.mxu0 %v100
    %v1185 = vpop.f32.mrf.mxu0
    %v1186 = vadd.f32 %v1163, %v1185
    %1187 = vdwg.mxu0
    %1188 = vmatpush.msra.mxu0 %v288
    %1189 = vmatpush.msra.mxu0 %v276
    %1190 = vmatpush.msra.mxu0 %v264
    %1191 = vmatpush.msra.mxu0 %v252
    %1192 = vmatpush.msra.mxu0 %v240
    %1193 = vmatpush.msra.mxu0 %v228
    %1194 = vmatpush.msra.mxu0 %v216
    %1195 = vmatpush.msra.mxu0 %v204
    %1196 = vmatpush.msra.mxu0 %v192
    %1197 = vmatpush.msra.mxu0 %v180
    %1198 = vmatpush.msra.mxu0 %v168
    %1199 = vmatpush.msra.mxu0 %v156
    %1200 = vmatpush.msra.mxu0 %v144
    %1201 = vmatpush.msra.mxu0 %v132
    %1202 = vmatpush.msra.mxu0 %v120
    %1203 = vmatpush.msra.mxu0 %v108
    %1204 = vmatmul.f32.gmra.mxu0 %v95
    %v1205 = vpop.f32.mrf.mxu0
    %v1206 = vadd.f32 %v688, %v1205
    %1207 = vmatmul.f32.gmra.mxu0 %v98
    %v1208 = vpop.f32.mrf.mxu0
    %v1209 = vadd.f32 %v688, %v1208
    %1210 = vdwg.mxu0
    %1211 = vmatpush.msra.mxu0 %v480
    %1212 = vmatpush.msra.mxu0 %v468
    %1213 = vmatpush.msra.mxu0 %v456
    %1214 = vmatpush.msra.mxu0 %v444
    %1215 = vmatpush.msra.mxu0 %v432
    %1216 = vmatpush.msra.mxu0 %v420
    %1217 = vmatpush.msra.mxu0 %v408
    %1218 = vmatpush.msra.mxu0 %v396
    %1219 = vmatpush.msra.mxu0 %v384
    %1220 = vmatpush.msra.mxu0 %v372
    %1221 = vmatpush.msra.mxu0 %v360
    %1222 = vmatpush.msra.mxu0 %v348
    %1223 = vmatpush.msra.mxu0 %v336
    %1224 = vmatpush.msra.mxu0 %v324
    %1225 = vmatpush.msra.mxu0 %v312
    %1226 = vmatpush.msra.mxu0 %v300
    %1227 = vmatmul.f32.gmra.mxu0 %v96
    %v1228 = vpop.f32.mrf.mxu0
    %v1229 = vadd.f32 %v1206, %v1228
    %1230 = vmatmul.f32.gmra.mxu0 %v99
    %v1231 = vpop.f32.mrf.mxu0
    %v1232 = vadd.f32 %v1209, %v1231
    %1233 = vdwg.mxu0
    %1234 = vmatpush.msra.mxu0 %v672
    %1235 = vmatpush.msra.mxu0 %v660
    %1236 = vmatpush.msra.mxu0 %v648
    %1237 = vmatpush.msra.mxu0 %v636
    %1238 = vmatpush.msra.mxu0 %v624
    %1239 = vmatpush.msra.mxu0 %v612
    %1240 = vmatpush.msra.mxu0 %v600
    %1241 = vmatpush.msra.mxu0 %v588
    %1242 = vmatpush.msra.mxu0 %v576
    %1243 = vmatpush.msra.mxu0 %v564
    %1244 = vmatpush.msra.mxu0 %v552
    %1245 = vmatpush.msra.mxu0 %v540
    %1246 = vmatpush.msra.mxu0 %v528
    %1247 = vmatpush.msra.mxu0 %v516
    %1248 = vmatpush.msra.mxu0 %v504
    %1249 = vmatpush.msra.mxu0 %v492
    %1250 = vmatmul.f32.gmra.mxu0 %v97
    %v1251 = vpop.f32.mrf.mxu0
    %v1252 = vadd.f32 %v1229, %v1251
    %1253 = vmatmul.f32.gmra.mxu0 %v100
    %v1254 = vpop.f32.mrf.mxu0
    %v1255 = vadd.f32 %v1232, %v1254
    %1256 = vdwg.mxu0
    %1257 = vmatpush.msra.mxu0 %v289
    %1258 = vmatpush.msra.mxu0 %v277
    %1259 = vmatpush.msra.mxu0 %v265
    %1260 = vmatpush.msra.mxu0 %v253
    %1261 = vmatpush.msra.mxu0 %v241
    %1262 = vmatpush.msra.mxu0 %v229
    %1263 = vmatpush.msra.mxu0 %v217
    %1264 = vmatpush.msra.mxu0 %v205
    %1265 = vmatpush.msra.mxu0 %v193
    %1266 = vmatpush.msra.mxu0 %v181
    %1267 = vmatpush.msra.mxu0 %v169
    %1268 = vmatpush.msra.mxu0 %v157
    %1269 = vmatpush.msra.mxu0 %v145
    %1270 = vmatpush.msra.mxu0 %v133
    %1271 = vmatpush.msra.mxu0 %v121
    %1272 = vmatpush.msra.mxu0 %v109
    %1273 = vmatmul.f32.gmra.mxu0 %v95
    %v1274 = vpop.f32.mrf.mxu0
    %v1275 = vadd.f32 %v689, %v1274
    %1276 = vmatmul.f32.gmra.mxu0 %v98
    %v1277 = vpop.f32.mrf.mxu0
    %v1278 = vadd.f32 %v689, %v1277
    %1279 = vdwg.mxu0
    %1280 = vmatpush.msra.mxu0 %v481
    %1281 = vmatpush.msra.mxu0 %v469
    %1282 = vmatpush.msra.mxu0 %v457
    %1283 = vmatpush.msra.mxu0 %v445
    %1284 = vmatpush.msra.mxu0 %v433
    %1285 = vmatpush.msra.mxu0 %v421
    %1286 = vmatpush.msra.mxu0 %v409
    %1287 = vmatpush.msra.mxu0 %v397
    %1288 = vmatpush.msra.mxu0 %v385
    %1289 = vmatpush.msra.mxu0 %v373
    %1290 = vmatpush.msra.mxu0 %v361
    %1291 = vmatpush.msra.mxu0 %v349
    %1292 = vmatpush.msra.mxu0 %v337
    %1293 = vmatpush.msra.mxu0 %v325
    %1294 = vmatpush.msra.mxu0 %v313
    %1295 = vmatpush.msra.mxu0 %v301
    %1296 = vmatmul.f32.gmra.mxu0 %v96
    %v1297 = vpop.f32.mrf.mxu0
    %v1298 = vadd.f32 %v1275, %v1297
    %1299 = vmatmul.f32.gmra.mxu0 %v99
    %v1300 = vpop.f32.mrf.mxu0
    %v1301 = vadd.f32 %v1278, %v1300
    %1302 = vdwg.mxu0
    %1303 = vmatpush.msra.mxu0 %v673
    %1304 = vmatpush.msra.mxu0 %v661
    %1305 = vmatpush.msra.mxu0 %v649
    %1306 = vmatpush.msra.mxu0 %v637
    %1307 = vmatpush.msra.mxu0 %v625
    %1308 = vmatpush.msra.mxu0 %v613
    %1309 = vmatpush.msra.mxu0 %v601
    %1310 = vmatpush.msra.mxu0 %v589
    %1311 = vmatpush.msra.mxu0 %v577
    %1312 = vmatpush.msra.mxu0 %v565
    %1313 = vmatpush.msra.mxu0 %v553
    %1314 = vmatpush.msra.mxu0 %v541
    %1315 = vmatpush.msra.mxu0 %v529
    %1316 = vmatpush.msra.mxu0 %v517
    %1317 = vmatpush.msra.mxu0 %v505
    %1318 = vmatpush.msra.mxu0 %v493
    %1319 = vmatmul.f32.gmra.mxu0 %v97
    %v1320 = vpop.f32.mrf.mxu0
    %v1321 = vadd.f32 %v1298, %v1320
    %1322 = vmatmul.f32.gmra.mxu0 %v100
    %v1323 = vpop.f32.mrf.mxu0
    %v1324 = vadd.f32 %v1301, %v1323
    %1325 = vdwg.mxu0
    %1326 = vmatpush.msra.mxu0 %v290
    %1327 = vmatpush.msra.mxu0 %v278
    %1328 = vmatpush.msra.mxu0 %v266
    %1329 = vmatpush.msra.mxu0 %v254
    %1330 = vmatpush.msra.mxu0 %v242
    %1331 = vmatpush.msra.mxu0 %v230
    %1332 = vmatpush.msra.mxu0 %v218
    %1333 = vmatpush.msra.mxu0 %v206
    %1334 = vmatpush.msra.mxu0 %v194
    %1335 = vmatpush.msra.mxu0 %v182
    %1336 = vmatpush.msra.mxu0 %v170
    %1337 = vmatpush.msra.mxu0 %v158
    %1338 = vmatpush.msra.mxu0 %v146
    %1339 = vmatpush.msra.mxu0 %v134
    %1340 = vmatpush.msra.mxu0 %v122
    %1341 = vmatpush.msra.mxu0 %v110
    %1342 = vmatmul.f32.gmra.mxu0 %v95
    %v1343 = vpop.f32.mrf.mxu0
    %v1344 = vadd.f32 %v690, %v1343
    %1345 = vmatmul.f32.gmra.mxu0 %v98
    %v1346 = vpop.f32.mrf.mxu0
    %v1347 = vadd.f32 %v690, %v1346
    %1348 = vdwg.mxu0
    %1349 = vmatpush.msra.mxu0 %v482
    %1350 = vmatpush.msra.mxu0 %v470
    %1351 = vmatpush.msra.mxu0 %v458
    %1352 = vmatpush.msra.mxu0 %v446
    %1353 = vmatpush.msra.mxu0 %v434
    %1354 = vmatpush.msra.mxu0 %v422
    %1355 = vmatpush.msra.mxu0 %v410
    %1356 = vmatpush.msra.mxu0 %v398
    %1357 = vmatpush.msra.mxu0 %v386
    %1358 = vmatpush.msra.mxu0 %v374
    %1359 = vmatpush.msra.mxu0 %v362
    %1360 = vmatpush.msra.mxu0 %v350
    %1361 = vmatpush.msra.mxu0 %v338
    %1362 = vmatpush.msra.mxu0 %v326
    %1363 = vmatpush.msra.mxu0 %v314
    %1364 = vmatpush.msra.mxu0 %v302
    %1365 = vmatmul.f32.gmra.mxu0 %v96
    %v1366 = vpop.f32.mrf.mxu0
    %v1367 = vadd.f32 %v1344, %v1366
    %1368 = vmatmul.f32.gmra.mxu0 %v99
    %v1369 = vpop.f32.mrf.mxu0
    %v1370 = vadd.f32 %v1347, %v1369
    %1371 = vdwg.mxu0
    %1372 = vmatpush.msra.mxu0 %v674
    %1373 = vmatpush.msra.mxu0 %v662
    %1374 = vmatpush.msra.mxu0 %v650
    %1375 = vmatpush.msra.mxu0 %v638
    %1376 = vmatpush.msra.mxu0 %v626
    %1377 = vmatpush.msra.mxu0 %v614
    %1378 = vmatpush.msra.mxu0 %v602
    %1379 = vmatpush.msra.mxu0 %v590
    %1380 = vmatpush.msra.mxu0 %v578
    %1381 = vmatpush.msra.mxu0 %v566
    %1382 = vmatpush.msra.mxu0 %v554
    %1383 = vmatpush.msra.mxu0 %v542
    %1384 = vmatpush.msra.mxu0 %v530
    %1385 = vmatpush.msra.mxu0 %v518
    %1386 = vmatpush.msra.mxu0 %v506
    %1387 = vmatpush.msra.mxu0 %v494
    %1388 = vmatmul.f32.gmra.mxu0 %v97
    %v1389 = vpop.f32.mrf.mxu0
    %v1390 = vadd.f32 %v1367, %v1389
    %1391 = vmatmul.f32.gmra.mxu0 %v100
    %v1392 = vpop.f32.mrf.mxu0
    %v1393 = vadd.f32 %v1370, %v1392
    %1394 = vdwg.mxu0
    %1395 = vmatpush.msra.mxu0 %v291
    %1396 = vmatpush.msra.mxu0 %v279
    %1397 = vmatpush.msra.mxu0 %v267
    %1398 = vmatpush.msra.mxu0 %v255
    %1399 = vmatpush.msra.mxu0 %v243
    %1400 = vmatpush.msra.mxu0 %v231
    %1401 = vmatpush.msra.mxu0 %v219
    %1402 = vmatpush.msra.mxu0 %v207
    %1403 = vmatpush.msra.mxu0 %v195
    %1404 = vmatpush.msra.mxu0 %v183
    %1405 = vmatpush.msra.mxu0 %v171
    %1406 = vmatpush.msra.mxu0 %v159
    %1407 = vmatpush.msra.mxu0 %v147
    %1408 = vmatpush.msra.mxu0 %v135
    %1409 = vmatpush.msra.mxu0 %v123
    %1410 = vmatpush.msra.mxu0 %v111
    %1411 = vmatmul.f32.gmra.mxu0 %v95
    %v1412 = vpop.f32.mrf.mxu0
    %v1413 = vadd.f32 %v691, %v1412
    %1414 = vmatmul.f32.gmra.mxu0 %v98
    %v1415 = vpop.f32.mrf.mxu0
    %v1416 = vadd.f32 %v691, %v1415
    %1417 = vdwg.mxu0
    %1418 = vmatpush.msra.mxu0 %v483
    %1419 = vmatpush.msra.mxu0 %v471
    %1420 = vmatpush.msra.mxu0 %v459
    %1421 = vmatpush.msra.mxu0 %v447
    %1422 = vmatpush.msra.mxu0 %v435
    %1423 = vmatpush.msra.mxu0 %v423
    %1424 = vmatpush.msra.mxu0 %v411
    %1425 = vmatpush.msra.mxu0 %v399
    %1426 = vmatpush.msra.mxu0 %v387
    %1427 = vmatpush.msra.mxu0 %v375
    %1428 = vmatpush.msra.mxu0 %v363
    %1429 = vmatpush.msra.mxu0 %v351
    %1430 = vmatpush.msra.mxu0 %v339
    %1431 = vmatpush.msra.mxu0 %v327
    %1432 = vmatpush.msra.mxu0 %v315
    %1433 = vmatpush.msra.mxu0 %v303
    %1434 = vmatmul.f32.gmra.mxu0 %v96
    %v1435 = vpop.f32.mrf.mxu0
    %v1436 = vadd.f32 %v1413, %v1435
    %1437 = vmatmul.f32.gmra.mxu0 %v99
    %v1438 = vpop.f32.mrf.mxu0
    %v1439 = vadd.f32 %v1416, %v1438
    %1440 = vdwg.mxu0
    %1441 = vmatpush.msra.mxu0 %v675
    %1442 = vmatpush.msra.mxu0 %v663
    %1443 = vmatpush.msra.mxu0 %v651
    %1444 = vmatpush.msra.mxu0 %v639
    %1445 = vmatpush.msra.mxu0 %v627
    %1446 = vmatpush.msra.mxu0 %v615
    %1447 = vmatpush.msra.mxu0 %v603
    %1448 = vmatpush.msra.mxu0 %v591
    %1449 = vmatpush.msra.mxu0 %v579
    %1450 = vmatpush.msra.mxu0 %v567
    %1451 = vmatpush.msra.mxu0 %v555
    %1452 = vmatpush.msra.mxu0 %v543
    %1453 = vmatpush.msra.mxu0 %v531
    %1454 = vmatpush.msra.mxu0 %v519
    %1455 = vmatpush.msra.mxu0 %v507
    %1456 = vmatpush.msra.mxu0 %v495
    %1457 = vmatmul.f32.gmra.mxu0 %v97
    %v1458 = vpop.f32.mrf.mxu0
    %v1459 = vadd.f32 %v1436, %v1458
    %1460 = vmatmul.f32.gmra.mxu0 %v100
    %v1461 = vpop.f32.mrf.mxu0
    %v1462 = vadd.f32 %v1439, %v1461
    %1463 = vdwg.mxu0
    %1464 = vmatpush.msra.mxu0 %v292
    %1465 = vmatpush.msra.mxu0 %v280
    %1466 = vmatpush.msra.mxu0 %v268
    %1467 = vmatpush.msra.mxu0 %v256
    %1468 = vmatpush.msra.mxu0 %v244
    %1469 = vmatpush.msra.mxu0 %v232
    %1470 = vmatpush.msra.mxu0 %v220
    %1471 = vmatpush.msra.mxu0 %v208
    %1472 = vmatpush.msra.mxu0 %v196
    %1473 = vmatpush.msra.mxu0 %v184
    %1474 = vmatpush.msra.mxu0 %v172
    %1475 = vmatpush.msra.mxu0 %v160
    %1476 = vmatpush.msra.mxu0 %v148
    %1477 = vmatpush.msra.mxu0 %v136
    %1478 = vmatpush.msra.mxu0 %v124
    %1479 = vmatpush.msra.mxu0 %v112
    %1480 = vmatmul.f32.gmra.mxu0 %v95
    %v1481 = vpop.f32.mrf.mxu0
    %v1482 = vadd.f32 %v692, %v1481
    %1483 = vmatmul.f32.gmra.mxu0 %v98
    %v1484 = vpop.f32.mrf.mxu0
    %v1485 = vadd.f32 %v692, %v1484
    %1486 = vdwg.mxu0
    %1487 = vmatpush.msra.mxu0 %v484
    %1488 = vmatpush.msra.mxu0 %v472
    %1489 = vmatpush.msra.mxu0 %v460
    %1490 = vmatpush.msra.mxu0 %v448
    %1491 = vmatpush.msra.mxu0 %v436
    %1492 = vmatpush.msra.mxu0 %v424
    %1493 = vmatpush.msra.mxu0 %v412
    %1494 = vmatpush.msra.mxu0 %v400
    %1495 = vmatpush.msra.mxu0 %v388
    %1496 = vmatpush.msra.mxu0 %v376
    %1497 = vmatpush.msra.mxu0 %v364
    %1498 = vmatpush.msra.mxu0 %v352
    %1499 = vmatpush.msra.mxu0 %v340
    %1500 = vmatpush.msra.mxu0 %v328
    %1501 = vmatpush.msra.mxu0 %v316
    %1502 = vmatpush.msra.mxu0 %v304
    %1503 = vmatmul.f32.gmra.mxu0 %v96
    %v1504 = vpop.f32.mrf.mxu0
    %v1505 = vadd.f32 %v1482, %v1504
    %1506 = vmatmul.f32.gmra.mxu0 %v99
    %v1507 = vpop.f32.mrf.mxu0
    %v1508 = vadd.f32 %v1485, %v1507
    %1509 = vdwg.mxu0
    %1510 = vmatpush.msra.mxu0 %v676
    %1511 = vmatpush.msra.mxu0 %v664
    %1512 = vmatpush.msra.mxu0 %v652
    %1513 = vmatpush.msra.mxu0 %v640
    %1514 = vmatpush.msra.mxu0 %v628
    %1515 = vmatpush.msra.mxu0 %v616
    %1516 = vmatpush.msra.mxu0 %v604
    %1517 = vmatpush.msra.mxu0 %v592
    %1518 = vmatpush.msra.mxu0 %v580
    %1519 = vmatpush.msra.mxu0 %v568
    %1520 = vmatpush.msra.mxu0 %v556
    %1521 = vmatpush.msra.mxu0 %v544
    %1522 = vmatpush.msra.mxu0 %v532
    %1523 = vmatpush.msra.mxu0 %v520
    %1524 = vmatpush.msra.mxu0 %v508
    %1525 = vmatpush.msra.mxu0 %v496
    %1526 = vmatmul.f32.gmra.mxu0 %v97
    %v1527 = vpop.f32.mrf.mxu0
    %v1528 = vadd.f32 %v1505, %v1527
    %1529 = vmatmul.f32.gmra.mxu0 %v100
    %v1530 = vpop.f32.mrf.mxu0
    %v1531 = vadd.f32 %v1508, %v1530
    %1532 = vdwg.mxu0
    %v1533 = vmax.f32 %v769, 0.0
    %v1534 = vmax.f32 %v838, 0.0
    %v1535 = vmax.f32 %v907, 0.0
    %v1536 = vmax.f32 %v976, 0.0
    %v1537 = vmax.f32 %v1045, 0.0
    %v1538 = vmax.f32 %v1114, 0.0
    %v1539 = vmax.f32 %v1183, 0.0
    %v1540 = vmax.f32 %v1252, 0.0
    %v1541 = vmax.f32 %v1321, 0.0
    %v1542 = vmax.f32 %v1390, 0.0
    %v1543 = vmax.f32 %v1459, 0.0
    %v1544 = vmax.f32 %v1528, 0.0
    %v1545 = vmax.f32 %v772, 0.0
    %v1546 = vmax.f32 %v841, 0.0
    %v1547 = vmax.f32 %v910, 0.0
    %v1548 = vmax.f32 %v979, 0.0
    %v1549 = vmax.f32 %v1048, 0.0
    %v1550 = vmax.f32 %v1117, 0.0
    %v1551 = vmax.f32 %v1186, 0.0
    %v1552 = vmax.f32 %v1255, 0.0
    %v1553 = vmax.f32 %v1324, 0.0
    %v1554 = vmax.f32 %v1393, 0.0
    %v1555 = vmax.f32 %v1462, 0.0
    %v1556 = vmax.f32 %v1531, 0.0
    %v1557 = vld [vmem:[#allocation8] sm:$0xff]
    %v1558 = vld [vmem:[#allocation8 + $0x8] sm:$0xff]
    %v1559 = vld [vmem:[#allocation8 + $0x10] sm:$0xff]
    %v1560 = vld [vmem:[#allocation8 + $0x18] sm:$0xff]
    %v1561 = vld [vmem:[#allocation8 + $0x20] sm:$0xff]
    %v1562 = vld [vmem:[#allocation8 + $0x28] sm:$0xff]
    %v1563 = vld [vmem:[#allocation8 + $0x30] sm:$0xff]
    %v1564 = vld [vmem:[#allocation8 + $0x38] sm:$0xff]
    %v1565 = vld [vmem:[#allocation8 + $0x40] sm:$0xff]
    %v1566 = vld [vmem:[#allocation8 + $0x48] sm:$0xff]
    %v1567 = vld [vmem:[#allocation8 + $0x50] sm:$0xff]
    %v1568 = vld [vmem:[#allocation8 + $0x58] sm:$0xff]
    %v1569 = vld [vmem:[#allocation8 + $0x60] sm:$0xff]
    %v1570 = vld [vmem:[#allocation8 + $0x68] sm:$0xff]
    %v1571 = vld [vmem:[#allocation8 + $0x70] sm:$0xff]
    %v1572 = vld [vmem:[#allocation8 + $0x78] sm:$0xff]
    %v1573 = vld [vmem:[#allocation8 + $0x80] sm:$0xff]
    %v1574 = vld [vmem:[#allocation8 + $0x88] sm:$0xff]
    %v1575 = vld [vmem:[#allocation8 + $0x90] sm:$0xff]
    %v1576 = vld [vmem:[#allocation8 + $0x98] sm:$0xff]
    %v1577 = vld [vmem:[#allocation8 + $0xa0] sm:$0xff]
    %v1578 = vld [vmem:[#allocation8 + $0xa8] sm:$0xff]
    %v1579 = vld [vmem:[#allocation8 + $0xb0] sm:$0xff]
    %v1580 = vld [vmem:[#allocation8 + $0xb8] sm:$0xff]
    %v1581 = vld [vmem:[#allocation8 + $0xc0] sm:$0xff]
    %v1582 = vld [vmem:[#allocation8 + $0xc8] sm:$0xff]
    %v1583 = vld [vmem:[#allocation8 + $0xd0] sm:$0xff]
    %v1584 = vld [vmem:[#allocation8 + $0xd8] sm:$0xff]
    %v1585 = vld [vmem:[#allocation8 + $0xe0] sm:$0xff]
    %v1586 = vld [vmem:[#allocation8 + $0xe8] sm:$0xff]
    %v1587 = vld [vmem:[#allocation8 + $0xf0] sm:$0xff]
    %v1588 = vld [vmem:[#allocation8 + $0xf8] sm:$0xff]
    %v1589 = vld [vmem:[#allocation8 + $0x100] sm:$0xff]
    %v1590 = vld [vmem:[#allocation8 + $0x108] sm:$0xff]
    %v1591 = vld [vmem:[#allocation8 + $0x110] sm:$0xff]
    %v1592 = vld [vmem:[#allocation8 + $0x118] sm:$0xff]
    %v1593 = vld [vmem:[#allocation8 + $0x120] sm:$0xff]
    %v1594 = vld [vmem:[#allocation8 + $0x128] sm:$0xff]
    %v1595 = vld [vmem:[#allocation8 + $0x130] sm:$0xff]
    %v1596 = vld [vmem:[#allocation8 + $0x138] sm:$0xff]
    %v1597 = vld [vmem:[#allocation8 + $0x140] sm:$0xff]
    %v1598 = vld [vmem:[#allocation8 + $0x148] sm:$0xff]
    %v1599 = vld [vmem:[#allocation8 + $0x150] sm:$0xff]
    %v1600 = vld [vmem:[#allocation8 + $0x158] sm:$0xff]
    %v1601 = vld [vmem:[#allocation8 + $0x160] sm:$0xff]
    %v1602 = vld [vmem:[#allocation8 + $0x168] sm:$0xff]
    %v1603 = vld [vmem:[#allocation8 + $0x170] sm:$0xff]
    %v1604 = vld [vmem:[#allocation8 + $0x178] sm:$0xff]
    %v1605 = vld [vmem:[#allocation8 + $0x180] sm:$0xff]
    %v1606 = vld [vmem:[#allocation8 + $0x188] sm:$0xff]
    %v1607 = vld [vmem:[#allocation8 + $0x190] sm:$0xff]
    %v1608 = vld [vmem:[#allocation8 + $0x198] sm:$0xff]
    %v1609 = vld [vmem:[#allocation8 + $0x1a0] sm:$0xff]
    %v1610 = vld [vmem:[#allocation8 + $0x1a8] sm:$0xff]
    %v1611 = vld [vmem:[#allocation8 + $0x1b0] sm:$0xff]
    %v1612 = vld [vmem:[#allocation8 + $0x1b8] sm:$0xff]
    %v1613 = vld [vmem:[#allocation8 + $0x1c0] sm:$0xff]
    %v1614 = vld [vmem:[#allocation8 + $0x1c8] sm:$0xff]
    %v1615 = vld [vmem:[#allocation8 + $0x1d0] sm:$0xff]
    %v1616 = vld [vmem:[#allocation8 + $0x1d8] sm:$0xff]
    %v1617 = vld [vmem:[#allocation8 + $0x1e0] sm:$0xff]
    %v1618 = vld [vmem:[#allocation8 + $0x1e8] sm:$0xff]
    %v1619 = vld [vmem:[#allocation8 + $0x1f0] sm:$0xff]
    %v1620 = vld [vmem:[#allocation8 + $0x1f8] sm:$0xff]
    %v1621 = vld [vmem:[#allocation8 + $0x200] sm:$0xff]
    %v1622 = vld [vmem:[#allocation8 + $0x208] sm:$0xff]
    %v1623 = vld [vmem:[#allocation8 + $0x210] sm:$0xff]
    %v1624 = vld [vmem:[#allocation8 + $0x218] sm:$0xff]
    %v1625 = vld [vmem:[#allocation8 + $0x220] sm:$0xff]
    %v1626 = vld [vmem:[#allocation8 + $0x228] sm:$0xff]
    %v1627 = vld [vmem:[#allocation8 + $0x230] sm:$0xff]
    %v1628 = vld [vmem:[#allocation8 + $0x238] sm:$0xff]
    %v1629 = vld [vmem:[#allocation8 + $0x240] sm:$0xff]
    %v1630 = vld [vmem:[#allocation8 + $0x248] sm:$0xff]
    %v1631 = vld [vmem:[#allocation8 + $0x250] sm:$0xff]
    %v1632 = vld [vmem:[#allocation8 + $0x258] sm:$0xff]
    %v1633 = vld [vmem:[#allocation8 + $0x260] sm:$0xff]
    %v1634 = vld [vmem:[#allocation8 + $0x268] sm:$0xff]
    %v1635 = vld [vmem:[#allocation8 + $0x270] sm:$0xff]
    %v1636 = vld [vmem:[#allocation8 + $0x278] sm:$0xff]
    %v1637 = vld [vmem:[#allocation8 + $0x280] sm:$0xff]
    %v1638 = vld [vmem:[#allocation8 + $0x288] sm:$0xff]
    %v1639 = vld [vmem:[#allocation8 + $0x290] sm:$0xff]
    %v1640 = vld [vmem:[#allocation8 + $0x298] sm:$0xff]
    %v1641 = vld [vmem:[#allocation8 + $0x2a0] sm:$0xff]
    %v1642 = vld [vmem:[#allocation8 + $0x2a8] sm:$0xff]
    %v1643 = vld [vmem:[#allocation8 + $0x2b0] sm:$0xff]
    %v1644 = vld [vmem:[#allocation8 + $0x2b8] sm:$0xff]
    %v1645 = vld [vmem:[#allocation8 + $0x2c0] sm:$0xff]
    %v1646 = vld [vmem:[#allocation8 + $0x2c8] sm:$0xff]
    %v1647 = vld [vmem:[#allocation8 + $0x2d0] sm:$0xff]
    %v1648 = vld [vmem:[#allocation8 + $0x2d8] sm:$0xff]
    %v1649 = vld [vmem:[#allocation8 + $0x2e0] sm:$0xff]
    %v1650 = vld [vmem:[#allocation8 + $0x2e8] sm:$0xff]
    %v1651 = vld [vmem:[#allocation8 + $0x2f0] sm:$0xff]
    %v1652 = vld [vmem:[#allocation8 + $0x2f8] sm:$0xff]
    %v1653 = vld [vmem:[#allocation8 + $0x300] sm:$0xff]
    %v1654 = vld [vmem:[#allocation8 + $0x308] sm:$0xff]
    %v1655 = vld [vmem:[#allocation8 + $0x310] sm:$0xff]
    %v1656 = vld [vmem:[#allocation8 + $0x318] sm:$0xff]
    %v1657 = vld [vmem:[#allocation8 + $0x320] sm:$0xff]
    %v1658 = vld [vmem:[#allocation8 + $0x328] sm:$0xff]
    %v1659 = vld [vmem:[#allocation8 + $0x330] sm:$0xff]
    %v1660 = vld [vmem:[#allocation8 + $0x338] sm:$0xff]
    %v1661 = vld [vmem:[#allocation8 + $0x340] sm:$0xff]
    %v1662 = vld [vmem:[#allocation8 + $0x348] sm:$0xff]
    %v1663 = vld [vmem:[#allocation8 + $0x350] sm:$0xff]
    %v1664 = vld [vmem:[#allocation8 + $0x358] sm:$0xff]
    %v1665 = vld [vmem:[#allocation8 + $0x360] sm:$0xff]
    %v1666 = vld [vmem:[#allocation8 + $0x368] sm:$0xff]
    %v1667 = vld [vmem:[#allocation8 + $0x370] sm:$0xff]
    %v1668 = vld [vmem:[#allocation8 + $0x378] sm:$0xff]
    %v1669 = vld [vmem:[#allocation8 + $0x380] sm:$0xff]
    %v1670 = vld [vmem:[#allocation8 + $0x388] sm:$0xff]
    %v1671 = vld [vmem:[#allocation8 + $0x390] sm:$0xff]
    %v1672 = vld [vmem:[#allocation8 + $0x398] sm:$0xff]
    %v1673 = vld [vmem:[#allocation8 + $0x3a0] sm:$0xff]
    %v1674 = vld [vmem:[#allocation8 + $0x3a8] sm:$0xff]
    %v1675 = vld [vmem:[#allocation8 + $0x3b0] sm:$0xff]
    %v1676 = vld [vmem:[#allocation8 + $0x3b8] sm:$0xff]
    %v1677 = vld [vmem:[#allocation8 + $0x3c0] sm:$0xff]
    %v1678 = vld [vmem:[#allocation8 + $0x3c8] sm:$0xff]
    %v1679 = vld [vmem:[#allocation8 + $0x3d0] sm:$0xff]
    %v1680 = vld [vmem:[#allocation8 + $0x3d8] sm:$0xff]
    %v1681 = vld [vmem:[#allocation8 + $0x3e0] sm:$0xff]
    %v1682 = vld [vmem:[#allocation8 + $0x3e8] sm:$0xff]
    %v1683 = vld [vmem:[#allocation8 + $0x3f0] sm:$0xff]
    %v1684 = vld [vmem:[#allocation8 + $0x3f8] sm:$0xff]
    %v1685 = vld [vmem:[#allocation8 + $0x400] sm:$0xff]
    %v1686 = vld [vmem:[#allocation8 + $0x408] sm:$0xff]
    %v1687 = vld [vmem:[#allocation8 + $0x410] sm:$0xff]
    %v1688 = vld [vmem:[#allocation8 + $0x418] sm:$0xff]
    %v1689 = vld [vmem:[#allocation8 + $0x420] sm:$0xff]
    %v1690 = vld [vmem:[#allocation8 + $0x428] sm:$0xff]
    %v1691 = vld [vmem:[#allocation8 + $0x430] sm:$0xff]
    %v1692 = vld [vmem:[#allocation8 + $0x438] sm:$0xff]
    %v1693 = vld [vmem:[#allocation8 + $0x440] sm:$0xff]
    %v1694 = vld [vmem:[#allocation8 + $0x448] sm:$0xff]
    %v1695 = vld [vmem:[#allocation8 + $0x450] sm:$0xff]
    %v1696 = vld [vmem:[#allocation8 + $0x458] sm:$0xff]
    %v1697 = vld [vmem:[#allocation8 + $0x460] sm:$0xff]
    %v1698 = vld [vmem:[#allocation8 + $0x468] sm:$0xff]
    %v1699 = vld [vmem:[#allocation8 + $0x470] sm:$0xff]
    %v1700 = vld [vmem:[#allocation8 + $0x478] sm:$0xff]
    %v1701 = vld [vmem:[#allocation8 + $0x480] sm:$0xff]
    %v1702 = vld [vmem:[#allocation8 + $0x488] sm:$0xff]
    %v1703 = vld [vmem:[#allocation8 + $0x490] sm:$0xff]
    %v1704 = vld [vmem:[#allocation8 + $0x498] sm:$0xff]
    %v1705 = vld [vmem:[#allocation8 + $0x4a0] sm:$0xff]
    %v1706 = vld [vmem:[#allocation8 + $0x4a8] sm:$0xff]
    %v1707 = vld [vmem:[#allocation8 + $0x4b0] sm:$0xff]
    %v1708 = vld [vmem:[#allocation8 + $0x4b8] sm:$0xff]
    %v1709 = vld [vmem:[#allocation8 + $0x4c0] sm:$0xff]
    %v1710 = vld [vmem:[#allocation8 + $0x4c8] sm:$0xff]
    %v1711 = vld [vmem:[#allocation8 + $0x4d0] sm:$0xff]
    %v1712 = vld [vmem:[#allocation8 + $0x4d8] sm:$0xff]
    %v1713 = vld [vmem:[#allocation8 + $0x4e0] sm:$0xff]
    %v1714 = vld [vmem:[#allocation8 + $0x4e8] sm:$0xff]
    %v1715 = vld [vmem:[#allocation8 + $0x4f0] sm:$0xff]
    %v1716 = vld [vmem:[#allocation8 + $0x4f8] sm:$0xff]
    %v1717 = vld [vmem:[#allocation8 + $0x500] sm:$0xff]
    %v1718 = vld [vmem:[#allocation8 + $0x508] sm:$0xff]
    %v1719 = vld [vmem:[#allocation8 + $0x510] sm:$0xff]
    %v1720 = vld [vmem:[#allocation8 + $0x518] sm:$0xff]
    %v1721 = vld [vmem:[#allocation8 + $0x520] sm:$0xff]
    %v1722 = vld [vmem:[#allocation8 + $0x528] sm:$0xff]
    %v1723 = vld [vmem:[#allocation8 + $0x530] sm:$0xff]
    %v1724 = vld [vmem:[#allocation8 + $0x538] sm:$0xff]
    %v1725 = vld [vmem:[#allocation8 + $0x540] sm:$0xff]
    %v1726 = vld [vmem:[#allocation8 + $0x548] sm:$0xff]
    %v1727 = vld [vmem:[#allocation8 + $0x550] sm:$0xff]
    %v1728 = vld [vmem:[#allocation8 + $0x558] sm:$0xff]
    %v1729 = vld [vmem:[#allocation8 + $0x560] sm:$0xff]
    %v1730 = vld [vmem:[#allocation8 + $0x568] sm:$0xff]
    %v1731 = vld [vmem:[#allocation8 + $0x570] sm:$0xff]
    %v1732 = vld [vmem:[#allocation8 + $0x578] sm:$0xff]
    %v1733 = vld [vmem:[#allocation8 + $0x580] sm:$0xff]
    %v1734 = vld [vmem:[#allocation8 + $0x588] sm:$0xff]
    %v1735 = vld [vmem:[#allocation8 + $0x590] sm:$0xff]
    %v1736 = vld [vmem:[#allocation8 + $0x598] sm:$0xff]
    %v1737 = vld [vmem:[#allocation8 + $0x5a0] sm:$0xff]
    %v1738 = vld [vmem:[#allocation8 + $0x5a8] sm:$0xff]
    %v1739 = vld [vmem:[#allocation8 + $0x5b0] sm:$0xff]
    %v1740 = vld [vmem:[#allocation8 + $0x5b8] sm:$0xff]
    %v1741 = vld [vmem:[#allocation8 + $0x5c0] sm:$0xff]
    %v1742 = vld [vmem:[#allocation8 + $0x5c8] sm:$0xff]
    %v1743 = vld [vmem:[#allocation8 + $0x5d0] sm:$0xff]
    %v1744 = vld [vmem:[#allocation8 + $0x5d8] sm:$0xff]
    %v1745 = vld [vmem:[#allocation8 + $0x5e0] sm:$0xff]
    %v1746 = vld [vmem:[#allocation8 + $0x5e8] sm:$0xff]
    %v1747 = vld [vmem:[#allocation8 + $0x5f0] sm:$0xff]
    %v1748 = vld [vmem:[#allocation8 + $0x5f8] sm:$0xff]
    %v1749 = vld [vmem:[#allocation8 + $0x600] sm:$0xff]
    %v1750 = vld [vmem:[#allocation8 + $0x608] sm:$0xff]
    %v1751 = vld [vmem:[#allocation8 + $0x610] sm:$0xff]
    %v1752 = vld [vmem:[#allocation8 + $0x618] sm:$0xff]
    %v1753 = vld [vmem:[#allocation8 + $0x620] sm:$0xff]
    %v1754 = vld [vmem:[#allocation8 + $0x628] sm:$0xff]
    %v1755 = vld [vmem:[#allocation8 + $0x630] sm:$0xff]
    %v1756 = vld [vmem:[#allocation8 + $0x638] sm:$0xff]
    %v1757 = vld [vmem:[#allocation8 + $0x640] sm:$0xff]
    %v1758 = vld [vmem:[#allocation8 + $0x648] sm:$0xff]
    %v1759 = vld [vmem:[#allocation8 + $0x650] sm:$0xff]
    %v1760 = vld [vmem:[#allocation8 + $0x658] sm:$0xff]
    %v1761 = vld [vmem:[#allocation8 + $0x660] sm:$0xff]
    %v1762 = vld [vmem:[#allocation8 + $0x668] sm:$0xff]
    %v1763 = vld [vmem:[#allocation8 + $0x670] sm:$0xff]
    %v1764 = vld [vmem:[#allocation8 + $0x678] sm:$0xff]
    %v1765 = vld [vmem:[#allocation8 + $0x680] sm:$0xff]
    %v1766 = vld [vmem:[#allocation8 + $0x688] sm:$0xff]
    %v1767 = vld [vmem:[#allocation8 + $0x690] sm:$0xff]
    %v1768 = vld [vmem:[#allocation8 + $0x698] sm:$0xff]
    %v1769 = vld [vmem:[#allocation8 + $0x6a0] sm:$0xff]
    %v1770 = vld [vmem:[#allocation8 + $0x6a8] sm:$0xff]
    %v1771 = vld [vmem:[#allocation8 + $0x6b0] sm:$0xff]
    %v1772 = vld [vmem:[#allocation8 + $0x6b8] sm:$0xff]
    %v1773 = vld [vmem:[#allocation8 + $0x6c0] sm:$0xff]
    %v1774 = vld [vmem:[#allocation8 + $0x6c8] sm:$0xff]
    %v1775 = vld [vmem:[#allocation8 + $0x6d0] sm:$0xff]
    %v1776 = vld [vmem:[#allocation8 + $0x6d8] sm:$0xff]
    %v1777 = vld [vmem:[#allocation8 + $0x6e0] sm:$0xff]
    %v1778 = vld [vmem:[#allocation8 + $0x6e8] sm:$0xff]
    %v1779 = vld [vmem:[#allocation8 + $0x6f0] sm:$0xff]
    %v1780 = vld [vmem:[#allocation8 + $0x6f8] sm:$0xff]
    %v1781 = vld [vmem:[#allocation8 + $0x700] sm:$0xff]
    %v1782 = vld [vmem:[#allocation8 + $0x708] sm:$0xff]
    %v1783 = vld [vmem:[#allocation8 + $0x710] sm:$0xff]
    %v1784 = vld [vmem:[#allocation8 + $0x718] sm:$0xff]
    %v1785 = vld [vmem:[#allocation8 + $0x720] sm:$0xff]
    %v1786 = vld [vmem:[#allocation8 + $0x728] sm:$0xff]
    %v1787 = vld [vmem:[#allocation8 + $0x730] sm:$0xff]
    %v1788 = vld [vmem:[#allocation8 + $0x738] sm:$0xff]
    %v1789 = vld [vmem:[#allocation8 + $0x740] sm:$0xff]
    %v1790 = vld [vmem:[#allocation8 + $0x748] sm:$0xff]
    %v1791 = vld [vmem:[#allocation8 + $0x750] sm:$0xff]
    %v1792 = vld [vmem:[#allocation8 + $0x758] sm:$0xff]
    %v1793 = vld [vmem:[#allocation8 + $0x760] sm:$0xff]
    %v1794 = vld [vmem:[#allocation8 + $0x768] sm:$0xff]
    %v1795 = vld [vmem:[#allocation8 + $0x770] sm:$0xff]
    %v1796 = vld [vmem:[#allocation8 + $0x778] sm:$0xff]
    %v1797 = vld [vmem:[#allocation8 + $0x780] sm:$0xff]
    %v1798 = vld [vmem:[#allocation8 + $0x788] sm:$0xff]
    %v1799 = vld [vmem:[#allocation8 + $0x790] sm:$0xff]
    %v1800 = vld [vmem:[#allocation8 + $0x798] sm:$0xff]
    %v1801 = vld [vmem:[#allocation8 + $0x7a0] sm:$0xff]
    %v1802 = vld [vmem:[#allocation8 + $0x7a8] sm:$0xff]
    %v1803 = vld [vmem:[#allocation8 + $0x7b0] sm:$0xff]
    %v1804 = vld [vmem:[#allocation8 + $0x7b8] sm:$0xff]
    %v1805 = vld [vmem:[#allocation8 + $0x7c0] sm:$0xff]
    %v1806 = vld [vmem:[#allocation8 + $0x7c8] sm:$0xff]
    %v1807 = vld [vmem:[#allocation8 + $0x7d0] sm:$0xff]
    %v1808 = vld [vmem:[#allocation8 + $0x7d8] sm:$0xff]
    %v1809 = vld [vmem:[#allocation8 + $0x7e0] sm:$0xff]
    %v1810 = vld [vmem:[#allocation8 + $0x7e8] sm:$0xff]
    %v1811 = vld [vmem:[#allocation8 + $0x7f0] sm:$0xff]
    %v1812 = vld [vmem:[#allocation8 + $0x7f8] sm:$0xff]
    %v1813 = vld [vmem:[#allocation8 + $0x800] sm:$0xff]
    %v1814 = vld [vmem:[#allocation8 + $0x808] sm:$0xff]
    %v1815 = vld [vmem:[#allocation8 + $0x810] sm:$0xff]
    %v1816 = vld [vmem:[#allocation8 + $0x818] sm:$0xff]
    %v1817 = vld [vmem:[#allocation8 + $0x820] sm:$0xff]
    %v1818 = vld [vmem:[#allocation8 + $0x828] sm:$0xff]
    %v1819 = vld [vmem:[#allocation8 + $0x830] sm:$0xff]
    %v1820 = vld [vmem:[#allocation8 + $0x838] sm:$0xff]
    %v1821 = vld [vmem:[#allocation8 + $0x840] sm:$0xff]
    %v1822 = vld [vmem:[#allocation8 + $0x848] sm:$0xff]
    %v1823 = vld [vmem:[#allocation8 + $0x850] sm:$0xff]
    %v1824 = vld [vmem:[#allocation8 + $0x858] sm:$0xff]
    %v1825 = vld [vmem:[#allocation8 + $0x860] sm:$0xff]
    %v1826 = vld [vmem:[#allocation8 + $0x868] sm:$0xff]
    %v1827 = vld [vmem:[#allocation8 + $0x870] sm:$0xff]
    %v1828 = vld [vmem:[#allocation8 + $0x878] sm:$0xff]
    %v1829 = vld [vmem:[#allocation8 + $0x880] sm:$0xff]
    %v1830 = vld [vmem:[#allocation8 + $0x888] sm:$0xff]
    %v1831 = vld [vmem:[#allocation8 + $0x890] sm:$0xff]
    %v1832 = vld [vmem:[#allocation8 + $0x898] sm:$0xff]
    %v1833 = vld [vmem:[#allocation8 + $0x8a0] sm:$0xff]
    %v1834 = vld [vmem:[#allocation8 + $0x8a8] sm:$0xff]
    %v1835 = vld [vmem:[#allocation8 + $0x8b0] sm:$0xff]
    %v1836 = vld [vmem:[#allocation8 + $0x8b8] sm:$0xff]
    %v1837 = vld [vmem:[#allocation8 + $0x8c0] sm:$0xff]
    %v1838 = vld [vmem:[#allocation8 + $0x8c8] sm:$0xff]
    %v1839 = vld [vmem:[#allocation8 + $0x8d0] sm:$0xff]
    %v1840 = vld [vmem:[#allocation8 + $0x8d8] sm:$0xff]
    %v1841 = vld [vmem:[#allocation8 + $0x8e0] sm:$0xff]
    %v1842 = vld [vmem:[#allocation8 + $0x8e8] sm:$0xff]
    %v1843 = vld [vmem:[#allocation8 + $0x8f0] sm:$0xff]
    %v1844 = vld [vmem:[#allocation8 + $0x8f8] sm:$0xff]
    %v1845 = vld [vmem:[#allocation8 + $0x900] sm:$0xff]
    %v1846 = vld [vmem:[#allocation8 + $0x908] sm:$0xff]
    %v1847 = vld [vmem:[#allocation8 + $0x910] sm:$0xff]
    %v1848 = vld [vmem:[#allocation8 + $0x918] sm:$0xff]
    %v1849 = vld [vmem:[#allocation8 + $0x920] sm:$0xff]
    %v1850 = vld [vmem:[#allocation8 + $0x928] sm:$0xff]
    %v1851 = vld [vmem:[#allocation8 + $0x930] sm:$0xff]
    %v1852 = vld [vmem:[#allocation8 + $0x938] sm:$0xff]
    %v1853 = vld [vmem:[#allocation8 + $0x940] sm:$0xff]
    %v1854 = vld [vmem:[#allocation8 + $0x948] sm:$0xff]
    %v1855 = vld [vmem:[#allocation8 + $0x950] sm:$0xff]
    %v1856 = vld [vmem:[#allocation8 + $0x958] sm:$0xff]
    %v1857 = vld [vmem:[#allocation8 + $0x960] sm:$0xff]
    %v1858 = vld [vmem:[#allocation8 + $0x968] sm:$0xff]
    %v1859 = vld [vmem:[#allocation8 + $0x970] sm:$0xff]
    %v1860 = vld [vmem:[#allocation8 + $0x978] sm:$0xff]
    %v1861 = vld [vmem:[#allocation8 + $0x980] sm:$0xff]
    %v1862 = vld [vmem:[#allocation8 + $0x988] sm:$0xff]
    %v1863 = vld [vmem:[#allocation8 + $0x990] sm:$0xff]
    %v1864 = vld [vmem:[#allocation8 + $0x998] sm:$0xff]
    %v1865 = vld [vmem:[#allocation8 + $0x9a0] sm:$0xff]
    %v1866 = vld [vmem:[#allocation8 + $0x9a8] sm:$0xff]
    %v1867 = vld [vmem:[#allocation8 + $0x9b0] sm:$0xff]
    %v1868 = vld [vmem:[#allocation8 + $0x9b8] sm:$0xff]
    %v1869 = vld [vmem:[#allocation8 + $0x9c0] sm:$0xff]
    %v1870 = vld [vmem:[#allocation8 + $0x9c8] sm:$0xff]
    %v1871 = vld [vmem:[#allocation8 + $0x9d0] sm:$0xff]
    %v1872 = vld [vmem:[#allocation8 + $0x9d8] sm:$0xff]
    %v1873 = vld [vmem:[#allocation8 + $0x9e0] sm:$0xff]
    %v1874 = vld [vmem:[#allocation8 + $0x9e8] sm:$0xff]
    %v1875 = vld [vmem:[#allocation8 + $0x9f0] sm:$0xff]
    %v1876 = vld [vmem:[#allocation8 + $0x9f8] sm:$0xff]
    %v1877 = vld [vmem:[#allocation8 + $0xa00] sm:$0xff]
    %v1878 = vld [vmem:[#allocation8 + $0xa08] sm:$0xff]
    %v1879 = vld [vmem:[#allocation8 + $0xa10] sm:$0xff]
    %v1880 = vld [vmem:[#allocation8 + $0xa18] sm:$0xff]
    %v1881 = vld [vmem:[#allocation8 + $0xa20] sm:$0xff]
    %v1882 = vld [vmem:[#allocation8 + $0xa28] sm:$0xff]
    %v1883 = vld [vmem:[#allocation8 + $0xa30] sm:$0xff]
    %v1884 = vld [vmem:[#allocation8 + $0xa38] sm:$0xff]
    %v1885 = vld [vmem:[#allocation8 + $0xa40] sm:$0xff]
    %v1886 = vld [vmem:[#allocation8 + $0xa48] sm:$0xff]
    %v1887 = vld [vmem:[#allocation8 + $0xa50] sm:$0xff]
    %v1888 = vld [vmem:[#allocation8 + $0xa58] sm:$0xff]
    %v1889 = vld [vmem:[#allocation8 + $0xa60] sm:$0xff]
    %v1890 = vld [vmem:[#allocation8 + $0xa68] sm:$0xff]
    %v1891 = vld [vmem:[#allocation8 + $0xa70] sm:$0xff]
    %v1892 = vld [vmem:[#allocation8 + $0xa78] sm:$0xff]
    %v1893 = vld [vmem:[#allocation8 + $0xa80] sm:$0xff]
    %v1894 = vld [vmem:[#allocation8 + $0xa88] sm:$0xff]
    %v1895 = vld [vmem:[#allocation8 + $0xa90] sm:$0xff]
    %v1896 = vld [vmem:[#allocation8 + $0xa98] sm:$0xff]
    %v1897 = vld [vmem:[#allocation8 + $0xaa0] sm:$0xff]
    %v1898 = vld [vmem:[#allocation8 + $0xaa8] sm:$0xff]
    %v1899 = vld [vmem:[#allocation8 + $0xab0] sm:$0xff]
    %v1900 = vld [vmem:[#allocation8 + $0xab8] sm:$0xff]
    %v1901 = vld [vmem:[#allocation8 + $0xac0] sm:$0xff]
    %v1902 = vld [vmem:[#allocation8 + $0xac8] sm:$0xff]
    %v1903 = vld [vmem:[#allocation8 + $0xad0] sm:$0xff]
    %v1904 = vld [vmem:[#allocation8 + $0xad8] sm:$0xff]
    %v1905 = vld [vmem:[#allocation8 + $0xae0] sm:$0xff]
    %v1906 = vld [vmem:[#allocation8 + $0xae8] sm:$0xff]
    %v1907 = vld [vmem:[#allocation8 + $0xaf0] sm:$0xff]
    %v1908 = vld [vmem:[#allocation8 + $0xaf8] sm:$0xff]
    %v1909 = vld [vmem:[#allocation8 + $0xb00] sm:$0xff]
    %v1910 = vld [vmem:[#allocation8 + $0xb08] sm:$0xff]
    %v1911 = vld [vmem:[#allocation8 + $0xb10] sm:$0xff]
    %v1912 = vld [vmem:[#allocation8 + $0xb18] sm:$0xff]
    %v1913 = vld [vmem:[#allocation8 + $0xb20] sm:$0xff]
    %v1914 = vld [vmem:[#allocation8 + $0xb28] sm:$0xff]
    %v1915 = vld [vmem:[#allocation8 + $0xb30] sm:$0xff]
    %v1916 = vld [vmem:[#allocation8 + $0xb38] sm:$0xff]
    %v1917 = vld [vmem:[#allocation8 + $0xb40] sm:$0xff]
    %v1918 = vld [vmem:[#allocation8 + $0xb48] sm:$0xff]
    %v1919 = vld [vmem:[#allocation8 + $0xb50] sm:$0xff]
    %v1920 = vld [vmem:[#allocation8 + $0xb58] sm:$0xff]
    %v1921 = vld [vmem:[#allocation8 + $0xb60] sm:$0xff]
    %v1922 = vld [vmem:[#allocation8 + $0xb68] sm:$0xff]
    %v1923 = vld [vmem:[#allocation8 + $0xb70] sm:$0xff]
    %v1924 = vld [vmem:[#allocation8 + $0xb78] sm:$0xff]
    %v1925 = vld [vmem:[#allocation8 + $0xb80] sm:$0xff]
    %v1926 = vld [vmem:[#allocation8 + $0xb88] sm:$0xff]
    %v1927 = vld [vmem:[#allocation8 + $0xb90] sm:$0xff]
    %v1928 = vld [vmem:[#allocation8 + $0xb98] sm:$0xff]
    %v1929 = vld [vmem:[#allocation8 + $0xba0] sm:$0xff]
    %v1930 = vld [vmem:[#allocation8 + $0xba8] sm:$0xff]
    %v1931 = vld [vmem:[#allocation8 + $0xbb0] sm:$0xff]
    %v1932 = vld [vmem:[#allocation8 + $0xbb8] sm:$0xff]
    %v1933 = vld [vmem:[#allocation8 + $0xbc0] sm:$0xff]
    %v1934 = vld [vmem:[#allocation8 + $0xbc8] sm:$0xff]
    %v1935 = vld [vmem:[#allocation8 + $0xbd0] sm:$0xff]
    %v1936 = vld [vmem:[#allocation8 + $0xbd8] sm:$0xff]
    %v1937 = vld [vmem:[#allocation8 + $0xbe0] sm:$0xff]
    %v1938 = vld [vmem:[#allocation8 + $0xbe8] sm:$0xff]
    %v1939 = vld [vmem:[#allocation8 + $0xbf0] sm:$0xff]
    %v1940 = vld [vmem:[#allocation8 + $0xbf8] sm:$0xff]
    %v1941 = vld [vmem:[#allocation8 + $0xc00] sm:$0xff]
    %v1942 = vld [vmem:[#allocation8 + $0xc08] sm:$0xff]
    %v1943 = vld [vmem:[#allocation8 + $0xc10] sm:$0xff]
    %v1944 = vld [vmem:[#allocation8 + $0xc18] sm:$0xff]
    %v1945 = vld [vmem:[#allocation8 + $0xc20] sm:$0xff]
    %v1946 = vld [vmem:[#allocation8 + $0xc28] sm:$0xff]
    %v1947 = vld [vmem:[#allocation8 + $0xc30] sm:$0xff]
    %v1948 = vld [vmem:[#allocation8 + $0xc38] sm:$0xff]
    %v1949 = vld [vmem:[#allocation8 + $0xc40] sm:$0xff]
    %v1950 = vld [vmem:[#allocation8 + $0xc48] sm:$0xff]
    %v1951 = vld [vmem:[#allocation8 + $0xc50] sm:$0xff]
    %v1952 = vld [vmem:[#allocation8 + $0xc58] sm:$0xff]
    %v1953 = vld [vmem:[#allocation8 + $0xc60] sm:$0xff]
    %v1954 = vld [vmem:[#allocation8 + $0xc68] sm:$0xff]
    %v1955 = vld [vmem:[#allocation8 + $0xc70] sm:$0xff]
    %v1956 = vld [vmem:[#allocation8 + $0xc78] sm:$0xff]
    %v1957 = vld [vmem:[#allocation8 + $0xc80] sm:$0xff]
    %v1958 = vld [vmem:[#allocation8 + $0xc88] sm:$0xff]
    %v1959 = vld [vmem:[#allocation8 + $0xc90] sm:$0xff]
    %v1960 = vld [vmem:[#allocation8 + $0xc98] sm:$0xff]
    %v1961 = vld [vmem:[#allocation8 + $0xca0] sm:$0xff]
    %v1962 = vld [vmem:[#allocation8 + $0xca8] sm:$0xff]
    %v1963 = vld [vmem:[#allocation8 + $0xcb0] sm:$0xff]
    %v1964 = vld [vmem:[#allocation8 + $0xcb8] sm:$0xff]
    %v1965 = vld [vmem:[#allocation8 + $0xcc0] sm:$0xff]
    %v1966 = vld [vmem:[#allocation8 + $0xcc8] sm:$0xff]
    %v1967 = vld [vmem:[#allocation8 + $0xcd0] sm:$0xff]
    %v1968 = vld [vmem:[#allocation8 + $0xcd8] sm:$0xff]
    %v1969 = vld [vmem:[#allocation8 + $0xce0] sm:$0xff]
    %v1970 = vld [vmem:[#allocation8 + $0xce8] sm:$0xff]
    %v1971 = vld [vmem:[#allocation8 + $0xcf0] sm:$0xff]
    %v1972 = vld [vmem:[#allocation8 + $0xcf8] sm:$0xff]
    %v1973 = vld [vmem:[#allocation8 + $0xd00] sm:$0xff]
    %v1974 = vld [vmem:[#allocation8 + $0xd08] sm:$0xff]
    %v1975 = vld [vmem:[#allocation8 + $0xd10] sm:$0xff]
    %v1976 = vld [vmem:[#allocation8 + $0xd18] sm:$0xff]
    %v1977 = vld [vmem:[#allocation8 + $0xd20] sm:$0xff]
    %v1978 = vld [vmem:[#allocation8 + $0xd28] sm:$0xff]
    %v1979 = vld [vmem:[#allocation8 + $0xd30] sm:$0xff]
    %v1980 = vld [vmem:[#allocation8 + $0xd38] sm:$0xff]
    %v1981 = vld [vmem:[#allocation8 + $0xd40] sm:$0xff]
    %v1982 = vld [vmem:[#allocation8 + $0xd48] sm:$0xff]
    %v1983 = vld [vmem:[#allocation8 + $0xd50] sm:$0xff]
    %v1984 = vld [vmem:[#allocation8 + $0xd58] sm:$0xff]
    %v1985 = vld [vmem:[#allocation8 + $0xd60] sm:$0xff]
    %v1986 = vld [vmem:[#allocation8 + $0xd68] sm:$0xff]
    %v1987 = vld [vmem:[#allocation8 + $0xd70] sm:$0xff]
    %v1988 = vld [vmem:[#allocation8 + $0xd78] sm:$0xff]
    %v1989 = vld [vmem:[#allocation8 + $0xd80] sm:$0xff]
    %v1990 = vld [vmem:[#allocation8 + $0xd88] sm:$0xff]
    %v1991 = vld [vmem:[#allocation8 + $0xd90] sm:$0xff]
    %v1992 = vld [vmem:[#allocation8 + $0xd98] sm:$0xff]
    %v1993 = vld [vmem:[#allocation8 + $0xda0] sm:$0xff]
    %v1994 = vld [vmem:[#allocation8 + $0xda8] sm:$0xff]
    %v1995 = vld [vmem:[#allocation8 + $0xdb0] sm:$0xff]
    %v1996 = vld [vmem:[#allocation8 + $0xdb8] sm:$0xff]
    %v1997 = vld [vmem:[#allocation8 + $0xdc0] sm:$0xff]
    %v1998 = vld [vmem:[#allocation8 + $0xdc8] sm:$0xff]
    %v1999 = vld [vmem:[#allocation8 + $0xdd0] sm:$0xff]
    %v2000 = vld [vmem:[#allocation8 + $0xdd8] sm:$0xff]
    %v2001 = vld [vmem:[#allocation8 + $0xde0] sm:$0xff]
    %v2002 = vld [vmem:[#allocation8 + $0xde8] sm:$0xff]
    %v2003 = vld [vmem:[#allocation8 + $0xdf0] sm:$0xff]
    %v2004 = vld [vmem:[#allocation8 + $0xdf8] sm:$0xff]
    %v2005 = vld [vmem:[#allocation8 + $0xe00] sm:$0xff]
    %v2006 = vld [vmem:[#allocation8 + $0xe08] sm:$0xff]
    %v2007 = vld [vmem:[#allocation8 + $0xe10] sm:$0xff]
    %v2008 = vld [vmem:[#allocation8 + $0xe18] sm:$0xff]
    %v2009 = vld [vmem:[#allocation8 + $0xe20] sm:$0xff]
    %v2010 = vld [vmem:[#allocation8 + $0xe28] sm:$0xff]
    %v2011 = vld [vmem:[#allocation8 + $0xe30] sm:$0xff]
    %v2012 = vld [vmem:[#allocation8 + $0xe38] sm:$0xff]
    %v2013 = vld [vmem:[#allocation8 + $0xe40] sm:$0xff]
    %v2014 = vld [vmem:[#allocation8 + $0xe48] sm:$0xff]
    %v2015 = vld [vmem:[#allocation8 + $0xe50] sm:$0xff]
    %v2016 = vld [vmem:[#allocation8 + $0xe58] sm:$0xff]
    %v2017 = vld [vmem:[#allocation8 + $0xe60] sm:$0xff]
    %v2018 = vld [vmem:[#allocation8 + $0xe68] sm:$0xff]
    %v2019 = vld [vmem:[#allocation8 + $0xe70] sm:$0xff]
    %v2020 = vld [vmem:[#allocation8 + $0xe78] sm:$0xff]
    %v2021 = vld [vmem:[#allocation8 + $0xe80] sm:$0xff]
    %v2022 = vld [vmem:[#allocation8 + $0xe88] sm:$0xff]
    %v2023 = vld [vmem:[#allocation8 + $0xe90] sm:$0xff]
    %v2024 = vld [vmem:[#allocation8 + $0xe98] sm:$0xff]
    %v2025 = vld [vmem:[#allocation8 + $0xea0] sm:$0xff]
    %v2026 = vld [vmem:[#allocation8 + $0xea8] sm:$0xff]
    %v2027 = vld [vmem:[#allocation8 + $0xeb0] sm:$0xff]
    %v2028 = vld [vmem:[#allocation8 + $0xeb8] sm:$0xff]
    %v2029 = vld [vmem:[#allocation8 + $0xec0] sm:$0xff]
    %v2030 = vld [vmem:[#allocation8 + $0xec8] sm:$0xff]
    %v2031 = vld [vmem:[#allocation8 + $0xed0] sm:$0xff]
    %v2032 = vld [vmem:[#allocation8 + $0xed8] sm:$0xff]
    %v2033 = vld [vmem:[#allocation8 + $0xee0] sm:$0xff]
    %v2034 = vld [vmem:[#allocation8 + $0xee8] sm:$0xff]
    %v2035 = vld [vmem:[#allocation8 + $0xef0] sm:$0xff]
    %v2036 = vld [vmem:[#allocation8 + $0xef8] sm:$0xff]
    %v2037 = vld [vmem:[#allocation8 + $0xf00] sm:$0xff]
    %v2038 = vld [vmem:[#allocation8 + $0xf08] sm:$0xff]
    %v2039 = vld [vmem:[#allocation8 + $0xf10] sm:$0xff]
    %v2040 = vld [vmem:[#allocation8 + $0xf18] sm:$0xff]
    %v2041 = vld [vmem:[#allocation8 + $0xf20] sm:$0xff]
    %v2042 = vld [vmem:[#allocation8 + $0xf28] sm:$0xff]
    %v2043 = vld [vmem:[#allocation8 + $0xf30] sm:$0xff]
    %v2044 = vld [vmem:[#allocation8 + $0xf38] sm:$0xff]
    %v2045 = vld [vmem:[#allocation8 + $0xf40] sm:$0xff]
    %v2046 = vld [vmem:[#allocation8 + $0xf48] sm:$0xff]
    %v2047 = vld [vmem:[#allocation8 + $0xf50] sm:$0xff]
    %v2048 = vld [vmem:[#allocation8 + $0xf58] sm:$0xff]
    %v2049 = vld [vmem:[#allocation8 + $0xf60] sm:$0xff]
    %v2050 = vld [vmem:[#allocation8 + $0xf68] sm:$0xff]
    %v2051 = vld [vmem:[#allocation8 + $0xf70] sm:$0xff]
    %v2052 = vld [vmem:[#allocation8 + $0xf78] sm:$0xff]
    %v2053 = vld [vmem:[#allocation8 + $0xf80] sm:$0xff]
    %v2054 = vld [vmem:[#allocation8 + $0xf88] sm:$0xff]
    %v2055 = vld [vmem:[#allocation8 + $0xf90] sm:$0xff]
    %v2056 = vld [vmem:[#allocation8 + $0xf98] sm:$0xff]
    %v2057 = vld [vmem:[#allocation8 + $0xfa0] sm:$0xff]
    %v2058 = vld [vmem:[#allocation8 + $0xfa8] sm:$0xff]
    %v2059 = vld [vmem:[#allocation8 + $0xfb0] sm:$0xff]
    %v2060 = vld [vmem:[#allocation8 + $0xfb8] sm:$0xff]
    %v2061 = vld [vmem:[#allocation8 + $0xfc0] sm:$0xff]
    %v2062 = vld [vmem:[#allocation8 + $0xfc8] sm:$0xff]
    %v2063 = vld [vmem:[#allocation8 + $0xfd0] sm:$0xff]
    %v2064 = vld [vmem:[#allocation8 + $0xfd8] sm:$0xff]
    %v2065 = vld [vmem:[#allocation8 + $0xfe0] sm:$0xff]
    %v2066 = vld [vmem:[#allocation8 + $0xfe8] sm:$0xff]
    %v2067 = vld [vmem:[#allocation8 + $0xff0] sm:$0xff]
    %v2068 = vld [vmem:[#allocation8 + $0xff8] sm:$0xff]
    %v2069 = vld [vmem:[#allocation8 + $0x1000] sm:$0xff]
    %v2070 = vld [vmem:[#allocation8 + $0x1008] sm:$0xff]
    %v2071 = vld [vmem:[#allocation8 + $0x1010] sm:$0xff]
    %v2072 = vld [vmem:[#allocation8 + $0x1018] sm:$0xff]
    %v2073 = vld [vmem:[#allocation8 + $0x1020] sm:$0xff]
    %v2074 = vld [vmem:[#allocation8 + $0x1028] sm:$0xff]
    %v2075 = vld [vmem:[#allocation8 + $0x1030] sm:$0xff]
    %v2076 = vld [vmem:[#allocation8 + $0x1038] sm:$0xff]
    %v2077 = vld [vmem:[#allocation8 + $0x1040] sm:$0xff]
    %v2078 = vld [vmem:[#allocation8 + $0x1048] sm:$0xff]
    %v2079 = vld [vmem:[#allocation8 + $0x1050] sm:$0xff]
    %v2080 = vld [vmem:[#allocation8 + $0x1058] sm:$0xff]
    %v2081 = vld [vmem:[#allocation8 + $0x1060] sm:$0xff]
    %v2082 = vld [vmem:[#allocation8 + $0x1068] sm:$0xff]
    %v2083 = vld [vmem:[#allocation8 + $0x1070] sm:$0xff]
    %v2084 = vld [vmem:[#allocation8 + $0x1078] sm:$0xff]
    %v2085 = vld [vmem:[#allocation8 + $0x1080] sm:$0xff]
    %v2086 = vld [vmem:[#allocation8 + $0x1088] sm:$0xff]
    %v2087 = vld [vmem:[#allocation8 + $0x1090] sm:$0xff]
    %v2088 = vld [vmem:[#allocation8 + $0x1098] sm:$0xff]
    %v2089 = vld [vmem:[#allocation8 + $0x10a0] sm:$0xff]
    %v2090 = vld [vmem:[#allocation8 + $0x10a8] sm:$0xff]
    %v2091 = vld [vmem:[#allocation8 + $0x10b0] sm:$0xff]
    %v2092 = vld [vmem:[#allocation8 + $0x10b8] sm:$0xff]
    %v2093 = vld [vmem:[#allocation8 + $0x10c0] sm:$0xff]
    %v2094 = vld [vmem:[#allocation8 + $0x10c8] sm:$0xff]
    %v2095 = vld [vmem:[#allocation8 + $0x10d0] sm:$0xff]
    %v2096 = vld [vmem:[#allocation8 + $0x10d8] sm:$0xff]
    %v2097 = vld [vmem:[#allocation8 + $0x10e0] sm:$0xff]
    %v2098 = vld [vmem:[#allocation8 + $0x10e8] sm:$0xff]
    %v2099 = vld [vmem:[#allocation8 + $0x10f0] sm:$0xff]
    %v2100 = vld [vmem:[#allocation8 + $0x10f8] sm:$0xff]
    %v2101 = vld [vmem:[#allocation8 + $0x1100] sm:$0xff]
    %v2102 = vld [vmem:[#allocation8 + $0x1108] sm:$0xff]
    %v2103 = vld [vmem:[#allocation8 + $0x1110] sm:$0xff]
    %v2104 = vld [vmem:[#allocation8 + $0x1118] sm:$0xff]
    %v2105 = vld [vmem:[#allocation8 + $0x1120] sm:$0xff]
    %v2106 = vld [vmem:[#allocation8 + $0x1128] sm:$0xff]
    %v2107 = vld [vmem:[#allocation8 + $0x1130] sm:$0xff]
    %v2108 = vld [vmem:[#allocation8 + $0x1138] sm:$0xff]
    %v2109 = vld [vmem:[#allocation8 + $0x1140] sm:$0xff]
    %v2110 = vld [vmem:[#allocation8 + $0x1148] sm:$0xff]
    %v2111 = vld [vmem:[#allocation8 + $0x1150] sm:$0xff]
    %v2112 = vld [vmem:[#allocation8 + $0x1158] sm:$0xff]
    %v2113 = vld [vmem:[#allocation8 + $0x1160] sm:$0xff]
    %v2114 = vld [vmem:[#allocation8 + $0x1168] sm:$0xff]
    %v2115 = vld [vmem:[#allocation8 + $0x1170] sm:$0xff]
    %v2116 = vld [vmem:[#allocation8 + $0x1178] sm:$0xff]
    %v2117 = vld [vmem:[#allocation8 + $0x1180] sm:$0xff]
    %v2118 = vld [vmem:[#allocation8 + $0x1188] sm:$0xff]
    %v2119 = vld [vmem:[#allocation8 + $0x1190] sm:$0xff]
    %v2120 = vld [vmem:[#allocation8 + $0x1198] sm:$0xff]
    %v2121 = vld [vmem:[#allocation8 + $0x11a0] sm:$0xff]
    %v2122 = vld [vmem:[#allocation8 + $0x11a8] sm:$0xff]
    %v2123 = vld [vmem:[#allocation8 + $0x11b0] sm:$0xff]
    %v2124 = vld [vmem:[#allocation8 + $0x11b8] sm:$0xff]
    %v2125 = vld [vmem:[#allocation8 + $0x11c0] sm:$0xff]
    %v2126 = vld [vmem:[#allocation8 + $0x11c8] sm:$0xff]
    %v2127 = vld [vmem:[#allocation8 + $0x11d0] sm:$0xff]
    %v2128 = vld [vmem:[#allocation8 + $0x11d8] sm:$0xff]
    %v2129 = vld [vmem:[#allocation8 + $0x11e0] sm:$0xff]
    %v2130 = vld [vmem:[#allocation8 + $0x11e8] sm:$0xff]
    %v2131 = vld [vmem:[#allocation8 + $0x11f0] sm:$0xff]
    %v2132 = vld [vmem:[#allocation8 + $0x11f8] sm:$0xff]
    %v2133 = vld [vmem:[#allocation10] sm:$0x7]
    %v2135 = vperm.slane %v2133, 0
    %v2136 = vperm.slane %v2133, 1
    %v2137 = vperm.slane %v2133, 2
    %2141 = vmatpush.msra.mxu0 %v1602
    %2142 = vmatpush.msra.mxu0 %v1599
    %2143 = vmatpush.msra.mxu0 %v1596
    %2144 = vmatpush.msra.mxu0 %v1593
    %2145 = vmatpush.msra.mxu0 %v1590
    %2146 = vmatpush.msra.mxu0 %v1587
    %2147 = vmatpush.msra.mxu0 %v1584
    %2148 = vmatpush.msra.mxu0 %v1581
    %2149 = vmatpush.msra.mxu0 %v1578
    %2150 = vmatpush.msra.mxu0 %v1575
    %2151 = vmatpush.msra.mxu0 %v1572
    %2152 = vmatpush.msra.mxu0 %v1569
    %2153 = vmatpush.msra.mxu0 %v1566
    %2154 = vmatpush.msra.mxu0 %v1563
    %2155 = vmatpush.msra.mxu0 %v1560
    %2156 = vmatpush.msra.mxu0 %v1557
    %2157 = vmatmul.f32.gmra.mxu0 %v1533
    %v2158 = vpop.f32.mrf.mxu0
    %v2159 = vadd.f32 %v2135, %v2158
    %2160 = vmatmul.f32.gmra.mxu0 %v1545
    %v2161 = vpop.f32.mrf.mxu0
    %v2162 = vadd.f32 %v2135, %v2161
    %2163 = vdwg.mxu0
    %2164 = vmatpush.msra.mxu0 %v1650
    %2165 = vmatpush.msra.mxu0 %v1647
    %2166 = vmatpush.msra.mxu0 %v1644
    %2167 = vmatpush.msra.mxu0 %v1641
    %2168 = vmatpush.msra.mxu0 %v1638
    %2169 = vmatpush.msra.mxu0 %v1635
    %2170 = vmatpush.msra.mxu0 %v1632
    %2171 = vmatpush.msra.mxu0 %v1629
    %2172 = vmatpush.msra.mxu0 %v1626
    %2173 = vmatpush.msra.mxu0 %v1623
    %2174 = vmatpush.msra.mxu0 %v1620
    %2175 = vmatpush.msra.mxu0 %v1617
    %2176 = vmatpush.msra.mxu0 %v1614
    %2177 = vmatpush.msra.mxu0 %v1611
    %2178 = vmatpush.msra.mxu0 %v1608
    %2179 = vmatpush.msra.mxu0 %v1605
    %2180 = vmatmul.f32.gmra.mxu0 %v1534
    %v2181 = vpop.f32.mrf.mxu0
    %v2182 = vadd.f32 %v2159, %v2181
    %2183 = vmatmul.f32.gmra.mxu0 %v1546
    %v2184 = vpop.f32.mrf.mxu0
    %v2185 = vadd.f32 %v2162, %v2184
    %2186 = vdwg.mxu0
    %2187 = vmatpush.msra.mxu0 %v1698
    %2188 = vmatpush.msra.mxu0 %v1695
    %2189 = vmatpush.msra.mxu0 %v1692
    %2190 = vmatpush.msra.mxu0 %v1689
    %2191 = vmatpush.msra.mxu0 %v1686
    %2192 = vmatpush.msra.mxu0 %v1683
    %2193 = vmatpush.msra.mxu0 %v1680
    %2194 = vmatpush.msra.mxu0 %v1677
    %2195 = vmatpush.msra.mxu0 %v1674
    %2196 = vmatpush.msra.mxu0 %v1671
    %2197 = vmatpush.msra.mxu0 %v1668
    %2198 = vmatpush.msra.mxu0 %v1665
    %2199 = vmatpush.msra.mxu0 %v1662
    %2200 = vmatpush.msra.mxu0 %v1659
    %2201 = vmatpush.msra.mxu0 %v1656
    %2202 = vmatpush.msra.mxu0 %v1653
    %2203 = vmatmul.f32.gmra.mxu0 %v1535
    %v2204 = vpop.f32.mrf.mxu0
    %v2205 = vadd.f32 %v2182, %v2204
    %2206 = vmatmul.f32.gmra.mxu0 %v1547
    %v2207 = vpop.f32.mrf.mxu0
    %v2208 = vadd.f32 %v2185, %v2207
    %2209 = vdwg.mxu0
    %2210 = vmatpush.msra.mxu0 %v1746
    %2211 = vmatpush.msra.mxu0 %v1743
    %2212 = vmatpush.msra.mxu0 %v1740
    %2213 = vmatpush.msra.mxu0 %v1737
    %2214 = vmatpush.msra.mxu0 %v1734
    %2215 = vmatpush.msra.mxu0 %v1731
    %2216 = vmatpush.msra.mxu0 %v1728
    %2217 = vmatpush.msra.mxu0 %v1725
    %2218 = vmatpush.msra.mxu0 %v1722
    %2219 = vmatpush.msra.mxu0 %v1719
    %2220 = vmatpush.msra.mxu0 %v1716
    %2221 = vmatpush.msra.mxu0 %v1713
    %2222 = vmatpush.msra.mxu0 %v1710
    %2223 = vmatpush.msra.mxu0 %v1707
    %2224 = vmatpush.msra.mxu0 %v1704
    %2225 = vmatpush.msra.mxu0 %v1701
    %2226 = vmatmul.f32.gmra.mxu0 %v1536
    %v2227 = vpop.f32.mrf.mxu0
    %v2228 = vadd.f32 %v2205, %v2227
    %2229 = vmatmul.f32.gmra.mxu0 %v1548
    %v2230 = vpop.f32.mrf.mxu0
    %v2231 = vadd.f32 %v2208, %v2230
    %2232 = vdwg.mxu0
    %2233 = vmatpush.msra.mxu0 %v1794
    %2234 = vmatpush.msra.mxu0 %v1791
    %2235 = vmatpush.msra.mxu0 %v1788
    %2236 = vmatpush.msra.mxu0 %v1785
    %2237 = vmatpush.msra.mxu0 %v1782
    %2238 = vmatpush.msra.mxu0 %v1779
    %2239 = vmatpush.msra.mxu0 %v1776
    %2240 = vmatpush.msra.mxu0 %v1773
    %2241 = vmatpush.msra.mxu0 %v1770
    %2242 = vmatpush.msra.mxu0 %v1767
    %2243 = vmatpush.msra.mxu0 %v1764
    %2244 = vmatpush.msra.mxu0 %v1761
    %2245 = vmatpush.msra.mxu0 %v1758
    %2246 = vmatpush.msra.mxu0 %v1755
    %2247 = vmatpush.msra.mxu0 %v1752
    %2248 = vmatpush.msra.mxu0 %v1749
    %2249 = vmatmul.f32.gmra.mxu0 %v1537
    %v2250 = vpop.f32.mrf.mxu0
    %v2251 = vadd.f32 %v2228, %v2250
    %2252 = vmatmul.f32.gmra.mxu0 %v1549
    %v2253 = vpop.f32.mrf.mxu0
    %v2254 = vadd.f32 %v2231, %v2253
    %2255 = vdwg.mxu0
    %2256 = vmatpush.msra.mxu0 %v1842
    %2257 = vmatpush.msra.mxu0 %v1839
    %2258 = vmatpush.msra.mxu0 %v1836
    %2259 = vmatpush.msra.mxu0 %v1833
    %2260 = vmatpush.msra.mxu0 %v1830
    %2261 = vmatpush.msra.mxu0 %v1827
    %2262 = vmatpush.msra.mxu0 %v1824
    %2263 = vmatpush.msra.mxu0 %v1821
    %2264 = vmatpush.msra.mxu0 %v1818
    %2265 = vmatpush.msra.mxu0 %v1815
    %2266 = vmatpush.msra.mxu0 %v1812
    %2267 = vmatpush.msra.mxu0 %v1809
    %2268 = vmatpush.msra.mxu0 %v1806
    %2269 = vmatpush.msra.mxu0 %v1803
    %2270 = vmatpush.msra.mxu0 %v1800
    %2271 = vmatpush.msra.mxu0 %v1797
    %2272 = vmatmul.f32.gmra.mxu0 %v1538
    %v2273 = vpop.f32.mrf.mxu0
    %v2274 = vadd.f32 %v2251, %v2273
    %2275 = vmatmul.f32.gmra.mxu0 %v1550
    %v2276 = vpop.f32.mrf.mxu0
    %v2277 = vadd.f32 %v2254, %v2276
    %2278 = vdwg.mxu0
    %2279 = vmatpush.msra.mxu0 %v1890
    %2280 = vmatpush.msra.mxu0 %v1887
    %2281 = vmatpush.msra.mxu0 %v1884
    %2282 = vmatpush.msra.mxu0 %v1881
    %2283 = vmatpush.msra.mxu0 %v1878
    %2284 = vmatpush.msra.mxu0 %v1875
    %2285 = vmatpush.msra.mxu0 %v1872
    %2286 = vmatpush.msra.mxu0 %v1869
    %2287 = vmatpush.msra.mxu0 %v1866
    %2288 = vmatpush.msra.mxu0 %v1863
    %2289 = vmatpush.msra.mxu0 %v1860
    %2290 = vmatpush.msra.mxu0 %v1857
    %2291 = vmatpush.msra.mxu0 %v1854
    %2292 = vmatpush.msra.mxu0 %v1851
    %2293 = vmatpush.msra.mxu0 %v1848
    %2294 = vmatpush.msra.mxu0 %v1845
    %2295 = vmatmul.f32.gmra.mxu0 %v1539
    %v2296 = vpop.f32.mrf.mxu0
    %v2297 = vadd.f32 %v2274, %v2296
    %2298 = vmatmul.f32.gmra.mxu0 %v1551
    %v2299 = vpop.f32.mrf.mxu0
    %v2300 = vadd.f32 %v2277, %v2299
    %2301 = vdwg.mxu0
    %2302 = vmatpush.msra.mxu0 %v1938
    %2303 = vmatpush.msra.mxu0 %v1935
    %2304 = vmatpush.msra.mxu0 %v1932
    %2305 = vmatpush.msra.mxu0 %v1929
    %2306 = vmatpush.msra.mxu0 %v1926
    %2307 = vmatpush.msra.mxu0 %v1923
    %2308 = vmatpush.msra.mxu0 %v1920
    %2309 = vmatpush.msra.mxu0 %v1917
    %2310 = vmatpush.msra.mxu0 %v1914
    %2311 = vmatpush.msra.mxu0 %v1911
    %2312 = vmatpush.msra.mxu0 %v1908
    %2313 = vmatpush.msra.mxu0 %v1905
    %2314 = vmatpush.msra.mxu0 %v1902
    %2315 = vmatpush.msra.mxu0 %v1899
    %2316 = vmatpush.msra.mxu0 %v1896
    %2317 = vmatpush.msra.mxu0 %v1893
    %2318 = vmatmul.f32.gmra.mxu0 %v1540
    %v2319 = vpop.f32.mrf.mxu0
    %v2320 = vadd.f32 %v2297, %v2319
    %2321 = vmatmul.f32.gmra.mxu0 %v1552
    %v2322 = vpop.f32.mrf.mxu0
    %v2323 = vadd.f32 %v2300, %v2322
    %2324 = vdwg.mxu0
    %2325 = vmatpush.msra.mxu0 %v1986
    %2326 = vmatpush.msra.mxu0 %v1983
    %2327 = vmatpush.msra.mxu0 %v1980
    %2328 = vmatpush.msra.mxu0 %v1977
    %2329 = vmatpush.msra.mxu0 %v1974
    %2330 = vmatpush.msra.mxu0 %v1971
    %2331 = vmatpush.msra.mxu0 %v1968
    %2332 = vmatpush.msra.mxu0 %v1965
    %2333 = vmatpush.msra.mxu0 %v1962
    %2334 = vmatpush.msra.mxu0 %v1959
    %2335 = vmatpush.msra.mxu0 %v1956
    %2336 = vmatpush.msra.mxu0 %v1953
    %2337 = vmatpush.msra.mxu0 %v1950
    %2338 = vmatpush.msra.mxu0 %v1947
    %2339 = vmatpush.msra.mxu0 %v1944
    %2340 = vmatpush.msra.mxu0 %v1941
    %2341 = vmatmul.f32.gmra.mxu0 %v1541
    %v2342 = vpop.f32.mrf.mxu0
    %v2343 = vadd.f32 %v2320, %v2342
    %2344 = vmatmul.f32.gmra.mxu0 %v1553
    %v2345 = vpop.f32.mrf.mxu0
    %v2346 = vadd.f32 %v2323, %v2345
    %2347 = vdwg.mxu0
    %2348 = vmatpush.msra.mxu0 %v2034
    %2349 = vmatpush.msra.mxu0 %v2031
    %2350 = vmatpush.msra.mxu0 %v2028
    %2351 = vmatpush.msra.mxu0 %v2025
    %2352 = vmatpush.msra.mxu0 %v2022
    %2353 = vmatpush.msra.mxu0 %v2019
    %2354 = vmatpush.msra.mxu0 %v2016
    %2355 = vmatpush.msra.mxu0 %v2013
    %2356 = vmatpush.msra.mxu0 %v2010
    %2357 = vmatpush.msra.mxu0 %v2007
    %2358 = vmatpush.msra.mxu0 %v2004
    %2359 = vmatpush.msra.mxu0 %v2001
    %2360 = vmatpush.msra.mxu0 %v1998
    %2361 = vmatpush.msra.mxu0 %v1995
    %2362 = vmatpush.msra.mxu0 %v1992
    %2363 = vmatpush.msra.mxu0 %v1989
    %2364 = vmatmul.f32.gmra.mxu0 %v1542
    %v2365 = vpop.f32.mrf.mxu0
    %v2366 = vadd.f32 %v2343, %v2365
    %2367 = vmatmul.f32.gmra.mxu0 %v1554
    %v2368 = vpop.f32.mrf.mxu0
    %v2369 = vadd.f32 %v2346, %v2368
    %2370 = vdwg.mxu0
    %2371 = vmatpush.msra.mxu0 %v2082
    %2372 = vmatpush.msra.mxu0 %v2079
    %2373 = vmatpush.msra.mxu0 %v2076
    %2374 = vmatpush.msra.mxu0 %v2073
    %2375 = vmatpush.msra.mxu0 %v2070
    %2376 = vmatpush.msra.mxu0 %v2067
    %2377 = vmatpush.msra.mxu0 %v2064
    %2378 = vmatpush.msra.mxu0 %v2061
    %2379 = vmatpush.msra.mxu0 %v2058
    %2380 = vmatpush.msra.mxu0 %v2055
    %2381 = vmatpush.msra.mxu0 %v2052
    %2382 = vmatpush.msra.mxu0 %v2049
    %2383 = vmatpush.msra.mxu0 %v2046
    %2384 = vmatpush.msra.mxu0 %v2043
    %2385 = vmatpush.msra.mxu0 %v2040
    %2386 = vmatpush.msra.mxu0 %v2037
    %2387 = vmatmul.f32.gmra.mxu0 %v1543
    %v2388 = vpop.f32.mrf.mxu0
    %v2389 = vadd.f32 %v2366, %v2388
    %2390 = vmatmul.f32.gmra.mxu0 %v1555
    %v2391 = vpop.f32.mrf.mxu0
    %v2392 = vadd.f32 %v2369, %v2391
    %2393 = vdwg.mxu0
    %2394 = vmatpush.msra.mxu0 %v2130
    %2395 = vmatpush.msra.mxu0 %v2127
    %2396 = vmatpush.msra.mxu0 %v2124
    %2397 = vmatpush.msra.mxu0 %v2121
    %2398 = vmatpush.msra.mxu0 %v2118
    %2399 = vmatpush.msra.mxu0 %v2115
    %2400 = vmatpush.msra.mxu0 %v2112
    %2401 = vmatpush.msra.mxu0 %v2109
    %2402 = vmatpush.msra.mxu0 %v2106
    %2403 = vmatpush.msra.mxu0 %v2103
    %2404 = vmatpush.msra.mxu0 %v2100
    %2405 = vmatpush.msra.mxu0 %v2097
    %2406 = vmatpush.msra.mxu0 %v2094
    %2407 = vmatpush.msra.mxu0 %v2091
    %2408 = vmatpush.msra.mxu0 %v2088
    %2409 = vmatpush.msra.mxu0 %v2085
    %2410 = vmatmul.f32.gmra.mxu0 %v1544
    %v2411 = vpop.f32.mrf.mxu0
    %v2412 = vadd.f32 %v2389, %v2411
    %2413 = vmatmul.f32.gmra.mxu0 %v1556
    %v2414 = vpop.f32.mrf.mxu0
    %v2415 = vadd.f32 %v2392, %v2414
    %2416 = vdwg.mxu0
    %2417 = vmatpush.msra.mxu0 %v1603
    %2418 = vmatpush.msra.mxu0 %v1600
    %2419 = vmatpush.msra.mxu0 %v1597
    %2420 = vmatpush.msra.mxu0 %v1594
    %2421 = vmatpush.msra.mxu0 %v1591
    %2422 = vmatpush.msra.mxu0 %v1588
    %2423 = vmatpush.msra.mxu0 %v1585
    %2424 = vmatpush.msra.mxu0 %v1582
    %2425 = vmatpush.msra.mxu0 %v1579
    %2426 = vmatpush.msra.mxu0 %v1576
    %2427 = vmatpush.msra.mxu0 %v1573
    %2428 = vmatpush.msra.mxu0 %v1570
    %2429 = vmatpush.msra.mxu0 %v1567
    %2430 = vmatpush.msra.mxu0 %v1564
    %2431 = vmatpush.msra.mxu0 %v1561
    %2432 = vmatpush.msra.mxu0 %v1558
    %2433 = vmatmul.f32.gmra.mxu0 %v1533
    %v2434 = vpop.f32.mrf.mxu0
    %v2435 = vadd.f32 %v2136, %v2434
    %2436 = vmatmul.f32.gmra.mxu0 %v1545
    %v2437 = vpop.f32.mrf.mxu0
    %v2438 = vadd.f32 %v2136, %v2437
    %2439 = vdwg.mxu0
    %2440 = vmatpush.msra.mxu0 %v1651
    %2441 = vmatpush.msra.mxu0 %v1648
    %2442 = vmatpush.msra.mxu0 %v1645
    %2443 = vmatpush.msra.mxu0 %v1642
    %2444 = vmatpush.msra.mxu0 %v1639
    %2445 = vmatpush.msra.mxu0 %v1636
    %2446 = vmatpush.msra.mxu0 %v1633
    %2447 = vmatpush.msra.mxu0 %v1630
    %2448 = vmatpush.msra.mxu0 %v1627
    %2449 = vmatpush.msra.mxu0 %v1624
    %2450 = vmatpush.msra.mxu0 %v1621
    %2451 = vmatpush.msra.mxu0 %v1618
    %2452 = vmatpush.msra.mxu0 %v1615
    %2453 = vmatpush.msra.mxu0 %v1612
    %2454 = vmatpush.msra.mxu0 %v1609
    %2455 = vmatpush.msra.mxu0 %v1606
    %2456 = vmatmul.f32.gmra.mxu0 %v1534
    %v2457 = vpop.f32.mrf.mxu0
    %v2458 = vadd.f32 %v2435, %v2457
    %2459 = vmatmul.f32.gmra.mxu0 %v1546
    %v2460 = vpop.f32.mrf.mxu0
    %v2461 = vadd.f32 %v2438, %v2460
    %2462 = vdwg.mxu0
    %2463 = vmatpush.msra.mxu0 %v1699
    %2464 = vmatpush.msra.mxu0 %v1696
    %2465 = vmatpush.msra.mxu0 %v1693
    %2466 = vmatpush.msra.mxu0 %v1690
    %2467 = vmatpush.msra.mxu0 %v1687
    %2468 = vmatpush.msra.mxu0 %v1684
    %2469 = vmatpush.msra.mxu0 %v1681
    %2470 = vmatpush.msra.mxu0 %v1678
    %2471 = vmatpush.msra.mxu0 %v1675
    %2472 = vmatpush.msra.mxu0 %v1672
    %2473 = vmatpush.msra.mxu0 %v1669
    %2474 = vmatpush.msra.mxu0 %v1666
    %2475 = vmatpush.msra.mxu0 %v1663
    %2476 = vmatpush.msra.mxu0 %v1660
    %2477 = vmatpush.msra.mxu0 %v1657
    %2478 = vmatpush.msra.mxu0 %v1654
    %2479 = vmatmul.f32.gmra.mxu0 %v1535
    %v2480 = vpop.f32.mrf.mxu0
    %v2481 = vadd.f32 %v2458, %v2480
    %2482 = vmatmul.f32.gmra.mxu0 %v1547
    %v2483 = vpop.f32.mrf.mxu0
    %v2484 = vadd.f32 %v2461, %v2483
    %2485 = vdwg.mxu0
    %2486 = vmatpush.msra.mxu0 %v1747
    %2487 = vmatpush.msra.mxu0 %v1744
    %2488 = vmatpush.msra.mxu0 %v1741
    %2489 = vmatpush.msra.mxu0 %v1738
    %2490 = vmatpush.msra.mxu0 %v1735
    %2491 = vmatpush.msra.mxu0 %v1732
    %2492 = vmatpush.msra.mxu0 %v1729
    %2493 = vmatpush.msra.mxu0 %v1726
    %2494 = vmatpush.msra.mxu0 %v1723
    %2495 = vmatpush.msra.mxu0 %v1720
    %2496 = vmatpush.msra.mxu0 %v1717
    %2497 = vmatpush.msra.mxu0 %v1714
    %2498 = vmatpush.msra.mxu0 %v1711
    %2499 = vmatpush.msra.mxu0 %v1708
    %2500 = vmatpush.msra.mxu0 %v1705
    %2501 = vmatpush.msra.mxu0 %v1702
    %2502 = vmatmul.f32.gmra.mxu0 %v1536
    %v2503 = vpop.f32.mrf.mxu0
    %v2504 = vadd.f32 %v2481, %v2503
    %2505 = vmatmul.f32.gmra.mxu0 %v1548
    %v2506 = vpop.f32.mrf.mxu0
    %v2507 = vadd.f32 %v2484, %v2506
    %2508 = vdwg.mxu0
    %2509 = vmatpush.msra.mxu0 %v1795
    %2510 = vmatpush.msra.mxu0 %v1792
    %2511 = vmatpush.msra.mxu0 %v1789
    %2512 = vmatpush.msra.mxu0 %v1786
    %2513 = vmatpush.msra.mxu0 %v1783
    %2514 = vmatpush.msra.mxu0 %v1780
    %2515 = vmatpush.msra.mxu0 %v1777
    %2516 = vmatpush.msra.mxu0 %v1774
    %2517 = vmatpush.msra.mxu0 %v1771
    %2518 = vmatpush.msra.mxu0 %v1768
    %2519 = vmatpush.msra.mxu0 %v1765
    %2520 = vmatpush.msra.mxu0 %v1762
    %2521 = vmatpush.msra.mxu0 %v1759
    %2522 = vmatpush.msra.mxu0 %v1756
    %2523 = vmatpush.msra.mxu0 %v1753
    %2524 = vmatpush.msra.mxu0 %v1750
    %2525 = vmatmul.f32.gmra.mxu0 %v1537
    %v2526 = vpop.f32.mrf.mxu0
    %v2527 = vadd.f32 %v2504, %v2526
    %2528 = vmatmul.f32.gmra.mxu0 %v1549
    %v2529 = vpop.f32.mrf.mxu0
    %v2530 = vadd.f32 %v2507, %v2529
    %2531 = vdwg.mxu0
    %2532 = vmatpush.msra.mxu0 %v1843
    %2533 = vmatpush.msra.mxu0 %v1840
    %2534 = vmatpush.msra.mxu0 %v1837
    %2535 = vmatpush.msra.mxu0 %v1834
    %2536 = vmatpush.msra.mxu0 %v1831
    %2537 = vmatpush.msra.mxu0 %v1828
    %2538 = vmatpush.msra.mxu0 %v1825
    %2539 = vmatpush.msra.mxu0 %v1822
    %2540 = vmatpush.msra.mxu0 %v1819
    %2541 = vmatpush.msra.mxu0 %v1816
    %2542 = vmatpush.msra.mxu0 %v1813
    %2543 = vmatpush.msra.mxu0 %v1810
    %2544 = vmatpush.msra.mxu0 %v1807
    %2545 = vmatpush.msra.mxu0 %v1804
    %2546 = vmatpush.msra.mxu0 %v1801
    %2547 = vmatpush.msra.mxu0 %v1798
    %2548 = vmatmul.f32.gmra.mxu0 %v1538
    %v2549 = vpop.f32.mrf.mxu0
    %v2550 = vadd.f32 %v2527, %v2549
    %2551 = vmatmul.f32.gmra.mxu0 %v1550
    %v2552 = vpop.f32.mrf.mxu0
    %v2553 = vadd.f32 %v2530, %v2552
    %2554 = vdwg.mxu0
    %2555 = vmatpush.msra.mxu0 %v1891
    %2556 = vmatpush.msra.mxu0 %v1888
    %2557 = vmatpush.msra.mxu0 %v1885
    %2558 = vmatpush.msra.mxu0 %v1882
    %2559 = vmatpush.msra.mxu0 %v1879
    %2560 = vmatpush.msra.mxu0 %v1876
    %2561 = vmatpush.msra.mxu0 %v1873
    %2562 = vmatpush.msra.mxu0 %v1870
    %2563 = vmatpush.msra.mxu0 %v1867
    %2564 = vmatpush.msra.mxu0 %v1864
    %2565 = vmatpush.msra.mxu0 %v1861
    %2566 = vmatpush.msra.mxu0 %v1858
    %2567 = vmatpush.msra.mxu0 %v1855
    %2568 = vmatpush.msra.mxu0 %v1852
    %2569 = vmatpush.msra.mxu0 %v1849
    %2570 = vmatpush.msra.mxu0 %v1846
    %2571 = vmatmul.f32.gmra.mxu0 %v1539
    %v2572 = vpop.f32.mrf.mxu0
    %v2573 = vadd.f32 %v2550, %v2572
    %2574 = vmatmul.f32.gmra.mxu0 %v1551
    %v2575 = vpop.f32.mrf.mxu0
    %v2576 = vadd.f32 %v2553, %v2575
    %2577 = vdwg.mxu0
    %2578 = vmatpush.msra.mxu0 %v1939
    %2579 = vmatpush.msra.mxu0 %v1936
    %2580 = vmatpush.msra.mxu0 %v1933
    %2581 = vmatpush.msra.mxu0 %v1930
    %2582 = vmatpush.msra.mxu0 %v1927
    %2583 = vmatpush.msra.mxu0 %v1924
    %2584 = vmatpush.msra.mxu0 %v1921
    %2585 = vmatpush.msra.mxu0 %v1918
    %2586 = vmatpush.msra.mxu0 %v1915
    %2587 = vmatpush.msra.mxu0 %v1912
    %2588 = vmatpush.msra.mxu0 %v1909
    %2589 = vmatpush.msra.mxu0 %v1906
    %2590 = vmatpush.msra.mxu0 %v1903
    %2591 = vmatpush.msra.mxu0 %v1900
    %2592 = vmatpush.msra.mxu0 %v1897
    %2593 = vmatpush.msra.mxu0 %v1894
    %2594 = vmatmul.f32.gmra.mxu0 %v1540
    %v2595 = vpop.f32.mrf.mxu0
    %v2596 = vadd.f32 %v2573, %v2595
    %2597 = vmatmul.f32.gmra.mxu0 %v1552
    %v2598 = vpop.f32.mrf.mxu0
    %v2599 = vadd.f32 %v2576, %v2598
    %2600 = vdwg.mxu0
    %2601 = vmatpush.msra.mxu0 %v1987
    %2602 = vmatpush.msra.mxu0 %v1984
    %2603 = vmatpush.msra.mxu0 %v1981
    %2604 = vmatpush.msra.mxu0 %v1978
    %2605 = vmatpush.msra.mxu0 %v1975
    %2606 = vmatpush.msra.mxu0 %v1972
    %2607 = vmatpush.msra.mxu0 %v1969
    %2608 = vmatpush.msra.mxu0 %v1966
    %2609 = vmatpush.msra.mxu0 %v1963
    %2610 = vmatpush.msra.mxu0 %v1960
    %2611 = vmatpush.msra.mxu0 %v1957
    %2612 = vmatpush.msra.mxu0 %v1954
    %2613 = vmatpush.msra.mxu0 %v1951
    %2614 = vmatpush.msra.mxu0 %v1948
    %2615 = vmatpush.msra.mxu0 %v1945
    %2616 = vmatpush.msra.mxu0 %v1942
    %2617 = vmatmul.f32.gmra.mxu0 %v1541
    %v2618 = vpop.f32.mrf.mxu0
    %v2619 = vadd.f32 %v2596, %v2618
    %2620 = vmatmul.f32.gmra.mxu0 %v1553
    %v2621 = vpop.f32.mrf.mxu0
    %v2622 = vadd.f32 %v2599, %v2621
    %2623 = vdwg.mxu0
    %2624 = vmatpush.msra.mxu0 %v2035
    %2625 = vmatpush.msra.mxu0 %v2032
    %2626 = vmatpush.msra.mxu0 %v2029
    %2627 = vmatpush.msra.mxu0 %v2026
    %2628 = vmatpush.msra.mxu0 %v2023
    %2629 = vmatpush.msra.mxu0 %v2020
    %2630 = vmatpush.msra.mxu0 %v2017
    %2631 = vmatpush.msra.mxu0 %v2014
    %2632 = vmatpush.msra.mxu0 %v2011
    %2633 = vmatpush.msra.mxu0 %v2008
    %2634 = vmatpush.msra.mxu0 %v2005
    %2635 = vmatpush.msra.mxu0 %v2002
    %2636 = vmatpush.msra.mxu0 %v1999
    %2637 = vmatpush.msra.mxu0 %v1996
    %2638 = vmatpush.msra.mxu0 %v1993
    %2639 = vmatpush.msra.mxu0 %v1990
    %2640 = vmatmul.f32.gmra.mxu0 %v1542
    %v2641 = vpop.f32.mrf.mxu0
    %v2642 = vadd.f32 %v2619, %v2641
    %2643 = vmatmul.f32.gmra.mxu0 %v1554
    %v2644 = vpop.f32.mrf.mxu0
    %v2645 = vadd.f32 %v2622, %v2644
    %2646 = vdwg.mxu0
    %2647 = vmatpush.msra.mxu0 %v2083
    %2648 = vmatpush.msra.mxu0 %v2080
    %2649 = vmatpush.msra.mxu0 %v2077
    %2650 = vmatpush.msra.mxu0 %v2074
    %2651 = vmatpush.msra.mxu0 %v2071
    %2652 = vmatpush.msra.mxu0 %v2068
    %2653 = vmatpush.msra.mxu0 %v2065
    %2654 = vmatpush.msra.mxu0 %v2062
    %2655 = vmatpush.msra.mxu0 %v2059
    %2656 = vmatpush.msra.mxu0 %v2056
    %2657 = vmatpush.msra.mxu0 %v2053
    %2658 = vmatpush.msra.mxu0 %v2050
    %2659 = vmatpush.msra.mxu0 %v2047
    %2660 = vmatpush.msra.mxu0 %v2044
    %2661 = vmatpush.msra.mxu0 %v2041
    %2662 = vmatpush.msra.mxu0 %v2038
    %2663 = vmatmul.f32.gmra.mxu0 %v1543
    %v2664 = vpop.f32.mrf.mxu0
    %v2665 = vadd.f32 %v2642, %v2664
    %2666 = vmatmul.f32.gmra.mxu0 %v1555
    %v2667 = vpop.f32.mrf.mxu0
    %v2668 = vadd.f32 %v2645, %v2667
    %2669 = vdwg.mxu0
    %2670 = vmatpush.msra.mxu0 %v2131
    %2671 = vmatpush.msra.mxu0 %v2128
    %2672 = vmatpush.msra.mxu0 %v2125
    %2673 = vmatpush.msra.mxu0 %v2122
    %2674 = vmatpush.msra.mxu0 %v2119
    %2675 = vmatpush.msra.mxu0 %v2116
    %2676 = vmatpush.msra.mxu0 %v2113
    %2677 = vmatpush.msra.mxu0 %v2110
    %2678 = vmatpush.msra.mxu0 %v2107
    %2679 = vmatpush.msra.mxu0 %v2104
    %2680 = vmatpush.msra.mxu0 %v2101
    %2681 = vmatpush.msra.mxu0 %v2098
    %2682 = vmatpush.msra.mxu0 %v2095
    %2683 = vmatpush.msra.mxu0 %v2092
    %2684 = vmatpush.msra.mxu0 %v2089
    %2685 = vmatpush.msra.mxu0 %v2086
    %2686 = vmatmul.f32.gmra.mxu0 %v1544
    %v2687 = vpop.f32.mrf.mxu0
    %v2688 = vadd.f32 %v2665, %v2687
    %2689 = vmatmul.f32.gmra.mxu0 %v1556
    %v2690 = vpop.f32.mrf.mxu0
    %v2691 = vadd.f32 %v2668, %v2690
    %2692 = vdwg.mxu0
    %2693 = vmatpush.msra.mxu0 %v1604
    %2694 = vmatpush.msra.mxu0 %v1601
    %2695 = vmatpush.msra.mxu0 %v1598
    %2696 = vmatpush.msra.mxu0 %v1595
    %2697 = vmatpush.msra.mxu0 %v1592
    %2698 = vmatpush.msra.mxu0 %v1589
    %2699 = vmatpush.msra.mxu0 %v1586
    %2700 = vmatpush.msra.mxu0 %v1583
    %2701 = vmatpush.msra.mxu0 %v1580
    %2702 = vmatpush.msra.mxu0 %v1577
    %2703 = vmatpush.msra.mxu0 %v1574
    %2704 = vmatpush.msra.mxu0 %v1571
    %2705 = vmatpush.msra.mxu0 %v1568
    %2706 = vmatpush.msra.mxu0 %v1565
    %2707 = vmatpush.msra.mxu0 %v1562
    %2708 = vmatpush.msra.mxu0 %v1559
    %2709 = vmatmul.f32.gmra.mxu0 %v1533
    %v2710 = vpop.f32.mrf.mxu0
    %v2711 = vadd.f32 %v2137, %v2710
    %2712 = vmatmul.f32.gmra.mxu0 %v1545
    %v2713 = vpop.f32.mrf.mxu0
    %v2714 = vadd.f32 %v2137, %v2713
    %2715 = vdwg.mxu0
    %2716 = vmatpush.msra.mxu0 %v1652
    %2717 = vmatpush.msra.mxu0 %v1649
    %2718 = vmatpush.msra.mxu0 %v1646
    %2719 = vmatpush.msra.mxu0 %v1643
    %2720 = vmatpush.msra.mxu0 %v1640
    %2721 = vmatpush.msra.mxu0 %v1637
    %2722 = vmatpush.msra.mxu0 %v1634
    %2723 = vmatpush.msra.mxu0 %v1631
    %2724 = vmatpush.msra.mxu0 %v1628
    %2725 = vmatpush.msra.mxu0 %v1625
    %2726 = vmatpush.msra.mxu0 %v1622
    %2727 = vmatpush.msra.mxu0 %v1619
    %2728 = vmatpush.msra.mxu0 %v1616
    %2729 = vmatpush.msra.mxu0 %v1613
    %2730 = vmatpush.msra.mxu0 %v1610
    %2731 = vmatpush.msra.mxu0 %v1607
    %2732 = vmatmul.f32.gmra.mxu0 %v1534
    %v2733 = vpop.f32.mrf.mxu0
    %v2734 = vadd.f32 %v2711, %v2733
    %2735 = vmatmul.f32.gmra.mxu0 %v1546
    %v2736 = vpop.f32.mrf.mxu0
    %v2737 = vadd.f32 %v2714, %v2736
    %2738 = vdwg.mxu0
    %2739 = vmatpush.msra.mxu0 %v1700
    %2740 = vmatpush.msra.mxu0 %v1697
    %2741 = vmatpush.msra.mxu0 %v1694
    %2742 = vmatpush.msra.mxu0 %v1691
    %2743 = vmatpush.msra.mxu0 %v1688
    %2744 = vmatpush.msra.mxu0 %v1685
    %2745 = vmatpush.msra.mxu0 %v1682
    %2746 = vmatpush.msra.mxu0 %v1679
    %2747 = vmatpush.msra.mxu0 %v1676
    %2748 = vmatpush.msra.mxu0 %v1673
    %2749 = vmatpush.msra.mxu0 %v1670
    %2750 = vmatpush.msra.mxu0 %v1667
    %2751 = vmatpush.msra.mxu0 %v1664
    %2752 = vmatpush.msra.mxu0 %v1661
    %2753 = vmatpush.msra.mxu0 %v1658
    %2754 = vmatpush.msra.mxu0 %v1655
    %2755 = vmatmul.f32.gmra.mxu0 %v1535
    %v2756 = vpop.f32.mrf.mxu0
    %v2757 = vadd.f32 %v2734, %v2756
    %2758 = vmatmul.f32.gmra.mxu0 %v1547
    %v2759 = vpop.f32.mrf.mxu0
    %v2760 = vadd.f32 %v2737, %v2759
    %2761 = vdwg.mxu0
    %2762 = vmatpush.msra.mxu0 %v1748
    %2763 = vmatpush.msra.mxu0 %v1745
    %2764 = vmatpush.msra.mxu0 %v1742
    %2765 = vmatpush.msra.mxu0 %v1739
    %2766 = vmatpush.msra.mxu0 %v1736
    %2767 = vmatpush.msra.mxu0 %v1733
    %2768 = vmatpush.msra.mxu0 %v1730
    %2769 = vmatpush.msra.mxu0 %v1727
    %2770 = vmatpush.msra.mxu0 %v1724
    %2771 = vmatpush.msra.mxu0 %v1721
    %2772 = vmatpush.msra.mxu0 %v1718
    %2773 = vmatpush.msra.mxu0 %v1715
    %2774 = vmatpush.msra.mxu0 %v1712
    %2775 = vmatpush.msra.mxu0 %v1709
    %2776 = vmatpush.msra.mxu0 %v1706
    %2777 = vmatpush.msra.mxu0 %v1703
    %2778 = vmatmul.f32.gmra.mxu0 %v1536
    %v2779 = vpop.f32.mrf.mxu0
    %v2780 = vadd.f32 %v2757, %v2779
    %2781 = vmatmul.f32.gmra.mxu0 %v1548
    %v2782 = vpop.f32.mrf.mxu0
    %v2783 = vadd.f32 %v2760, %v2782
    %2784 = vdwg.mxu0
    %2785 = vmatpush.msra.mxu0 %v1796
    %2786 = vmatpush.msra.mxu0 %v1793
    %2787 = vmatpush.msra.mxu0 %v1790
    %2788 = vmatpush.msra.mxu0 %v1787
    %2789 = vmatpush.msra.mxu0 %v1784
    %2790 = vmatpush.msra.mxu0 %v1781
    %2791 = vmatpush.msra.mxu0 %v1778
    %2792 = vmatpush.msra.mxu0 %v1775
    %2793 = vmatpush.msra.mxu0 %v1772
    %2794 = vmatpush.msra.mxu0 %v1769
    %2795 = vmatpush.msra.mxu0 %v1766
    %2796 = vmatpush.msra.mxu0 %v1763
    %2797 = vmatpush.msra.mxu0 %v1760
    %2798 = vmatpush.msra.mxu0 %v1757
    %2799 = vmatpush.msra.mxu0 %v1754
    %2800 = vmatpush.msra.mxu0 %v1751
    %2801 = vmatmul.f32.gmra.mxu0 %v1537
    %v2802 = vpop.f32.mrf.mxu0
    %v2803 = vadd.f32 %v2780, %v2802
    %2804 = vmatmul.f32.gmra.mxu0 %v1549
    %v2805 = vpop.f32.mrf.mxu0
    %v2806 = vadd.f32 %v2783, %v2805
    %2807 = vdwg.mxu0
    %2808 = vmatpush.msra.mxu0 %v1844
    %2809 = vmatpush.msra.mxu0 %v1841
    %2810 = vmatpush.msra.mxu0 %v1838
    %2811 = vmatpush.msra.mxu0 %v1835
    %2812 = vmatpush.msra.mxu0 %v1832
    %2813 = vmatpush.msra.mxu0 %v1829
    %2814 = vmatpush.msra.mxu0 %v1826
    %2815 = vmatpush.msra.mxu0 %v1823
    %2816 = vmatpush.msra.mxu0 %v1820
    %2817 = vmatpush.msra.mxu0 %v1817
    %2818 = vmatpush.msra.mxu0 %v1814
    %2819 = vmatpush.msra.mxu0 %v1811
    %2820 = vmatpush.msra.mxu0 %v1808
    %2821 = vmatpush.msra.mxu0 %v1805
    %2822 = vmatpush.msra.mxu0 %v1802
    %2823 = vmatpush.msra.mxu0 %v1799
    %2824 = vmatmul.f32.gmra.mxu0 %v1538
    %v2825 = vpop.f32.mrf.mxu0
    %v2826 = vadd.f32 %v2803, %v2825
    %2827 = vmatmul.f32.gmra.mxu0 %v1550
    %v2828 = vpop.f32.mrf.mxu0
    %v2829 = vadd.f32 %v2806, %v2828
    %2830 = vdwg.mxu0
    %2831 = vmatpush.msra.mxu0 %v1892
    %2832 = vmatpush.msra.mxu0 %v1889
    %2833 = vmatpush.msra.mxu0 %v1886
    %2834 = vmatpush.msra.mxu0 %v1883
    %2835 = vmatpush.msra.mxu0 %v1880
    %2836 = vmatpush.msra.mxu0 %v1877
    %2837 = vmatpush.msra.mxu0 %v1874
    %2838 = vmatpush.msra.mxu0 %v1871
    %2839 = vmatpush.msra.mxu0 %v1868
    %2840 = vmatpush.msra.mxu0 %v1865
    %2841 = vmatpush.msra.mxu0 %v1862
    %2842 = vmatpush.msra.mxu0 %v1859
    %2843 = vmatpush.msra.mxu0 %v1856
    %2844 = vmatpush.msra.mxu0 %v1853
    %2845 = vmatpush.msra.mxu0 %v1850
    %2846 = vmatpush.msra.mxu0 %v1847
    %2847 = vmatmul.f32.gmra.mxu0 %v1539
    %v2848 = vpop.f32.mrf.mxu0
    %v2849 = vadd.f32 %v2826, %v2848
    %2850 = vmatmul.f32.gmra.mxu0 %v1551
    %v2851 = vpop.f32.mrf.mxu0
    %v2852 = vadd.f32 %v2829, %v2851
    %2853 = vdwg.mxu0
    %2854 = vmatpush.msra.mxu0 %v1940
    %2855 = vmatpush.msra.mxu0 %v1937
    %2856 = vmatpush.msra.mxu0 %v1934
    %2857 = vmatpush.msra.mxu0 %v1931
    %2858 = vmatpush.msra.mxu0 %v1928
    %2859 = vmatpush.msra.mxu0 %v1925
    %2860 = vmatpush.msra.mxu0 %v1922
    %2861 = vmatpush.msra.mxu0 %v1919
    %2862 = vmatpush.msra.mxu0 %v1916
    %2863 = vmatpush.msra.mxu0 %v1913
    %2864 = vmatpush.msra.mxu0 %v1910
    %2865 = vmatpush.msra.mxu0 %v1907
    %2866 = vmatpush.msra.mxu0 %v1904
    %2867 = vmatpush.msra.mxu0 %v1901
    %2868 = vmatpush.msra.mxu0 %v1898
    %2869 = vmatpush.msra.mxu0 %v1895
    %2870 = vmatmul.f32.gmra.mxu0 %v1540
    %v2871 = vpop.f32.mrf.mxu0
    %v2872 = vadd.f32 %v2849, %v2871
    %2873 = vmatmul.f32.gmra.mxu0 %v1552
    %v2874 = vpop.f32.mrf.mxu0
    %v2875 = vadd.f32 %v2852, %v2874
    %2876 = vdwg.mxu0
    %2877 = vmatpush.msra.mxu0 %v1988
    %2878 = vmatpush.msra.mxu0 %v1985
    %2879 = vmatpush.msra.mxu0 %v1982
    %2880 = vmatpush.msra.mxu0 %v1979
    %2881 = vmatpush.msra.mxu0 %v1976
    %2882 = vmatpush.msra.mxu0 %v1973
    %2883 = vmatpush.msra.mxu0 %v1970
    %2884 = vmatpush.msra.mxu0 %v1967
    %2885 = vmatpush.msra.mxu0 %v1964
    %2886 = vmatpush.msra.mxu0 %v1961
    %2887 = vmatpush.msra.mxu0 %v1958
    %2888 = vmatpush.msra.mxu0 %v1955
    %2889 = vmatpush.msra.mxu0 %v1952
    %2890 = vmatpush.msra.mxu0 %v1949
    %2891 = vmatpush.msra.mxu0 %v1946
    %2892 = vmatpush.msra.mxu0 %v1943
    %2893 = vmatmul.f32.gmra.mxu0 %v1541
    %v2894 = vpop.f32.mrf.mxu0
    %v2895 = vadd.f32 %v2872, %v2894
    %2896 = vmatmul.f32.gmra.mxu0 %v1553
    %v2897 = vpop.f32.mrf.mxu0
    %v2898 = vadd.f32 %v2875, %v2897
    %2899 = vdwg.mxu0
    %2900 = vmatpush.msra.mxu0 %v2036
    %2901 = vmatpush.msra.mxu0 %v2033
    %2902 = vmatpush.msra.mxu0 %v2030
    %2903 = vmatpush.msra.mxu0 %v2027
    %2904 = vmatpush.msra.mxu0 %v2024
    %2905 = vmatpush.msra.mxu0 %v2021
    %2906 = vmatpush.msra.mxu0 %v2018
    %2907 = vmatpush.msra.mxu0 %v2015
    %2908 = vmatpush.msra.mxu0 %v2012
    %2909 = vmatpush.msra.mxu0 %v2009
    %2910 = vmatpush.msra.mxu0 %v2006
    %2911 = vmatpush.msra.mxu0 %v2003
    %2912 = vmatpush.msra.mxu0 %v2000
    %2913 = vmatpush.msra.mxu0 %v1997
    %2914 = vmatpush.msra.mxu0 %v1994
    %2915 = vmatpush.msra.mxu0 %v1991
    %2916 = vmatmul.f32.gmra.mxu0 %v1542
    %v2917 = vpop.f32.mrf.mxu0
    %v2918 = vadd.f32 %v2895, %v2917
    %2919 = vmatmul.f32.gmra.mxu0 %v1554
    %v2920 = vpop.f32.mrf.mxu0
    %v2921 = vadd.f32 %v2898, %v2920
    %2922 = vdwg.mxu0
    %2923 = vmatpush.msra.mxu0 %v2084
    %2924 = vmatpush.msra.mxu0 %v2081
    %2925 = vmatpush.msra.mxu0 %v2078
    %2926 = vmatpush.msra.mxu0 %v2075
    %2927 = vmatpush.msra.mxu0 %v2072
    %2928 = vmatpush.msra.mxu0 %v2069
    %2929 = vmatpush.msra.mxu0 %v2066
    %2930 = vmatpush.msra.mxu0 %v2063
    %2931 = vmatpush.msra.mxu0 %v2060
    %2932 = vmatpush.msra.mxu0 %v2057
    %2933 = vmatpush.msra.mxu0 %v2054
    %2934 = vmatpush.msra.mxu0 %v2051
    %2935 = vmatpush.msra.mxu0 %v2048
    %2936 = vmatpush.msra.mxu0 %v2045
    %2937 = vmatpush.msra.mxu0 %v2042
    %2938 = vmatpush.msra.mxu0 %v2039
    %2939 = vmatmul.f32.gmra.mxu0 %v1543
    %v2940 = vpop.f32.mrf.mxu0
    %v2941 = vadd.f32 %v2918, %v2940
    %2942 = vmatmul.f32.gmra.mxu0 %v1555
    %v2943 = vpop.f32.mrf.mxu0
    %v2944 = vadd.f32 %v2921, %v2943
    %2945 = vdwg.mxu0
    %2946 = vmatpush.msra.mxu0 %v2132
    %2947 = vmatpush.msra.mxu0 %v2129
    %2948 = vmatpush.msra.mxu0 %v2126
    %2949 = vmatpush.msra.mxu0 %v2123
    %2950 = vmatpush.msra.mxu0 %v2120
    %2951 = vmatpush.msra.mxu0 %v2117
    %2952 = vmatpush.msra.mxu0 %v2114
    %2953 = vmatpush.msra.mxu0 %v2111
    %2954 = vmatpush.msra.mxu0 %v2108
    %2955 = vmatpush.msra.mxu0 %v2105
    %2956 = vmatpush.msra.mxu0 %v2102
    %2957 = vmatpush.msra.mxu0 %v2099
    %2958 = vmatpush.msra.mxu0 %v2096
    %2959 = vmatpush.msra.mxu0 %v2093
    %2960 = vmatpush.msra.mxu0 %v2090
    %2961 = vmatpush.msra.mxu0 %v2087
    %2962 = vmatmul.f32.gmra.mxu0 %v1544
    %v2963 = vpop.f32.mrf.mxu0
    %v2964 = vadd.f32 %v2941, %v2963
    %2965 = vmatmul.f32.gmra.mxu0 %v1556
    %v2966 = vpop.f32.mrf.mxu0
    %v2967 = vadd.f32 %v2944, %v2966
    %2968 = vdwg.mxu0
    %2969 = vst [vmem:[#allocation11] sm:$0xff] %v2412
    %2970 = vst [vmem:[#allocation11 + $0x8] sm:$0xff] %v2688
    %2971 = vst [vmem:[#allocation11 + $0x10] sm:$0xff] %v2964
    %2972 = vst [vmem:[#allocation11 + $0x18] sm:$0xff] %v2415
    %2973 = vst [vmem:[#allocation11 + $0x20] sm:$0xff] %v2691
    %2974 = vst [vmem:[#allocation11 + $0x28] sm:$0xff] %v2967
    // Predicated region
    $region42: #{tpu_custom_call.1} parent=1 // pred_check
      _
    $region43: #{tpu_custom_call.1} parent=1 // pred_check_branch
      %2976 = sbr.rel (0) target = $region45
    $region44: #{tpu_custom_call.1} parent=1 // pred_region
      %2978 = vsyncadd [#allocation4], 0
      %s2979 = sshll.u32 [#allocation11], 4
      %s2980 = int_to_ptr.vmem [resolvable:$true] %s2979
      %s2981 = sshll.u32 %s5, 4
      %s2982 = int_to_ptr.hbm [resolvable:$true] %s2981
      %2987 = dma.vmem_to_hbm [thread:$0]  %s2980, 768, %s2982, [#allocation4], 384, 384, 24
    $region45: #{tpu_custom_call.1} parent=1 // pred_fallthru
      _
    // Predicated region
    $region46: #{tpu_custom_call.1} parent=1 // pred_check
      _
    $region47: #{tpu_custom_call.1} parent=1 // pred_check_branch
      %2989 = sbr.rel (0) target = $region49
    $region48: #{tpu_custom_call.1} parent=1 // pred_region
      %2991 = dma.done [#allocation4], 768
    $region49: #{tpu_custom_call.1} parent=1 // pred_fallthru
      _
    %2992 = vsyncpa [#allocation3], 1
    %2993 = vsyncpa [#allocation6], 1
    %2994 = vsyncpa [#allocation9], 1
    %2995 = vsyncpa [#allocation4], 1

</llo_original>
